<compile_context>
chip_gen: v7x
topology: tpu7x:2x2x1
jax: 0.10.0
libtpu: 0.0.40
codegen_flags: <defaults>
</compile_context>

<pallas_src>
import math
import functools

import jax
import jax.numpy as jnp
import numpy as np
from jax.experimental import pallas as pl
from jax.experimental.pallas import tpu as pltpu

LN_EPS = 1e-6   # nn.LayerNorm(eps=1e-6)
IN_EPS = 1e-5   # nn.InstanceNorm2d default eps (affine=False, track_running_stats=False)


def _erf(x):
    # Abramowitz & Stegun 7.1.26 (|err| < 1.5e-7): matches PyTorch's exact-erf nn.GELU()
    # to well within the test tolerance.  The 1/(1+p*|x|) divide is routed through the
    # EUP (pl.reciprocal approx) -- error is damped by exp(-x^2), well inside 2e-3.
    a1, a2, a3, a4, a5 = 0.254829592, -0.284496736, 1.421413741, -1.453152027, 1.061405429
    p = 0.3275911
    s = jnp.where(x < 0.0, -1.0, 1.0)
    ax = jnp.abs(x)
    t = pl.reciprocal(1.0 + p * ax, approx=True)
    poly = ((((a5 * t + a4) * t + a3) * t + a2) * t + a1) * t
    return s * (1.0 - poly * jnp.exp(-ax * ax))


def _gelu_exact(x):
    # PyTorch nn.GELU() default is exact-erf GELU; kept exact (not tanh) for fidelity.
    return 0.5 * x * (1.0 + _erf(x * (1.0 / math.sqrt(2.0))))


def _layernorm(x, g, b):
    mu = jnp.mean(x, axis=-1, keepdims=True)
    var = jnp.mean((x - mu) ** 2, axis=-1, keepdims=True)
    return (x - mu) * jax.lax.rsqrt(var + LN_EPS) * g + b


def _mean_last2(x):
    # per-head mean over a (..., C, C) map via two single-axis reduces (safe lowering)
    return jnp.mean(jnp.mean(x, axis=-1, keepdims=True), axis=-2, keepdims=True)


def _encoder_kernel(num_layers, num_heads, bt, n_tok, c,
                    emb_ref,
                    ang_ref, anb_ref,
                    wqkv_ref, wo_ref,
                    fng_ref, fnb_ref,
                    w1_ref, b1_ref, w2_ref, b2_ref,
                    eng_ref, enb_ref,
                    out_ref, attw_ref,
                    ctx_ref):
    hc = num_heads * c
    inv_sqrt_c = 1.0 / math.sqrt(c)
    inv_h = 1.0 / num_heads

    # Batch block folded into rows: (bt * n_tok, c).
    x = emb_ref[0]

    for l in range(num_layers):                 # static layer loop (Block_ViT blocks)
        org1 = x
        xn = _layernorm(x, ang_ref[l], anb_ref[l])                    # attn_norm1

        # Fused Q/K/V projection for all heads & all samples: one lane-filling matmul.
        qkv = jnp.dot(xn, wqkv_ref[l], preferred_element_type=jnp.float32)   # (R, 3*H*C)

        for s in range(bt):                     # channel attention is per-sample
            r0 = s * n_tok
            q_cat = qkv[r0:r0 + n_tok, 0:hc]               # (N, H*C) lane-aligned slices
            k_cat = qkv[r0:r0 + n_tok, hc:2 * hc]
            v_cat = qkv[r0:r0 + n_tok, 2 * hc:3 * hc]

            # All-head scores in ONE MXU pass: (H*C, H*C); diagonal (C, C) blocks are
            # the per-head channel-attention scores Q_h^T K_h.
            s_all = jnp.einsum('nc,nd->cd', q_cat, k_cat,
                               preferred_element_type=jnp.float32)
            s_heads = jnp.stack(
                [s_all[h * c:(h + 1) * c, h * c:(h + 1) * c] for h in range(num_heads)],
                axis=0) * inv_sqrt_c                        # (H, C, C), scaled by 1/sqrt(KV)

            # InstanceNorm2d over each (C, C) map (per sample, per head); no affine,
            # no running stats (matches PyTorch defaults).  All heads at once.
            mu = _mean_last2(s_heads)
            d = s_heads - mu
            var = _mean_last2(d * d)
            sn = d * jax.lax.rsqrt(var + IN_EPS)

            # Softmax over the last dim for all heads at once; reciprocal on the EUP.
            sn = sn - jnp.max(sn, axis=-1, keepdims=True)
            e = jnp.exp(sn)
            p = e * pl.reciprocal(jnp.sum(e, axis=-1, keepdims=True), approx=True)

            # vis weights: attention_probs1.mean(dim=heads) -> (C, C)
            attw_ref[0, l * bt + s] = jnp.mean(p, axis=0)

            # Fold the head-mean of the context into one K = H*C contraction:
            #   ctx[n, c] = (1/H) * sum_{h,d} V_h[n, d] * P_h[c, d]
            # Small (C, C) transposes go to the XLU; the matmul fills the MXU K dim.
            pt = jnp.concatenate([p[h].T for h in range(num_heads)], axis=0)   # (H*C, C)
            ctx_ref[r0:r0 + n_tok, :] = (
                jnp.dot(v_cat, pt, preferred_element_type=jnp.float32) * inv_h)

        o1 = jnp.dot(ctx_ref[...], wo_ref[l], preferred_element_type=jnp.float32)  # out1 (no bias)
        cx1 = org1 + o1

        # ffn_norm1 + Mlp (fc1 -> GELU -> fc2), residual
        xn2 = _layernorm(cx1, fng_ref[l], fnb_ref[l])
        h1 = jnp.dot(xn2, w1_ref[l], preferred_element_type=jnp.float32) + b1_ref[l]
        h1 = _gelu_exact(h1)
        h2 = jnp.dot(h1, w2_ref[l], preferred_element_type=jnp.float32) + b2_ref[l]
        x = h2 + cx1

    # encoder_norm1
    # TODO(synk): a lane-dense (Bt, N*C)/(C, Bt*C) output slab would avoid masked
    # stores on the C=32 trailing dim, but needs a lane-collapsing relayout in-kernel;
    # kept C-trailing for robust lowering at these shapes.
    out_ref[0] = _layernorm(x, eng_ref[0], enb_ref[0])


def _choose_batch_block(B, N, target_rows=256, min_split_rows=128):
    """Pick the per-grid-step batch block Bt.

    Aim for row blocks R = Bt*N of ~target_rows (R is the M dim of every matmul in
    the kernel, and fewer grid steps means less per-step pipeline overhead).  Only
    leave >= 2 grid points (to feed v7x's two TensorCores) when each block still
    keeps >= min_split_rows rows -- two starved blocks lose to one full block.
    """
    divs = [d for d in range(1, B + 1) if B % d == 0]
    fitting = [d for d in divs if d * N <= target_rows]
    bt = max(fitting) if fitting else 1
    if bt == B and B > 1:
        halves = [d for d in divs if d < B and d * N >= min_split_rows]
        if halves:
            bt = max(halves)
    return bt


def encoder_pallas(emb, params, num_layers, num_heads, batch_block=None):
    B, N, C = emb.shape
    H, C4 = num_heads, 4 * C
    Bt = _choose_batch_block(B, N) if batch_block is None else batch_block
    assert B % Bt == 0
    nb = B // Bt
    R = Bt * N

    # --- one-time wrapper-side weight prep (free layout plumbing) ---
    # nn.Linear stores (out, in); pre-transpose to (in, out) so every in-kernel
    # projection is a plain A @ B, and fuse Q/K/V over heads along the output axis.
    # TODO(synk): optionally cast weights/activations to bf16 on v6e/v7x (keep f32
    # accumulate) to halve weight DMA; kept f32 here to stay well inside tolerance.
    def to_in_out(w):                               # (L, H, Cout, Cin) -> (L, Cin, H*Cout)
        return jnp.transpose(w, (0, 3, 1, 2)).reshape(num_layers, C, H * C)

    wqkv = jnp.concatenate([to_in_out(params["wq"]),
                            to_in_out(params["wk"]),
                            to_in_out(params["wv"])], axis=-1)        # (L, C, 3*H*C)
    woT = jnp.transpose(params["wo"], (0, 2, 1))                      # (L, C, C)
    w1T = jnp.transpose(params["w1"], (0, 2, 1))                      # (L, C, 4C)
    w2T = jnp.transpose(params["w2"], (0, 2, 1))                      # (L, 4C, C)

    # Fold batch into rows: each grid step sees a (Bt*N, C) row block.
    emb_rows = emb.reshape(nb, R, C)

    kern = functools.partial(_encoder_kernel, num_layers, num_heads, Bt, N, C)

    def fixed(nd):
        return lambda b: (0,) * nd

    in_specs = [
        pl.BlockSpec((1, R, C), lambda b: (b, 0, 0)),                 # emb rows
        pl.BlockSpec((num_layers, 1, C), fixed(3)),                   # attn_norm1 gamma
        pl.BlockSpec((num_layers, 1, C), fixed(3)),                   # attn_norm1 beta
        pl.BlockSpec((num_layers, C, 3 * H * C), fixed(3)),           # fused QKV weights (in,out)
        pl.BlockSpec((num_layers, C, C), fixed(3)),                   # out1 weight (in,out)
        pl.BlockSpec((num_layers, 1, C), fixed(3)),                   # ffn_norm1 gamma
        pl.BlockSpec((num_layers, 1, C), fixed(3)),                   # ffn_norm1 beta
        pl.BlockSpec((num_layers, C, C4), fixed(3)),                  # fc1 weight (in,out)
        pl.BlockSpec((num_layers, 1, C4), fixed(3)),                  # fc1 bias
        pl.BlockSpec((num_layers, C4, C), fixed(3)),                  # fc2 weight (in,out)
        pl.BlockSpec((num_layers, 1, C), fixed(3)),                   # fc2 bias
        pl.BlockSpec((1, 1, C), fixed(3)),                            # encoder_norm1 gamma
        pl.BlockSpec((1, 1, C), fixed(3)),                            # encoder_norm1 beta
    ]
    out_specs = [
        pl.BlockSpec((1, R, C), lambda b: (b, 0, 0)),                        # encoder output rows
        pl.BlockSpec((1, num_layers * Bt, C, C), lambda b: (b, 0, 0, 0)),    # attn weights (vis)
    ]
    out_shape = [
        jax.ShapeDtypeStruct((nb, R, C), jnp.float32),
        jax.ShapeDtypeStruct((nb, num_layers * Bt, C, C), jnp.float32),
    ]
    # TODO(synk): for large num_layers / channel_num on v7x (64 MiB VMEM), stream weights
    # per layer via an extra "arbitrary" grid axis instead of keeping all layers resident.
    f = pl.pallas_call(
        kern,
        out_shape=out_shape,
        grid_spec=pltpu.PrefetchScalarGridSpec(
            num_scalar_prefetch=0,
            grid=(nb,),
            in_specs=in_specs,
            out_specs=out_specs,
            scratch_shapes=[pltpu.VMEM((R, C), jnp.float32)],         # ctx accumulator
        ),
        compiler_params=pltpu.CompilerParams(dimension_semantics=("parallel",)),
    )
    out_rows, attw_flat = f(emb_rows,
                            params["an_g"], params["an_b"],
                            wqkv, woT,
                            params["fn_g"], params["fn_b"],
                            w1T, params["b1"], w2T, params["b2"],
                            params["enc_g"], params["enc_b"])
    out = out_rows.reshape(B, N, C)
    attw = attw_flat.reshape(nb, num_layers, Bt, C, C)
    attw = jnp.transpose(attw, (1, 0, 2, 3, 4)).reshape(num_layers, B, C, C)
    return out, attw


# ---------------- pure-JAX reference (exact math, for sanity check) ----------------
def _layernorm_ref(x, g, b):
    mu = jnp.mean(x, axis=-1, keepdims=True)
    var = jnp.mean((x - mu) ** 2, axis=-1, keepdims=True)
    return (x - mu) / jnp.sqrt(var + LN_EPS) * g + b


def encoder_reference(emb, params, num_layers, num_heads):
    x = emb
    C = x.shape[-1]
    attw = []
    for l in range(num_layers):
        org1 = x
        xn = _layernorm_ref(x, params["an_g"][l, 0], params["an_b"][l, 0])
        Q = jnp.einsum('bnc,hoc->bhno', xn, params["wq"][l])
        K = jnp.einsum('bnc,hoc->bhno', xn, params["wk"][l])
        V = jnp.einsum('bnc,hoc->bhno', xn, params["wv"][l])
        S = jnp.einsum('bhnc,bhnd->bhcd', Q, K) / math.sqrt(C)
        mu = S.mean(axis=(-1, -2), keepdims=True)
        var = ((S - mu) ** 2).mean(axis=(-1, -2), keepdims=True)
        Sn = (S - mu) / jnp.sqrt(var + IN_EPS)
        P = jax.nn.softmax(Sn, axis=-1)
        attw.append(P.mean(axis=1))
        ctx = jnp.einsum('bhcd,bhnd->bhcn', P, V)
        ctx = ctx.transpose(0, 3, 2, 1).mean(axis=3)               # (B, N, C)
        O1 = jnp.einsum('bnc,oc->bno', ctx, params["wo"][l])
        cx1 = org1 + O1
        xn2 = _layernorm_ref(cx1, params["fn_g"][l, 0], params["fn_b"][l, 0])
        h1 = jnp.einsum('bnc,oc->bno', xn2, params["w1"][l]) + params["b1"][l, 0]
        h1 = jax.nn.gelu(h1, approximate=False)
        h2 = jnp.einsum('bno,co->bnc', h1, params["w2"][l]) + params["b2"][l, 0]
        x = h2 + cx1
    out = _layernorm_ref(x, params["enc_g"][0, 0], params["enc_b"][0, 0])
    return out, jnp.stack(attw, axis=0)


def init_params(key, num_layers, num_heads, C):
    C4 = 4 * C
    ks = jax.random.split(key, 8)
    f32 = jnp.float32
    return {
        "an_g": jnp.ones((num_layers, 1, C), f32),
        "an_b": jnp.zeros((num_layers, 1, C), f32),
        "wq": 0.05 * jax.random.normal(ks[0], (num_layers, num_heads, C, C), f32),
        "wk": 0.05 * jax.random.normal(ks[1], (num_layers, num_heads, C, C), f32),
        "wv": 0.05 * jax.random.normal(ks[2], (num_layers, num_heads, C, C), f32),
        "wo": 0.05 * jax.random.normal(ks[3], (num_layers, C, C), f32),
        "fn_g": jnp.ones((num_layers, 1, C), f32),
        "fn_b": jnp.zeros((num_layers, 1, C), f32),
        "w1": 0.05 * jax.random.normal(ks[4], (num_layers, C4, C), f32),
        "b1": 1e-6 * jax.random.normal(ks[5], (num_layers, 1, C4), f32),
        "w2": 0.05 * jax.random.normal(ks[6], (num_layers, C, C4), f32),
        "b2": 1e-6 * jax.random.normal(ks[7], (num_layers, 1, C), f32),
        "enc_g": jnp.ones((1, 1, C), f32),
        "enc_b": jnp.zeros((1, 1, C), f32),
    }


if __name__ == "__main__":
    B, N, C = 4, 8, 32          # batch, tokens, channel_num
    num_heads, num_layers = 4, 2
    key = jax.random.PRNGKey(0)
    k_emb, k_par = jax.random.split(key)
    emb1 = jax.random.normal(k_emb, (B, N, C), jnp.float32)
    params = init_params(k_par, num_layers, num_heads, C)

    out, attn_weights = encoder_pallas(emb1, params, num_layers, num_heads)
    jax.block_until_ready((out, attn_weights))

    ref_out, ref_attw = encoder_reference(emb1, params, num_layers, num_heads)
    np.testing.assert_allclose(np.asarray(out), np.asarray(ref_out), rtol=2e-3, atol=2e-3)
    np.testing.assert_allclose(np.asarray(attn_weights), np.asarray(ref_attw), rtol=2e-3, atol=2e-3)

    print("KERNEL_OK")
</pallas_src>

<mosaic_0001>
module attributes {stable_mosaic.version = 11 : i64} {
  func.func @_encoder_kernel(%arg0: i32, %arg1: memref<1x32x32xf32, #tpu.memory_space<vmem>>, %arg2: memref<2x1x32xf32, #tpu.memory_space<vmem>>, %arg3: memref<2x1x32xf32, #tpu.memory_space<vmem>>, %arg4: memref<2x32x384xf32, #tpu.memory_space<vmem>>, %arg5: memref<2x32x32xf32, #tpu.memory_space<vmem>>, %arg6: memref<2x1x32xf32, #tpu.memory_space<vmem>>, %arg7: memref<2x1x32xf32, #tpu.memory_space<vmem>>, %arg8: memref<2x32x128xf32, #tpu.memory_space<vmem>>, %arg9: memref<2x1x128xf32, #tpu.memory_space<vmem>>, %arg10: memref<2x128x32xf32, #tpu.memory_space<vmem>>, %arg11: memref<2x1x32xf32, #tpu.memory_space<vmem>>, %arg12: memref<1x1x32xf32, #tpu.memory_space<vmem>>, %arg13: memref<1x1x32xf32, #tpu.memory_space<vmem>>, %arg14: memref<1x32x32xf32, #tpu.memory_space<vmem>>, %arg15: memref<1x8x32x32xf32, #tpu.memory_space<vmem>>, %arg16: memref<32x32xf32, #tpu.memory_space<vmem>>) attributes {dimension_semantics = [#tpu.dimension_semantics<parallel>], iteration_bounds = array<i64: 1>, scalar_prefetch = 0 : i64, scratch_operands = 1 : i64, tpu.core_type = #tpu.core_type<tc>, window_params = [{transform_indices = @transform_0, window_bounds = array<i64: 1, 32, 32>}, {pipeline_mode = #tpu.pipeline_mode<synchronous>, transform_indices = @transform_1, window_bounds = array<i64: 2, 1, 32>}, {pipeline_mode = #tpu.pipeline_mode<synchronous>, transform_indices = @transform_2, window_bounds = array<i64: 2, 1, 32>}, {pipeline_mode = #tpu.pipeline_mode<synchronous>, transform_indices = @transform_3, window_bounds = array<i64: 2, 32, 384>}, {pipeline_mode = #tpu.pipeline_mode<synchronous>, transform_indices = @transform_4, window_bounds = array<i64: 2, 32, 32>}, {pipeline_mode = #tpu.pipeline_mode<synchronous>, transform_indices = @transform_5, window_bounds = array<i64: 2, 1, 32>}, {pipeline_mode = #tpu.pipeline_mode<synchronous>, transform_indices = @transform_6, window_bounds = array<i64: 2, 1, 32>}, {pipeline_mode = #tpu.pipeline_mode<synchronous>, transform_indices = @transform_7, window_bounds = array<i64: 2, 32, 128>}, {pipeline_mode = #tpu.pipeline_mode<synchronous>, transform_indices = @transform_8, window_bounds = array<i64: 2, 1, 128>}, {pipeline_mode = #tpu.pipeline_mode<synchronous>, transform_indices = @transform_9, window_bounds = array<i64: 2, 128, 32>}, {pipeline_mode = #tpu.pipeline_mode<synchronous>, transform_indices = @transform_10, window_bounds = array<i64: 2, 1, 32>}, {pipeline_mode = #tpu.pipeline_mode<synchronous>, transform_indices = @transform_11, window_bounds = array<i64: 1, 1, 32>}, {pipeline_mode = #tpu.pipeline_mode<synchronous>, transform_indices = @transform_12, window_bounds = array<i64: 1, 1, 32>}, {transform_indices = @transform_13, window_bounds = array<i64: 1, 32, 32>}, {transform_indices = @transform_14, window_bounds = array<i64: 1, 8, 32, 32>}]} {
    %c0 = arith.constant 0 : index
    %c0_0 = arith.constant 0 : index
    %c0_1 = arith.constant 0 : index
    %0 = vector.load %arg1[%c0, %c0_0, %c0_1] : memref<1x32x32xf32, #tpu.memory_space<vmem>>, vector<1x32x32xf32>
    %1 = vector.shape_cast %0 : vector<1x32x32xf32> to vector<32x32xf32>
    %c0_2 = arith.constant 0 : index
    %c0_3 = arith.constant 0 : index
    %c0_4 = arith.constant 0 : index
    %2 = vector.load %arg2[%c0_2, %c0_3, %c0_4] : memref<2x1x32xf32, #tpu.memory_space<vmem>>, vector<1x1x32xf32>
    %3 = vector.shape_cast %2 : vector<1x1x32xf32> to vector<1x32xf32>
    %c0_5 = arith.constant 0 : index
    %c0_6 = arith.constant 0 : index
    %c0_7 = arith.constant 0 : index
    %4 = vector.load %arg3[%c0_5, %c0_6, %c0_7] : memref<2x1x32xf32, #tpu.memory_space<vmem>>, vector<1x1x32xf32>
    %5 = vector.shape_cast %4 : vector<1x1x32xf32> to vector<1x32xf32>
    %cst = arith.constant dense<0.000000e+00> : vector<32xf32>
    %6 = vector.multi_reduction <add>, %1, %cst [1] : vector<32x32xf32> to vector<32xf32>
    %7 = vector.shape_cast %6 : vector<32xf32> to vector<32x1xf32>
    %cst_8 = arith.constant 3.200000e+01 : f32
    %8 = vector.broadcast %cst_8 : f32 to vector<32x1xf32>
    %9 = arith.divf %7, %8 : vector<32x1xf32>
    %10 = vector.broadcast %9 : vector<32x1xf32> to vector<32x32xf32>
    %11 = arith.subf %1, %10 : vector<32x32xf32>
    %12 = arith.mulf %11, %11 : vector<32x32xf32>
    %cst_9 = arith.constant dense<0.000000e+00> : vector<32xf32>
    %13 = vector.multi_reduction <add>, %12, %cst_9 [1] : vector<32x32xf32> to vector<32xf32>
    %14 = vector.shape_cast %13 : vector<32xf32> to vector<32x1xf32>
    %cst_10 = arith.constant 3.200000e+01 : f32
    %15 = vector.broadcast %cst_10 : f32 to vector<32x1xf32>
    %16 = arith.divf %14, %15 : vector<32x1xf32>
    %17 = vector.broadcast %9 : vector<32x1xf32> to vector<32x32xf32>
    %18 = arith.subf %1, %17 : vector<32x32xf32>
    %cst_11 = arith.constant 9.99999997E-7 : f32
    %19 = vector.broadcast %cst_11 : f32 to vector<32x1xf32>
    %20 = arith.addf %16, %19 : vector<32x1xf32>
    %21 = math.rsqrt %20 : vector<32x1xf32>
    %22 = vector.broadcast %21 : vector<32x1xf32> to vector<32x32xf32>
    %23 = arith.mulf %18, %22 : vector<32x32xf32>
    %24 = vector.broadcast %3 : vector<1x32xf32> to vector<32x32xf32>
    %25 = arith.mulf %23, %24 : vector<32x32xf32>
    %26 = vector.broadcast %5 : vector<1x32xf32> to vector<32x32xf32>
    %27 = arith.addf %25, %26 : vector<32x32xf32>
    %c0_12 = arith.constant 0 : index
    %c0_13 = arith.constant 0 : index
    %c0_14 = arith.constant 0 : index
    %28 = vector.load %arg4[%c0_12, %c0_13, %c0_14] : memref<2x32x384xf32, #tpu.memory_space<vmem>>, vector<1x32x384xf32>
    %29 = vector.shape_cast %28 : vector<1x32x384xf32> to vector<32x384xf32>
    %cst_15 = arith.constant dense<0.000000e+00> : vector<32x384xf32>
    %30 = tpu.matmul %27, %29, %cst_15 {dimension_numbers = #tpu.dot_dimension_numbers<[1], [0], [0], [1], [0, 0, 1, 1], [], []>} : vector<32x32xf32>, vector<32x384xf32>, vector<32x384xf32> -> vector<32x384xf32>
    %31 = vector.extract_strided_slice %30 {offsets = [0, 0], sizes = [8, 128], strides = [1, 1]} : vector<32x384xf32> to vector<8x128xf32>
    %32 = vector.extract_strided_slice %30 {offsets = [0, 128], sizes = [8, 128], strides = [1, 1]} : vector<32x384xf32> to vector<8x128xf32>
    %33 = vector.extract_strided_slice %30 {offsets = [0, 256], sizes = [8, 128], strides = [1, 1]} : vector<32x384xf32> to vector<8x128xf32>
    "tpu.trace_start"() <{level = 10 : i32, message = "nc,nd->cd"}> : () -> ()
    %cst_16 = arith.constant dense<0.000000e+00> : vector<128x128xf32>
    %34 = tpu.matmul %31, %32, %cst_16 {dimension_numbers = #tpu.dot_dimension_numbers<[0], [0], [1], [1], [0, 1, 1, 1], [], []>} : vector<8x128xf32>, vector<8x128xf32>, vector<128x128xf32> -> vector<128x128xf32>
    "tpu.trace_stop"() : () -> ()
    %35 = vector.extract_strided_slice %34 {offsets = [0, 0], sizes = [32, 32], strides = [1, 1]} : vector<128x128xf32> to vector<32x32xf32>
    %36 = vector.extract_strided_slice %34 {offsets = [32, 32], sizes = [32, 32], strides = [1, 1]} : vector<128x128xf32> to vector<32x32xf32>
    %37 = vector.extract_strided_slice %34 {offsets = [64, 64], sizes = [32, 32], strides = [1, 1]} : vector<128x128xf32> to vector<32x32xf32>
    %38 = vector.extract_strided_slice %34 {offsets = [96, 96], sizes = [32, 32], strides = [1, 1]} : vector<128x128xf32> to vector<32x32xf32>
    %39 = vector.shape_cast %35 : vector<32x32xf32> to vector<1x32x32xf32>
    %40 = vector.shape_cast %36 : vector<32x32xf32> to vector<1x32x32xf32>
    %41 = vector.shape_cast %37 : vector<32x32xf32> to vector<1x32x32xf32>
    %42 = vector.shape_cast %38 : vector<32x32xf32> to vector<1x32x32xf32>
    %43 = tpu.concatenate %39, %40, %41, %42 in 0 : vector<1x32x32xf32>, vector<1x32x32xf32>, vector<1x32x32xf32>, vector<1x32x32xf32> -> vector<4x32x32xf32>
    %cst_17 = arith.constant 0.176776692 : f32
    %44 = vector.broadcast %cst_17 : f32 to vector<4x32x32xf32>
    %45 = arith.mulf %43, %44 : vector<4x32x32xf32>
    %cst_18 = arith.constant dense<0.000000e+00> : vector<4x32xf32>
    %46 = vector.multi_reduction <add>, %45, %cst_18 [2] : vector<4x32x32xf32> to vector<4x32xf32>
    %47 = vector.shape_cast %46 : vector<4x32xf32> to vector<4x32x1xf32>
    %cst_19 = arith.constant 3.200000e+01 : f32
    %48 = vector.broadcast %cst_19 : f32 to vector<4x32x1xf32>
    %49 = arith.divf %47, %48 : vector<4x32x1xf32>
    %cst_20 = arith.constant dense<0.000000e+00> : vector<4x1xf32>
    %50 = vector.multi_reduction <add>, %49, %cst_20 [1] : vector<4x32x1xf32> to vector<4x1xf32>
    %51 = vector.shape_cast %50 : vector<4x1xf32> to vector<4x1x1xf32>
    %cst_21 = arith.constant 3.200000e+01 : f32
    %52 = vector.broadcast %cst_21 : f32 to vector<4x1x1xf32>
    %53 = arith.divf %51, %52 : vector<4x1x1xf32>
    %54 = vector.broadcast %53 : vector<4x1x1xf32> to vector<4x32x32xf32>
    %55 = arith.subf %45, %54 : vector<4x32x32xf32>
    %56 = arith.mulf %55, %55 : vector<4x32x32xf32>
    %cst_22 = arith.constant dense<0.000000e+00> : vector<4x32xf32>
    %57 = vector.multi_reduction <add>, %56, %cst_22 [2] : vector<4x32x32xf32> to vector<4x32xf32>
    %58 = vector.shape_cast %57 : vector<4x32xf32> to vector<4x32x1xf32>
    %cst_23 = arith.constant 3.200000e+01 : f32
    %59 = vector.broadcast %cst_23 : f32 to vector<4x32x1xf32>
    %60 = arith.divf %58, %59 : vector<4x32x1xf32>
    %cst_24 = arith.constant dense<0.000000e+00> : vector<4x1xf32>
    %61 = vector.multi_reduction <add>, %60, %cst_24 [1] : vector<4x32x1xf32> to vector<4x1xf32>
    %62 = vector.shape_cast %61 : vector<4x1xf32> to vector<4x1x1xf32>
    %cst_25 = arith.constant 3.200000e+01 : f32
    %63 = vector.broadcast %cst_25 : f32 to vector<4x1x1xf32>
    %64 = arith.divf %62, %63 : vector<4x1x1xf32>
    %cst_26 = arith.constant 9.99999974E-6 : f32
    %65 = vector.broadcast %cst_26 : f32 to vector<4x1x1xf32>
    %66 = arith.addf %64, %65 : vector<4x1x1xf32>
    %67 = math.rsqrt %66 : vector<4x1x1xf32>
    %68 = vector.broadcast %67 : vector<4x1x1xf32> to vector<4x32x32xf32>
    %69 = arith.mulf %55, %68 : vector<4x32x32xf32>
    %cst_27 = arith.constant dense<0xFF800000> : vector<4x32xf32>
    %70 = vector.multi_reduction <maximumf>, %69, %cst_27 [2] : vector<4x32x32xf32> to vector<4x32xf32>
    %71 = vector.shape_cast %70 : vector<4x32xf32> to vector<4x32x1xf32>
    %72 = vector.broadcast %71 : vector<4x32x1xf32> to vector<4x32x32xf32>
    %73 = arith.subf %69, %72 : vector<4x32x32xf32>
    %74 = math.exp %73 : vector<4x32x32xf32>
    %cst_28 = arith.constant dense<0.000000e+00> : vector<4x32xf32>
    %75 = vector.multi_reduction <add>, %74, %cst_28 [2] : vector<4x32x32xf32> to vector<4x32xf32>
    %76 = vector.shape_cast %75 : vector<4x32xf32> to vector<4x32x1xf32>
    %77 = tpu.reciprocal %76 {approx = true} : vector<4x32x1xf32> -> vector<4x32x1xf32>
    %78 = vector.broadcast %77 : vector<4x32x1xf32> to vector<4x32x32xf32>
    %79 = arith.mulf %74, %78 : vector<4x32x32xf32>
    %cst_29 = arith.constant dense<0.000000e+00> : vector<32x32xf32>
    %80 = vector.multi_reduction <add>, %79, %cst_29 [0] : vector<4x32x32xf32> to vector<32x32xf32>
    %cst_30 = arith.constant 4.000000e+00 : f32
    %81 = vector.broadcast %cst_30 : f32 to vector<32x32xf32>
    %82 = arith.divf %80, %81 : vector<32x32xf32>
    %c0_31 = arith.constant 0 : index
    %c0_32 = arith.constant 0 : index
    %c0_33 = arith.constant 0 : index
    %c0_34 = arith.constant 0 : index
    %83 = vector.load %arg15[%c0_31, %c0_32, %c0_33, %c0_34] : memref<1x8x32x32xf32, #tpu.memory_space<vmem>>, vector<1x1x32x32xf32>
    %84 = vector.shape_cast %83 : vector<1x1x32x32xf32> to vector<32x32xf32>
    %85 = vector.shape_cast %82 : vector<32x32xf32> to vector<1x1x32x32xf32>
    tpu.vector_store %arg15[%c0_31, %c0_32, %c0_33, %c0_34], %85 {strides = array<i32>} : memref<1x8x32x32xf32, #tpu.memory_space<vmem>>, vector<1x1x32x32xf32>,
    %86 = vector.extract_strided_slice %79 {offsets = [0, 0, 0], sizes = [1, 32, 32], strides = [1, 1, 1]} : vector<4x32x32xf32> to vector<1x32x32xf32>
    %87 = vector.shape_cast %86 : vector<1x32x32xf32> to vector<32x32xf32>
    %88 = tpu.transpose %87, [1, 0] : vector<32x32xf32> -> vector<32x32xf32>
    %89 = vector.extract_strided_slice %79 {offsets = [1, 0, 0], sizes = [1, 32, 32], strides = [1, 1, 1]} : vector<4x32x32xf32> to vector<1x32x32xf32>
    %90 = vector.shape_cast %89 : vector<1x32x32xf32> to vector<32x32xf32>
    %91 = tpu.transpose %90, [1, 0] : vector<32x32xf32> -> vector<32x32xf32>
    %92 = vector.extract_strided_slice %79 {offsets = [2, 0, 0], sizes = [1, 32, 32], strides = [1, 1, 1]} : vector<4x32x32xf32> to vector<1x32x32xf32>
    %93 = vector.shape_cast %92 : vector<1x32x32xf32> to vector<32x32xf32>
    %94 = tpu.transpose %93, [1, 0] : vector<32x32xf32> -> vector<32x32xf32>
    %95 = vector.extract_strided_slice %79 {offsets = [3, 0, 0], sizes = [1, 32, 32], strides = [1, 1, 1]} : vector<4x32x32xf32> to vector<1x32x32xf32>
    %96 = vector.shape_cast %95 : vector<1x32x32xf32> to vector<32x32xf32>
    %97 = tpu.transpose %96, [1, 0] : vector<32x32xf32> -> vector<32x32xf32>
    %98 = tpu.concatenate %88, %91, %94, %97 in 0 : vector<32x32xf32>, vector<32x32xf32>, vector<32x32xf32>, vector<32x32xf32> -> vector<128x32xf32>
    %cst_35 = arith.constant dense<0.000000e+00> : vector<8x32xf32>
    %99 = tpu.matmul %33, %98, %cst_35 {dimension_numbers = #tpu.dot_dimension_numbers<[1], [0], [0], [1], [0, 0, 1, 1], [], []>} : vector<8x128xf32>, vector<128x32xf32>, vector<8x32xf32> -> vector<8x32xf32>
    %cst_36 = arith.constant 2.500000e-01 : f32
    %100 = vector.broadcast %cst_36 : f32 to vector<8x32xf32>
    %101 = arith.mulf %99, %100 : vector<8x32xf32>
    %c0_37 = arith.constant 0 : index
    %c0_38 = arith.constant 0 : index
    %102 = vector.load %arg16[%c0_37, %c0_38] : memref<32x32xf32, #tpu.memory_space<vmem>>, vector<8x32xf32>
    tpu.vector_store %arg16[%c0_37, %c0_38], %101 {strides = array<i32>} : memref<32x32xf32, #tpu.memory_space<vmem>>, vector<8x32xf32>,
    %103 = vector.extract_strided_slice %30 {offsets = [8, 0], sizes = [8, 128], strides = [1, 1]} : vector<32x384xf32> to vector<8x128xf32>
    %104 = vector.extract_strided_slice %30 {offsets = [8, 128], sizes = [8, 128], strides = [1, 1]} : vector<32x384xf32> to vector<8x128xf32>
    %105 = vector.extract_strided_slice %30 {offsets = [8, 256], sizes = [8, 128], strides = [1, 1]} : vector<32x384xf32> to vector<8x128xf32>
    "tpu.trace_start"() <{level = 10 : i32, message = "nc,nd->cd"}> : () -> ()
    %cst_39 = arith.constant dense<0.000000e+00> : vector<128x128xf32>
    %106 = tpu.matmul %103, %104, %cst_39 {dimension_numbers = #tpu.dot_dimension_numbers<[0], [0], [1], [1], [0, 1, 1, 1], [], []>} : vector<8x128xf32>, vector<8x128xf32>, vector<128x128xf32> -> vector<128x128xf32>
    "tpu.trace_stop"() : () -> ()
    %107 = vector.extract_strided_slice %106 {offsets = [0, 0], sizes = [32, 32], strides = [1, 1]} : vector<128x128xf32> to vector<32x32xf32>
    %108 = vector.extract_strided_slice %106 {offsets = [32, 32], sizes = [32, 32], strides = [1, 1]} : vector<128x128xf32> to vector<32x32xf32>
    %109 = vector.extract_strided_slice %106 {offsets = [64, 64], sizes = [32, 32], strides = [1, 1]} : vector<128x128xf32> to vector<32x32xf32>
    %110 = vector.extract_strided_slice %106 {offsets = [96, 96], sizes = [32, 32], strides = [1, 1]} : vector<128x128xf32> to vector<32x32xf32>
    %111 = vector.shape_cast %107 : vector<32x32xf32> to vector<1x32x32xf32>
    %112 = vector.shape_cast %108 : vector<32x32xf32> to vector<1x32x32xf32>
    %113 = vector.shape_cast %109 : vector<32x32xf32> to vector<1x32x32xf32>
    %114 = vector.shape_cast %110 : vector<32x32xf32> to vector<1x32x32xf32>
    %115 = tpu.concatenate %111, %112, %113, %114 in 0 : vector<1x32x32xf32>, vector<1x32x32xf32>, vector<1x32x32xf32>, vector<1x32x32xf32> -> vector<4x32x32xf32>
    %cst_40 = arith.constant 0.176776692 : f32
    %116 = vector.broadcast %cst_40 : f32 to vector<4x32x32xf32>
    %117 = arith.mulf %115, %116 : vector<4x32x32xf32>
    %cst_41 = arith.constant dense<0.000000e+00> : vector<4x32xf32>
    %118 = vector.multi_reduction <add>, %117, %cst_41 [2] : vector<4x32x32xf32> to vector<4x32xf32>
    %119 = vector.shape_cast %118 : vector<4x32xf32> to vector<4x32x1xf32>
    %cst_42 = arith.constant 3.200000e+01 : f32
    %120 = vector.broadcast %cst_42 : f32 to vector<4x32x1xf32>
    %121 = arith.divf %119, %120 : vector<4x32x1xf32>
    %cst_43 = arith.constant dense<0.000000e+00> : vector<4x1xf32>
    %122 = vector.multi_reduction <add>, %121, %cst_43 [1] : vector<4x32x1xf32> to vector<4x1xf32>
    %123 = vector.shape_cast %122 : vector<4x1xf32> to vector<4x1x1xf32>
    %cst_44 = arith.constant 3.200000e+01 : f32
    %124 = vector.broadcast %cst_44 : f32 to vector<4x1x1xf32>
    %125 = arith.divf %123, %124 : vector<4x1x1xf32>
    %126 = vector.broadcast %125 : vector<4x1x1xf32> to vector<4x32x32xf32>
    %127 = arith.subf %117, %126 : vector<4x32x32xf32>
    %128 = arith.mulf %127, %127 : vector<4x32x32xf32>
    %cst_45 = arith.constant dense<0.000000e+00> : vector<4x32xf32>
    %129 = vector.multi_reduction <add>, %128, %cst_45 [2] : vector<4x32x32xf32> to vector<4x32xf32>
    %130 = vector.shape_cast %129 : vector<4x32xf32> to vector<4x32x1xf32>
    %cst_46 = arith.constant 3.200000e+01 : f32
    %131 = vector.broadcast %cst_46 : f32 to vector<4x32x1xf32>
    %132 = arith.divf %130, %131 : vector<4x32x1xf32>
    %cst_47 = arith.constant dense<0.000000e+00> : vector<4x1xf32>
    %133 = vector.multi_reduction <add>, %132, %cst_47 [1] : vector<4x32x1xf32> to vector<4x1xf32>
    %134 = vector.shape_cast %133 : vector<4x1xf32> to vector<4x1x1xf32>
    %cst_48 = arith.constant 3.200000e+01 : f32
    %135 = vector.broadcast %cst_48 : f32 to vector<4x1x1xf32>
    %136 = arith.divf %134, %135 : vector<4x1x1xf32>
    %cst_49 = arith.constant 9.99999974E-6 : f32
    %137 = vector.broadcast %cst_49 : f32 to vector<4x1x1xf32>
    %138 = arith.addf %136, %137 : vector<4x1x1xf32>
    %139 = math.rsqrt %138 : vector<4x1x1xf32>
    %140 = vector.broadcast %139 : vector<4x1x1xf32> to vector<4x32x32xf32>
    %141 = arith.mulf %127, %140 : vector<4x32x32xf32>
    %cst_50 = arith.constant dense<0xFF800000> : vector<4x32xf32>
    %142 = vector.multi_reduction <maximumf>, %141, %cst_50 [2] : vector<4x32x32xf32> to vector<4x32xf32>
    %143 = vector.shape_cast %142 : vector<4x32xf32> to vector<4x32x1xf32>
    %144 = vector.broadcast %143 : vector<4x32x1xf32> to vector<4x32x32xf32>
    %145 = arith.subf %141, %144 : vector<4x32x32xf32>
    %146 = math.exp %145 : vector<4x32x32xf32>
    %cst_51 = arith.constant dense<0.000000e+00> : vector<4x32xf32>
    %147 = vector.multi_reduction <add>, %146, %cst_51 [2] : vector<4x32x32xf32> to vector<4x32xf32>
    %148 = vector.shape_cast %147 : vector<4x32xf32> to vector<4x32x1xf32>
    %149 = tpu.reciprocal %148 {approx = true} : vector<4x32x1xf32> -> vector<4x32x1xf32>
    %150 = vector.broadcast %149 : vector<4x32x1xf32> to vector<4x32x32xf32>
    %151 = arith.mulf %146, %150 : vector<4x32x32xf32>
    %cst_52 = arith.constant dense<0.000000e+00> : vector<32x32xf32>
    %152 = vector.multi_reduction <add>, %151, %cst_52 [0] : vector<4x32x32xf32> to vector<32x32xf32>
    %cst_53 = arith.constant 4.000000e+00 : f32
    %153 = vector.broadcast %cst_53 : f32 to vector<32x32xf32>
    %154 = arith.divf %152, %153 : vector<32x32xf32>
    %c0_54 = arith.constant 0 : index
    %c1 = arith.constant 1 : index
    %c0_55 = arith.constant 0 : index
    %c0_56 = arith.constant 0 : index
    %155 = vector.load %arg15[%c0_54, %c1, %c0_55, %c0_56] : memref<1x8x32x32xf32, #tpu.memory_space<vmem>>, vector<1x1x32x32xf32>
    %156 = vector.shape_cast %155 : vector<1x1x32x32xf32> to vector<32x32xf32>
    %157 = vector.shape_cast %154 : vector<32x32xf32> to vector<1x1x32x32xf32>
    tpu.vector_store %arg15[%c0_54, %c1, %c0_55, %c0_56], %157 {strides = array<i32>} : memref<1x8x32x32xf32, #tpu.memory_space<vmem>>, vector<1x1x32x32xf32>,
    %158 = vector.extract_strided_slice %151 {offsets = [0, 0, 0], sizes = [1, 32, 32], strides = [1, 1, 1]} : vector<4x32x32xf32> to vector<1x32x32xf32>
    %159 = vector.shape_cast %158 : vector<1x32x32xf32> to vector<32x32xf32>
    %160 = tpu.transpose %159, [1, 0] : vector<32x32xf32> -> vector<32x32xf32>
    %161 = vector.extract_strided_slice %151 {offsets = [1, 0, 0], sizes = [1, 32, 32], strides = [1, 1, 1]} : vector<4x32x32xf32> to vector<1x32x32xf32>
    %162 = vector.shape_cast %161 : vector<1x32x32xf32> to vector<32x32xf32>
    %163 = tpu.transpose %162, [1, 0] : vector<32x32xf32> -> vector<32x32xf32>
    %164 = vector.extract_strided_slice %151 {offsets = [2, 0, 0], sizes = [1, 32, 32], strides = [1, 1, 1]} : vector<4x32x32xf32> to vector<1x32x32xf32>
    %165 = vector.shape_cast %164 : vector<1x32x32xf32> to vector<32x32xf32>
    %166 = tpu.transpose %165, [1, 0] : vector<32x32xf32> -> vector<32x32xf32>
    %167 = vector.extract_strided_slice %151 {offsets = [3, 0, 0], sizes = [1, 32, 32], strides = [1, 1, 1]} : vector<4x32x32xf32> to vector<1x32x32xf32>
    %168 = vector.shape_cast %167 : vector<1x32x32xf32> to vector<32x32xf32>
    %169 = tpu.transpose %168, [1, 0] : vector<32x32xf32> -> vector<32x32xf32>
    %170 = tpu.concatenate %160, %163, %166, %169 in 0 : vector<32x32xf32>, vector<32x32xf32>, vector<32x32xf32>, vector<32x32xf32> -> vector<128x32xf32>
    %cst_57 = arith.constant dense<0.000000e+00> : vector<8x32xf32>
    %171 = tpu.matmul %105, %170, %cst_57 {dimension_numbers = #tpu.dot_dimension_numbers<[1], [0], [0], [1], [0, 0, 1, 1], [], []>} : vector<8x128xf32>, vector<128x32xf32>, vector<8x32xf32> -> vector<8x32xf32>
    %cst_58 = arith.constant 2.500000e-01 : f32
    %172 = vector.broadcast %cst_58 : f32 to vector<8x32xf32>
    %173 = arith.mulf %171, %172 : vector<8x32xf32>
    %c8 = arith.constant 8 : index
    %c0_59 = arith.constant 0 : index
    %174 = vector.load %arg16[%c8, %c0_59] : memref<32x32xf32, #tpu.memory_space<vmem>>, vector<8x32xf32>
    tpu.vector_store %arg16[%c8, %c0_59], %173 {strides = array<i32>} : memref<32x32xf32, #tpu.memory_space<vmem>>, vector<8x32xf32>,
    %175 = vector.extract_strided_slice %30 {offsets = [16, 0], sizes = [8, 128], strides = [1, 1]} : vector<32x384xf32> to vector<8x128xf32>
    %176 = vector.extract_strided_slice %30 {offsets = [16, 128], sizes = [8, 128], strides = [1, 1]} : vector<32x384xf32> to vector<8x128xf32>
    %177 = vector.extract_strided_slice %30 {offsets = [16, 256], sizes = [8, 128], strides = [1, 1]} : vector<32x384xf32> to vector<8x128xf32>
    "tpu.trace_start"() <{level = 10 : i32, message = "nc,nd->cd"}> : () -> ()
    %cst_60 = arith.constant dense<0.000000e+00> : vector<128x128xf32>
    %178 = tpu.matmul %175, %176, %cst_60 {dimension_numbers = #tpu.dot_dimension_numbers<[0], [0], [1], [1], [0, 1, 1, 1], [], []>} : vector<8x128xf32>, vector<8x128xf32>, vector<128x128xf32> -> vector<128x128xf32>
    "tpu.trace_stop"() : () -> ()
    %179 = vector.extract_strided_slice %178 {offsets = [0, 0], sizes = [32, 32], strides = [1, 1]} : vector<128x128xf32> to vector<32x32xf32>
    %180 = vector.extract_strided_slice %178 {offsets = [32, 32], sizes = [32, 32], strides = [1, 1]} : vector<128x128xf32> to vector<32x32xf32>
    %181 = vector.extract_strided_slice %178 {offsets = [64, 64], sizes = [32, 32], strides = [1, 1]} : vector<128x128xf32> to vector<32x32xf32>
    %182 = vector.extract_strided_slice %178 {offsets = [96, 96], sizes = [32, 32], strides = [1, 1]} : vector<128x128xf32> to vector<32x32xf32>
    %183 = vector.shape_cast %179 : vector<32x32xf32> to vector<1x32x32xf32>
    %184 = vector.shape_cast %180 : vector<32x32xf32> to vector<1x32x32xf32>
    %185 = vector.shape_cast %181 : vector<32x32xf32> to vector<1x32x32xf32>
    %186 = vector.shape_cast %182 : vector<32x32xf32> to vector<1x32x32xf32>
    %187 = tpu.concatenate %183, %184, %185, %186 in 0 : vector<1x32x32xf32>, vector<1x32x32xf32>, vector<1x32x32xf32>, vector<1x32x32xf32> -> vector<4x32x32xf32>
    %cst_61 = arith.constant 0.176776692 : f32
    %188 = vector.broadcast %cst_61 : f32 to vector<4x32x32xf32>
    %189 = arith.mulf %187, %188 : vector<4x32x32xf32>
    %cst_62 = arith.constant dense<0.000000e+00> : vector<4x32xf32>
    %190 = vector.multi_reduction <add>, %189, %cst_62 [2] : vector<4x32x32xf32> to vector<4x32xf32>
    %191 = vector.shape_cast %190 : vector<4x32xf32> to vector<4x32x1xf32>
    %cst_63 = arith.constant 3.200000e+01 : f32
    %192 = vector.broadcast %cst_63 : f32 to vector<4x32x1xf32>
    %193 = arith.divf %191, %192 : vector<4x32x1xf32>
    %cst_64 = arith.constant dense<0.000000e+00> : vector<4x1xf32>
    %194 = vector.multi_reduction <add>, %193, %cst_64 [1] : vector<4x32x1xf32> to vector<4x1xf32>
    %195 = vector.shape_cast %194 : vector<4x1xf32> to vector<4x1x1xf32>
    %cst_65 = arith.constant 3.200000e+01 : f32
    %196 = vector.broadcast %cst_65 : f32 to vector<4x1x1xf32>
    %197 = arith.divf %195, %196 : vector<4x1x1xf32>
    %198 = vector.broadcast %197 : vector<4x1x1xf32> to vector<4x32x32xf32>
    %199 = arith.subf %189, %198 : vector<4x32x32xf32>
    %200 = arith.mulf %199, %199 : vector<4x32x32xf32>
    %cst_66 = arith.constant dense<0.000000e+00> : vector<4x32xf32>
    %201 = vector.multi_reduction <add>, %200, %cst_66 [2] : vector<4x32x32xf32> to vector<4x32xf32>
    %202 = vector.shape_cast %201 : vector<4x32xf32> to vector<4x32x1xf32>
    %cst_67 = arith.constant 3.200000e+01 : f32
    %203 = vector.broadcast %cst_67 : f32 to vector<4x32x1xf32>
    %204 = arith.divf %202, %203 : vector<4x32x1xf32>
    %cst_68 = arith.constant dense<0.000000e+00> : vector<4x1xf32>
    %205 = vector.multi_reduction <add>, %204, %cst_68 [1] : vector<4x32x1xf32> to vector<4x1xf32>
    %206 = vector.shape_cast %205 : vector<4x1xf32> to vector<4x1x1xf32>
    %cst_69 = arith.constant 3.200000e+01 : f32
    %207 = vector.broadcast %cst_69 : f32 to vector<4x1x1xf32>
    %208 = arith.divf %206, %207 : vector<4x1x1xf32>
    %cst_70 = arith.constant 9.99999974E-6 : f32
    %209 = vector.broadcast %cst_70 : f32 to vector<4x1x1xf32>
    %210 = arith.addf %208, %209 : vector<4x1x1xf32>
    %211 = math.rsqrt %210 : vector<4x1x1xf32>
    %212 = vector.broadcast %211 : vector<4x1x1xf32> to vector<4x32x32xf32>
    %213 = arith.mulf %199, %212 : vector<4x32x32xf32>
    %cst_71 = arith.constant dense<0xFF800000> : vector<4x32xf32>
    %214 = vector.multi_reduction <maximumf>, %213, %cst_71 [2] : vector<4x32x32xf32> to vector<4x32xf32>
    %215 = vector.shape_cast %214 : vector<4x32xf32> to vector<4x32x1xf32>
    %216 = vector.broadcast %215 : vector<4x32x1xf32> to vector<4x32x32xf32>
    %217 = arith.subf %213, %216 : vector<4x32x32xf32>
    %218 = math.exp %217 : vector<4x32x32xf32>
    %cst_72 = arith.constant dense<0.000000e+00> : vector<4x32xf32>
    %219 = vector.multi_reduction <add>, %218, %cst_72 [2] : vector<4x32x32xf32> to vector<4x32xf32>
    %220 = vector.shape_cast %219 : vector<4x32xf32> to vector<4x32x1xf32>
    %221 = tpu.reciprocal %220 {approx = true} : vector<4x32x1xf32> -> vector<4x32x1xf32>
    %222 = vector.broadcast %221 : vector<4x32x1xf32> to vector<4x32x32xf32>
    %223 = arith.mulf %218, %222 : vector<4x32x32xf32>
    %cst_73 = arith.constant dense<0.000000e+00> : vector<32x32xf32>
    %224 = vector.multi_reduction <add>, %223, %cst_73 [0] : vector<4x32x32xf32> to vector<32x32xf32>
    %cst_74 = arith.constant 4.000000e+00 : f32
    %225 = vector.broadcast %cst_74 : f32 to vector<32x32xf32>
    %226 = arith.divf %224, %225 : vector<32x32xf32>
    %c0_75 = arith.constant 0 : index
    %c2 = arith.constant 2 : index
    %c0_76 = arith.constant 0 : index
    %c0_77 = arith.constant 0 : index
    %227 = vector.load %arg15[%c0_75, %c2, %c0_76, %c0_77] : memref<1x8x32x32xf32, #tpu.memory_space<vmem>>, vector<1x1x32x32xf32>
    %228 = vector.shape_cast %227 : vector<1x1x32x32xf32> to vector<32x32xf32>
    %229 = vector.shape_cast %226 : vector<32x32xf32> to vector<1x1x32x32xf32>
    tpu.vector_store %arg15[%c0_75, %c2, %c0_76, %c0_77], %229 {strides = array<i32>} : memref<1x8x32x32xf32, #tpu.memory_space<vmem>>, vector<1x1x32x32xf32>,
    %230 = vector.extract_strided_slice %223 {offsets = [0, 0, 0], sizes = [1, 32, 32], strides = [1, 1, 1]} : vector<4x32x32xf32> to vector<1x32x32xf32>
    %231 = vector.shape_cast %230 : vector<1x32x32xf32> to vector<32x32xf32>
    %232 = tpu.transpose %231, [1, 0] : vector<32x32xf32> -> vector<32x32xf32>
    %233 = vector.extract_strided_slice %223 {offsets = [1, 0, 0], sizes = [1, 32, 32], strides = [1, 1, 1]} : vector<4x32x32xf32> to vector<1x32x32xf32>
    %234 = vector.shape_cast %233 : vector<1x32x32xf32> to vector<32x32xf32>
    %235 = tpu.transpose %234, [1, 0] : vector<32x32xf32> -> vector<32x32xf32>
    %236 = vector.extract_strided_slice %223 {offsets = [2, 0, 0], sizes = [1, 32, 32], strides = [1, 1, 1]} : vector<4x32x32xf32> to vector<1x32x32xf32>
    %237 = vector.shape_cast %236 : vector<1x32x32xf32> to vector<32x32xf32>
    %238 = tpu.transpose %237, [1, 0] : vector<32x32xf32> -> vector<32x32xf32>
    %239 = vector.extract_strided_slice %223 {offsets = [3, 0, 0], sizes = [1, 32, 32], strides = [1, 1, 1]} : vector<4x32x32xf32> to vector<1x32x32xf32>
    %240 = vector.shape_cast %239 : vector<1x32x32xf32> to vector<32x32xf32>
    %241 = tpu.transpose %240, [1, 0] : vector<32x32xf32> -> vector<32x32xf32>
    %242 = tpu.concatenate %232, %235, %238, %241 in 0 : vector<32x32xf32>, vector<32x32xf32>, vector<32x32xf32>, vector<32x32xf32> -> vector<128x32xf32>
    %cst_78 = arith.constant dense<0.000000e+00> : vector<8x32xf32>
    %243 = tpu.matmul %177, %242, %cst_78 {dimension_numbers = #tpu.dot_dimension_numbers<[1], [0], [0], [1], [0, 0, 1, 1], [], []>} : vector<8x128xf32>, vector<128x32xf32>, vector<8x32xf32> -> vector<8x32xf32>
    %cst_79 = arith.constant 2.500000e-01 : f32
    %244 = vector.broadcast %cst_79 : f32 to vector<8x32xf32>
    %245 = arith.mulf %243, %244 : vector<8x32xf32>
    %c16 = arith.constant 16 : index
    %c0_80 = arith.constant 0 : index
    %246 = vector.load %arg16[%c16, %c0_80] : memref<32x32xf32, #tpu.memory_space<vmem>>, vector<8x32xf32>
    tpu.vector_store %arg16[%c16, %c0_80], %245 {strides = array<i32>} : memref<32x32xf32, #tpu.memory_space<vmem>>, vector<8x32xf32>,
    %247 = vector.extract_strided_slice %30 {offsets = [24, 0], sizes = [8, 128], strides = [1, 1]} : vector<32x384xf32> to vector<8x128xf32>
    %248 = vector.extract_strided_slice %30 {offsets = [24, 128], sizes = [8, 128], strides = [1, 1]} : vector<32x384xf32> to vector<8x128xf32>
    %249 = vector.extract_strided_slice %30 {offsets = [24, 256], sizes = [8, 128], strides = [1, 1]} : vector<32x384xf32> to vector<8x128xf32>
    "tpu.trace_start"() <{level = 10 : i32, message = "nc,nd->cd"}> : () -> ()
    %cst_81 = arith.constant dense<0.000000e+00> : vector<128x128xf32>
    %250 = tpu.matmul %247, %248, %cst_81 {dimension_numbers = #tpu.dot_dimension_numbers<[0], [0], [1], [1], [0, 1, 1, 1], [], []>} : vector<8x128xf32>, vector<8x128xf32>, vector<128x128xf32> -> vector<128x128xf32>
    "tpu.trace_stop"() : () -> ()
    %251 = vector.extract_strided_slice %250 {offsets = [0, 0], sizes = [32, 32], strides = [1, 1]} : vector<128x128xf32> to vector<32x32xf32>
    %252 = vector.extract_strided_slice %250 {offsets = [32, 32], sizes = [32, 32], strides = [1, 1]} : vector<128x128xf32> to vector<32x32xf32>
    %253 = vector.extract_strided_slice %250 {offsets = [64, 64], sizes = [32, 32], strides = [1, 1]} : vector<128x128xf32> to vector<32x32xf32>
    %254 = vector.extract_strided_slice %250 {offsets = [96, 96], sizes = [32, 32], strides = [1, 1]} : vector<128x128xf32> to vector<32x32xf32>
    %255 = vector.shape_cast %251 : vector<32x32xf32> to vector<1x32x32xf32>
    %256 = vector.shape_cast %252 : vector<32x32xf32> to vector<1x32x32xf32>
    %257 = vector.shape_cast %253 : vector<32x32xf32> to vector<1x32x32xf32>
    %258 = vector.shape_cast %254 : vector<32x32xf32> to vector<1x32x32xf32>
    %259 = tpu.concatenate %255, %256, %257, %258 in 0 : vector<1x32x32xf32>, vector<1x32x32xf32>, vector<1x32x32xf32>, vector<1x32x32xf32> -> vector<4x32x32xf32>
    %cst_82 = arith.constant 0.176776692 : f32
    %260 = vector.broadcast %cst_82 : f32 to vector<4x32x32xf32>
    %261 = arith.mulf %259, %260 : vector<4x32x32xf32>
    %cst_83 = arith.constant dense<0.000000e+00> : vector<4x32xf32>
    %262 = vector.multi_reduction <add>, %261, %cst_83 [2] : vector<4x32x32xf32> to vector<4x32xf32>
    %263 = vector.shape_cast %262 : vector<4x32xf32> to vector<4x32x1xf32>
    %cst_84 = arith.constant 3.200000e+01 : f32
    %264 = vector.broadcast %cst_84 : f32 to vector<4x32x1xf32>
    %265 = arith.divf %263, %264 : vector<4x32x1xf32>
    %cst_85 = arith.constant dense<0.000000e+00> : vector<4x1xf32>
    %266 = vector.multi_reduction <add>, %265, %cst_85 [1] : vector<4x32x1xf32> to vector<4x1xf32>
    %267 = vector.shape_cast %266 : vector<4x1xf32> to vector<4x1x1xf32>
    %cst_86 = arith.constant 3.200000e+01 : f32
    %268 = vector.broadcast %cst_86 : f32 to vector<4x1x1xf32>
    %269 = arith.divf %267, %268 : vector<4x1x1xf32>
    %270 = vector.broadcast %269 : vector<4x1x1xf32> to vector<4x32x32xf32>
    %271 = arith.subf %261, %270 : vector<4x32x32xf32>
    %272 = arith.mulf %271, %271 : vector<4x32x32xf32>
    %cst_87 = arith.constant dense<0.000000e+00> : vector<4x32xf32>
    %273 = vector.multi_reduction <add>, %272, %cst_87 [2] : vector<4x32x32xf32> to vector<4x32xf32>
    %274 = vector.shape_cast %273 : vector<4x32xf32> to vector<4x32x1xf32>
    %cst_88 = arith.constant 3.200000e+01 : f32
    %275 = vector.broadcast %cst_88 : f32 to vector<4x32x1xf32>
    %276 = arith.divf %274, %275 : vector<4x32x1xf32>
    %cst_89 = arith.constant dense<0.000000e+00> : vector<4x1xf32>
    %277 = vector.multi_reduction <add>, %276, %cst_89 [1] : vector<4x32x1xf32> to vector<4x1xf32>
    %278 = vector.shape_cast %277 : vector<4x1xf32> to vector<4x1x1xf32>
    %cst_90 = arith.constant 3.200000e+01 : f32
    %279 = vector.broadcast %cst_90 : f32 to vector<4x1x1xf32>
    %280 = arith.divf %278, %279 : vector<4x1x1xf32>
    %cst_91 = arith.constant 9.99999974E-6 : f32
    %281 = vector.broadcast %cst_91 : f32 to vector<4x1x1xf32>
    %282 = arith.addf %280, %281 : vector<4x1x1xf32>
    %283 = math.rsqrt %282 : vector<4x1x1xf32>
    %284 = vector.broadcast %283 : vector<4x1x1xf32> to vector<4x32x32xf32>
    %285 = arith.mulf %271, %284 : vector<4x32x32xf32>
    %cst_92 = arith.constant dense<0xFF800000> : vector<4x32xf32>
    %286 = vector.multi_reduction <maximumf>, %285, %cst_92 [2] : vector<4x32x32xf32> to vector<4x32xf32>
    %287 = vector.shape_cast %286 : vector<4x32xf32> to vector<4x32x1xf32>
    %288 = vector.broadcast %287 : vector<4x32x1xf32> to vector<4x32x32xf32>
    %289 = arith.subf %285, %288 : vector<4x32x32xf32>
    %290 = math.exp %289 : vector<4x32x32xf32>
    %cst_93 = arith.constant dense<0.000000e+00> : vector<4x32xf32>
    %291 = vector.multi_reduction <add>, %290, %cst_93 [2] : vector<4x32x32xf32> to vector<4x32xf32>
    %292 = vector.shape_cast %291 : vector<4x32xf32> to vector<4x32x1xf32>
    %293 = tpu.reciprocal %292 {approx = true} : vector<4x32x1xf32> -> vector<4x32x1xf32>
    %294 = vector.broadcast %293 : vector<4x32x1xf32> to vector<4x32x32xf32>
    %295 = arith.mulf %290, %294 : vector<4x32x32xf32>
    %cst_94 = arith.constant dense<0.000000e+00> : vector<32x32xf32>
    %296 = vector.multi_reduction <add>, %295, %cst_94 [0] : vector<4x32x32xf32> to vector<32x32xf32>
    %cst_95 = arith.constant 4.000000e+00 : f32
    %297 = vector.broadcast %cst_95 : f32 to vector<32x32xf32>
    %298 = arith.divf %296, %297 : vector<32x32xf32>
    %c0_96 = arith.constant 0 : index
    %c3 = arith.constant 3 : index
    %c0_97 = arith.constant 0 : index
    %c0_98 = arith.constant 0 : index
    %299 = vector.load %arg15[%c0_96, %c3, %c0_97, %c0_98] : memref<1x8x32x32xf32, #tpu.memory_space<vmem>>, vector<1x1x32x32xf32>
    %300 = vector.shape_cast %299 : vector<1x1x32x32xf32> to vector<32x32xf32>
    %301 = vector.shape_cast %298 : vector<32x32xf32> to vector<1x1x32x32xf32>
    tpu.vector_store %arg15[%c0_96, %c3, %c0_97, %c0_98], %301 {strides = array<i32>} : memref<1x8x32x32xf32, #tpu.memory_space<vmem>>, vector<1x1x32x32xf32>,
    %302 = vector.extract_strided_slice %295 {offsets = [0, 0, 0], sizes = [1, 32, 32], strides = [1, 1, 1]} : vector<4x32x32xf32> to vector<1x32x32xf32>
    %303 = vector.shape_cast %302 : vector<1x32x32xf32> to vector<32x32xf32>
    %304 = tpu.transpose %303, [1, 0] : vector<32x32xf32> -> vector<32x32xf32>
    %305 = vector.extract_strided_slice %295 {offsets = [1, 0, 0], sizes = [1, 32, 32], strides = [1, 1, 1]} : vector<4x32x32xf32> to vector<1x32x32xf32>
    %306 = vector.shape_cast %305 : vector<1x32x32xf32> to vector<32x32xf32>
    %307 = tpu.transpose %306, [1, 0] : vector<32x32xf32> -> vector<32x32xf32>
    %308 = vector.extract_strided_slice %295 {offsets = [2, 0, 0], sizes = [1, 32, 32], strides = [1, 1, 1]} : vector<4x32x32xf32> to vector<1x32x32xf32>
    %309 = vector.shape_cast %308 : vector<1x32x32xf32> to vector<32x32xf32>
    %310 = tpu.transpose %309, [1, 0] : vector<32x32xf32> -> vector<32x32xf32>
    %311 = vector.extract_strided_slice %295 {offsets = [3, 0, 0], sizes = [1, 32, 32], strides = [1, 1, 1]} : vector<4x32x32xf32> to vector<1x32x32xf32>
    %312 = vector.shape_cast %311 : vector<1x32x32xf32> to vector<32x32xf32>
    %313 = tpu.transpose %312, [1, 0] : vector<32x32xf32> -> vector<32x32xf32>
    %314 = tpu.concatenate %304, %307, %310, %313 in 0 : vector<32x32xf32>, vector<32x32xf32>, vector<32x32xf32>, vector<32x32xf32> -> vector<128x32xf32>
    %cst_99 = arith.constant dense<0.000000e+00> : vector<8x32xf32>
    %315 = tpu.matmul %249, %314, %cst_99 {dimension_numbers = #tpu.dot_dimension_numbers<[1], [0], [0], [1], [0, 0, 1, 1], [], []>} : vector<8x128xf32>, vector<128x32xf32>, vector<8x32xf32> -> vector<8x32xf32>
    %cst_100 = arith.constant 2.500000e-01 : f32
    %316 = vector.broadcast %cst_100 : f32 to vector<8x32xf32>
    %317 = arith.mulf %315, %316 : vector<8x32xf32>
    %c24 = arith.constant 24 : index
    %c0_101 = arith.constant 0 : index
    %318 = vector.load %arg16[%c24, %c0_101] : memref<32x32xf32, #tpu.memory_space<vmem>>, vector<8x32xf32>
    tpu.vector_store %arg16[%c24, %c0_101], %317 {strides = array<i32>} : memref<32x32xf32, #tpu.memory_space<vmem>>, vector<8x32xf32>,
    %c0_102 = arith.constant 0 : index
    %c0_103 = arith.constant 0 : index
    %319 = vector.load %arg16[%c0_102, %c0_103] : memref<32x32xf32, #tpu.memory_space<vmem>>, vector<32x32xf32>
    %c0_104 = arith.constant 0 : index
    %c0_105 = arith.constant 0 : index
    %c0_106 = arith.constant 0 : index
    %320 = vector.load %arg5[%c0_104, %c0_105, %c0_106] : memref<2x32x32xf32, #tpu.memory_space<vmem>>, vector<1x32x32xf32>
    %321 = vector.shape_cast %320 : vector<1x32x32xf32> to vector<32x32xf32>
    %cst_107 = arith.constant dense<0.000000e+00> : vector<32x32xf32>
    %322 = tpu.matmul %319, %321, %cst_107 {dimension_numbers = #tpu.dot_dimension_numbers<[1], [0], [0], [1], [0, 0, 1, 1], [], []>} : vector<32x32xf32>, vector<32x32xf32>, vector<32x32xf32> -> vector<32x32xf32>
    %323 = arith.addf %1, %322 : vector<32x32xf32>
    %c0_108 = arith.constant 0 : index
    %c0_109 = arith.constant 0 : index
    %c0_110 = arith.constant 0 : index
    %324 = vector.load %arg6[%c0_108, %c0_109, %c0_110] : memref<2x1x32xf32, #tpu.memory_space<vmem>>, vector<1x1x32xf32>
    %325 = vector.shape_cast %324 : vector<1x1x32xf32> to vector<1x32xf32>
    %c0_111 = arith.constant 0 : index
    %c0_112 = arith.constant 0 : index
    %c0_113 = arith.constant 0 : index
    %326 = vector.load %arg7[%c0_111, %c0_112, %c0_113] : memref<2x1x32xf32, #tpu.memory_space<vmem>>, vector<1x1x32xf32>
    %327 = vector.shape_cast %326 : vector<1x1x32xf32> to vector<1x32xf32>
    %cst_114 = arith.constant dense<0.000000e+00> : vector<32xf32>
    %328 = vector.multi_reduction <add>, %323, %cst_114 [1] : vector<32x32xf32> to vector<32xf32>
    %329 = vector.shape_cast %328 : vector<32xf32> to vector<32x1xf32>
    %cst_115 = arith.constant 3.200000e+01 : f32
    %330 = vector.broadcast %cst_115 : f32 to vector<32x1xf32>
    %331 = arith.divf %329, %330 : vector<32x1xf32>
    %332 = vector.broadcast %331 : vector<32x1xf32> to vector<32x32xf32>
    %333 = arith.subf %323, %332 : vector<32x32xf32>
    %334 = arith.mulf %333, %333 : vector<32x32xf32>
    %cst_116 = arith.constant dense<0.000000e+00> : vector<32xf32>
    %335 = vector.multi_reduction <add>, %334, %cst_116 [1] : vector<32x32xf32> to vector<32xf32>
    %336 = vector.shape_cast %335 : vector<32xf32> to vector<32x1xf32>
    %cst_117 = arith.constant 3.200000e+01 : f32
    %337 = vector.broadcast %cst_117 : f32 to vector<32x1xf32>
    %338 = arith.divf %336, %337 : vector<32x1xf32>
    %339 = vector.broadcast %331 : vector<32x1xf32> to vector<32x32xf32>
    %340 = arith.subf %323, %339 : vector<32x32xf32>
    %cst_118 = arith.constant 9.99999997E-7 : f32
    %341 = vector.broadcast %cst_118 : f32 to vector<32x1xf32>
    %342 = arith.addf %338, %341 : vector<32x1xf32>
    %343 = math.rsqrt %342 : vector<32x1xf32>
    %344 = vector.broadcast %343 : vector<32x1xf32> to vector<32x32xf32>
    %345 = arith.mulf %340, %344 : vector<32x32xf32>
    %346 = vector.broadcast %325 : vector<1x32xf32> to vector<32x32xf32>
    %347 = arith.mulf %345, %346 : vector<32x32xf32>
    %348 = vector.broadcast %327 : vector<1x32xf32> to vector<32x32xf32>
    %349 = arith.addf %347, %348 : vector<32x32xf32>
    %c0_119 = arith.constant 0 : index
    %c0_120 = arith.constant 0 : index
    %c0_121 = arith.constant 0 : index
    %350 = vector.load %arg8[%c0_119, %c0_120, %c0_121] : memref<2x32x128xf32, #tpu.memory_space<vmem>>, vector<1x32x128xf32>
    %351 = vector.shape_cast %350 : vector<1x32x128xf32> to vector<32x128xf32>
    %cst_122 = arith.constant dense<0.000000e+00> : vector<32x128xf32>
    %352 = tpu.matmul %349, %351, %cst_122 {dimension_numbers = #tpu.dot_dimension_numbers<[1], [0], [0], [1], [0, 0, 1, 1], [], []>} : vector<32x32xf32>, vector<32x128xf32>, vector<32x128xf32> -> vector<32x128xf32>
    %c0_123 = arith.constant 0 : index
    %c0_124 = arith.constant 0 : index
    %c0_125 = arith.constant 0 : index
    %353 = vector.load %arg9[%c0_123, %c0_124, %c0_125] : memref<2x1x128xf32, #tpu.memory_space<vmem>>, vector<1x1x128xf32>
    %354 = vector.shape_cast %353 : vector<1x1x128xf32> to vector<1x128xf32>
    %355 = vector.broadcast %354 : vector<1x128xf32> to vector<32x128xf32>
    %356 = arith.addf %352, %355 : vector<32x128xf32>
    %cst_126 = arith.constant 5.000000e-01 : f32
    %357 = vector.broadcast %cst_126 : f32 to vector<32x128xf32>
    %358 = arith.mulf %357, %356 : vector<32x128xf32>
    %cst_127 = arith.constant 0.707106769 : f32
    %359 = vector.broadcast %cst_127 : f32 to vector<32x128xf32>
    %360 = arith.mulf %356, %359 : vector<32x128xf32>
    %cst_128 = arith.constant 0.000000e+00 : f32
    %361 = vector.broadcast %cst_128 : f32 to vector<32x128xf32>
    %362 = arith.cmpf olt, %360, %361 : vector<32x128xf32>
    %cst_129 = arith.constant -1.000000e+00 : f32
    %cst_130 = arith.constant 1.000000e+00 : f32
    %363 = vector.broadcast %cst_129 : f32 to vector<32x128xf32>
    %364 = vector.broadcast %cst_130 : f32 to vector<32x128xf32>
    %365 = arith.select %362, %363, %364 : vector<32x128xi1>, vector<32x128xf32>
    %366 = math.absf %360 : vector<32x128xf32>
    %cst_131 = arith.constant 0.327591091 : f32
    %367 = vector.broadcast %cst_131 : f32 to vector<32x128xf32>
    %368 = arith.mulf %367, %366 : vector<32x128xf32>
    %cst_132 = arith.constant 1.000000e+00 : f32
    %369 = vector.broadcast %cst_132 : f32 to vector<32x128xf32>
    %370 = arith.addf %369, %368 : vector<32x128xf32>
    %371 = tpu.reciprocal %370 {approx = true} : vector<32x128xf32> -> vector<32x128xf32>
    %cst_133 = arith.constant 1.06140542 : f32
    %372 = vector.broadcast %cst_133 : f32 to vector<32x128xf32>
    %373 = arith.mulf %372, %371 : vector<32x128xf32>
    %cst_134 = arith.constant -1.45315206 : f32
    %374 = vector.broadcast %cst_134 : f32 to vector<32x128xf32>
    %375 = arith.addf %373, %374 : vector<32x128xf32>
    %376 = arith.mulf %375, %371 : vector<32x128xf32>
    %cst_135 = arith.constant 1.42141378 : f32
    %377 = vector.broadcast %cst_135 : f32 to vector<32x128xf32>
    %378 = arith.addf %376, %377 : vector<32x128xf32>
    %379 = arith.mulf %378, %371 : vector<32x128xf32>
    %cst_136 = arith.constant -0.284496725 : f32
    %380 = vector.broadcast %cst_136 : f32 to vector<32x128xf32>
    %381 = arith.addf %379, %380 : vector<32x128xf32>
    %382 = arith.mulf %381, %371 : vector<32x128xf32>
    %cst_137 = arith.constant 0.254829586 : f32
    %383 = vector.broadcast %cst_137 : f32 to vector<32x128xf32>
    %384 = arith.addf %382, %383 : vector<32x128xf32>
    %385 = arith.mulf %384, %371 : vector<32x128xf32>
    %cst_138 = arith.constant 0.000000e+00 : f32
    %386 = vector.broadcast %cst_138 : f32 to vector<32x128xf32>
    %387 = arith.subf %386, %366 : vector<32x128xf32>
    %388 = arith.mulf %387, %366 : vector<32x128xf32>
    %389 = math.exp %388 : vector<32x128xf32>
    %390 = arith.mulf %385, %389 : vector<32x128xf32>
    %cst_139 = arith.constant 1.000000e+00 : f32
    %391 = vector.broadcast %cst_139 : f32 to vector<32x128xf32>
    %392 = arith.subf %391, %390 : vector<32x128xf32>
    %393 = arith.mulf %365, %392 : vector<32x128xf32>
    %cst_140 = arith.constant 1.000000e+00 : f32
    %394 = vector.broadcast %cst_140 : f32 to vector<32x128xf32>
    %395 = arith.addf %394, %393 : vector<32x128xf32>
    %396 = arith.mulf %358, %395 : vector<32x128xf32>
    %c0_141 = arith.constant 0 : index
    %c0_142 = arith.constant 0 : index
    %c0_143 = arith.constant 0 : index
    %397 = vector.load %arg10[%c0_141, %c0_142, %c0_143] : memref<2x128x32xf32, #tpu.memory_space<vmem>>, vector<1x128x32xf32>
    %398 = vector.shape_cast %397 : vector<1x128x32xf32> to vector<128x32xf32>
    %cst_144 = arith.constant dense<0.000000e+00> : vector<32x32xf32>
    %399 = tpu.matmul %396, %398, %cst_144 {dimension_numbers = #tpu.dot_dimension_numbers<[1], [0], [0], [1], [0, 0, 1, 1], [], []>} : vector<32x128xf32>, vector<128x32xf32>, vector<32x32xf32> -> vector<32x32xf32>
    %c0_145 = arith.constant 0 : index
    %c0_146 = arith.constant 0 : index
    %c0_147 = arith.constant 0 : index
    %400 = vector.load %arg11[%c0_145, %c0_146, %c0_147] : memref<2x1x32xf32, #tpu.memory_space<vmem>>, vector<1x1x32xf32>
    %401 = vector.shape_cast %400 : vector<1x1x32xf32> to vector<1x32xf32>
    %402 = vector.broadcast %401 : vector<1x32xf32> to vector<32x32xf32>
    %403 = arith.addf %399, %402 : vector<32x32xf32>
    %404 = arith.addf %403, %323 : vector<32x32xf32>
    %c1_148 = arith.constant 1 : index
    %c0_149 = arith.constant 0 : index
    %c0_150 = arith.constant 0 : index
    %405 = vector.load %arg2[%c1_148, %c0_149, %c0_150] : memref<2x1x32xf32, #tpu.memory_space<vmem>>, vector<1x1x32xf32>
    %406 = vector.shape_cast %405 : vector<1x1x32xf32> to vector<1x32xf32>
    %c1_151 = arith.constant 1 : index
    %c0_152 = arith.constant 0 : index
    %c0_153 = arith.constant 0 : index
    %407 = vector.load %arg3[%c1_151, %c0_152, %c0_153] : memref<2x1x32xf32, #tpu.memory_space<vmem>>, vector<1x1x32xf32>
    %408 = vector.shape_cast %407 : vector<1x1x32xf32> to vector<1x32xf32>
    %cst_154 = arith.constant dense<0.000000e+00> : vector<32xf32>
    %409 = vector.multi_reduction <add>, %404, %cst_154 [1] : vector<32x32xf32> to vector<32xf32>
    %410 = vector.shape_cast %409 : vector<32xf32> to vector<32x1xf32>
    %cst_155 = arith.constant 3.200000e+01 : f32
    %411 = vector.broadcast %cst_155 : f32 to vector<32x1xf32>
    %412 = arith.divf %410, %411 : vector<32x1xf32>
    %413 = vector.broadcast %412 : vector<32x1xf32> to vector<32x32xf32>
    %414 = arith.subf %404, %413 : vector<32x32xf32>
    %415 = arith.mulf %414, %414 : vector<32x32xf32>
    %cst_156 = arith.constant dense<0.000000e+00> : vector<32xf32>
    %416 = vector.multi_reduction <add>, %415, %cst_156 [1] : vector<32x32xf32> to vector<32xf32>
    %417 = vector.shape_cast %416 : vector<32xf32> to vector<32x1xf32>
    %cst_157 = arith.constant 3.200000e+01 : f32
    %418 = vector.broadcast %cst_157 : f32 to vector<32x1xf32>
    %419 = arith.divf %417, %418 : vector<32x1xf32>
    %420 = vector.broadcast %412 : vector<32x1xf32> to vector<32x32xf32>
    %421 = arith.subf %404, %420 : vector<32x32xf32>
    %cst_158 = arith.constant 9.99999997E-7 : f32
    %422 = vector.broadcast %cst_158 : f32 to vector<32x1xf32>
    %423 = arith.addf %419, %422 : vector<32x1xf32>
    %424 = math.rsqrt %423 : vector<32x1xf32>
    %425 = vector.broadcast %424 : vector<32x1xf32> to vector<32x32xf32>
    %426 = arith.mulf %421, %425 : vector<32x32xf32>
    %427 = vector.broadcast %406 : vector<1x32xf32> to vector<32x32xf32>
    %428 = arith.mulf %426, %427 : vector<32x32xf32>
    %429 = vector.broadcast %408 : vector<1x32xf32> to vector<32x32xf32>
    %430 = arith.addf %428, %429 : vector<32x32xf32>
    %c1_159 = arith.constant 1 : index
    %c0_160 = arith.constant 0 : index
    %c0_161 = arith.constant 0 : index
    %431 = vector.load %arg4[%c1_159, %c0_160, %c0_161] : memref<2x32x384xf32, #tpu.memory_space<vmem>>, vector<1x32x384xf32>
    %432 = vector.shape_cast %431 : vector<1x32x384xf32> to vector<32x384xf32>
    %cst_162 = arith.constant dense<0.000000e+00> : vector<32x384xf32>
    %433 = tpu.matmul %430, %432, %cst_162 {dimension_numbers = #tpu.dot_dimension_numbers<[1], [0], [0], [1], [0, 0, 1, 1], [], []>} : vector<32x32xf32>, vector<32x384xf32>, vector<32x384xf32> -> vector<32x384xf32>
    %434 = vector.extract_strided_slice %433 {offsets = [0, 0], sizes = [8, 128], strides = [1, 1]} : vector<32x384xf32> to vector<8x128xf32>
    %435 = vector.extract_strided_slice %433 {offsets = [0, 128], sizes = [8, 128], strides = [1, 1]} : vector<32x384xf32> to vector<8x128xf32>
    %436 = vector.extract_strided_slice %433 {offsets = [0, 256], sizes = [8, 128], strides = [1, 1]} : vector<32x384xf32> to vector<8x128xf32>
    "tpu.trace_start"() <{level = 10 : i32, message = "nc,nd->cd"}> : () -> ()
    %cst_163 = arith.constant dense<0.000000e+00> : vector<128x128xf32>
    %437 = tpu.matmul %434, %435, %cst_163 {dimension_numbers = #tpu.dot_dimension_numbers<[0], [0], [1], [1], [0, 1, 1, 1], [], []>} : vector<8x128xf32>, vector<8x128xf32>, vector<128x128xf32> -> vector<128x128xf32>
    "tpu.trace_stop"() : () -> ()
    %438 = vector.extract_strided_slice %437 {offsets = [0, 0], sizes = [32, 32], strides = [1, 1]} : vector<128x128xf32> to vector<32x32xf32>
    %439 = vector.extract_strided_slice %437 {offsets = [32, 32], sizes = [32, 32], strides = [1, 1]} : vector<128x128xf32> to vector<32x32xf32>
    %440 = vector.extract_strided_slice %437 {offsets = [64, 64], sizes = [32, 32], strides = [1, 1]} : vector<128x128xf32> to vector<32x32xf32>
    %441 = vector.extract_strided_slice %437 {offsets = [96, 96], sizes = [32, 32], strides = [1, 1]} : vector<128x128xf32> to vector<32x32xf32>
    %442 = vector.shape_cast %438 : vector<32x32xf32> to vector<1x32x32xf32>
    %443 = vector.shape_cast %439 : vector<32x32xf32> to vector<1x32x32xf32>
    %444 = vector.shape_cast %440 : vector<32x32xf32> to vector<1x32x32xf32>
    %445 = vector.shape_cast %441 : vector<32x32xf32> to vector<1x32x32xf32>
    %446 = tpu.concatenate %442, %443, %444, %445 in 0 : vector<1x32x32xf32>, vector<1x32x32xf32>, vector<1x32x32xf32>, vector<1x32x32xf32> -> vector<4x32x32xf32>
    %cst_164 = arith.constant 0.176776692 : f32
    %447 = vector.broadcast %cst_164 : f32 to vector<4x32x32xf32>
    %448 = arith.mulf %446, %447 : vector<4x32x32xf32>
    %cst_165 = arith.constant dense<0.000000e+00> : vector<4x32xf32>
    %449 = vector.multi_reduction <add>, %448, %cst_165 [2] : vector<4x32x32xf32> to vector<4x32xf32>
    %450 = vector.shape_cast %449 : vector<4x32xf32> to vector<4x32x1xf32>
    %cst_166 = arith.constant 3.200000e+01 : f32
    %451 = vector.broadcast %cst_166 : f32 to vector<4x32x1xf32>
    %452 = arith.divf %450, %451 : vector<4x32x1xf32>
    %cst_167 = arith.constant dense<0.000000e+00> : vector<4x1xf32>
    %453 = vector.multi_reduction <add>, %452, %cst_167 [1] : vector<4x32x1xf32> to vector<4x1xf32>
    %454 = vector.shape_cast %453 : vector<4x1xf32> to vector<4x1x1xf32>
    %cst_168 = arith.constant 3.200000e+01 : f32
    %455 = vector.broadcast %cst_168 : f32 to vector<4x1x1xf32>
    %456 = arith.divf %454, %455 : vector<4x1x1xf32>
    %457 = vector.broadcast %456 : vector<4x1x1xf32> to vector<4x32x32xf32>
    %458 = arith.subf %448, %457 : vector<4x32x32xf32>
    %459 = arith.mulf %458, %458 : vector<4x32x32xf32>
    %cst_169 = arith.constant dense<0.000000e+00> : vector<4x32xf32>
    %460 = vector.multi_reduction <add>, %459, %cst_169 [2] : vector<4x32x32xf32> to vector<4x32xf32>
    %461 = vector.shape_cast %460 : vector<4x32xf32> to vector<4x32x1xf32>
    %cst_170 = arith.constant 3.200000e+01 : f32
    %462 = vector.broadcast %cst_170 : f32 to vector<4x32x1xf32>
    %463 = arith.divf %461, %462 : vector<4x32x1xf32>
    %cst_171 = arith.constant dense<0.000000e+00> : vector<4x1xf32>
    %464 = vector.multi_reduction <add>, %463, %cst_171 [1] : vector<4x32x1xf32> to vector<4x1xf32>
    %465 = vector.shape_cast %464 : vector<4x1xf32> to vector<4x1x1xf32>
    %cst_172 = arith.constant 3.200000e+01 : f32
    %466 = vector.broadcast %cst_172 : f32 to vector<4x1x1xf32>
    %467 = arith.divf %465, %466 : vector<4x1x1xf32>
    %cst_173 = arith.constant 9.99999974E-6 : f32
    %468 = vector.broadcast %cst_173 : f32 to vector<4x1x1xf32>
    %469 = arith.addf %467, %468 : vector<4x1x1xf32>
    %470 = math.rsqrt %469 : vector<4x1x1xf32>
    %471 = vector.broadcast %470 : vector<4x1x1xf32> to vector<4x32x32xf32>
    %472 = arith.mulf %458, %471 : vector<4x32x32xf32>
    %cst_174 = arith.constant dense<0xFF800000> : vector<4x32xf32>
    %473 = vector.multi_reduction <maximumf>, %472, %cst_174 [2] : vector<4x32x32xf32> to vector<4x32xf32>
    %474 = vector.shape_cast %473 : vector<4x32xf32> to vector<4x32x1xf32>
    %475 = vector.broadcast %474 : vector<4x32x1xf32> to vector<4x32x32xf32>
    %476 = arith.subf %472, %475 : vector<4x32x32xf32>
    %477 = math.exp %476 : vector<4x32x32xf32>
    %cst_175 = arith.constant dense<0.000000e+00> : vector<4x32xf32>
    %478 = vector.multi_reduction <add>, %477, %cst_175 [2] : vector<4x32x32xf32> to vector<4x32xf32>
    %479 = vector.shape_cast %478 : vector<4x32xf32> to vector<4x32x1xf32>
    %480 = tpu.reciprocal %479 {approx = true} : vector<4x32x1xf32> -> vector<4x32x1xf32>
    %481 = vector.broadcast %480 : vector<4x32x1xf32> to vector<4x32x32xf32>
    %482 = arith.mulf %477, %481 : vector<4x32x32xf32>
    %cst_176 = arith.constant dense<0.000000e+00> : vector<32x32xf32>
    %483 = vector.multi_reduction <add>, %482, %cst_176 [0] : vector<4x32x32xf32> to vector<32x32xf32>
    %cst_177 = arith.constant 4.000000e+00 : f32
    %484 = vector.broadcast %cst_177 : f32 to vector<32x32xf32>
    %485 = arith.divf %483, %484 : vector<32x32xf32>
    %c0_178 = arith.constant 0 : index
    %c4 = arith.constant 4 : index
    %c0_179 = arith.constant 0 : index
    %c0_180 = arith.constant 0 : index
    %486 = vector.load %arg15[%c0_178, %c4, %c0_179, %c0_180] : memref<1x8x32x32xf32, #tpu.memory_space<vmem>>, vector<1x1x32x32xf32>
    %487 = vector.shape_cast %486 : vector<1x1x32x32xf32> to vector<32x32xf32>
    %488 = vector.shape_cast %485 : vector<32x32xf32> to vector<1x1x32x32xf32>
    tpu.vector_store %arg15[%c0_178, %c4, %c0_179, %c0_180], %488 {strides = array<i32>} : memref<1x8x32x32xf32, #tpu.memory_space<vmem>>, vector<1x1x32x32xf32>,
    %489 = vector.extract_strided_slice %482 {offsets = [0, 0, 0], sizes = [1, 32, 32], strides = [1, 1, 1]} : vector<4x32x32xf32> to vector<1x32x32xf32>
    %490 = vector.shape_cast %489 : vector<1x32x32xf32> to vector<32x32xf32>
    %491 = tpu.transpose %490, [1, 0] : vector<32x32xf32> -> vector<32x32xf32>
    %492 = vector.extract_strided_slice %482 {offsets = [1, 0, 0], sizes = [1, 32, 32], strides = [1, 1, 1]} : vector<4x32x32xf32> to vector<1x32x32xf32>
    %493 = vector.shape_cast %492 : vector<1x32x32xf32> to vector<32x32xf32>
    %494 = tpu.transpose %493, [1, 0] : vector<32x32xf32> -> vector<32x32xf32>
    %495 = vector.extract_strided_slice %482 {offsets = [2, 0, 0], sizes = [1, 32, 32], strides = [1, 1, 1]} : vector<4x32x32xf32> to vector<1x32x32xf32>
    %496 = vector.shape_cast %495 : vector<1x32x32xf32> to vector<32x32xf32>
    %497 = tpu.transpose %496, [1, 0] : vector<32x32xf32> -> vector<32x32xf32>
    %498 = vector.extract_strided_slice %482 {offsets = [3, 0, 0], sizes = [1, 32, 32], strides = [1, 1, 1]} : vector<4x32x32xf32> to vector<1x32x32xf32>
    %499 = vector.shape_cast %498 : vector<1x32x32xf32> to vector<32x32xf32>
    %500 = tpu.transpose %499, [1, 0] : vector<32x32xf32> -> vector<32x32xf32>
    %501 = tpu.concatenate %491, %494, %497, %500 in 0 : vector<32x32xf32>, vector<32x32xf32>, vector<32x32xf32>, vector<32x32xf32> -> vector<128x32xf32>
    %cst_181 = arith.constant dense<0.000000e+00> : vector<8x32xf32>
    %502 = tpu.matmul %436, %501, %cst_181 {dimension_numbers = #tpu.dot_dimension_numbers<[1], [0], [0], [1], [0, 0, 1, 1], [], []>} : vector<8x128xf32>, vector<128x32xf32>, vector<8x32xf32> -> vector<8x32xf32>
    %cst_182 = arith.constant 2.500000e-01 : f32
    %503 = vector.broadcast %cst_182 : f32 to vector<8x32xf32>
    %504 = arith.mulf %502, %503 : vector<8x32xf32>
    %c0_183 = arith.constant 0 : index
    %c0_184 = arith.constant 0 : index
    %505 = vector.load %arg16[%c0_183, %c0_184] : memref<32x32xf32, #tpu.memory_space<vmem>>, vector<8x32xf32>
    tpu.vector_store %arg16[%c0_183, %c0_184], %504 {strides = array<i32>} : memref<32x32xf32, #tpu.memory_space<vmem>>, vector<8x32xf32>,
    %506 = vector.extract_strided_slice %433 {offsets = [8, 0], sizes = [8, 128], strides = [1, 1]} : vector<32x384xf32> to vector<8x128xf32>
    %507 = vector.extract_strided_slice %433 {offsets = [8, 128], sizes = [8, 128], strides = [1, 1]} : vector<32x384xf32> to vector<8x128xf32>
    %508 = vector.extract_strided_slice %433 {offsets = [8, 256], sizes = [8, 128], strides = [1, 1]} : vector<32x384xf32> to vector<8x128xf32>
    "tpu.trace_start"() <{level = 10 : i32, message = "nc,nd->cd"}> : () -> ()
    %cst_185 = arith.constant dense<0.000000e+00> : vector<128x128xf32>
    %509 = tpu.matmul %506, %507, %cst_185 {dimension_numbers = #tpu.dot_dimension_numbers<[0], [0], [1], [1], [0, 1, 1, 1], [], []>} : vector<8x128xf32>, vector<8x128xf32>, vector<128x128xf32> -> vector<128x128xf32>
    "tpu.trace_stop"() : () -> ()
    %510 = vector.extract_strided_slice %509 {offsets = [0, 0], sizes = [32, 32], strides = [1, 1]} : vector<128x128xf32> to vector<32x32xf32>
    %511 = vector.extract_strided_slice %509 {offsets = [32, 32], sizes = [32, 32], strides = [1, 1]} : vector<128x128xf32> to vector<32x32xf32>
    %512 = vector.extract_strided_slice %509 {offsets = [64, 64], sizes = [32, 32], strides = [1, 1]} : vector<128x128xf32> to vector<32x32xf32>
    %513 = vector.extract_strided_slice %509 {offsets = [96, 96], sizes = [32, 32], strides = [1, 1]} : vector<128x128xf32> to vector<32x32xf32>
    %514 = vector.shape_cast %510 : vector<32x32xf32> to vector<1x32x32xf32>
    %515 = vector.shape_cast %511 : vector<32x32xf32> to vector<1x32x32xf32>
    %516 = vector.shape_cast %512 : vector<32x32xf32> to vector<1x32x32xf32>
    %517 = vector.shape_cast %513 : vector<32x32xf32> to vector<1x32x32xf32>
    %518 = tpu.concatenate %514, %515, %516, %517 in 0 : vector<1x32x32xf32>, vector<1x32x32xf32>, vector<1x32x32xf32>, vector<1x32x32xf32> -> vector<4x32x32xf32>
    %cst_186 = arith.constant 0.176776692 : f32
    %519 = vector.broadcast %cst_186 : f32 to vector<4x32x32xf32>
    %520 = arith.mulf %518, %519 : vector<4x32x32xf32>
    %cst_187 = arith.constant dense<0.000000e+00> : vector<4x32xf32>
    %521 = vector.multi_reduction <add>, %520, %cst_187 [2] : vector<4x32x32xf32> to vector<4x32xf32>
    %522 = vector.shape_cast %521 : vector<4x32xf32> to vector<4x32x1xf32>
    %cst_188 = arith.constant 3.200000e+01 : f32
    %523 = vector.broadcast %cst_188 : f32 to vector<4x32x1xf32>
    %524 = arith.divf %522, %523 : vector<4x32x1xf32>
    %cst_189 = arith.constant dense<0.000000e+00> : vector<4x1xf32>
    %525 = vector.multi_reduction <add>, %524, %cst_189 [1] : vector<4x32x1xf32> to vector<4x1xf32>
    %526 = vector.shape_cast %525 : vector<4x1xf32> to vector<4x1x1xf32>
    %cst_190 = arith.constant 3.200000e+01 : f32
    %527 = vector.broadcast %cst_190 : f32 to vector<4x1x1xf32>
    %528 = arith.divf %526, %527 : vector<4x1x1xf32>
    %529 = vector.broadcast %528 : vector<4x1x1xf32> to vector<4x32x32xf32>
    %530 = arith.subf %520, %529 : vector<4x32x32xf32>
    %531 = arith.mulf %530, %530 : vector<4x32x32xf32>
    %cst_191 = arith.constant dense<0.000000e+00> : vector<4x32xf32>
    %532 = vector.multi_reduction <add>, %531, %cst_191 [2] : vector<4x32x32xf32> to vector<4x32xf32>
    %533 = vector.shape_cast %532 : vector<4x32xf32> to vector<4x32x1xf32>
    %cst_192 = arith.constant 3.200000e+01 : f32
    %534 = vector.broadcast %cst_192 : f32 to vector<4x32x1xf32>
    %535 = arith.divf %533, %534 : vector<4x32x1xf32>
    %cst_193 = arith.constant dense<0.000000e+00> : vector<4x1xf32>
    %536 = vector.multi_reduction <add>, %535, %cst_193 [1] : vector<4x32x1xf32> to vector<4x1xf32>
    %537 = vector.shape_cast %536 : vector<4x1xf32> to vector<4x1x1xf32>
    %cst_194 = arith.constant 3.200000e+01 : f32
    %538 = vector.broadcast %cst_194 : f32 to vector<4x1x1xf32>
    %539 = arith.divf %537, %538 : vector<4x1x1xf32>
    %cst_195 = arith.constant 9.99999974E-6 : f32
    %540 = vector.broadcast %cst_195 : f32 to vector<4x1x1xf32>
    %541 = arith.addf %539, %540 : vector<4x1x1xf32>
    %542 = math.rsqrt %541 : vector<4x1x1xf32>
    %543 = vector.broadcast %542 : vector<4x1x1xf32> to vector<4x32x32xf32>
    %544 = arith.mulf %530, %543 : vector<4x32x32xf32>
    %cst_196 = arith.constant dense<0xFF800000> : vector<4x32xf32>
    %545 = vector.multi_reduction <maximumf>, %544, %cst_196 [2] : vector<4x32x32xf32> to vector<4x32xf32>
    %546 = vector.shape_cast %545 : vector<4x32xf32> to vector<4x32x1xf32>
    %547 = vector.broadcast %546 : vector<4x32x1xf32> to vector<4x32x32xf32>
    %548 = arith.subf %544, %547 : vector<4x32x32xf32>
    %549 = math.exp %548 : vector<4x32x32xf32>
    %cst_197 = arith.constant dense<0.000000e+00> : vector<4x32xf32>
    %550 = vector.multi_reduction <add>, %549, %cst_197 [2] : vector<4x32x32xf32> to vector<4x32xf32>
    %551 = vector.shape_cast %550 : vector<4x32xf32> to vector<4x32x1xf32>
    %552 = tpu.reciprocal %551 {approx = true} : vector<4x32x1xf32> -> vector<4x32x1xf32>
    %553 = vector.broadcast %552 : vector<4x32x1xf32> to vector<4x32x32xf32>
    %554 = arith.mulf %549, %553 : vector<4x32x32xf32>
    %cst_198 = arith.constant dense<0.000000e+00> : vector<32x32xf32>
    %555 = vector.multi_reduction <add>, %554, %cst_198 [0] : vector<4x32x32xf32> to vector<32x32xf32>
    %cst_199 = arith.constant 4.000000e+00 : f32
    %556 = vector.broadcast %cst_199 : f32 to vector<32x32xf32>
    %557 = arith.divf %555, %556 : vector<32x32xf32>
    %c0_200 = arith.constant 0 : index
    %c5 = arith.constant 5 : index
    %c0_201 = arith.constant 0 : index
    %c0_202 = arith.constant 0 : index
    %558 = vector.load %arg15[%c0_200, %c5, %c0_201, %c0_202] : memref<1x8x32x32xf32, #tpu.memory_space<vmem>>, vector<1x1x32x32xf32>
    %559 = vector.shape_cast %558 : vector<1x1x32x32xf32> to vector<32x32xf32>
    %560 = vector.shape_cast %557 : vector<32x32xf32> to vector<1x1x32x32xf32>
    tpu.vector_store %arg15[%c0_200, %c5, %c0_201, %c0_202], %560 {strides = array<i32>} : memref<1x8x32x32xf32, #tpu.memory_space<vmem>>, vector<1x1x32x32xf32>,
    %561 = vector.extract_strided_slice %554 {offsets = [0, 0, 0], sizes = [1, 32, 32], strides = [1, 1, 1]} : vector<4x32x32xf32> to vector<1x32x32xf32>
    %562 = vector.shape_cast %561 : vector<1x32x32xf32> to vector<32x32xf32>
    %563 = tpu.transpose %562, [1, 0] : vector<32x32xf32> -> vector<32x32xf32>
    %564 = vector.extract_strided_slice %554 {offsets = [1, 0, 0], sizes = [1, 32, 32], strides = [1, 1, 1]} : vector<4x32x32xf32> to vector<1x32x32xf32>
    %565 = vector.shape_cast %564 : vector<1x32x32xf32> to vector<32x32xf32>
    %566 = tpu.transpose %565, [1, 0] : vector<32x32xf32> -> vector<32x32xf32>
    %567 = vector.extract_strided_slice %554 {offsets = [2, 0, 0], sizes = [1, 32, 32], strides = [1, 1, 1]} : vector<4x32x32xf32> to vector<1x32x32xf32>
    %568 = vector.shape_cast %567 : vector<1x32x32xf32> to vector<32x32xf32>
    %569 = tpu.transpose %568, [1, 0] : vector<32x32xf32> -> vector<32x32xf32>
    %570 = vector.extract_strided_slice %554 {offsets = [3, 0, 0], sizes = [1, 32, 32], strides = [1, 1, 1]} : vector<4x32x32xf32> to vector<1x32x32xf32>
    %571 = vector.shape_cast %570 : vector<1x32x32xf32> to vector<32x32xf32>
    %572 = tpu.transpose %571, [1, 0] : vector<32x32xf32> -> vector<32x32xf32>
    %573 = tpu.concatenate %563, %566, %569, %572 in 0 : vector<32x32xf32>, vector<32x32xf32>, vector<32x32xf32>, vector<32x32xf32> -> vector<128x32xf32>
    %cst_203 = arith.constant dense<0.000000e+00> : vector<8x32xf32>
    %574 = tpu.matmul %508, %573, %cst_203 {dimension_numbers = #tpu.dot_dimension_numbers<[1], [0], [0], [1], [0, 0, 1, 1], [], []>} : vector<8x128xf32>, vector<128x32xf32>, vector<8x32xf32> -> vector<8x32xf32>
    %cst_204 = arith.constant 2.500000e-01 : f32
    %575 = vector.broadcast %cst_204 : f32 to vector<8x32xf32>
    %576 = arith.mulf %574, %575 : vector<8x32xf32>
    %c8_205 = arith.constant 8 : index
    %c0_206 = arith.constant 0 : index
    %577 = vector.load %arg16[%c8_205, %c0_206] : memref<32x32xf32, #tpu.memory_space<vmem>>, vector<8x32xf32>
    tpu.vector_store %arg16[%c8_205, %c0_206], %576 {strides = array<i32>} : memref<32x32xf32, #tpu.memory_space<vmem>>, vector<8x32xf32>,
    %578 = vector.extract_strided_slice %433 {offsets = [16, 0], sizes = [8, 128], strides = [1, 1]} : vector<32x384xf32> to vector<8x128xf32>
    %579 = vector.extract_strided_slice %433 {offsets = [16, 128], sizes = [8, 128], strides = [1, 1]} : vector<32x384xf32> to vector<8x128xf32>
    %580 = vector.extract_strided_slice %433 {offsets = [16, 256], sizes = [8, 128], strides = [1, 1]} : vector<32x384xf32> to vector<8x128xf32>
    "tpu.trace_start"() <{level = 10 : i32, message = "nc,nd->cd"}> : () -> ()
    %cst_207 = arith.constant dense<0.000000e+00> : vector<128x128xf32>
    %581 = tpu.matmul %578, %579, %cst_207 {dimension_numbers = #tpu.dot_dimension_numbers<[0], [0], [1], [1], [0, 1, 1, 1], [], []>} : vector<8x128xf32>, vector<8x128xf32>, vector<128x128xf32> -> vector<128x128xf32>
    "tpu.trace_stop"() : () -> ()
    %582 = vector.extract_strided_slice %581 {offsets = [0, 0], sizes = [32, 32], strides = [1, 1]} : vector<128x128xf32> to vector<32x32xf32>
    %583 = vector.extract_strided_slice %581 {offsets = [32, 32], sizes = [32, 32], strides = [1, 1]} : vector<128x128xf32> to vector<32x32xf32>
    %584 = vector.extract_strided_slice %581 {offsets = [64, 64], sizes = [32, 32], strides = [1, 1]} : vector<128x128xf32> to vector<32x32xf32>
    %585 = vector.extract_strided_slice %581 {offsets = [96, 96], sizes = [32, 32], strides = [1, 1]} : vector<128x128xf32> to vector<32x32xf32>
    %586 = vector.shape_cast %582 : vector<32x32xf32> to vector<1x32x32xf32>
    %587 = vector.shape_cast %583 : vector<32x32xf32> to vector<1x32x32xf32>
    %588 = vector.shape_cast %584 : vector<32x32xf32> to vector<1x32x32xf32>
    %589 = vector.shape_cast %585 : vector<32x32xf32> to vector<1x32x32xf32>
    %590 = tpu.concatenate %586, %587, %588, %589 in 0 : vector<1x32x32xf32>, vector<1x32x32xf32>, vector<1x32x32xf32>, vector<1x32x32xf32> -> vector<4x32x32xf32>
    %cst_208 = arith.constant 0.176776692 : f32
    %591 = vector.broadcast %cst_208 : f32 to vector<4x32x32xf32>
    %592 = arith.mulf %590, %591 : vector<4x32x32xf32>
    %cst_209 = arith.constant dense<0.000000e+00> : vector<4x32xf32>
    %593 = vector.multi_reduction <add>, %592, %cst_209 [2] : vector<4x32x32xf32> to vector<4x32xf32>
    %594 = vector.shape_cast %593 : vector<4x32xf32> to vector<4x32x1xf32>
    %cst_210 = arith.constant 3.200000e+01 : f32
    %595 = vector.broadcast %cst_210 : f32 to vector<4x32x1xf32>
    %596 = arith.divf %594, %595 : vector<4x32x1xf32>
    %cst_211 = arith.constant dense<0.000000e+00> : vector<4x1xf32>
    %597 = vector.multi_reduction <add>, %596, %cst_211 [1] : vector<4x32x1xf32> to vector<4x1xf32>
    %598 = vector.shape_cast %597 : vector<4x1xf32> to vector<4x1x1xf32>
    %cst_212 = arith.constant 3.200000e+01 : f32
    %599 = vector.broadcast %cst_212 : f32 to vector<4x1x1xf32>
    %600 = arith.divf %598, %599 : vector<4x1x1xf32>
    %601 = vector.broadcast %600 : vector<4x1x1xf32> to vector<4x32x32xf32>
    %602 = arith.subf %592, %601 : vector<4x32x32xf32>
    %603 = arith.mulf %602, %602 : vector<4x32x32xf32>
    %cst_213 = arith.constant dense<0.000000e+00> : vector<4x32xf32>
    %604 = vector.multi_reduction <add>, %603, %cst_213 [2] : vector<4x32x32xf32> to vector<4x32xf32>
    %605 = vector.shape_cast %604 : vector<4x32xf32> to vector<4x32x1xf32>
    %cst_214 = arith.constant 3.200000e+01 : f32
    %606 = vector.broadcast %cst_214 : f32 to vector<4x32x1xf32>
    %607 = arith.divf %605, %606 : vector<4x32x1xf32>
    %cst_215 = arith.constant dense<0.000000e+00> : vector<4x1xf32>
    %608 = vector.multi_reduction <add>, %607, %cst_215 [1] : vector<4x32x1xf32> to vector<4x1xf32>
    %609 = vector.shape_cast %608 : vector<4x1xf32> to vector<4x1x1xf32>
    %cst_216 = arith.constant 3.200000e+01 : f32
    %610 = vector.broadcast %cst_216 : f32 to vector<4x1x1xf32>
    %611 = arith.divf %609, %610 : vector<4x1x1xf32>
    %cst_217 = arith.constant 9.99999974E-6 : f32
    %612 = vector.broadcast %cst_217 : f32 to vector<4x1x1xf32>
    %613 = arith.addf %611, %612 : vector<4x1x1xf32>
    %614 = math.rsqrt %613 : vector<4x1x1xf32>
    %615 = vector.broadcast %614 : vector<4x1x1xf32> to vector<4x32x32xf32>
    %616 = arith.mulf %602, %615 : vector<4x32x32xf32>
    %cst_218 = arith.constant dense<0xFF800000> : vector<4x32xf32>
    %617 = vector.multi_reduction <maximumf>, %616, %cst_218 [2] : vector<4x32x32xf32> to vector<4x32xf32>
    %618 = vector.shape_cast %617 : vector<4x32xf32> to vector<4x32x1xf32>
    %619 = vector.broadcast %618 : vector<4x32x1xf32> to vector<4x32x32xf32>
    %620 = arith.subf %616, %619 : vector<4x32x32xf32>
    %621 = math.exp %620 : vector<4x32x32xf32>
    %cst_219 = arith.constant dense<0.000000e+00> : vector<4x32xf32>
    %622 = vector.multi_reduction <add>, %621, %cst_219 [2] : vector<4x32x32xf32> to vector<4x32xf32>
    %623 = vector.shape_cast %622 : vector<4x32xf32> to vector<4x32x1xf32>
    %624 = tpu.reciprocal %623 {approx = true} : vector<4x32x1xf32> -> vector<4x32x1xf32>
    %625 = vector.broadcast %624 : vector<4x32x1xf32> to vector<4x32x32xf32>
    %626 = arith.mulf %621, %625 : vector<4x32x32xf32>
    %cst_220 = arith.constant dense<0.000000e+00> : vector<32x32xf32>
    %627 = vector.multi_reduction <add>, %626, %cst_220 [0] : vector<4x32x32xf32> to vector<32x32xf32>
    %cst_221 = arith.constant 4.000000e+00 : f32
    %628 = vector.broadcast %cst_221 : f32 to vector<32x32xf32>
    %629 = arith.divf %627, %628 : vector<32x32xf32>
    %c0_222 = arith.constant 0 : index
    %c6 = arith.constant 6 : index
    %c0_223 = arith.constant 0 : index
    %c0_224 = arith.constant 0 : index
    %630 = vector.load %arg15[%c0_222, %c6, %c0_223, %c0_224] : memref<1x8x32x32xf32, #tpu.memory_space<vmem>>, vector<1x1x32x32xf32>
    %631 = vector.shape_cast %630 : vector<1x1x32x32xf32> to vector<32x32xf32>
    %632 = vector.shape_cast %629 : vector<32x32xf32> to vector<1x1x32x32xf32>
    tpu.vector_store %arg15[%c0_222, %c6, %c0_223, %c0_224], %632 {strides = array<i32>} : memref<1x8x32x32xf32, #tpu.memory_space<vmem>>, vector<1x1x32x32xf32>,
    %633 = vector.extract_strided_slice %626 {offsets = [0, 0, 0], sizes = [1, 32, 32], strides = [1, 1, 1]} : vector<4x32x32xf32> to vector<1x32x32xf32>
    %634 = vector.shape_cast %633 : vector<1x32x32xf32> to vector<32x32xf32>
    %635 = tpu.transpose %634, [1, 0] : vector<32x32xf32> -> vector<32x32xf32>
    %636 = vector.extract_strided_slice %626 {offsets = [1, 0, 0], sizes = [1, 32, 32], strides = [1, 1, 1]} : vector<4x32x32xf32> to vector<1x32x32xf32>
    %637 = vector.shape_cast %636 : vector<1x32x32xf32> to vector<32x32xf32>
    %638 = tpu.transpose %637, [1, 0] : vector<32x32xf32> -> vector<32x32xf32>
    %639 = vector.extract_strided_slice %626 {offsets = [2, 0, 0], sizes = [1, 32, 32], strides = [1, 1, 1]} : vector<4x32x32xf32> to vector<1x32x32xf32>
    %640 = vector.shape_cast %639 : vector<1x32x32xf32> to vector<32x32xf32>
    %641 = tpu.transpose %640, [1, 0] : vector<32x32xf32> -> vector<32x32xf32>
    %642 = vector.extract_strided_slice %626 {offsets = [3, 0, 0], sizes = [1, 32, 32], strides = [1, 1, 1]} : vector<4x32x32xf32> to vector<1x32x32xf32>
    %643 = vector.shape_cast %642 : vector<1x32x32xf32> to vector<32x32xf32>
    %644 = tpu.transpose %643, [1, 0] : vector<32x32xf32> -> vector<32x32xf32>
    %645 = tpu.concatenate %635, %638, %641, %644 in 0 : vector<32x32xf32>, vector<32x32xf32>, vector<32x32xf32>, vector<32x32xf32> -> vector<128x32xf32>
    %cst_225 = arith.constant dense<0.000000e+00> : vector<8x32xf32>
    %646 = tpu.matmul %580, %645, %cst_225 {dimension_numbers = #tpu.dot_dimension_numbers<[1], [0], [0], [1], [0, 0, 1, 1], [], []>} : vector<8x128xf32>, vector<128x32xf32>, vector<8x32xf32> -> vector<8x32xf32>
    %cst_226 = arith.constant 2.500000e-01 : f32
    %647 = vector.broadcast %cst_226 : f32 to vector<8x32xf32>
    %648 = arith.mulf %646, %647 : vector<8x32xf32>
    %c16_227 = arith.constant 16 : index
    %c0_228 = arith.constant 0 : index
    %649 = vector.load %arg16[%c16_227, %c0_228] : memref<32x32xf32, #tpu.memory_space<vmem>>, vector<8x32xf32>
    tpu.vector_store %arg16[%c16_227, %c0_228], %648 {strides = array<i32>} : memref<32x32xf32, #tpu.memory_space<vmem>>, vector<8x32xf32>,
    %650 = vector.extract_strided_slice %433 {offsets = [24, 0], sizes = [8, 128], strides = [1, 1]} : vector<32x384xf32> to vector<8x128xf32>
    %651 = vector.extract_strided_slice %433 {offsets = [24, 128], sizes = [8, 128], strides = [1, 1]} : vector<32x384xf32> to vector<8x128xf32>
    %652 = vector.extract_strided_slice %433 {offsets = [24, 256], sizes = [8, 128], strides = [1, 1]} : vector<32x384xf32> to vector<8x128xf32>
    "tpu.trace_start"() <{level = 10 : i32, message = "nc,nd->cd"}> : () -> ()
    %cst_229 = arith.constant dense<0.000000e+00> : vector<128x128xf32>
    %653 = tpu.matmul %650, %651, %cst_229 {dimension_numbers = #tpu.dot_dimension_numbers<[0], [0], [1], [1], [0, 1, 1, 1], [], []>} : vector<8x128xf32>, vector<8x128xf32>, vector<128x128xf32> -> vector<128x128xf32>
    "tpu.trace_stop"() : () -> ()
    %654 = vector.extract_strided_slice %653 {offsets = [0, 0], sizes = [32, 32], strides = [1, 1]} : vector<128x128xf32> to vector<32x32xf32>
    %655 = vector.extract_strided_slice %653 {offsets = [32, 32], sizes = [32, 32], strides = [1, 1]} : vector<128x128xf32> to vector<32x32xf32>
    %656 = vector.extract_strided_slice %653 {offsets = [64, 64], sizes = [32, 32], strides = [1, 1]} : vector<128x128xf32> to vector<32x32xf32>
    %657 = vector.extract_strided_slice %653 {offsets = [96, 96], sizes = [32, 32], strides = [1, 1]} : vector<128x128xf32> to vector<32x32xf32>
    %658 = vector.shape_cast %654 : vector<32x32xf32> to vector<1x32x32xf32>
    %659 = vector.shape_cast %655 : vector<32x32xf32> to vector<1x32x32xf32>
    %660 = vector.shape_cast %656 : vector<32x32xf32> to vector<1x32x32xf32>
    %661 = vector.shape_cast %657 : vector<32x32xf32> to vector<1x32x32xf32>
    %662 = tpu.concatenate %658, %659, %660, %661 in 0 : vector<1x32x32xf32>, vector<1x32x32xf32>, vector<1x32x32xf32>, vector<1x32x32xf32> -> vector<4x32x32xf32>
    %cst_230 = arith.constant 0.176776692 : f32
    %663 = vector.broadcast %cst_230 : f32 to vector<4x32x32xf32>
    %664 = arith.mulf %662, %663 : vector<4x32x32xf32>
    %cst_231 = arith.constant dense<0.000000e+00> : vector<4x32xf32>
    %665 = vector.multi_reduction <add>, %664, %cst_231 [2] : vector<4x32x32xf32> to vector<4x32xf32>
    %666 = vector.shape_cast %665 : vector<4x32xf32> to vector<4x32x1xf32>
    %cst_232 = arith.constant 3.200000e+01 : f32
    %667 = vector.broadcast %cst_232 : f32 to vector<4x32x1xf32>
    %668 = arith.divf %666, %667 : vector<4x32x1xf32>
    %cst_233 = arith.constant dense<0.000000e+00> : vector<4x1xf32>
    %669 = vector.multi_reduction <add>, %668, %cst_233 [1] : vector<4x32x1xf32> to vector<4x1xf32>
    %670 = vector.shape_cast %669 : vector<4x1xf32> to vector<4x1x1xf32>
    %cst_234 = arith.constant 3.200000e+01 : f32
    %671 = vector.broadcast %cst_234 : f32 to vector<4x1x1xf32>
    %672 = arith.divf %670, %671 : vector<4x1x1xf32>
    %673 = vector.broadcast %672 : vector<4x1x1xf32> to vector<4x32x32xf32>
    %674 = arith.subf %664, %673 : vector<4x32x32xf32>
    %675 = arith.mulf %674, %674 : vector<4x32x32xf32>
    %cst_235 = arith.constant dense<0.000000e+00> : vector<4x32xf32>
    %676 = vector.multi_reduction <add>, %675, %cst_235 [2] : vector<4x32x32xf32> to vector<4x32xf32>
    %677 = vector.shape_cast %676 : vector<4x32xf32> to vector<4x32x1xf32>
    %cst_236 = arith.constant 3.200000e+01 : f32
    %678 = vector.broadcast %cst_236 : f32 to vector<4x32x1xf32>
    %679 = arith.divf %677, %678 : vector<4x32x1xf32>
    %cst_237 = arith.constant dense<0.000000e+00> : vector<4x1xf32>
    %680 = vector.multi_reduction <add>, %679, %cst_237 [1] : vector<4x32x1xf32> to vector<4x1xf32>
    %681 = vector.shape_cast %680 : vector<4x1xf32> to vector<4x1x1xf32>
    %cst_238 = arith.constant 3.200000e+01 : f32
    %682 = vector.broadcast %cst_238 : f32 to vector<4x1x1xf32>
    %683 = arith.divf %681, %682 : vector<4x1x1xf32>
    %cst_239 = arith.constant 9.99999974E-6 : f32
    %684 = vector.broadcast %cst_239 : f32 to vector<4x1x1xf32>
    %685 = arith.addf %683, %684 : vector<4x1x1xf32>
    %686 = math.rsqrt %685 : vector<4x1x1xf32>
    %687 = vector.broadcast %686 : vector<4x1x1xf32> to vector<4x32x32xf32>
    %688 = arith.mulf %674, %687 : vector<4x32x32xf32>
    %cst_240 = arith.constant dense<0xFF800000> : vector<4x32xf32>
    %689 = vector.multi_reduction <maximumf>, %688, %cst_240 [2] : vector<4x32x32xf32> to vector<4x32xf32>
    %690 = vector.shape_cast %689 : vector<4x32xf32> to vector<4x32x1xf32>
    %691 = vector.broadcast %690 : vector<4x32x1xf32> to vector<4x32x32xf32>
    %692 = arith.subf %688, %691 : vector<4x32x32xf32>
    %693 = math.exp %692 : vector<4x32x32xf32>
    %cst_241 = arith.constant dense<0.000000e+00> : vector<4x32xf32>
    %694 = vector.multi_reduction <add>, %693, %cst_241 [2] : vector<4x32x32xf32> to vector<4x32xf32>
    %695 = vector.shape_cast %694 : vector<4x32xf32> to vector<4x32x1xf32>
    %696 = tpu.reciprocal %695 {approx = true} : vector<4x32x1xf32> -> vector<4x32x1xf32>
    %697 = vector.broadcast %696 : vector<4x32x1xf32> to vector<4x32x32xf32>
    %698 = arith.mulf %693, %697 : vector<4x32x32xf32>
    %cst_242 = arith.constant dense<0.000000e+00> : vector<32x32xf32>
    %699 = vector.multi_reduction <add>, %698, %cst_242 [0] : vector<4x32x32xf32> to vector<32x32xf32>
    %cst_243 = arith.constant 4.000000e+00 : f32
    %700 = vector.broadcast %cst_243 : f32 to vector<32x32xf32>
    %701 = arith.divf %699, %700 : vector<32x32xf32>
    %c0_244 = arith.constant 0 : index
    %c7 = arith.constant 7 : index
    %c0_245 = arith.constant 0 : index
    %c0_246 = arith.constant 0 : index
    %702 = vector.load %arg15[%c0_244, %c7, %c0_245, %c0_246] : memref<1x8x32x32xf32, #tpu.memory_space<vmem>>, vector<1x1x32x32xf32>
    %703 = vector.shape_cast %702 : vector<1x1x32x32xf32> to vector<32x32xf32>
    %704 = vector.shape_cast %701 : vector<32x32xf32> to vector<1x1x32x32xf32>
    tpu.vector_store %arg15[%c0_244, %c7, %c0_245, %c0_246], %704 {strides = array<i32>} : memref<1x8x32x32xf32, #tpu.memory_space<vmem>>, vector<1x1x32x32xf32>,
    %705 = vector.extract_strided_slice %698 {offsets = [0, 0, 0], sizes = [1, 32, 32], strides = [1, 1, 1]} : vector<4x32x32xf32> to vector<1x32x32xf32>
    %706 = vector.shape_cast %705 : vector<1x32x32xf32> to vector<32x32xf32>
    %707 = tpu.transpose %706, [1, 0] : vector<32x32xf32> -> vector<32x32xf32>
    %708 = vector.extract_strided_slice %698 {offsets = [1, 0, 0], sizes = [1, 32, 32], strides = [1, 1, 1]} : vector<4x32x32xf32> to vector<1x32x32xf32>
    %709 = vector.shape_cast %708 : vector<1x32x32xf32> to vector<32x32xf32>
    %710 = tpu.transpose %709, [1, 0] : vector<32x32xf32> -> vector<32x32xf32>
    %711 = vector.extract_strided_slice %698 {offsets = [2, 0, 0], sizes = [1, 32, 32], strides = [1, 1, 1]} : vector<4x32x32xf32> to vector<1x32x32xf32>
    %712 = vector.shape_cast %711 : vector<1x32x32xf32> to vector<32x32xf32>
    %713 = tpu.transpose %712, [1, 0] : vector<32x32xf32> -> vector<32x32xf32>
    %714 = vector.extract_strided_slice %698 {offsets = [3, 0, 0], sizes = [1, 32, 32], strides = [1, 1, 1]} : vector<4x32x32xf32> to vector<1x32x32xf32>
    %715 = vector.shape_cast %714 : vector<1x32x32xf32> to vector<32x32xf32>
    %716 = tpu.transpose %715, [1, 0] : vector<32x32xf32> -> vector<32x32xf32>
    %717 = tpu.concatenate %707, %710, %713, %716 in 0 : vector<32x32xf32>, vector<32x32xf32>, vector<32x32xf32>, vector<32x32xf32> -> vector<128x32xf32>
    %cst_247 = arith.constant dense<0.000000e+00> : vector<8x32xf32>
    %718 = tpu.matmul %652, %717, %cst_247 {dimension_numbers = #tpu.dot_dimension_numbers<[1], [0], [0], [1], [0, 0, 1, 1], [], []>} : vector<8x128xf32>, vector<128x32xf32>, vector<8x32xf32> -> vector<8x32xf32>
    %cst_248 = arith.constant 2.500000e-01 : f32
    %719 = vector.broadcast %cst_248 : f32 to vector<8x32xf32>
    %720 = arith.mulf %718, %719 : vector<8x32xf32>
    %c24_249 = arith.constant 24 : index
    %c0_250 = arith.constant 0 : index
    %721 = vector.load %arg16[%c24_249, %c0_250] : memref<32x32xf32, #tpu.memory_space<vmem>>, vector<8x32xf32>
    tpu.vector_store %arg16[%c24_249, %c0_250], %720 {strides = array<i32>} : memref<32x32xf32, #tpu.memory_space<vmem>>, vector<8x32xf32>,
    %c0_251 = arith.constant 0 : index
    %c0_252 = arith.constant 0 : index
    %722 = vector.load %arg16[%c0_251, %c0_252] : memref<32x32xf32, #tpu.memory_space<vmem>>, vector<32x32xf32>
    %c1_253 = arith.constant 1 : index
    %c0_254 = arith.constant 0 : index
    %c0_255 = arith.constant 0 : index
    %723 = vector.load %arg5[%c1_253, %c0_254, %c0_255] : memref<2x32x32xf32, #tpu.memory_space<vmem>>, vector<1x32x32xf32>
    %724 = vector.shape_cast %723 : vector<1x32x32xf32> to vector<32x32xf32>
    %cst_256 = arith.constant dense<0.000000e+00> : vector<32x32xf32>
    %725 = tpu.matmul %722, %724, %cst_256 {dimension_numbers = #tpu.dot_dimension_numbers<[1], [0], [0], [1], [0, 0, 1, 1], [], []>} : vector<32x32xf32>, vector<32x32xf32>, vector<32x32xf32> -> vector<32x32xf32>
    %726 = arith.addf %404, %725 : vector<32x32xf32>
    %c1_257 = arith.constant 1 : index
    %c0_258 = arith.constant 0 : index
    %c0_259 = arith.constant 0 : index
    %727 = vector.load %arg6[%c1_257, %c0_258, %c0_259] : memref<2x1x32xf32, #tpu.memory_space<vmem>>, vector<1x1x32xf32>
    %728 = vector.shape_cast %727 : vector<1x1x32xf32> to vector<1x32xf32>
    %c1_260 = arith.constant 1 : index
    %c0_261 = arith.constant 0 : index
    %c0_262 = arith.constant 0 : index
    %729 = vector.load %arg7[%c1_260, %c0_261, %c0_262] : memref<2x1x32xf32, #tpu.memory_space<vmem>>, vector<1x1x32xf32>
    %730 = vector.shape_cast %729 : vector<1x1x32xf32> to vector<1x32xf32>
    %cst_263 = arith.constant dense<0.000000e+00> : vector<32xf32>
    %731 = vector.multi_reduction <add>, %726, %cst_263 [1] : vector<32x32xf32> to vector<32xf32>
    %732 = vector.shape_cast %731 : vector<32xf32> to vector<32x1xf32>
    %cst_264 = arith.constant 3.200000e+01 : f32
    %733 = vector.broadcast %cst_264 : f32 to vector<32x1xf32>
    %734 = arith.divf %732, %733 : vector<32x1xf32>
    %735 = vector.broadcast %734 : vector<32x1xf32> to vector<32x32xf32>
    %736 = arith.subf %726, %735 : vector<32x32xf32>
    %737 = arith.mulf %736, %736 : vector<32x32xf32>
    %cst_265 = arith.constant dense<0.000000e+00> : vector<32xf32>
    %738 = vector.multi_reduction <add>, %737, %cst_265 [1] : vector<32x32xf32> to vector<32xf32>
    %739 = vector.shape_cast %738 : vector<32xf32> to vector<32x1xf32>
    %cst_266 = arith.constant 3.200000e+01 : f32
    %740 = vector.broadcast %cst_266 : f32 to vector<32x1xf32>
    %741 = arith.divf %739, %740 : vector<32x1xf32>
    %742 = vector.broadcast %734 : vector<32x1xf32> to vector<32x32xf32>
    %743 = arith.subf %726, %742 : vector<32x32xf32>
    %cst_267 = arith.constant 9.99999997E-7 : f32
    %744 = vector.broadcast %cst_267 : f32 to vector<32x1xf32>
    %745 = arith.addf %741, %744 : vector<32x1xf32>
    %746 = math.rsqrt %745 : vector<32x1xf32>
    %747 = vector.broadcast %746 : vector<32x1xf32> to vector<32x32xf32>
    %748 = arith.mulf %743, %747 : vector<32x32xf32>
    %749 = vector.broadcast %728 : vector<1x32xf32> to vector<32x32xf32>
    %750 = arith.mulf %748, %749 : vector<32x32xf32>
    %751 = vector.broadcast %730 : vector<1x32xf32> to vector<32x32xf32>
    %752 = arith.addf %750, %751 : vector<32x32xf32>
    %c1_268 = arith.constant 1 : index
    %c0_269 = arith.constant 0 : index
    %c0_270 = arith.constant 0 : index
    %753 = vector.load %arg8[%c1_268, %c0_269, %c0_270] : memref<2x32x128xf32, #tpu.memory_space<vmem>>, vector<1x32x128xf32>
    %754 = vector.shape_cast %753 : vector<1x32x128xf32> to vector<32x128xf32>
    %cst_271 = arith.constant dense<0.000000e+00> : vector<32x128xf32>
    %755 = tpu.matmul %752, %754, %cst_271 {dimension_numbers = #tpu.dot_dimension_numbers<[1], [0], [0], [1], [0, 0, 1, 1], [], []>} : vector<32x32xf32>, vector<32x128xf32>, vector<32x128xf32> -> vector<32x128xf32>
    %c1_272 = arith.constant 1 : index
    %c0_273 = arith.constant 0 : index
    %c0_274 = arith.constant 0 : index
    %756 = vector.load %arg9[%c1_272, %c0_273, %c0_274] : memref<2x1x128xf32, #tpu.memory_space<vmem>>, vector<1x1x128xf32>
    %757 = vector.shape_cast %756 : vector<1x1x128xf32> to vector<1x128xf32>
    %758 = vector.broadcast %757 : vector<1x128xf32> to vector<32x128xf32>
    %759 = arith.addf %755, %758 : vector<32x128xf32>
    %cst_275 = arith.constant 5.000000e-01 : f32
    %760 = vector.broadcast %cst_275 : f32 to vector<32x128xf32>
    %761 = arith.mulf %760, %759 : vector<32x128xf32>
    %cst_276 = arith.constant 0.707106769 : f32
    %762 = vector.broadcast %cst_276 : f32 to vector<32x128xf32>
    %763 = arith.mulf %759, %762 : vector<32x128xf32>
    %cst_277 = arith.constant 0.000000e+00 : f32
    %764 = vector.broadcast %cst_277 : f32 to vector<32x128xf32>
    %765 = arith.cmpf olt, %763, %764 : vector<32x128xf32>
    %cst_278 = arith.constant -1.000000e+00 : f32
    %cst_279 = arith.constant 1.000000e+00 : f32
    %766 = vector.broadcast %cst_278 : f32 to vector<32x128xf32>
    %767 = vector.broadcast %cst_279 : f32 to vector<32x128xf32>
    %768 = arith.select %765, %766, %767 : vector<32x128xi1>, vector<32x128xf32>
    %769 = math.absf %763 : vector<32x128xf32>
    %cst_280 = arith.constant 0.327591091 : f32
    %770 = vector.broadcast %cst_280 : f32 to vector<32x128xf32>
    %771 = arith.mulf %770, %769 : vector<32x128xf32>
    %cst_281 = arith.constant 1.000000e+00 : f32
    %772 = vector.broadcast %cst_281 : f32 to vector<32x128xf32>
    %773 = arith.addf %772, %771 : vector<32x128xf32>
    %774 = tpu.reciprocal %773 {approx = true} : vector<32x128xf32> -> vector<32x128xf32>
    %cst_282 = arith.constant 1.06140542 : f32
    %775 = vector.broadcast %cst_282 : f32 to vector<32x128xf32>
    %776 = arith.mulf %775, %774 : vector<32x128xf32>
    %cst_283 = arith.constant -1.45315206 : f32
    %777 = vector.broadcast %cst_283 : f32 to vector<32x128xf32>
    %778 = arith.addf %776, %777 : vector<32x128xf32>
    %779 = arith.mulf %778, %774 : vector<32x128xf32>
    %cst_284 = arith.constant 1.42141378 : f32
    %780 = vector.broadcast %cst_284 : f32 to vector<32x128xf32>
    %781 = arith.addf %779, %780 : vector<32x128xf32>
    %782 = arith.mulf %781, %774 : vector<32x128xf32>
    %cst_285 = arith.constant -0.284496725 : f32
    %783 = vector.broadcast %cst_285 : f32 to vector<32x128xf32>
    %784 = arith.addf %782, %783 : vector<32x128xf32>
    %785 = arith.mulf %784, %774 : vector<32x128xf32>
    %cst_286 = arith.constant 0.254829586 : f32
    %786 = vector.broadcast %cst_286 : f32 to vector<32x128xf32>
    %787 = arith.addf %785, %786 : vector<32x128xf32>
    %788 = arith.mulf %787, %774 : vector<32x128xf32>
    %cst_287 = arith.constant 0.000000e+00 : f32
    %789 = vector.broadcast %cst_287 : f32 to vector<32x128xf32>
    %790 = arith.subf %789, %769 : vector<32x128xf32>
    %791 = arith.mulf %790, %769 : vector<32x128xf32>
    %792 = math.exp %791 : vector<32x128xf32>
    %793 = arith.mulf %788, %792 : vector<32x128xf32>
    %cst_288 = arith.constant 1.000000e+00 : f32
    %794 = vector.broadcast %cst_288 : f32 to vector<32x128xf32>
    %795 = arith.subf %794, %793 : vector<32x128xf32>
    %796 = arith.mulf %768, %795 : vector<32x128xf32>
    %cst_289 = arith.constant 1.000000e+00 : f32
    %797 = vector.broadcast %cst_289 : f32 to vector<32x128xf32>
    %798 = arith.addf %797, %796 : vector<32x128xf32>
    %799 = arith.mulf %761, %798 : vector<32x128xf32>
    %c1_290 = arith.constant 1 : index
    %c0_291 = arith.constant 0 : index
    %c0_292 = arith.constant 0 : index
    %800 = vector.load %arg10[%c1_290, %c0_291, %c0_292] : memref<2x128x32xf32, #tpu.memory_space<vmem>>, vector<1x128x32xf32>
    %801 = vector.shape_cast %800 : vector<1x128x32xf32> to vector<128x32xf32>
    %cst_293 = arith.constant dense<0.000000e+00> : vector<32x32xf32>
    %802 = tpu.matmul %799, %801, %cst_293 {dimension_numbers = #tpu.dot_dimension_numbers<[1], [0], [0], [1], [0, 0, 1, 1], [], []>} : vector<32x128xf32>, vector<128x32xf32>, vector<32x32xf32> -> vector<32x32xf32>
    %c1_294 = arith.constant 1 : index
    %c0_295 = arith.constant 0 : index
    %c0_296 = arith.constant 0 : index
    %803 = vector.load %arg11[%c1_294, %c0_295, %c0_296] : memref<2x1x32xf32, #tpu.memory_space<vmem>>, vector<1x1x32xf32>
    %804 = vector.shape_cast %803 : vector<1x1x32xf32> to vector<1x32xf32>
    %805 = vector.broadcast %804 : vector<1x32xf32> to vector<32x32xf32>
    %806 = arith.addf %802, %805 : vector<32x32xf32>
    %807 = arith.addf %806, %726 : vector<32x32xf32>
    %c0_297 = arith.constant 0 : index
    %c0_298 = arith.constant 0 : index
    %c0_299 = arith.constant 0 : index
    %808 = vector.load %arg12[%c0_297, %c0_298, %c0_299] : memref<1x1x32xf32, #tpu.memory_space<vmem>>, vector<1x1x32xf32>
    %809 = vector.shape_cast %808 : vector<1x1x32xf32> to vector<1x32xf32>
    %c0_300 = arith.constant 0 : index
    %c0_301 = arith.constant 0 : index
    %c0_302 = arith.constant 0 : index
    %810 = vector.load %arg13[%c0_300, %c0_301, %c0_302] : memref<1x1x32xf32, #tpu.memory_space<vmem>>, vector<1x1x32xf32>
    %811 = vector.shape_cast %810 : vector<1x1x32xf32> to vector<1x32xf32>
    %cst_303 = arith.constant dense<0.000000e+00> : vector<32xf32>
    %812 = vector.multi_reduction <add>, %807, %cst_303 [1] : vector<32x32xf32> to vector<32xf32>
    %813 = vector.shape_cast %812 : vector<32xf32> to vector<32x1xf32>
    %cst_304 = arith.constant 3.200000e+01 : f32
    %814 = vector.broadcast %cst_304 : f32 to vector<32x1xf32>
    %815 = arith.divf %813, %814 : vector<32x1xf32>
    %816 = vector.broadcast %815 : vector<32x1xf32> to vector<32x32xf32>
    %817 = arith.subf %807, %816 : vector<32x32xf32>
    %818 = arith.mulf %817, %817 : vector<32x32xf32>
    %cst_305 = arith.constant dense<0.000000e+00> : vector<32xf32>
    %819 = vector.multi_reduction <add>, %818, %cst_305 [1] : vector<32x32xf32> to vector<32xf32>
    %820 = vector.shape_cast %819 : vector<32xf32> to vector<32x1xf32>
    %cst_306 = arith.constant 3.200000e+01 : f32
    %821 = vector.broadcast %cst_306 : f32 to vector<32x1xf32>
    %822 = arith.divf %820, %821 : vector<32x1xf32>
    %823 = vector.broadcast %815 : vector<32x1xf32> to vector<32x32xf32>
    %824 = arith.subf %807, %823 : vector<32x32xf32>
    %cst_307 = arith.constant 9.99999997E-7 : f32
    %825 = vector.broadcast %cst_307 : f32 to vector<32x1xf32>
    %826 = arith.addf %822, %825 : vector<32x1xf32>
    %827 = math.rsqrt %826 : vector<32x1xf32>
    %828 = vector.broadcast %827 : vector<32x1xf32> to vector<32x32xf32>
    %829 = arith.mulf %824, %828 : vector<32x32xf32>
    %830 = vector.broadcast %809 : vector<1x32xf32> to vector<32x32xf32>
    %831 = arith.mulf %829, %830 : vector<32x32xf32>
    %832 = vector.broadcast %811 : vector<1x32xf32> to vector<32x32xf32>
    %833 = arith.addf %831, %832 : vector<32x32xf32>
    %c0_308 = arith.constant 0 : index
    %c0_309 = arith.constant 0 : index
    %c0_310 = arith.constant 0 : index
    %834 = vector.load %arg14[%c0_308, %c0_309, %c0_310] : memref<1x32x32xf32, #tpu.memory_space<vmem>>, vector<1x32x32xf32>
    %835 = vector.shape_cast %834 : vector<1x32x32xf32> to vector<32x32xf32>
    %836 = vector.shape_cast %833 : vector<32x32xf32> to vector<1x32x32xf32>
    tpu.vector_store %arg14[%c0_308, %c0_309, %c0_310], %836 {strides = array<i32>} : memref<1x32x32xf32, #tpu.memory_space<vmem>>, vector<1x32x32xf32>,
    return
  }
  func.func @transform_0(%arg0: i32) -> (i32, i32, i32) {
    %c0_i32 = arith.constant 0 : i32
    %c0_i32_0 = arith.constant 0 : i32
    %c0_i32_1 = arith.constant 0 : i32
    return %arg0, %c0_i32, %c0_i32_0 : i32, i32, i32
  }
  func.func @transform_1(%arg0: i32) -> (i32, i32, i32) {
    %c0_i32 = arith.constant 0 : i32
    %c0_i32_0 = arith.constant 0 : i32
    %c0_i32_1 = arith.constant 0 : i32
    %c0_i32_2 = arith.constant 0 : i32
    return %c0_i32, %c0_i32_0, %c0_i32_1 : i32, i32, i32
  }
  func.func @transform_2(%arg0: i32) -> (i32, i32, i32) {
    %c0_i32 = arith.constant 0 : i32
    %c0_i32_0 = arith.constant 0 : i32
    %c0_i32_1 = arith.constant 0 : i32
    %c0_i32_2 = arith.constant 0 : i32
    return %c0_i32, %c0_i32_0, %c0_i32_1 : i32, i32, i32
  }
  func.func @transform_3(%arg0: i32) -> (i32, i32, i32) {
    %c0_i32 = arith.constant 0 : i32
    %c0_i32_0 = arith.constant 0 : i32
    %c0_i32_1 = arith.constant 0 : i32
    %c0_i32_2 = arith.constant 0 : i32
    return %c0_i32, %c0_i32_0, %c0_i32_1 : i32, i32, i32
  }
  func.func @transform_4(%arg0: i32) -> (i32, i32, i32) {
    %c0_i32 = arith.constant 0 : i32
    %c0_i32_0 = arith.constant 0 : i32
    %c0_i32_1 = arith.constant 0 : i32
    %c0_i32_2 = arith.constant 0 : i32
    return %c0_i32, %c0_i32_0, %c0_i32_1 : i32, i32, i32
  }
  func.func @transform_5(%arg0: i32) -> (i32, i32, i32) {
    %c0_i32 = arith.constant 0 : i32
    %c0_i32_0 = arith.constant 0 : i32
    %c0_i32_1 = arith.constant 0 : i32
    %c0_i32_2 = arith.constant 0 : i32
    return %c0_i32, %c0_i32_0, %c0_i32_1 : i32, i32, i32
  }
  func.func @transform_6(%arg0: i32) -> (i32, i32, i32) {
    %c0_i32 = arith.constant 0 : i32
    %c0_i32_0 = arith.constant 0 : i32
    %c0_i32_1 = arith.constant 0 : i32
    %c0_i32_2 = arith.constant 0 : i32
    return %c0_i32, %c0_i32_0, %c0_i32_1 : i32, i32, i32
  }
  func.func @transform_7(%arg0: i32) -> (i32, i32, i32) {
    %c0_i32 = arith.constant 0 : i32
    %c0_i32_0 = arith.constant 0 : i32
    %c0_i32_1 = arith.constant 0 : i32
    %c0_i32_2 = arith.constant 0 : i32
    return %c0_i32, %c0_i32_0, %c0_i32_1 : i32, i32, i32
  }
  func.func @transform_8(%arg0: i32) -> (i32, i32, i32) {
    %c0_i32 = arith.constant 0 : i32
    %c0_i32_0 = arith.constant 0 : i32
    %c0_i32_1 = arith.constant 0 : i32
    %c0_i32_2 = arith.constant 0 : i32
    return %c0_i32, %c0_i32_0, %c0_i32_1 : i32, i32, i32
  }
  func.func @transform_9(%arg0: i32) -> (i32, i32, i32) {
    %c0_i32 = arith.constant 0 : i32
    %c0_i32_0 = arith.constant 0 : i32
    %c0_i32_1 = arith.constant 0 : i32
    %c0_i32_2 = arith.constant 0 : i32
    return %c0_i32, %c0_i32_0, %c0_i32_1 : i32, i32, i32
  }
  func.func @transform_10(%arg0: i32) -> (i32, i32, i32) {
    %c0_i32 = arith.constant 0 : i32
    %c0_i32_0 = arith.constant 0 : i32
    %c0_i32_1 = arith.constant 0 : i32
    %c0_i32_2 = arith.constant 0 : i32
    return %c0_i32, %c0_i32_0, %c0_i32_1 : i32, i32, i32
  }
  func.func @transform_11(%arg0: i32) -> (i32, i32, i32) {
    %c0_i32 = arith.constant 0 : i32
    %c0_i32_0 = arith.constant 0 : i32
    %c0_i32_1 = arith.constant 0 : i32
    %c0_i32_2 = arith.constant 0 : i32
    return %c0_i32, %c0_i32_0, %c0_i32_1 : i32, i32, i32
  }
  func.func @transform_12(%arg0: i32) -> (i32, i32, i32) {
    %c0_i32 = arith.constant 0 : i32
    %c0_i32_0 = arith.constant 0 : i32
    %c0_i32_1 = arith.constant 0 : i32
    %c0_i32_2 = arith.constant 0 : i32
    return %c0_i32, %c0_i32_0, %c0_i32_1 : i32, i32, i32
  }
  func.func @transform_13(%arg0: i32) -> (i32, i32, i32) {
    %c0_i32 = arith.constant 0 : i32
    %c0_i32_0 = arith.constant 0 : i32
    %c0_i32_1 = arith.constant 0 : i32
    return %arg0, %c0_i32, %c0_i32_0 : i32, i32, i32
  }
  func.func @transform_14(%arg0: i32) -> (i32, i32, i32, i32) {
    %c0_i32 = arith.constant 0 : i32
    %c0_i32_0 = arith.constant 0 : i32
    %c0_i32_1 = arith.constant 0 : i32
    %c0_i32_2 = arith.constant 0 : i32
    return %arg0, %c0_i32, %c0_i32_0, %c0_i32_1 : i32, i32, i32, i32
  }
}

</mosaic_0001>

<llo_original>
// kernel: tpu_custom_call.1
$region0: #{tpu_custom_call.1}
  #allocation0 [shape = 'u32[]', space=smem, size = 0x4, offset = 0x4, fixed_abs, tag = 'smem constant byte address 0x4 - core index']
  #allocation1 [shape = 'u32[144,128]{1,0:T(1,128)}', space=vmem, size = 0x12000, scoped, tag = 'internal scratch']
  #allocation2 [shape = 'f32[32,32]{1,0:T(8,128)}', space=vmem, size = 0x4000, scoped, tag = 'scratch operand']
  %s0 = inlined_call_operand.hbm [shape: f32[1,32,32], index: 0, kind: input, shape index: {}]
  %s1 = inlined_call_operand.vmem [shape: f32[2,1,32], index: 1, kind: input, shape index: {}]
  %s2 = inlined_call_operand.vmem [shape: f32[2,1,32], index: 2, kind: input, shape index: {}]
  %s3 = inlined_call_operand.vmem [shape: f32[2,32,384], index: 3, kind: input, shape index: {}]
  %s4 = inlined_call_operand.vmem [shape: f32[2,32,32], index: 4, kind: input, shape index: {}]
  %s5 = inlined_call_operand.vmem [shape: f32[2,1,32], index: 5, kind: input, shape index: {}]
  %s6 = inlined_call_operand.vmem [shape: f32[2,1,32], index: 6, kind: input, shape index: {}]
  %s7 = inlined_call_operand.vmem [shape: f32[2,32,128], index: 7, kind: input, shape index: {}]
  %s8 = inlined_call_operand.vmem [shape: f32[2,1,128], index: 8, kind: input, shape index: {}]
  %s9 = inlined_call_operand.vmem [shape: f32[2,128,32], index: 9, kind: input, shape index: {}]
  %s10 = inlined_call_operand.vmem [shape: f32[2,1,32], index: 10, kind: input, shape index: {}]
  %s11 = inlined_call_operand.vmem [shape: f32[1,1,32], index: 11, kind: input, shape index: {}]
  %s12 = inlined_call_operand.vmem [shape: f32[1,1,32], index: 12, kind: input, shape index: {}]
  %s13 = inlined_call_operand.hbm [shape: f32[1,32,32], index: 13, kind: output, shape index: {0}]
  %s14 = inlined_call_operand.hbm [shape: f32[1,8,32,32], index: 14, kind: output, shape index: {1}]
  %15 = xla_tuple %s13, %s14
  %s16 = sld [smem:[#allocation0]]
  $region74: #{tpu_custom_call.1} parent=0
    _
  %s18 = ssub.s32 1, %s16
  %s19 = scalar_select 0, %s18, %s16
  $region1: #{tpu_custom_call.1} parent=0
    #allocation3 [shape = 'u8[16384]{0}', space=vmem, size = 0x4000, scoped, tag = 'input window, operand 0, single buffered']
    #allocation4 [shape = 's32[1]{0}', space=sflag, size = 0x4, scoped, tag = 'scoped memory for tpu_custom_call.1']
    #allocation5 [shape = 's32[1]{0}', space=sflag, size = 0x4, scoped, tag = 'scoped memory for tpu_custom_call.1']
    #allocation6 [shape = 'u8[16384]{0}', space=vmem, size = 0x4000, scoped, tag = 'output window, operand 0, single buffered']
    #allocation7 [shape = 'u8[131072]{0}', space=vmem, size = 0x20000, scoped, tag = 'output window, operand 1, single buffered']
    #allocation8 [shape = 's32[1]{0}', space=sflag, size = 0x4, scoped, tag = 'scoped memory for tpu_custom_call.1']
    %20 = vsyncpa [#allocation4], 0
    %21 = vsyncpa [#allocation5], 0
    %22 = vsyncpa [#allocation8], 0
    // Predicated region
    $region2: #{tpu_custom_call.1} parent=1 // pred_check
      _
    $region3: #{tpu_custom_call.1} parent=1 // pred_check_branch
      %24 = sbr.rel (0) target = $region5
    $region4: #{tpu_custom_call.1} parent=1 // pred_region
      %s26 = ssub.s32 512, 512
      %27 = vsyncadd [#allocation4], %s26
      %s28 = sshll.u32 [#allocation3], 4
      %s29 = int_to_ptr.vmem [resolvable:$true] %s28
      %34 = dma.hbm_to_vmem [thread:$0]  %s0, 512, %s29, [#allocation4], 128, 128, 8
    $region5: #{tpu_custom_call.1} parent=1 // pred_fallthru
      _
    // Predicated region
    $region6: #{tpu_custom_call.1} parent=1 // pred_check
      _
    $region7: #{tpu_custom_call.1} parent=1 // pred_check_branch
      %36 = sbr.rel (0) target = $region9
    $region8: #{tpu_custom_call.1} parent=1 // pred_region
      _
    $region9: #{tpu_custom_call.1} parent=1 // pred_fallthru
      _
    // Predicated region
    $region10: #{tpu_custom_call.1} parent=1 // pred_check
      _
    $region11: #{tpu_custom_call.1} parent=1 // pred_check_branch
      %38 = sbr.rel (0) target = $region13
    $region12: #{tpu_custom_call.1} parent=1 // pred_region
      _
    $region13: #{tpu_custom_call.1} parent=1 // pred_fallthru
      _
    // Predicated region
    $region14: #{tpu_custom_call.1} parent=1 // pred_check
      _
    $region15: #{tpu_custom_call.1} parent=1 // pred_check_branch
      %40 = sbr.rel (0) target = $region17
    $region16: #{tpu_custom_call.1} parent=1 // pred_region
      _
    $region17: #{tpu_custom_call.1} parent=1 // pred_fallthru
      _
    // Predicated region
    $region18: #{tpu_custom_call.1} parent=1 // pred_check
      _
    $region19: #{tpu_custom_call.1} parent=1 // pred_check_branch
      %42 = sbr.rel (0) target = $region21
    $region20: #{tpu_custom_call.1} parent=1 // pred_region
      _
    $region21: #{tpu_custom_call.1} parent=1 // pred_fallthru
      _
    // Predicated region
    $region22: #{tpu_custom_call.1} parent=1 // pred_check
      _
    $region23: #{tpu_custom_call.1} parent=1 // pred_check_branch
      %44 = sbr.rel (0) target = $region25
    $region24: #{tpu_custom_call.1} parent=1 // pred_region
      _
    $region25: #{tpu_custom_call.1} parent=1 // pred_fallthru
      _
    // Predicated region
    $region26: #{tpu_custom_call.1} parent=1 // pred_check
      _
    $region27: #{tpu_custom_call.1} parent=1 // pred_check_branch
      %46 = sbr.rel (0) target = $region29
    $region28: #{tpu_custom_call.1} parent=1 // pred_region
      _
    $region29: #{tpu_custom_call.1} parent=1 // pred_fallthru
      _
    // Predicated region
    $region30: #{tpu_custom_call.1} parent=1 // pred_check
      _
    $region31: #{tpu_custom_call.1} parent=1 // pred_check_branch
      %48 = sbr.rel (0) target = $region33
    $region32: #{tpu_custom_call.1} parent=1 // pred_region
      _
    $region33: #{tpu_custom_call.1} parent=1 // pred_fallthru
      _
    // Predicated region
    $region34: #{tpu_custom_call.1} parent=1 // pred_check
      _
    $region35: #{tpu_custom_call.1} parent=1 // pred_check_branch
      %50 = sbr.rel (0) target = $region37
    $region36: #{tpu_custom_call.1} parent=1 // pred_region
      _
    $region37: #{tpu_custom_call.1} parent=1 // pred_fallthru
      _
    // Predicated region
    $region38: #{tpu_custom_call.1} parent=1 // pred_check
      _
    $region39: #{tpu_custom_call.1} parent=1 // pred_check_branch
      %52 = sbr.rel (0) target = $region41
    $region40: #{tpu_custom_call.1} parent=1 // pred_region
      _
    $region41: #{tpu_custom_call.1} parent=1 // pred_fallthru
      _
    // Predicated region
    $region42: #{tpu_custom_call.1} parent=1 // pred_check
      _
    $region43: #{tpu_custom_call.1} parent=1 // pred_check_branch
      %54 = sbr.rel (0) target = $region45
    $region44: #{tpu_custom_call.1} parent=1 // pred_region
      _
    $region45: #{tpu_custom_call.1} parent=1 // pred_fallthru
      _
    // Predicated region
    $region46: #{tpu_custom_call.1} parent=1 // pred_check
      _
    $region47: #{tpu_custom_call.1} parent=1 // pred_check_branch
      %56 = sbr.rel (0) target = $region49
    $region48: #{tpu_custom_call.1} parent=1 // pred_region
      _
    $region49: #{tpu_custom_call.1} parent=1 // pred_fallthru
      _
    // Predicated region
    $region50: #{tpu_custom_call.1} parent=1 // pred_check
      _
    $region51: #{tpu_custom_call.1} parent=1 // pred_check_branch
      %58 = sbr.rel (0) target = $region53
    $region52: #{tpu_custom_call.1} parent=1 // pred_region
      _
    $region53: #{tpu_custom_call.1} parent=1 // pred_fallthru
      _
    // Predicated region
    $region54: #{tpu_custom_call.1} parent=1 // pred_check
      _
    $region55: #{tpu_custom_call.1} parent=1 // pred_check_branch
      %60 = sbr.rel (0) target = $region57
    $region56: #{tpu_custom_call.1} parent=1 // pred_region
      %61 = dma.done [#allocation4], 512
    $region57: #{tpu_custom_call.1} parent=1 // pred_fallthru
      _
    %v62 = vld [vmem:[#allocation3] sm:$0xff]
    %v63 = vld [vmem:[#allocation3 + $0x8] sm:$0xff]
    %v64 = vld [vmem:[#allocation3 + $0x10] sm:$0xff]
    %v65 = vld [vmem:[#allocation3 + $0x18] sm:$0xff]
    %v66 = vld [vmem:[%s1] sm:$0x1]
    %v67 = vld [vmem:[%s2] sm:$0x1]
    %vm68 = vcmask 261120
    %v69 = vsel %vm68, %v62, 0.0
    %70 = vadd.xlane.f32.xlu0 %v69
    %v71 = vpop.xlane.xlu0 %70
    %v72 = vsel %vm68, %v63, 0.0
    %73 = vadd.xlane.f32.xlu0 %v72
    %v74 = vpop.xlane.xlu0 %73
    %v75 = vsel %vm68, %v64, 0.0
    %76 = vadd.xlane.f32.xlu0 %v75
    %v77 = vpop.xlane.xlu0 %76
    %v78 = vsel %vm68, %v65, 0.0
    %79 = vadd.xlane.f32.xlu0 %v78
    %v80 = vpop.xlane.xlu0 %79
    %v81 = vrcp.pop 32.0
    %v82 = vmul.f32 %v71, %v81
    %v83 = vmul.f32 %v74, %v81
    %v84 = vmul.f32 %v77, %v81
    %v85 = vmul.f32 %v80, %v81
    %v86 = vsub.f32 %v62, %v82
    %v87 = vsub.f32 %v63, %v83
    %v88 = vsub.f32 %v64, %v84
    %v89 = vsub.f32 %v65, %v85
    %v90 = vmul.f32 %v86, %v86
    %v91 = vmul.f32 %v87, %v87
    %v92 = vmul.f32 %v88, %v88
    %v93 = vmul.f32 %v89, %v89
    %v94 = vsel %vm68, %v90, 0.0
    %95 = vadd.xlane.f32.xlu0 %v94
    %v96 = vpop.xlane.xlu0 %95
    %v97 = vsel %vm68, %v91, 0.0
    %98 = vadd.xlane.f32.xlu0 %v97
    %v99 = vpop.xlane.xlu0 %98
    %v100 = vsel %vm68, %v92, 0.0
    %101 = vadd.xlane.f32.xlu0 %v100
    %v102 = vpop.xlane.xlu0 %101
    %v103 = vsel %vm68, %v93, 0.0
    %104 = vadd.xlane.f32.xlu0 %v103
    %v105 = vpop.xlane.xlu0 %104
    %v106 = vmul.f32 %v96, %v81
    %v107 = vmul.f32 %v99, %v81
    %v108 = vmul.f32 %v102, %v81
    %v109 = vmul.f32 %v105, %v81
    %v110 = vadd.f32 %v106, 1e-06
    %v111 = vadd.f32 %v107, 1e-06
    %v112 = vadd.f32 %v108, 1e-06
    %v113 = vadd.f32 %v109, 1e-06
    %v114 = vrsqrt.pop %v110
    %v115 = vrsqrt.pop %v111
    %v116 = vrsqrt.pop %v112
    %v117 = vrsqrt.pop %v113
    %v118 = vmul.f32 %v86, %v114
    %v119 = vmul.f32 %v87, %v115
    %v120 = vmul.f32 %v88, %v116
    %v121 = vmul.f32 %v89, %v117
    %v123 = vlaneseq
    %v124 = vshrl.u32 %v123, 7
    %v125 = vsub.s32 0, %v124
    %v126 = vrot.slane %v66, %v125
    %v128 = vmul.f32 %v118, %v126
    %v129 = vmul.f32 %v119, %v126
    %v130 = vmul.f32 %v120, %v126
    %v131 = vmul.f32 %v121, %v126
    %v133 = vlaneseq
    %v134 = vshrl.u32 %v133, 7
    %v135 = vsub.s32 0, %v134
    %v136 = vrot.slane %v67, %v135
    %v138 = vadd.f32 %v128, %v136
    %v139 = vadd.f32 %v129, %v136
    %v140 = vadd.f32 %v130, %v136
    %v141 = vadd.f32 %v131, %v136
    %v142 = vld [vmem:[%s3] sm:$0xff]
    %v143 = vld [vmem:[%s3 + $0x8] sm:$0xff]
    %v144 = vld [vmem:[%s3 + $0x10] sm:$0xff]
    %v145 = vld [vmem:[%s3 + $0x18] sm:$0xff]
    %v146 = vld [vmem:[%s3 + $0x20] sm:$0xff]
    %v147 = vld [vmem:[%s3 + $0x28] sm:$0xff]
    %v148 = vld [vmem:[%s3 + $0x30] sm:$0xff]
    %v149 = vld [vmem:[%s3 + $0x38] sm:$0xff]
    %v150 = vld [vmem:[%s3 + $0x40] sm:$0xff]
    %v151 = vld [vmem:[%s3 + $0x48] sm:$0xff]
    %v152 = vld [vmem:[%s3 + $0x50] sm:$0xff]
    %v153 = vld [vmem:[%s3 + $0x58] sm:$0xff]
    %v155 = vsel %vm68, %v138, 0
    %v158 = vsel %vm68, %v139, 0
    %v161 = vsel %vm68, %v140, 0
    %v164 = vsel %vm68, %v141, 0
    %166 = vmatprep.subr.mxu0 %v143
    %167 = vmatpush1.msra.mxu0 %v142
    %168 = vmatprep.subr.mxu0 %v146
    %169 = vmatpush1.msra.mxu0 %v145
    %170 = vmatprep.subr.mxu0 %v149
    %171 = vmatpush1.msra.mxu0 %v148
    %172 = vmatprep.subr.mxu0 %v152
    %173 = vmatpush1.msra.mxu0 %v151
    %174 = vmatprep.subr.mxu0 0.0
    %175 = vmatpush1.msra.mxu0 0.0
    %176 = vmatprep.subr.mxu0 0.0
    %177 = vmatpush1.msra.mxu0 0.0
    %178 = vmatprep.subr.mxu0 0.0
    %179 = vmatpush1.msra.mxu0 0.0
    %180 = vmatprep.subr.mxu0 0.0
    %181 = vmatpush1.msra.mxu0 0.0
    %182 = vmatprep.subr.mxu0 0.0
    %183 = vmatpush1.msra.mxu0 0.0
    %184 = vmatprep.subr.mxu0 0.0
    %185 = vmatpush1.msra.mxu0 0.0
    %186 = vmatprep.subr.mxu0 0.0
    %187 = vmatpush1.msra.mxu0 0.0
    %188 = vmatprep.subr.mxu0 0.0
    %189 = vmatpush1.msra.mxu0 0.0
    %190 = vmatprep.subr.mxu0 0.0
    %191 = vmatpush1.msra.mxu0 0.0
    %192 = vmatprep.subr.mxu0 0.0
    %193 = vmatpush1.msra.mxu0 0.0
    %194 = vmatprep.subr.mxu0 0.0
    %195 = vmatpush1.msra.mxu0 0.0
    %196 = vmatprep.subr.mxu0 0.0
    %197 = vmatpush1.msra.mxu0 0.0
    %198 = vmatprep.subr.mxu0 0.0
    %199 = vmatpush1.msra.mxu0 0.0
    %200 = vmatprep.subr.mxu0 0.0
    %201 = vmatpush1.msra.mxu0 0.0
    %202 = vmatprep.subr.mxu0 0.0
    %203 = vmatpush1.msra.mxu0 0.0
    %204 = vmatprep.subr.mxu0 0.0
    %205 = vmatpush1.msra.mxu0 0.0
    %206 = vmatprep.subr.mxu0 0.0
    %207 = vmatpush1.msra.mxu0 0.0
    %208 = vmatprep.subr.mxu0 0.0
    %209 = vmatpush1.msra.mxu0 0.0
    %210 = vmatprep.subr.mxu0 0.0
    %211 = vmatpush1.msra.mxu0 0.0
    %212 = vmatprep.subr.mxu0 0.0
    %213 = vmatpush1.msra.mxu0 0.0
    %214 = vmatprep.subr.mxu0 0.0
    %215 = vmatpush1.msra.mxu0 0.0
    %216 = vmatprep.subr.mxu0 0.0
    %217 = vmatpush1.msra.mxu0 0.0
    %218 = vmatprep.subr.mxu0 0.0
    %219 = vmatpush1.msra.mxu0 0.0
    %220 = vmatprep.subr.mxu0 0.0
    %221 = vmatpush1.msra.mxu0 0.0
    %222 = vmatprep.subr.mxu0 0.0
    %223 = vmatpush1.msra.mxu0 0.0
    %224 = vmatprep.subr.mxu0 0.0
    %225 = vmatpush1.msra.mxu0 0.0
    %226 = vmatprep.subr.mxu0 0.0
    %227 = vmatpush1.msra.mxu0 0.0
    %228 = vmatprep.subr.mxu0 0.0
    %229 = vmatpush1.msra.mxu0 0.0
    %230 = vmatprep.mubr.f32.mxu0 0.0
    %231 = vmatmul.mubr.f32.gmra.mrb[0].mxu0 %v155
    %v232 = vpop.f32.mrb[0].mxu0
    %v233 = vadd.f32 0.0, %v232
    %v234 = vpop.f32.mrb[0].mxu0
    %v235 = vadd.f32 0.0, %v234
    %236 = vmatprep.mubr.f32.mxu0 0.0
    %237 = vmatmul.mubr.f32.gmra.mrb[0].mxu0 %v158
    %v238 = vpop.f32.mrb[0].mxu0
    %v239 = vadd.f32 0.0, %v238
    %v240 = vpop.f32.mrb[0].mxu0
    %v241 = vadd.f32 0.0, %v240
    %242 = vmatprep.mubr.f32.mxu0 0.0
    %243 = vmatmul.mubr.f32.gmra.mrb[0].mxu0 %v161
    %v244 = vpop.f32.mrb[0].mxu0
    %v245 = vadd.f32 0.0, %v244
    %v246 = vpop.f32.mrb[0].mxu0
    %v247 = vadd.f32 0.0, %v246
    %248 = vmatprep.mubr.f32.mxu0 0.0
    %249 = vmatmul.mubr.f32.gmra.mrb[0].mxu0 %v164
    %v250 = vpop.f32.mrb[0].mxu0
    %v251 = vadd.f32 0.0, %v250
    %v252 = vpop.f32.mrb[0].mxu0
    %v253 = vadd.f32 0.0, %v252
    %254 = vdwg.mxu0
    %255 = vmatprep.subr.mxu0 0.0
    %256 = vmatpush1.msra.mxu0 %v144
    %257 = vmatprep.subr.mxu0 0.0
    %258 = vmatpush1.msra.mxu0 %v147
    %259 = vmatprep.subr.mxu0 0.0
    %260 = vmatpush1.msra.mxu0 %v150
    %261 = vmatprep.subr.mxu0 0.0
    %262 = vmatpush1.msra.mxu0 %v153
    %263 = vmatprep.subr.mxu0 0.0
    %264 = vmatpush1.msra.mxu0 0.0
    %265 = vmatprep.subr.mxu0 0.0
    %266 = vmatpush1.msra.mxu0 0.0
    %267 = vmatprep.subr.mxu0 0.0
    %268 = vmatpush1.msra.mxu0 0.0
    %269 = vmatprep.subr.mxu0 0.0
    %270 = vmatpush1.msra.mxu0 0.0
    %271 = vmatprep.subr.mxu0 0.0
    %272 = vmatpush1.msra.mxu0 0.0
    %273 = vmatprep.subr.mxu0 0.0
    %274 = vmatpush1.msra.mxu0 0.0
    %275 = vmatprep.subr.mxu0 0.0
    %276 = vmatpush1.msra.mxu0 0.0
    %277 = vmatprep.subr.mxu0 0.0
    %278 = vmatpush1.msra.mxu0 0.0
    %279 = vmatprep.subr.mxu0 0.0
    %280 = vmatpush1.msra.mxu0 0.0
    %281 = vmatprep.subr.mxu0 0.0
    %282 = vmatpush1.msra.mxu0 0.0
    %283 = vmatprep.subr.mxu0 0.0
    %284 = vmatpush1.msra.mxu0 0.0
    %285 = vmatprep.subr.mxu0 0.0
    %286 = vmatpush1.msra.mxu0 0.0
    %287 = vmatprep.subr.mxu0 0.0
    %288 = vmatpush1.msra.mxu0 0.0
    %289 = vmatprep.subr.mxu0 0.0
    %290 = vmatpush1.msra.mxu0 0.0
    %291 = vmatprep.subr.mxu0 0.0
    %292 = vmatpush1.msra.mxu0 0.0
    %293 = vmatprep.subr.mxu0 0.0
    %294 = vmatpush1.msra.mxu0 0.0
    %295 = vmatprep.subr.mxu0 0.0
    %296 = vmatpush1.msra.mxu0 0.0
    %297 = vmatprep.subr.mxu0 0.0
    %298 = vmatpush1.msra.mxu0 0.0
    %299 = vmatprep.subr.mxu0 0.0
    %300 = vmatpush1.msra.mxu0 0.0
    %301 = vmatprep.subr.mxu0 0.0
    %302 = vmatpush1.msra.mxu0 0.0
    %303 = vmatprep.subr.mxu0 0.0
    %304 = vmatpush1.msra.mxu0 0.0
    %305 = vmatprep.subr.mxu0 0.0
    %306 = vmatpush1.msra.mxu0 0.0
    %307 = vmatprep.subr.mxu0 0.0
    %308 = vmatpush1.msra.mxu0 0.0
    %309 = vmatprep.subr.mxu0 0.0
    %310 = vmatpush1.msra.mxu0 0.0
    %311 = vmatprep.subr.mxu0 0.0
    %312 = vmatpush1.msra.mxu0 0.0
    %313 = vmatprep.subr.mxu0 0.0
    %314 = vmatpush1.msra.mxu0 0.0
    %315 = vmatprep.subr.mxu0 0.0
    %316 = vmatpush1.msra.mxu0 0.0
    %317 = vmatprep.subr.mxu0 0.0
    %318 = vmatpush1.msra.mxu0 0.0
    %319 = vmatprep.mubr.f32.mxu0 0.0
    %320 = vmatmul.mubr.f32.gmra.mrb[0].mxu0 %v155
    %v321 = vpop.f32.mrb[0].mxu0
    %v322 = vadd.f32 0.0, %v321
    %v323 = vpop.f32.mrb[0].mxu0
    %324 = vmatprep.mubr.f32.mxu0 0.0
    %325 = vmatmul.mubr.f32.gmra.mrb[0].mxu0 %v158
    %v326 = vpop.f32.mrb[0].mxu0
    %v327 = vadd.f32 0.0, %v326
    %v328 = vpop.f32.mrb[0].mxu0
    %329 = vmatprep.mubr.f32.mxu0 0.0
    %330 = vmatmul.mubr.f32.gmra.mrb[0].mxu0 %v161
    %v331 = vpop.f32.mrb[0].mxu0
    %v332 = vadd.f32 0.0, %v331
    %v333 = vpop.f32.mrb[0].mxu0
    %334 = vmatprep.mubr.f32.mxu0 0.0
    %335 = vmatmul.mubr.f32.gmra.mrb[0].mxu0 %v164
    %v336 = vpop.f32.mrb[0].mxu0
    %v337 = vadd.f32 0.0, %v336
    %v338 = vpop.f32.mrb[0].mxu0
    %339 = vdwg.mxu0
    %340 = vxpose.xlu0.b32.start [1/16] %v233, 128
    %341 = vxpose.xlu0.b32.cont [2/16] 0.0, 128
    %342 = vxpose.xlu0.b32.cont [3/16] 0.0, 128
    %343 = vxpose.xlu0.b32.cont [4/16] 0.0, 128
    %344 = vxpose.xlu0.b32.cont [5/16] 0.0, 128
    %345 = vxpose.xlu0.b32.cont [6/16] 0.0, 128
    %346 = vxpose.xlu0.b32.cont [7/16] 0.0, 128
    %347 = vxpose.xlu0.b32.cont [8/16] 0.0, 128
    %348 = vxpose.xlu0.b32.cont [9/16] 0.0, 128
    %349 = vxpose.xlu0.b32.cont [10/16] 0.0, 128
    %350 = vxpose.xlu0.b32.cont [11/16] 0.0, 128
    %351 = vxpose.xlu0.b32.cont [12/16] 0.0, 128
    %352 = vxpose.xlu0.b32.cont [13/16] 0.0, 128
    %353 = vxpose.xlu0.b32.cont [14/16] 0.0, 128
    %354 = vxpose.xlu0.b32.cont [15/16] 0.0, 128
    %355 = vxpose.xlu0.b32.end [16/16] 0.0, 128
    %v356 = vpop.trf.xlu0
    %v357 = vpop.trf.xlu0
    %v358 = vpop.trf.xlu0
    %v359 = vpop.trf.xlu0
    %v360 = vpop.trf.xlu0
    %v361 = vpop.trf.xlu0
    %v362 = vpop.trf.xlu0
    %v363 = vpop.trf.xlu0
    %v364 = vpop.trf.xlu0
    %v365 = vpop.trf.xlu0
    %v366 = vpop.trf.xlu0
    %v367 = vpop.trf.xlu0
    %v368 = vpop.trf.xlu0
    %v369 = vpop.trf.xlu0
    %v370 = vpop.trf.xlu0
    %v371 = vpop.trf.xlu0
    %vm372 = vcmask 64512
    %v374 = vsel %vm372, %v356, 0
    %v377 = vsel %vm372, %v357, 0
    %v380 = vsel %vm372, %v358, 0
    %v383 = vsel %vm372, %v359, 0
    %v386 = vsel %vm372, %v360, 0
    %v389 = vsel %vm372, %v361, 0
    %v392 = vsel %vm372, %v362, 0
    %v395 = vsel %vm372, %v363, 0
    %v398 = vsel %vm372, %v364, 0
    %v401 = vsel %vm372, %v365, 0
    %v404 = vsel %vm372, %v366, 0
    %v407 = vsel %vm372, %v367, 0
    %v410 = vsel %vm372, %v368, 0
    %v413 = vsel %vm372, %v369, 0
    %v416 = vsel %vm372, %v370, 0
    %v419 = vsel %vm372, %v371, 0
    %421 = vmatprep.subr.mxu0 0.0
    %422 = vmatpush1.msra.mxu0 %v235
    %423 = vmatprep.subr.mxu0 0.0
    %424 = vmatpush1.msra.mxu0 0.0
    %425 = vmatprep.subr.mxu0 0.0
    %426 = vmatpush1.msra.mxu0 0.0
    %427 = vmatprep.subr.mxu0 0.0
    %428 = vmatpush1.msra.mxu0 0.0
    %429 = vmatprep.subr.mxu0 0.0
    %430 = vmatpush1.msra.mxu0 0.0
    %431 = vmatprep.subr.mxu0 0.0
    %432 = vmatpush1.msra.mxu0 0.0
    %433 = vmatprep.subr.mxu0 0.0
    %434 = vmatpush1.msra.mxu0 0.0
    %435 = vmatprep.subr.mxu0 0.0
    %436 = vmatpush1.msra.mxu0 0.0
    %437 = vmatprep.subr.mxu0 0.0
    %438 = vmatpush1.msra.mxu0 0.0
    %439 = vmatprep.subr.mxu0 0.0
    %440 = vmatpush1.msra.mxu0 0.0
    %441 = vmatprep.subr.mxu0 0.0
    %442 = vmatpush1.msra.mxu0 0.0
    %443 = vmatprep.subr.mxu0 0.0
    %444 = vmatpush1.msra.mxu0 0.0
    %445 = vmatprep.subr.mxu0 0.0
    %446 = vmatpush1.msra.mxu0 0.0
    %447 = vmatprep.subr.mxu0 0.0
    %448 = vmatpush1.msra.mxu0 0.0
    %449 = vmatprep.subr.mxu0 0.0
    %450 = vmatpush1.msra.mxu0 0.0
    %451 = vmatprep.subr.mxu0 0.0
    %452 = vmatpush1.msra.mxu0 0.0
    %453 = vmatprep.subr.mxu0 0.0
    %454 = vmatpush1.msra.mxu0 0.0
    %455 = vmatprep.subr.mxu0 0.0
    %456 = vmatpush1.msra.mxu0 0.0
    %457 = vmatprep.subr.mxu0 0.0
    %458 = vmatpush1.msra.mxu0 0.0
    %459 = vmatprep.subr.mxu0 0.0
    %460 = vmatpush1.msra.mxu0 0.0
    %461 = vmatprep.subr.mxu0 0.0
    %462 = vmatpush1.msra.mxu0 0.0
    %463 = vmatprep.subr.mxu0 0.0
    %464 = vmatpush1.msra.mxu0 0.0
    %465 = vmatprep.subr.mxu0 0.0
    %466 = vmatpush1.msra.mxu0 0.0
    %467 = vmatprep.subr.mxu0 0.0
    %468 = vmatpush1.msra.mxu0 0.0
    %469 = vmatprep.subr.mxu0 0.0
    %470 = vmatpush1.msra.mxu0 0.0
    %471 = vmatprep.subr.mxu0 0.0
    %472 = vmatpush1.msra.mxu0 0.0
    %473 = vmatprep.subr.mxu0 0.0
    %474 = vmatpush1.msra.mxu0 0.0
    %475 = vmatprep.subr.mxu0 0.0
    %476 = vmatpush1.msra.mxu0 0.0
    %477 = vmatprep.subr.mxu0 0.0
    %478 = vmatpush1.msra.mxu0 0.0
    %479 = vmatprep.subr.mxu0 0.0
    %480 = vmatpush1.msra.mxu0 0.0
    %481 = vmatprep.subr.mxu0 0.0
    %482 = vmatpush1.msra.mxu0 0.0
    %483 = vmatprep.subr.mxu0 0.0
    %484 = vmatpush1.msra.mxu0 0.0
    %485 = vmatprep.mubr.f32.mxu0 0.0
    %486 = vmatmul.mubr.f32.gmra.mrb[0].mxu0 %v374
    %v487 = vpop.f32.mrb[0].mxu0
    %v488 = vadd.f32 0.0, %v487
    %v489 = vpop.f32.mrb[0].mxu0
    %490 = vmatprep.mubr.f32.mxu0 0.0
    %491 = vmatmul.mubr.f32.gmra.mrb[0].mxu0 %v377
    %v492 = vpop.f32.mrb[0].mxu0
    %v493 = vadd.f32 0.0, %v492
    %v494 = vpop.f32.mrb[0].mxu0
    %495 = vmatprep.mubr.f32.mxu0 0.0
    %496 = vmatmul.mubr.f32.gmra.mrb[0].mxu0 %v380
    %v497 = vpop.f32.mrb[0].mxu0
    %v498 = vadd.f32 0.0, %v497
    %v499 = vpop.f32.mrb[0].mxu0
    %500 = vmatprep.mubr.f32.mxu0 0.0
    %501 = vmatmul.mubr.f32.gmra.mrb[0].mxu0 %v383
    %v502 = vpop.f32.mrb[0].mxu0
    %v503 = vadd.f32 0.0, %v502
    %v504 = vpop.f32.mrb[0].mxu0
    %505 = vmatprep.mubr.f32.mxu0 0.0
    %506 = vmatmul.mubr.f32.gmra.mrb[0].mxu0 %v386
    %v507 = vpop.f32.mrb[0].mxu0
    %v508 = vadd.f32 0.0, %v507
    %v509 = vpop.f32.mrb[0].mxu0
    %510 = vmatprep.mubr.f32.mxu0 0.0
    %511 = vmatmul.mubr.f32.gmra.mrb[0].mxu0 %v389
    %v512 = vpop.f32.mrb[0].mxu0
    %v513 = vadd.f32 0.0, %v512
    %v514 = vpop.f32.mrb[0].mxu0
    %515 = vmatprep.mubr.f32.mxu0 0.0
    %516 = vmatmul.mubr.f32.gmra.mrb[0].mxu0 %v392
    %v517 = vpop.f32.mrb[0].mxu0
    %v518 = vadd.f32 0.0, %v517
    %v519 = vpop.f32.mrb[0].mxu0
    %520 = vmatprep.mubr.f32.mxu0 0.0
    %521 = vmatmul.mubr.f32.gmra.mrb[0].mxu0 %v395
    %v522 = vpop.f32.mrb[0].mxu0
    %v523 = vadd.f32 0.0, %v522
    %v524 = vpop.f32.mrb[0].mxu0
    %525 = vmatprep.mubr.f32.mxu0 0.0
    %526 = vmatmul.mubr.f32.gmra.mrb[0].mxu0 %v398
    %v527 = vpop.f32.mrb[0].mxu0
    %v528 = vadd.f32 0.0, %v527
    %v529 = vpop.f32.mrb[0].mxu0
    %530 = vmatprep.mubr.f32.mxu0 0.0
    %531 = vmatmul.mubr.f32.gmra.mrb[0].mxu0 %v401
    %v532 = vpop.f32.mrb[0].mxu0
    %v533 = vadd.f32 0.0, %v532
    %v534 = vpop.f32.mrb[0].mxu0
    %535 = vmatprep.mubr.f32.mxu0 0.0
    %536 = vmatmul.mubr.f32.gmra.mrb[0].mxu0 %v404
    %v537 = vpop.f32.mrb[0].mxu0
    %v538 = vadd.f32 0.0, %v537
    %v539 = vpop.f32.mrb[0].mxu0
    %540 = vmatprep.mubr.f32.mxu0 0.0
    %541 = vmatmul.mubr.f32.gmra.mrb[0].mxu0 %v407
    %v542 = vpop.f32.mrb[0].mxu0
    %v543 = vadd.f32 0.0, %v542
    %v544 = vpop.f32.mrb[0].mxu0
    %545 = vmatprep.mubr.f32.mxu0 0.0
    %546 = vmatmul.mubr.f32.gmra.mrb[0].mxu0 %v410
    %v547 = vpop.f32.mrb[0].mxu0
    %v548 = vadd.f32 0.0, %v547
    %v549 = vpop.f32.mrb[0].mxu0
    %550 = vmatprep.mubr.f32.mxu0 0.0
    %551 = vmatmul.mubr.f32.gmra.mrb[0].mxu0 %v413
    %v552 = vpop.f32.mrb[0].mxu0
    %v553 = vadd.f32 0.0, %v552
    %v554 = vpop.f32.mrb[0].mxu0
    %555 = vmatprep.mubr.f32.mxu0 0.0
    %556 = vmatmul.mubr.f32.gmra.mrb[0].mxu0 %v416
    %v557 = vpop.f32.mrb[0].mxu0
    %v558 = vadd.f32 0.0, %v557
    %v559 = vpop.f32.mrb[0].mxu0
    %560 = vmatprep.mubr.f32.mxu0 0.0
    %561 = vmatmul.mubr.f32.gmra.mrb[0].mxu0 %v419
    %v562 = vpop.f32.mrb[0].mxu0
    %v563 = vadd.f32 0.0, %v562
    %v564 = vpop.f32.mrb[0].mxu0
    %565 = vdwg.mxu0
    %570 = vrot.lane.b32.xlu0 %v508, 96
    %v571 = vpop.permute.xlu0 %570
    %572 = vrot.lane.b32.xlu0 %v513, 96
    %v573 = vpop.permute.xlu0 %572
    %574 = vrot.lane.b32.xlu0 %v518, 96
    %v575 = vpop.permute.xlu0 %574
    %576 = vrot.lane.b32.xlu0 %v523, 96
    %v577 = vpop.permute.xlu0 %576
    %586 = vrot.lane.b32.xlu0 %v528, 64
    %v587 = vpop.permute.xlu0 %586
    %588 = vrot.lane.b32.xlu0 %v533, 64
    %v589 = vpop.permute.xlu0 %588
    %590 = vrot.lane.b32.xlu0 %v538, 64
    %v591 = vpop.permute.xlu0 %590
    %592 = vrot.lane.b32.xlu0 %v543, 64
    %v593 = vpop.permute.xlu0 %592
    %602 = vrot.lane.b32.xlu0 %v548, 32
    %v603 = vpop.permute.xlu0 %602
    %604 = vrot.lane.b32.xlu0 %v553, 32
    %v605 = vpop.permute.xlu0 %604
    %606 = vrot.lane.b32.xlu0 %v558, 32
    %v607 = vpop.permute.xlu0 %606
    %608 = vrot.lane.b32.xlu0 %v563, 32
    %v609 = vpop.permute.xlu0 %608
    %v614 = vmul.f32 %v488, 0.17677669
    %v615 = vmul.f32 %v493, 0.17677669
    %v616 = vmul.f32 %v498, 0.17677669
    %v617 = vmul.f32 %v503, 0.17677669
    %v618 = vmul.f32 %v571, 0.17677669
    %v619 = vmul.f32 %v573, 0.17677669
    %v620 = vmul.f32 %v575, 0.17677669
    %v621 = vmul.f32 %v577, 0.17677669
    %v622 = vmul.f32 %v587, 0.17677669
    %v623 = vmul.f32 %v589, 0.17677669
    %v624 = vmul.f32 %v591, 0.17677669
    %v625 = vmul.f32 %v593, 0.17677669
    %v626 = vmul.f32 %v603, 0.17677669
    %v627 = vmul.f32 %v605, 0.17677669
    %v628 = vmul.f32 %v607, 0.17677669
    %v629 = vmul.f32 %v609, 0.17677669
    %v630 = vsel %vm68, %v614, 0.0
    %631 = vadd.xlane.f32.xlu0 %v630
    %v632 = vpop.xlane.xlu0 %631
    %v633 = vsel %vm68, %v615, 0.0
    %634 = vadd.xlane.f32.xlu0 %v633
    %v635 = vpop.xlane.xlu0 %634
    %v636 = vsel %vm68, %v616, 0.0
    %637 = vadd.xlane.f32.xlu0 %v636
    %v638 = vpop.xlane.xlu0 %637
    %v639 = vsel %vm68, %v617, 0.0
    %640 = vadd.xlane.f32.xlu0 %v639
    %v641 = vpop.xlane.xlu0 %640
    %v642 = vsel %vm68, %v618, 0.0
    %643 = vadd.xlane.f32.xlu0 %v642
    %v644 = vpop.xlane.xlu0 %643
    %v645 = vsel %vm68, %v619, 0.0
    %646 = vadd.xlane.f32.xlu0 %v645
    %v647 = vpop.xlane.xlu0 %646
    %v648 = vsel %vm68, %v620, 0.0
    %649 = vadd.xlane.f32.xlu0 %v648
    %v650 = vpop.xlane.xlu0 %649
    %v651 = vsel %vm68, %v621, 0.0
    %652 = vadd.xlane.f32.xlu0 %v651
    %v653 = vpop.xlane.xlu0 %652
    %v654 = vsel %vm68, %v622, 0.0
    %655 = vadd.xlane.f32.xlu0 %v654
    %v656 = vpop.xlane.xlu0 %655
    %v657 = vsel %vm68, %v623, 0.0
    %658 = vadd.xlane.f32.xlu0 %v657
    %v659 = vpop.xlane.xlu0 %658
    %v660 = vsel %vm68, %v624, 0.0
    %661 = vadd.xlane.f32.xlu0 %v660
    %v662 = vpop.xlane.xlu0 %661
    %v663 = vsel %vm68, %v625, 0.0
    %664 = vadd.xlane.f32.xlu0 %v663
    %v665 = vpop.xlane.xlu0 %664
    %v666 = vsel %vm68, %v626, 0.0
    %667 = vadd.xlane.f32.xlu0 %v666
    %v668 = vpop.xlane.xlu0 %667
    %v669 = vsel %vm68, %v627, 0.0
    %670 = vadd.xlane.f32.xlu0 %v669
    %v671 = vpop.xlane.xlu0 %670
    %v672 = vsel %vm68, %v628, 0.0
    %673 = vadd.xlane.f32.xlu0 %v672
    %v674 = vpop.xlane.xlu0 %673
    %v675 = vsel %vm68, %v629, 0.0
    %676 = vadd.xlane.f32.xlu0 %v675
    %v677 = vpop.xlane.xlu0 %676
    %v678 = vmul.f32 %v632, %v81
    %v679 = vmul.f32 %v635, %v81
    %v680 = vmul.f32 %v638, %v81
    %v681 = vmul.f32 %v641, %v81
    %v682 = vmul.f32 %v644, %v81
    %v683 = vmul.f32 %v647, %v81
    %v684 = vmul.f32 %v650, %v81
    %v685 = vmul.f32 %v653, %v81
    %v686 = vmul.f32 %v656, %v81
    %v687 = vmul.f32 %v659, %v81
    %v688 = vmul.f32 %v662, %v81
    %v689 = vmul.f32 %v665, %v81
    %v690 = vmul.f32 %v668, %v81
    %v691 = vmul.f32 %v671, %v81
    %v692 = vmul.f32 %v674, %v81
    %v693 = vmul.f32 %v677, %v81
    %v694 = vadd.f32 %v678, %v679
    %v695 = vadd.f32 %v694, %v680
    %v696 = vadd.f32 %v695, %v681
    %v697 = vrot.slane %v696, 4
    %v698 = vadd.f32 %v696, %v697
    %v699 = vrot.slane %v698, 2
    %v700 = vadd.f32 %v698, %v699
    %v701 = vrot.slane %v700, 1
    %v702 = vadd.f32 %v700, %v701
    %v703 = vadd.f32 %v682, %v683
    %v704 = vadd.f32 %v703, %v684
    %v705 = vadd.f32 %v704, %v685
    %v706 = vrot.slane %v705, 4
    %v707 = vadd.f32 %v705, %v706
    %v708 = vrot.slane %v707, 2
    %v709 = vadd.f32 %v707, %v708
    %v710 = vrot.slane %v709, 1
    %v711 = vadd.f32 %v709, %v710
    %v712 = vadd.f32 %v686, %v687
    %v713 = vadd.f32 %v712, %v688
    %v714 = vadd.f32 %v713, %v689
    %v715 = vrot.slane %v714, 4
    %v716 = vadd.f32 %v714, %v715
    %v717 = vrot.slane %v716, 2
    %v718 = vadd.f32 %v716, %v717
    %v719 = vrot.slane %v718, 1
    %v720 = vadd.f32 %v718, %v719
    %v721 = vadd.f32 %v690, %v691
    %v722 = vadd.f32 %v721, %v692
    %v723 = vadd.f32 %v722, %v693
    %v724 = vrot.slane %v723, 4
    %v725 = vadd.f32 %v723, %v724
    %v726 = vrot.slane %v725, 2
    %v727 = vadd.f32 %v725, %v726
    %v728 = vrot.slane %v727, 1
    %v729 = vadd.f32 %v727, %v728
    %v730 = vmul.f32 %v702, %v81
    %v731 = vmul.f32 %v711, %v81
    %v732 = vmul.f32 %v720, %v81
    %v733 = vmul.f32 %v729, %v81
    %v734 = vsub.f32 %v614, %v730
    %v735 = vsub.f32 %v615, %v730
    %v736 = vsub.f32 %v616, %v730
    %v737 = vsub.f32 %v617, %v730
    %v738 = vsub.f32 %v618, %v731
    %v739 = vsub.f32 %v619, %v731
    %v740 = vsub.f32 %v620, %v731
    %v741 = vsub.f32 %v621, %v731
    %v742 = vsub.f32 %v622, %v732
    %v743 = vsub.f32 %v623, %v732
    %v744 = vsub.f32 %v624, %v732
    %v745 = vsub.f32 %v625, %v732
    %v746 = vsub.f32 %v626, %v733
    %v747 = vsub.f32 %v627, %v733
    %v748 = vsub.f32 %v628, %v733
    %v749 = vsub.f32 %v629, %v733
    %v750 = vmul.f32 %v734, %v734
    %v751 = vmul.f32 %v735, %v735
    %v752 = vmul.f32 %v736, %v736
    %v753 = vmul.f32 %v737, %v737
    %v754 = vmul.f32 %v738, %v738
    %v755 = vmul.f32 %v739, %v739
    %v756 = vmul.f32 %v740, %v740
    %v757 = vmul.f32 %v741, %v741
    %v758 = vmul.f32 %v742, %v742
    %v759 = vmul.f32 %v743, %v743
    %v760 = vmul.f32 %v744, %v744
    %v761 = vmul.f32 %v745, %v745
    %v762 = vmul.f32 %v746, %v746
    %v763 = vmul.f32 %v747, %v747
    %v764 = vmul.f32 %v748, %v748
    %v765 = vmul.f32 %v749, %v749
    %v766 = vsel %vm68, %v750, 0.0
    %767 = vadd.xlane.f32.xlu0 %v766
    %v768 = vpop.xlane.xlu0 %767
    %v769 = vsel %vm68, %v751, 0.0
    %770 = vadd.xlane.f32.xlu0 %v769
    %v771 = vpop.xlane.xlu0 %770
    %v772 = vsel %vm68, %v752, 0.0
    %773 = vadd.xlane.f32.xlu0 %v772
    %v774 = vpop.xlane.xlu0 %773
    %v775 = vsel %vm68, %v753, 0.0
    %776 = vadd.xlane.f32.xlu0 %v775
    %v777 = vpop.xlane.xlu0 %776
    %v778 = vsel %vm68, %v754, 0.0
    %779 = vadd.xlane.f32.xlu0 %v778
    %v780 = vpop.xlane.xlu0 %779
    %v781 = vsel %vm68, %v755, 0.0
    %782 = vadd.xlane.f32.xlu0 %v781
    %v783 = vpop.xlane.xlu0 %782
    %v784 = vsel %vm68, %v756, 0.0
    %785 = vadd.xlane.f32.xlu0 %v784
    %v786 = vpop.xlane.xlu0 %785
    %v787 = vsel %vm68, %v757, 0.0
    %788 = vadd.xlane.f32.xlu0 %v787
    %v789 = vpop.xlane.xlu0 %788
    %v790 = vsel %vm68, %v758, 0.0
    %791 = vadd.xlane.f32.xlu0 %v790
    %v792 = vpop.xlane.xlu0 %791
    %v793 = vsel %vm68, %v759, 0.0
    %794 = vadd.xlane.f32.xlu0 %v793
    %v795 = vpop.xlane.xlu0 %794
    %v796 = vsel %vm68, %v760, 0.0
    %797 = vadd.xlane.f32.xlu0 %v796
    %v798 = vpop.xlane.xlu0 %797
    %v799 = vsel %vm68, %v761, 0.0
    %800 = vadd.xlane.f32.xlu0 %v799
    %v801 = vpop.xlane.xlu0 %800
    %v802 = vsel %vm68, %v762, 0.0
    %803 = vadd.xlane.f32.xlu0 %v802
    %v804 = vpop.xlane.xlu0 %803
    %v805 = vsel %vm68, %v763, 0.0
    %806 = vadd.xlane.f32.xlu0 %v805
    %v807 = vpop.xlane.xlu0 %806
    %v808 = vsel %vm68, %v764, 0.0
    %809 = vadd.xlane.f32.xlu0 %v808
    %v810 = vpop.xlane.xlu0 %809
    %v811 = vsel %vm68, %v765, 0.0
    %812 = vadd.xlane.f32.xlu0 %v811
    %v813 = vpop.xlane.xlu0 %812
    %v814 = vmul.f32 %v768, %v81
    %v815 = vmul.f32 %v771, %v81
    %v816 = vmul.f32 %v774, %v81
    %v817 = vmul.f32 %v777, %v81
    %v818 = vmul.f32 %v780, %v81
    %v819 = vmul.f32 %v783, %v81
    %v820 = vmul.f32 %v786, %v81
    %v821 = vmul.f32 %v789, %v81
    %v822 = vmul.f32 %v792, %v81
    %v823 = vmul.f32 %v795, %v81
    %v824 = vmul.f32 %v798, %v81
    %v825 = vmul.f32 %v801, %v81
    %v826 = vmul.f32 %v804, %v81
    %v827 = vmul.f32 %v807, %v81
    %v828 = vmul.f32 %v810, %v81
    %v829 = vmul.f32 %v813, %v81
    %v830 = vadd.f32 %v814, %v815
    %v831 = vadd.f32 %v830, %v816
    %v832 = vadd.f32 %v831, %v817
    %v833 = vrot.slane %v832, 4
    %v834 = vadd.f32 %v832, %v833
    %v835 = vrot.slane %v834, 2
    %v836 = vadd.f32 %v834, %v835
    %v837 = vrot.slane %v836, 1
    %v838 = vadd.f32 %v836, %v837
    %v839 = vadd.f32 %v818, %v819
    %v840 = vadd.f32 %v839, %v820
    %v841 = vadd.f32 %v840, %v821
    %v842 = vrot.slane %v841, 4
    %v843 = vadd.f32 %v841, %v842
    %v844 = vrot.slane %v843, 2
    %v845 = vadd.f32 %v843, %v844
    %v846 = vrot.slane %v845, 1
    %v847 = vadd.f32 %v845, %v846
    %v848 = vadd.f32 %v822, %v823
    %v849 = vadd.f32 %v848, %v824
    %v850 = vadd.f32 %v849, %v825
    %v851 = vrot.slane %v850, 4
    %v852 = vadd.f32 %v850, %v851
    %v853 = vrot.slane %v852, 2
    %v854 = vadd.f32 %v852, %v853
    %v855 = vrot.slane %v854, 1
    %v856 = vadd.f32 %v854, %v855
    %v857 = vadd.f32 %v826, %v827
    %v858 = vadd.f32 %v857, %v828
    %v859 = vadd.f32 %v858, %v829
    %v860 = vrot.slane %v859, 4
    %v861 = vadd.f32 %v859, %v860
    %v862 = vrot.slane %v861, 2
    %v863 = vadd.f32 %v861, %v862
    %v864 = vrot.slane %v863, 1
    %v865 = vadd.f32 %v863, %v864
    %v866 = vmul.f32 %v838, %v81
    %v867 = vmul.f32 %v847, %v81
    %v868 = vmul.f32 %v856, %v81
    %v869 = vmul.f32 %v865, %v81
    %v870 = vadd.f32 %v866, 1e-05
    %v871 = vadd.f32 %v867, 1e-05
    %v872 = vadd.f32 %v868, 1e-05
    %v873 = vadd.f32 %v869, 1e-05
    %v874 = vrsqrt.pop %v870
    %v875 = vrsqrt.pop %v871
    %v876 = vrsqrt.pop %v872
    %v877 = vrsqrt.pop %v873
    %v878 = vmul.f32 %v734, %v874
    %v879 = vmul.f32 %v735, %v874
    %v880 = vmul.f32 %v736, %v874
    %v881 = vmul.f32 %v737, %v874
    %v882 = vmul.f32 %v738, %v875
    %v883 = vmul.f32 %v739, %v875
    %v884 = vmul.f32 %v740, %v875
    %v885 = vmul.f32 %v741, %v875
    %v886 = vmul.f32 %v742, %v876
    %v887 = vmul.f32 %v743, %v876
    %v888 = vmul.f32 %v744, %v876
    %v889 = vmul.f32 %v745, %v876
    %v890 = vmul.f32 %v746, %v877
    %v891 = vmul.f32 %v747, %v877
    %v892 = vmul.f32 %v748, %v877
    %v893 = vmul.f32 %v749, %v877
    %v894 = vsel %vm68, %v878, -inf
    %895 = vmax.xlane.f32.xlu0 %v894
    %v896 = vpop.xlane.xlu0 %895
    %v897 = vsel %vm68, %v879, -inf
    %898 = vmax.xlane.f32.xlu0 %v897
    %v899 = vpop.xlane.xlu0 %898
    %v900 = vsel %vm68, %v880, -inf
    %901 = vmax.xlane.f32.xlu0 %v900
    %v902 = vpop.xlane.xlu0 %901
    %v903 = vsel %vm68, %v881, -inf
    %904 = vmax.xlane.f32.xlu0 %v903
    %v905 = vpop.xlane.xlu0 %904
    %v906 = vsel %vm68, %v882, -inf
    %907 = vmax.xlane.f32.xlu0 %v906
    %v908 = vpop.xlane.xlu0 %907
    %v909 = vsel %vm68, %v883, -inf
    %910 = vmax.xlane.f32.xlu0 %v909
    %v911 = vpop.xlane.xlu0 %910
    %v912 = vsel %vm68, %v884, -inf
    %913 = vmax.xlane.f32.xlu0 %v912
    %v914 = vpop.xlane.xlu0 %913
    %v915 = vsel %vm68, %v885, -inf
    %916 = vmax.xlane.f32.xlu0 %v915
    %v917 = vpop.xlane.xlu0 %916
    %v918 = vsel %vm68, %v886, -inf
    %919 = vmax.xlane.f32.xlu0 %v918
    %v920 = vpop.xlane.xlu0 %919
    %v921 = vsel %vm68, %v887, -inf
    %922 = vmax.xlane.f32.xlu0 %v921
    %v923 = vpop.xlane.xlu0 %922
    %v924 = vsel %vm68, %v888, -inf
    %925 = vmax.xlane.f32.xlu0 %v924
    %v926 = vpop.xlane.xlu0 %925
    %v927 = vsel %vm68, %v889, -inf
    %928 = vmax.xlane.f32.xlu0 %v927
    %v929 = vpop.xlane.xlu0 %928
    %v930 = vsel %vm68, %v890, -inf
    %931 = vmax.xlane.f32.xlu0 %v930
    %v932 = vpop.xlane.xlu0 %931
    %v933 = vsel %vm68, %v891, -inf
    %934 = vmax.xlane.f32.xlu0 %v933
    %v935 = vpop.xlane.xlu0 %934
    %v936 = vsel %vm68, %v892, -inf
    %937 = vmax.xlane.f32.xlu0 %v936
    %v938 = vpop.xlane.xlu0 %937
    %v939 = vsel %vm68, %v893, -inf
    %940 = vmax.xlane.f32.xlu0 %v939
    %v941 = vpop.xlane.xlu0 %940
    %v942 = vsub.f32 %v878, %v896
    %v943 = vsub.f32 %v879, %v899
    %v944 = vsub.f32 %v880, %v902
    %v945 = vsub.f32 %v881, %v905
    %v946 = vsub.f32 %v882, %v908
    %v947 = vsub.f32 %v883, %v911
    %v948 = vsub.f32 %v884, %v914
    %v949 = vsub.f32 %v885, %v917
    %v950 = vsub.f32 %v886, %v920
    %v951 = vsub.f32 %v887, %v923
    %v952 = vsub.f32 %v888, %v926
    %v953 = vsub.f32 %v889, %v929
    %v954 = vsub.f32 %v890, %v932
    %v955 = vsub.f32 %v891, %v935
    %v956 = vsub.f32 %v892, %v938
    %v957 = vsub.f32 %v893, %v941
    %v958 = vmul.f32 %v942, 1.442695
    %v959 = vpow.pop %v958
    %v960 = vmul.f32 %v943, 1.442695
    %v961 = vpow.pop %v960
    %v962 = vmul.f32 %v944, 1.442695
    %v963 = vpow.pop %v962
    %v964 = vmul.f32 %v945, 1.442695
    %v965 = vpow.pop %v964
    %v966 = vmul.f32 %v946, 1.442695
    %v967 = vpow.pop %v966
    %v968 = vmul.f32 %v947, 1.442695
    %v969 = vpow.pop %v968
    %v970 = vmul.f32 %v948, 1.442695
    %v971 = vpow.pop %v970
    %v972 = vmul.f32 %v949, 1.442695
    %v973 = vpow.pop %v972
    %v974 = vmul.f32 %v950, 1.442695
    %v975 = vpow.pop %v974
    %v976 = vmul.f32 %v951, 1.442695
    %v977 = vpow.pop %v976
    %v978 = vmul.f32 %v952, 1.442695
    %v979 = vpow.pop %v978
    %v980 = vmul.f32 %v953, 1.442695
    %v981 = vpow.pop %v980
    %v982 = vmul.f32 %v954, 1.442695
    %v983 = vpow.pop %v982
    %v984 = vmul.f32 %v955, 1.442695
    %v985 = vpow.pop %v984
    %v986 = vmul.f32 %v956, 1.442695
    %v987 = vpow.pop %v986
    %v988 = vmul.f32 %v957, 1.442695
    %v989 = vpow.pop %v988
    %v990 = vsel %vm68, %v959, 0.0
    %991 = vadd.xlane.f32.xlu0 %v990
    %v992 = vpop.xlane.xlu0 %991
    %v993 = vsel %vm68, %v961, 0.0
    %994 = vadd.xlane.f32.xlu0 %v993
    %v995 = vpop.xlane.xlu0 %994
    %v996 = vsel %vm68, %v963, 0.0
    %997 = vadd.xlane.f32.xlu0 %v996
    %v998 = vpop.xlane.xlu0 %997
    %v999 = vsel %vm68, %v965, 0.0
    %1000 = vadd.xlane.f32.xlu0 %v999
    %v1001 = vpop.xlane.xlu0 %1000
    %v1002 = vsel %vm68, %v967, 0.0
    %1003 = vadd.xlane.f32.xlu0 %v1002
    %v1004 = vpop.xlane.xlu0 %1003
    %v1005 = vsel %vm68, %v969, 0.0
    %1006 = vadd.xlane.f32.xlu0 %v1005
    %v1007 = vpop.xlane.xlu0 %1006
    %v1008 = vsel %vm68, %v971, 0.0
    %1009 = vadd.xlane.f32.xlu0 %v1008
    %v1010 = vpop.xlane.xlu0 %1009
    %v1011 = vsel %vm68, %v973, 0.0
    %1012 = vadd.xlane.f32.xlu0 %v1011
    %v1013 = vpop.xlane.xlu0 %1012
    %v1014 = vsel %vm68, %v975, 0.0
    %1015 = vadd.xlane.f32.xlu0 %v1014
    %v1016 = vpop.xlane.xlu0 %1015
    %v1017 = vsel %vm68, %v977, 0.0
    %1018 = vadd.xlane.f32.xlu0 %v1017
    %v1019 = vpop.xlane.xlu0 %1018
    %v1020 = vsel %vm68, %v979, 0.0
    %1021 = vadd.xlane.f32.xlu0 %v1020
    %v1022 = vpop.xlane.xlu0 %1021
    %v1023 = vsel %vm68, %v981, 0.0
    %1024 = vadd.xlane.f32.xlu0 %v1023
    %v1025 = vpop.xlane.xlu0 %1024
    %v1026 = vsel %vm68, %v983, 0.0
    %1027 = vadd.xlane.f32.xlu0 %v1026
    %v1028 = vpop.xlane.xlu0 %1027
    %v1029 = vsel %vm68, %v985, 0.0
    %1030 = vadd.xlane.f32.xlu0 %v1029
    %v1031 = vpop.xlane.xlu0 %1030
    %v1032 = vsel %vm68, %v987, 0.0
    %1033 = vadd.xlane.f32.xlu0 %v1032
    %v1034 = vpop.xlane.xlu0 %1033
    %v1035 = vsel %vm68, %v989, 0.0
    %1036 = vadd.xlane.f32.xlu0 %v1035
    %v1037 = vpop.xlane.xlu0 %1036
    %v1038 = vrcp.pop %v992
    %v1039 = vrcp.pop %v995
    %v1040 = vrcp.pop %v998
    %v1041 = vrcp.pop %v1001
    %v1042 = vrcp.pop %v1004
    %v1043 = vrcp.pop %v1007
    %v1044 = vrcp.pop %v1010
    %v1045 = vrcp.pop %v1013
    %v1046 = vrcp.pop %v1016
    %v1047 = vrcp.pop %v1019
    %v1048 = vrcp.pop %v1022
    %v1049 = vrcp.pop %v1025
    %v1050 = vrcp.pop %v1028
    %v1051 = vrcp.pop %v1031
    %v1052 = vrcp.pop %v1034
    %v1053 = vrcp.pop %v1037
    %v1054 = vmul.f32 %v959, %v1038
    %v1055 = vmul.f32 %v961, %v1039
    %v1056 = vmul.f32 %v963, %v1040
    %v1057 = vmul.f32 %v965, %v1041
    %v1058 = vmul.f32 %v967, %v1042
    %v1059 = vmul.f32 %v969, %v1043
    %v1060 = vmul.f32 %v971, %v1044
    %v1061 = vmul.f32 %v973, %v1045
    %v1062 = vmul.f32 %v975, %v1046
    %v1063 = vmul.f32 %v977, %v1047
    %v1064 = vmul.f32 %v979, %v1048
    %v1065 = vmul.f32 %v981, %v1049
    %v1066 = vmul.f32 %v983, %v1050
    %v1067 = vmul.f32 %v985, %v1051
    %v1068 = vmul.f32 %v987, %v1052
    %v1069 = vmul.f32 %v989, %v1053
    %v1070 = vsel %vm68, %v1054, 0.0
    %v1071 = vsel %vm68, %v1058, 0.0
    %v1072 = vadd.f32 %v1070, %v1071
    %v1073 = vsel %vm68, %v1062, 0.0
    %v1074 = vadd.f32 %v1072, %v1073
    %v1075 = vsel %vm68, %v1066, 0.0
    %v1076 = vadd.f32 %v1074, %v1075
    %v1077 = vsel %vm68, %v1055, 0.0
    %v1078 = vsel %vm68, %v1059, 0.0
    %v1079 = vadd.f32 %v1077, %v1078
    %v1080 = vsel %vm68, %v1063, 0.0
    %v1081 = vadd.f32 %v1079, %v1080
    %v1082 = vsel %vm68, %v1067, 0.0
    %v1083 = vadd.f32 %v1081, %v1082
    %v1084 = vsel %vm68, %v1056, 0.0
    %v1085 = vsel %vm68, %v1060, 0.0
    %v1086 = vadd.f32 %v1084, %v1085
    %v1087 = vsel %vm68, %v1064, 0.0
    %v1088 = vadd.f32 %v1086, %v1087
    %v1089 = vsel %vm68, %v1068, 0.0
    %v1090 = vadd.f32 %v1088, %v1089
    %v1091 = vsel %vm68, %v1057, 0.0
    %v1092 = vsel %vm68, %v1061, 0.0
    %v1093 = vadd.f32 %v1091, %v1092
    %v1094 = vsel %vm68, %v1065, 0.0
    %v1095 = vadd.f32 %v1093, %v1094
    %v1096 = vsel %vm68, %v1069, 0.0
    %v1097 = vadd.f32 %v1095, %v1096
    %v1098 = vrcp.pop 4.0
    %v1099 = vmul.f32 %v1076, %v1098
    %v1100 = vmul.f32 %v1083, %v1098
    %v1101 = vmul.f32 %v1090, %v1098
    %v1102 = vmul.f32 %v1097, %v1098
    %1103 = vst.msk [vmem:[#allocation7] sm:$0xff] %vm68, %v1099
    %1104 = vst.msk [vmem:[#allocation7 + $0x8] sm:$0xff] %vm68, %v1100
    %1105 = vst.msk [vmem:[#allocation7 + $0x10] sm:$0xff] %vm68, %v1101
    %1106 = vst.msk [vmem:[#allocation7 + $0x18] sm:$0xff] %vm68, %v1102
    %1107 = vxpose.xlu0.b32.start [1/16] %v1054, 128
    %1108 = vxpose.xlu0.b32.cont [2/16] %v1055, 128
    %1109 = vxpose.xlu0.b32.cont [3/16] %v1056, 128
    %1110 = vxpose.xlu0.b32.cont [4/16] %v1057, 128
    %1111 = vxpose.xlu0.b32.cont [5/16] 0.0, 128
    %1112 = vxpose.xlu0.b32.cont [6/16] 0.0, 128
    %1113 = vxpose.xlu0.b32.cont [7/16] 0.0, 128
    %1114 = vxpose.xlu0.b32.cont [8/16] 0.0, 128
    %1115 = vxpose.xlu0.b32.cont [9/16] 0.0, 128
    %1116 = vxpose.xlu0.b32.cont [10/16] 0.0, 128
    %1117 = vxpose.xlu0.b32.cont [11/16] 0.0, 128
    %1118 = vxpose.xlu0.b32.cont [12/16] 0.0, 128
    %1119 = vxpose.xlu0.b32.cont [13/16] 0.0, 128
    %1120 = vxpose.xlu0.b32.cont [14/16] 0.0, 128
    %1121 = vxpose.xlu0.b32.cont [15/16] 0.0, 128
    %1122 = vxpose.xlu0.b32.end [16/16] 0.0, 128
    %v1123 = vpop.trf.xlu0
    %v1124 = vpop.trf.xlu0
    %v1125 = vpop.trf.xlu0
    %v1126 = vpop.trf.xlu0
    %v1127 = vpop.trf.xlu0
    %v1128 = vpop.trf.xlu0
    %v1129 = vpop.trf.xlu0
    %v1130 = vpop.trf.xlu0
    %v1131 = vpop.trf.xlu0
    %v1132 = vpop.trf.xlu0
    %v1133 = vpop.trf.xlu0
    %v1134 = vpop.trf.xlu0
    %v1135 = vpop.trf.xlu0
    %v1136 = vpop.trf.xlu0
    %v1137 = vpop.trf.xlu0
    %v1138 = vpop.trf.xlu0
    %1139 = vxpose.xlu0.b32.start [1/16] %v1058, 128
    %1140 = vxpose.xlu0.b32.cont [2/16] %v1059, 128
    %1141 = vxpose.xlu0.b32.cont [3/16] %v1060, 128
    %1142 = vxpose.xlu0.b32.cont [4/16] %v1061, 128
    %1143 = vxpose.xlu0.b32.cont [5/16] 0.0, 128
    %1144 = vxpose.xlu0.b32.cont [6/16] 0.0, 128
    %1145 = vxpose.xlu0.b32.cont [7/16] 0.0, 128
    %1146 = vxpose.xlu0.b32.cont [8/16] 0.0, 128
    %1147 = vxpose.xlu0.b32.cont [9/16] 0.0, 128
    %1148 = vxpose.xlu0.b32.cont [10/16] 0.0, 128
    %1149 = vxpose.xlu0.b32.cont [11/16] 0.0, 128
    %1150 = vxpose.xlu0.b32.cont [12/16] 0.0, 128
    %1151 = vxpose.xlu0.b32.cont [13/16] 0.0, 128
    %1152 = vxpose.xlu0.b32.cont [14/16] 0.0, 128
    %1153 = vxpose.xlu0.b32.cont [15/16] 0.0, 128
    %1154 = vxpose.xlu0.b32.end [16/16] 0.0, 128
    %v1155 = vpop.trf.xlu0
    %v1156 = vpop.trf.xlu0
    %v1157 = vpop.trf.xlu0
    %v1158 = vpop.trf.xlu0
    %v1159 = vpop.trf.xlu0
    %v1160 = vpop.trf.xlu0
    %v1161 = vpop.trf.xlu0
    %v1162 = vpop.trf.xlu0
    %v1163 = vpop.trf.xlu0
    %v1164 = vpop.trf.xlu0
    %v1165 = vpop.trf.xlu0
    %v1166 = vpop.trf.xlu0
    %v1167 = vpop.trf.xlu0
    %v1168 = vpop.trf.xlu0
    %v1169 = vpop.trf.xlu0
    %v1170 = vpop.trf.xlu0
    %1171 = vxpose.xlu0.b32.start [1/16] %v1062, 128
    %1172 = vxpose.xlu0.b32.cont [2/16] %v1063, 128
    %1173 = vxpose.xlu0.b32.cont [3/16] %v1064, 128
    %1174 = vxpose.xlu0.b32.cont [4/16] %v1065, 128
    %1175 = vxpose.xlu0.b32.cont [5/16] 0.0, 128
    %1176 = vxpose.xlu0.b32.cont [6/16] 0.0, 128
    %1177 = vxpose.xlu0.b32.cont [7/16] 0.0, 128
    %1178 = vxpose.xlu0.b32.cont [8/16] 0.0, 128
    %1179 = vxpose.xlu0.b32.cont [9/16] 0.0, 128
    %1180 = vxpose.xlu0.b32.cont [10/16] 0.0, 128
    %1181 = vxpose.xlu0.b32.cont [11/16] 0.0, 128
    %1182 = vxpose.xlu0.b32.cont [12/16] 0.0, 128
    %1183 = vxpose.xlu0.b32.cont [13/16] 0.0, 128
    %1184 = vxpose.xlu0.b32.cont [14/16] 0.0, 128
    %1185 = vxpose.xlu0.b32.cont [15/16] 0.0, 128
    %1186 = vxpose.xlu0.b32.end [16/16] 0.0, 128
    %v1187 = vpop.trf.xlu0
    %v1188 = vpop.trf.xlu0
    %v1189 = vpop.trf.xlu0
    %v1190 = vpop.trf.xlu0
    %v1191 = vpop.trf.xlu0
    %v1192 = vpop.trf.xlu0
    %v1193 = vpop.trf.xlu0
    %v1194 = vpop.trf.xlu0
    %v1195 = vpop.trf.xlu0
    %v1196 = vpop.trf.xlu0
    %v1197 = vpop.trf.xlu0
    %v1198 = vpop.trf.xlu0
    %v1199 = vpop.trf.xlu0
    %v1200 = vpop.trf.xlu0
    %v1201 = vpop.trf.xlu0
    %v1202 = vpop.trf.xlu0
    %1203 = vxpose.xlu0.b32.start [1/16] %v1066, 128
    %1204 = vxpose.xlu0.b32.cont [2/16] %v1067, 128
    %1205 = vxpose.xlu0.b32.cont [3/16] %v1068, 128
    %1206 = vxpose.xlu0.b32.cont [4/16] %v1069, 128
    %1207 = vxpose.xlu0.b32.cont [5/16] 0.0, 128
    %1208 = vxpose.xlu0.b32.cont [6/16] 0.0, 128
    %1209 = vxpose.xlu0.b32.cont [7/16] 0.0, 128
    %1210 = vxpose.xlu0.b32.cont [8/16] 0.0, 128
    %1211 = vxpose.xlu0.b32.cont [9/16] 0.0, 128
    %1212 = vxpose.xlu0.b32.cont [10/16] 0.0, 128
    %1213 = vxpose.xlu0.b32.cont [11/16] 0.0, 128
    %1214 = vxpose.xlu0.b32.cont [12/16] 0.0, 128
    %1215 = vxpose.xlu0.b32.cont [13/16] 0.0, 128
    %1216 = vxpose.xlu0.b32.cont [14/16] 0.0, 128
    %1217 = vxpose.xlu0.b32.cont [15/16] 0.0, 128
    %1218 = vxpose.xlu0.b32.end [16/16] 0.0, 128
    %v1219 = vpop.trf.xlu0
    %v1220 = vpop.trf.xlu0
    %v1221 = vpop.trf.xlu0
    %v1222 = vpop.trf.xlu0
    %v1223 = vpop.trf.xlu0
    %v1224 = vpop.trf.xlu0
    %v1225 = vpop.trf.xlu0
    %v1226 = vpop.trf.xlu0
    %v1227 = vpop.trf.xlu0
    %v1228 = vpop.trf.xlu0
    %v1229 = vpop.trf.xlu0
    %v1230 = vpop.trf.xlu0
    %v1231 = vpop.trf.xlu0
    %v1232 = vpop.trf.xlu0
    %v1233 = vpop.trf.xlu0
    %v1234 = vpop.trf.xlu0
    %1235 = vmatprep.subr.mxu0 0.0
    %1236 = vmatpush1.msra.mxu0 %v1123
    %1237 = vmatprep.subr.mxu0 0.0
    %1238 = vmatpush1.msra.mxu0 %v1124
    %1239 = vmatprep.subr.mxu0 0.0
    %1240 = vmatpush1.msra.mxu0 %v1125
    %1241 = vmatprep.subr.mxu0 0.0
    %1242 = vmatpush1.msra.mxu0 %v1126
    %1243 = vmatprep.subr.mxu0 0.0
    %1244 = vmatpush1.msra.mxu0 %v1155
    %1245 = vmatprep.subr.mxu0 0.0
    %1246 = vmatpush1.msra.mxu0 %v1156
    %1247 = vmatprep.subr.mxu0 0.0
    %1248 = vmatpush1.msra.mxu0 %v1157
    %1249 = vmatprep.subr.mxu0 0.0
    %1250 = vmatpush1.msra.mxu0 %v1158
    %1251 = vmatprep.subr.mxu0 0.0
    %1252 = vmatpush1.msra.mxu0 %v1187
    %1253 = vmatprep.subr.mxu0 0.0
    %1254 = vmatpush1.msra.mxu0 %v1188
    %1255 = vmatprep.subr.mxu0 0.0
    %1256 = vmatpush1.msra.mxu0 %v1189
    %1257 = vmatprep.subr.mxu0 0.0
    %1258 = vmatpush1.msra.mxu0 %v1190
    %1259 = vmatprep.subr.mxu0 0.0
    %1260 = vmatpush1.msra.mxu0 %v1219
    %1261 = vmatprep.subr.mxu0 0.0
    %1262 = vmatpush1.msra.mxu0 %v1220
    %1263 = vmatprep.subr.mxu0 0.0
    %1264 = vmatpush1.msra.mxu0 %v1221
    %1265 = vmatprep.subr.mxu0 0.0
    %1266 = vmatpush1.msra.mxu0 %v1222
    %1267 = vmatprep.subr.mxu0 0.0
    %1268 = vmatpush1.msra.mxu0 0.0
    %1269 = vmatprep.subr.mxu0 0.0
    %1270 = vmatpush1.msra.mxu0 0.0
    %1271 = vmatprep.subr.mxu0 0.0
    %1272 = vmatpush1.msra.mxu0 0.0
    %1273 = vmatprep.subr.mxu0 0.0
    %1274 = vmatpush1.msra.mxu0 0.0
    %1275 = vmatprep.subr.mxu0 0.0
    %1276 = vmatpush1.msra.mxu0 0.0
    %1277 = vmatprep.subr.mxu0 0.0
    %1278 = vmatpush1.msra.mxu0 0.0
    %1279 = vmatprep.subr.mxu0 0.0
    %1280 = vmatpush1.msra.mxu0 0.0
    %1281 = vmatprep.subr.mxu0 0.0
    %1282 = vmatpush1.msra.mxu0 0.0
    %1283 = vmatprep.subr.mxu0 0.0
    %1284 = vmatpush1.msra.mxu0 0.0
    %1285 = vmatprep.subr.mxu0 0.0
    %1286 = vmatpush1.msra.mxu0 0.0
    %1287 = vmatprep.subr.mxu0 0.0
    %1288 = vmatpush1.msra.mxu0 0.0
    %1289 = vmatprep.subr.mxu0 0.0
    %1290 = vmatpush1.msra.mxu0 0.0
    %1291 = vmatprep.subr.mxu0 0.0
    %1292 = vmatpush1.msra.mxu0 0.0
    %1293 = vmatprep.subr.mxu0 0.0
    %1294 = vmatpush1.msra.mxu0 0.0
    %1295 = vmatprep.subr.mxu0 0.0
    %1296 = vmatpush1.msra.mxu0 0.0
    %1297 = vmatprep.subr.mxu0 0.0
    %1298 = vmatpush1.msra.mxu0 0.0
    %1299 = vmatprep.mubr.f32.mxu0 0.0
    %1300 = vmatmul.mubr.f32.gmra.mrb[0].mxu0 %v322
    %v1301 = vpop.f32.mrb[0].mxu0
    %v1302 = vadd.f32 0.0, %v1301
    %v1303 = vpop.f32.mrb[0].mxu0
    %1304 = vdwg.mxu0
    %v1305 = vmul.f32 %v1302, 0.25
    %1306 = vst.msk [vmem:[#allocation2] sm:$0xff] %vm68, %v1305
    %1307 = vxpose.xlu0.b32.start [1/16] %v239, 128
    %1308 = vxpose.xlu0.b32.cont [2/16] 0.0, 128
    %1309 = vxpose.xlu0.b32.cont [3/16] 0.0, 128
    %1310 = vxpose.xlu0.b32.cont [4/16] 0.0, 128
    %1311 = vxpose.xlu0.b32.cont [5/16] 0.0, 128
    %1312 = vxpose.xlu0.b32.cont [6/16] 0.0, 128
    %1313 = vxpose.xlu0.b32.cont [7/16] 0.0, 128
    %1314 = vxpose.xlu0.b32.cont [8/16] 0.0, 128
    %1315 = vxpose.xlu0.b32.cont [9/16] 0.0, 128
    %1316 = vxpose.xlu0.b32.cont [10/16] 0.0, 128
    %1317 = vxpose.xlu0.b32.cont [11/16] 0.0, 128
    %1318 = vxpose.xlu0.b32.cont [12/16] 0.0, 128
    %1319 = vxpose.xlu0.b32.cont [13/16] 0.0, 128
    %1320 = vxpose.xlu0.b32.cont [14/16] 0.0, 128
    %1321 = vxpose.xlu0.b32.cont [15/16] 0.0, 128
    %1322 = vxpose.xlu0.b32.end [16/16] 0.0, 128
    %v1323 = vpop.trf.xlu0
    %v1324 = vpop.trf.xlu0
    %v1325 = vpop.trf.xlu0
    %v1326 = vpop.trf.xlu0
    %v1327 = vpop.trf.xlu0
    %v1328 = vpop.trf.xlu0
    %v1329 = vpop.trf.xlu0
    %v1330 = vpop.trf.xlu0
    %v1331 = vpop.trf.xlu0
    %v1332 = vpop.trf.xlu0
    %v1333 = vpop.trf.xlu0
    %v1334 = vpop.trf.xlu0
    %v1335 = vpop.trf.xlu0
    %v1336 = vpop.trf.xlu0
    %v1337 = vpop.trf.xlu0
    %v1338 = vpop.trf.xlu0
    %v1340 = vsel %vm372, %v1323, 0
    %v1343 = vsel %vm372, %v1324, 0
    %v1346 = vsel %vm372, %v1325, 0
    %v1349 = vsel %vm372, %v1326, 0
    %v1352 = vsel %vm372, %v1327, 0
    %v1355 = vsel %vm372, %v1328, 0
    %v1358 = vsel %vm372, %v1329, 0
    %v1361 = vsel %vm372, %v1330, 0
    %v1364 = vsel %vm372, %v1331, 0
    %v1367 = vsel %vm372, %v1332, 0
    %v1370 = vsel %vm372, %v1333, 0
    %v1373 = vsel %vm372, %v1334, 0
    %v1376 = vsel %vm372, %v1335, 0
    %v1379 = vsel %vm372, %v1336, 0
    %v1382 = vsel %vm372, %v1337, 0
    %v1385 = vsel %vm372, %v1338, 0
    %1387 = vmatprep.subr.mxu0 0.0
    %1388 = vmatpush1.msra.mxu0 %v241
    %1389 = vmatprep.subr.mxu0 0.0
    %1390 = vmatpush1.msra.mxu0 0.0
    %1391 = vmatprep.subr.mxu0 0.0
    %1392 = vmatpush1.msra.mxu0 0.0
    %1393 = vmatprep.subr.mxu0 0.0
    %1394 = vmatpush1.msra.mxu0 0.0
    %1395 = vmatprep.subr.mxu0 0.0
    %1396 = vmatpush1.msra.mxu0 0.0
    %1397 = vmatprep.subr.mxu0 0.0
    %1398 = vmatpush1.msra.mxu0 0.0
    %1399 = vmatprep.subr.mxu0 0.0
    %1400 = vmatpush1.msra.mxu0 0.0
    %1401 = vmatprep.subr.mxu0 0.0
    %1402 = vmatpush1.msra.mxu0 0.0
    %1403 = vmatprep.subr.mxu0 0.0
    %1404 = vmatpush1.msra.mxu0 0.0
    %1405 = vmatprep.subr.mxu0 0.0
    %1406 = vmatpush1.msra.mxu0 0.0
    %1407 = vmatprep.subr.mxu0 0.0
    %1408 = vmatpush1.msra.mxu0 0.0
    %1409 = vmatprep.subr.mxu0 0.0
    %1410 = vmatpush1.msra.mxu0 0.0
    %1411 = vmatprep.subr.mxu0 0.0
    %1412 = vmatpush1.msra.mxu0 0.0
    %1413 = vmatprep.subr.mxu0 0.0
    %1414 = vmatpush1.msra.mxu0 0.0
    %1415 = vmatprep.subr.mxu0 0.0
    %1416 = vmatpush1.msra.mxu0 0.0
    %1417 = vmatprep.subr.mxu0 0.0
    %1418 = vmatpush1.msra.mxu0 0.0
    %1419 = vmatprep.subr.mxu0 0.0
    %1420 = vmatpush1.msra.mxu0 0.0
    %1421 = vmatprep.subr.mxu0 0.0
    %1422 = vmatpush1.msra.mxu0 0.0
    %1423 = vmatprep.subr.mxu0 0.0
    %1424 = vmatpush1.msra.mxu0 0.0
    %1425 = vmatprep.subr.mxu0 0.0
    %1426 = vmatpush1.msra.mxu0 0.0
    %1427 = vmatprep.subr.mxu0 0.0
    %1428 = vmatpush1.msra.mxu0 0.0
    %1429 = vmatprep.subr.mxu0 0.0
    %1430 = vmatpush1.msra.mxu0 0.0
    %1431 = vmatprep.subr.mxu0 0.0
    %1432 = vmatpush1.msra.mxu0 0.0
    %1433 = vmatprep.subr.mxu0 0.0
    %1434 = vmatpush1.msra.mxu0 0.0
    %1435 = vmatprep.subr.mxu0 0.0
    %1436 = vmatpush1.msra.mxu0 0.0
    %1437 = vmatprep.subr.mxu0 0.0
    %1438 = vmatpush1.msra.mxu0 0.0
    %1439 = vmatprep.subr.mxu0 0.0
    %1440 = vmatpush1.msra.mxu0 0.0
    %1441 = vmatprep.subr.mxu0 0.0
    %1442 = vmatpush1.msra.mxu0 0.0
    %1443 = vmatprep.subr.mxu0 0.0
    %1444 = vmatpush1.msra.mxu0 0.0
    %1445 = vmatprep.subr.mxu0 0.0
    %1446 = vmatpush1.msra.mxu0 0.0
    %1447 = vmatprep.subr.mxu0 0.0
    %1448 = vmatpush1.msra.mxu0 0.0
    %1449 = vmatprep.subr.mxu0 0.0
    %1450 = vmatpush1.msra.mxu0 0.0
    %1451 = vmatprep.mubr.f32.mxu0 0.0
    %1452 = vmatmul.mubr.f32.gmra.mrb[0].mxu0 %v1340
    %v1453 = vpop.f32.mrb[0].mxu0
    %v1454 = vadd.f32 0.0, %v1453
    %v1455 = vpop.f32.mrb[0].mxu0
    %1456 = vmatprep.mubr.f32.mxu0 0.0
    %1457 = vmatmul.mubr.f32.gmra.mrb[0].mxu0 %v1343
    %v1458 = vpop.f32.mrb[0].mxu0
    %v1459 = vadd.f32 0.0, %v1458
    %v1460 = vpop.f32.mrb[0].mxu0
    %1461 = vmatprep.mubr.f32.mxu0 0.0
    %1462 = vmatmul.mubr.f32.gmra.mrb[0].mxu0 %v1346
    %v1463 = vpop.f32.mrb[0].mxu0
    %v1464 = vadd.f32 0.0, %v1463
    %v1465 = vpop.f32.mrb[0].mxu0
    %1466 = vmatprep.mubr.f32.mxu0 0.0
    %1467 = vmatmul.mubr.f32.gmra.mrb[0].mxu0 %v1349
    %v1468 = vpop.f32.mrb[0].mxu0
    %v1469 = vadd.f32 0.0, %v1468
    %v1470 = vpop.f32.mrb[0].mxu0
    %1471 = vmatprep.mubr.f32.mxu0 0.0
    %1472 = vmatmul.mubr.f32.gmra.mrb[0].mxu0 %v1352
    %v1473 = vpop.f32.mrb[0].mxu0
    %v1474 = vadd.f32 0.0, %v1473
    %v1475 = vpop.f32.mrb[0].mxu0
    %1476 = vmatprep.mubr.f32.mxu0 0.0
    %1477 = vmatmul.mubr.f32.gmra.mrb[0].mxu0 %v1355
    %v1478 = vpop.f32.mrb[0].mxu0
    %v1479 = vadd.f32 0.0, %v1478
    %v1480 = vpop.f32.mrb[0].mxu0
    %1481 = vmatprep.mubr.f32.mxu0 0.0
    %1482 = vmatmul.mubr.f32.gmra.mrb[0].mxu0 %v1358
    %v1483 = vpop.f32.mrb[0].mxu0
    %v1484 = vadd.f32 0.0, %v1483
    %v1485 = vpop.f32.mrb[0].mxu0
    %1486 = vmatprep.mubr.f32.mxu0 0.0
    %1487 = vmatmul.mubr.f32.gmra.mrb[0].mxu0 %v1361
    %v1488 = vpop.f32.mrb[0].mxu0
    %v1489 = vadd.f32 0.0, %v1488
    %v1490 = vpop.f32.mrb[0].mxu0
    %1491 = vmatprep.mubr.f32.mxu0 0.0
    %1492 = vmatmul.mubr.f32.gmra.mrb[0].mxu0 %v1364
    %v1493 = vpop.f32.mrb[0].mxu0
    %v1494 = vadd.f32 0.0, %v1493
    %v1495 = vpop.f32.mrb[0].mxu0
    %1496 = vmatprep.mubr.f32.mxu0 0.0
    %1497 = vmatmul.mubr.f32.gmra.mrb[0].mxu0 %v1367
    %v1498 = vpop.f32.mrb[0].mxu0
    %v1499 = vadd.f32 0.0, %v1498
    %v1500 = vpop.f32.mrb[0].mxu0
    %1501 = vmatprep.mubr.f32.mxu0 0.0
    %1502 = vmatmul.mubr.f32.gmra.mrb[0].mxu0 %v1370
    %v1503 = vpop.f32.mrb[0].mxu0
    %v1504 = vadd.f32 0.0, %v1503
    %v1505 = vpop.f32.mrb[0].mxu0
    %1506 = vmatprep.mubr.f32.mxu0 0.0
    %1507 = vmatmul.mubr.f32.gmra.mrb[0].mxu0 %v1373
    %v1508 = vpop.f32.mrb[0].mxu0
    %v1509 = vadd.f32 0.0, %v1508
    %v1510 = vpop.f32.mrb[0].mxu0
    %1511 = vmatprep.mubr.f32.mxu0 0.0
    %1512 = vmatmul.mubr.f32.gmra.mrb[0].mxu0 %v1376
    %v1513 = vpop.f32.mrb[0].mxu0
    %v1514 = vadd.f32 0.0, %v1513
    %v1515 = vpop.f32.mrb[0].mxu0
    %1516 = vmatprep.mubr.f32.mxu0 0.0
    %1517 = vmatmul.mubr.f32.gmra.mrb[0].mxu0 %v1379
    %v1518 = vpop.f32.mrb[0].mxu0
    %v1519 = vadd.f32 0.0, %v1518
    %v1520 = vpop.f32.mrb[0].mxu0
    %1521 = vmatprep.mubr.f32.mxu0 0.0
    %1522 = vmatmul.mubr.f32.gmra.mrb[0].mxu0 %v1382
    %v1523 = vpop.f32.mrb[0].mxu0
    %v1524 = vadd.f32 0.0, %v1523
    %v1525 = vpop.f32.mrb[0].mxu0
    %1526 = vmatprep.mubr.f32.mxu0 0.0
    %1527 = vmatmul.mubr.f32.gmra.mrb[0].mxu0 %v1385
    %v1528 = vpop.f32.mrb[0].mxu0
    %v1529 = vadd.f32 0.0, %v1528
    %v1530 = vpop.f32.mrb[0].mxu0
    %1531 = vdwg.mxu0
    %1536 = vrot.lane.b32.xlu0 %v1474, 96
    %v1537 = vpop.permute.xlu0 %1536
    %1538 = vrot.lane.b32.xlu0 %v1479, 96
    %v1539 = vpop.permute.xlu0 %1538
    %1540 = vrot.lane.b32.xlu0 %v1484, 96
    %v1541 = vpop.permute.xlu0 %1540
    %1542 = vrot.lane.b32.xlu0 %v1489, 96
    %v1543 = vpop.permute.xlu0 %1542
    %1552 = vrot.lane.b32.xlu0 %v1494, 64
    %v1553 = vpop.permute.xlu0 %1552
    %1554 = vrot.lane.b32.xlu0 %v1499, 64
    %v1555 = vpop.permute.xlu0 %1554
    %1556 = vrot.lane.b32.xlu0 %v1504, 64
    %v1557 = vpop.permute.xlu0 %1556
    %1558 = vrot.lane.b32.xlu0 %v1509, 64
    %v1559 = vpop.permute.xlu0 %1558
    %1568 = vrot.lane.b32.xlu0 %v1514, 32
    %v1569 = vpop.permute.xlu0 %1568
    %1570 = vrot.lane.b32.xlu0 %v1519, 32
    %v1571 = vpop.permute.xlu0 %1570
    %1572 = vrot.lane.b32.xlu0 %v1524, 32
    %v1573 = vpop.permute.xlu0 %1572
    %1574 = vrot.lane.b32.xlu0 %v1529, 32
    %v1575 = vpop.permute.xlu0 %1574
    %v1580 = vmul.f32 %v1454, 0.17677669
    %v1581 = vmul.f32 %v1459, 0.17677669
    %v1582 = vmul.f32 %v1464, 0.17677669
    %v1583 = vmul.f32 %v1469, 0.17677669
    %v1584 = vmul.f32 %v1537, 0.17677669
    %v1585 = vmul.f32 %v1539, 0.17677669
    %v1586 = vmul.f32 %v1541, 0.17677669
    %v1587 = vmul.f32 %v1543, 0.17677669
    %v1588 = vmul.f32 %v1553, 0.17677669
    %v1589 = vmul.f32 %v1555, 0.17677669
    %v1590 = vmul.f32 %v1557, 0.17677669
    %v1591 = vmul.f32 %v1559, 0.17677669
    %v1592 = vmul.f32 %v1569, 0.17677669
    %v1593 = vmul.f32 %v1571, 0.17677669
    %v1594 = vmul.f32 %v1573, 0.17677669
    %v1595 = vmul.f32 %v1575, 0.17677669
    %v1596 = vsel %vm68, %v1580, 0.0
    %1597 = vadd.xlane.f32.xlu0 %v1596
    %v1598 = vpop.xlane.xlu0 %1597
    %v1599 = vsel %vm68, %v1581, 0.0
    %1600 = vadd.xlane.f32.xlu0 %v1599
    %v1601 = vpop.xlane.xlu0 %1600
    %v1602 = vsel %vm68, %v1582, 0.0
    %1603 = vadd.xlane.f32.xlu0 %v1602
    %v1604 = vpop.xlane.xlu0 %1603
    %v1605 = vsel %vm68, %v1583, 0.0
    %1606 = vadd.xlane.f32.xlu0 %v1605
    %v1607 = vpop.xlane.xlu0 %1606
    %v1608 = vsel %vm68, %v1584, 0.0
    %1609 = vadd.xlane.f32.xlu0 %v1608
    %v1610 = vpop.xlane.xlu0 %1609
    %v1611 = vsel %vm68, %v1585, 0.0
    %1612 = vadd.xlane.f32.xlu0 %v1611
    %v1613 = vpop.xlane.xlu0 %1612
    %v1614 = vsel %vm68, %v1586, 0.0
    %1615 = vadd.xlane.f32.xlu0 %v1614
    %v1616 = vpop.xlane.xlu0 %1615
    %v1617 = vsel %vm68, %v1587, 0.0
    %1618 = vadd.xlane.f32.xlu0 %v1617
    %v1619 = vpop.xlane.xlu0 %1618
    %v1620 = vsel %vm68, %v1588, 0.0
    %1621 = vadd.xlane.f32.xlu0 %v1620
    %v1622 = vpop.xlane.xlu0 %1621
    %v1623 = vsel %vm68, %v1589, 0.0
    %1624 = vadd.xlane.f32.xlu0 %v1623
    %v1625 = vpop.xlane.xlu0 %1624
    %v1626 = vsel %vm68, %v1590, 0.0
    %1627 = vadd.xlane.f32.xlu0 %v1626
    %v1628 = vpop.xlane.xlu0 %1627
    %v1629 = vsel %vm68, %v1591, 0.0
    %1630 = vadd.xlane.f32.xlu0 %v1629
    %v1631 = vpop.xlane.xlu0 %1630
    %v1632 = vsel %vm68, %v1592, 0.0
    %1633 = vadd.xlane.f32.xlu0 %v1632
    %v1634 = vpop.xlane.xlu0 %1633
    %v1635 = vsel %vm68, %v1593, 0.0
    %1636 = vadd.xlane.f32.xlu0 %v1635
    %v1637 = vpop.xlane.xlu0 %1636
    %v1638 = vsel %vm68, %v1594, 0.0
    %1639 = vadd.xlane.f32.xlu0 %v1638
    %v1640 = vpop.xlane.xlu0 %1639
    %v1641 = vsel %vm68, %v1595, 0.0
    %1642 = vadd.xlane.f32.xlu0 %v1641
    %v1643 = vpop.xlane.xlu0 %1642
    %v1644 = vmul.f32 %v1598, %v81
    %v1645 = vmul.f32 %v1601, %v81
    %v1646 = vmul.f32 %v1604, %v81
    %v1647 = vmul.f32 %v1607, %v81
    %v1648 = vmul.f32 %v1610, %v81
    %v1649 = vmul.f32 %v1613, %v81
    %v1650 = vmul.f32 %v1616, %v81
    %v1651 = vmul.f32 %v1619, %v81
    %v1652 = vmul.f32 %v1622, %v81
    %v1653 = vmul.f32 %v1625, %v81
    %v1654 = vmul.f32 %v1628, %v81
    %v1655 = vmul.f32 %v1631, %v81
    %v1656 = vmul.f32 %v1634, %v81
    %v1657 = vmul.f32 %v1637, %v81
    %v1658 = vmul.f32 %v1640, %v81
    %v1659 = vmul.f32 %v1643, %v81
    %v1660 = vadd.f32 %v1644, %v1645
    %v1661 = vadd.f32 %v1660, %v1646
    %v1662 = vadd.f32 %v1661, %v1647
    %v1663 = vrot.slane %v1662, 4
    %v1664 = vadd.f32 %v1662, %v1663
    %v1665 = vrot.slane %v1664, 2
    %v1666 = vadd.f32 %v1664, %v1665
    %v1667 = vrot.slane %v1666, 1
    %v1668 = vadd.f32 %v1666, %v1667
    %v1669 = vadd.f32 %v1648, %v1649
    %v1670 = vadd.f32 %v1669, %v1650
    %v1671 = vadd.f32 %v1670, %v1651
    %v1672 = vrot.slane %v1671, 4
    %v1673 = vadd.f32 %v1671, %v1672
    %v1674 = vrot.slane %v1673, 2
    %v1675 = vadd.f32 %v1673, %v1674
    %v1676 = vrot.slane %v1675, 1
    %v1677 = vadd.f32 %v1675, %v1676
    %v1678 = vadd.f32 %v1652, %v1653
    %v1679 = vadd.f32 %v1678, %v1654
    %v1680 = vadd.f32 %v1679, %v1655
    %v1681 = vrot.slane %v1680, 4
    %v1682 = vadd.f32 %v1680, %v1681
    %v1683 = vrot.slane %v1682, 2
    %v1684 = vadd.f32 %v1682, %v1683
    %v1685 = vrot.slane %v1684, 1
    %v1686 = vadd.f32 %v1684, %v1685
    %v1687 = vadd.f32 %v1656, %v1657
    %v1688 = vadd.f32 %v1687, %v1658
    %v1689 = vadd.f32 %v1688, %v1659
    %v1690 = vrot.slane %v1689, 4
    %v1691 = vadd.f32 %v1689, %v1690
    %v1692 = vrot.slane %v1691, 2
    %v1693 = vadd.f32 %v1691, %v1692
    %v1694 = vrot.slane %v1693, 1
    %v1695 = vadd.f32 %v1693, %v1694
    %v1696 = vmul.f32 %v1668, %v81
    %v1697 = vmul.f32 %v1677, %v81
    %v1698 = vmul.f32 %v1686, %v81
    %v1699 = vmul.f32 %v1695, %v81
    %v1700 = vsub.f32 %v1580, %v1696
    %v1701 = vsub.f32 %v1581, %v1696
    %v1702 = vsub.f32 %v1582, %v1696
    %v1703 = vsub.f32 %v1583, %v1696
    %v1704 = vsub.f32 %v1584, %v1697
    %v1705 = vsub.f32 %v1585, %v1697
    %v1706 = vsub.f32 %v1586, %v1697
    %v1707 = vsub.f32 %v1587, %v1697
    %v1708 = vsub.f32 %v1588, %v1698
    %v1709 = vsub.f32 %v1589, %v1698
    %v1710 = vsub.f32 %v1590, %v1698
    %v1711 = vsub.f32 %v1591, %v1698
    %v1712 = vsub.f32 %v1592, %v1699
    %v1713 = vsub.f32 %v1593, %v1699
    %v1714 = vsub.f32 %v1594, %v1699
    %v1715 = vsub.f32 %v1595, %v1699
    %v1716 = vmul.f32 %v1700, %v1700
    %v1717 = vmul.f32 %v1701, %v1701
    %v1718 = vmul.f32 %v1702, %v1702
    %v1719 = vmul.f32 %v1703, %v1703
    %v1720 = vmul.f32 %v1704, %v1704
    %v1721 = vmul.f32 %v1705, %v1705
    %v1722 = vmul.f32 %v1706, %v1706
    %v1723 = vmul.f32 %v1707, %v1707
    %v1724 = vmul.f32 %v1708, %v1708
    %v1725 = vmul.f32 %v1709, %v1709
    %v1726 = vmul.f32 %v1710, %v1710
    %v1727 = vmul.f32 %v1711, %v1711
    %v1728 = vmul.f32 %v1712, %v1712
    %v1729 = vmul.f32 %v1713, %v1713
    %v1730 = vmul.f32 %v1714, %v1714
    %v1731 = vmul.f32 %v1715, %v1715
    %v1732 = vsel %vm68, %v1716, 0.0
    %1733 = vadd.xlane.f32.xlu0 %v1732
    %v1734 = vpop.xlane.xlu0 %1733
    %v1735 = vsel %vm68, %v1717, 0.0
    %1736 = vadd.xlane.f32.xlu0 %v1735
    %v1737 = vpop.xlane.xlu0 %1736
    %v1738 = vsel %vm68, %v1718, 0.0
    %1739 = vadd.xlane.f32.xlu0 %v1738
    %v1740 = vpop.xlane.xlu0 %1739
    %v1741 = vsel %vm68, %v1719, 0.0
    %1742 = vadd.xlane.f32.xlu0 %v1741
    %v1743 = vpop.xlane.xlu0 %1742
    %v1744 = vsel %vm68, %v1720, 0.0
    %1745 = vadd.xlane.f32.xlu0 %v1744
    %v1746 = vpop.xlane.xlu0 %1745
    %v1747 = vsel %vm68, %v1721, 0.0
    %1748 = vadd.xlane.f32.xlu0 %v1747
    %v1749 = vpop.xlane.xlu0 %1748
    %v1750 = vsel %vm68, %v1722, 0.0
    %1751 = vadd.xlane.f32.xlu0 %v1750
    %v1752 = vpop.xlane.xlu0 %1751
    %v1753 = vsel %vm68, %v1723, 0.0
    %1754 = vadd.xlane.f32.xlu0 %v1753
    %v1755 = vpop.xlane.xlu0 %1754
    %v1756 = vsel %vm68, %v1724, 0.0
    %1757 = vadd.xlane.f32.xlu0 %v1756
    %v1758 = vpop.xlane.xlu0 %1757
    %v1759 = vsel %vm68, %v1725, 0.0
    %1760 = vadd.xlane.f32.xlu0 %v1759
    %v1761 = vpop.xlane.xlu0 %1760
    %v1762 = vsel %vm68, %v1726, 0.0
    %1763 = vadd.xlane.f32.xlu0 %v1762
    %v1764 = vpop.xlane.xlu0 %1763
    %v1765 = vsel %vm68, %v1727, 0.0
    %1766 = vadd.xlane.f32.xlu0 %v1765
    %v1767 = vpop.xlane.xlu0 %1766
    %v1768 = vsel %vm68, %v1728, 0.0
    %1769 = vadd.xlane.f32.xlu0 %v1768
    %v1770 = vpop.xlane.xlu0 %1769
    %v1771 = vsel %vm68, %v1729, 0.0
    %1772 = vadd.xlane.f32.xlu0 %v1771
    %v1773 = vpop.xlane.xlu0 %1772
    %v1774 = vsel %vm68, %v1730, 0.0
    %1775 = vadd.xlane.f32.xlu0 %v1774
    %v1776 = vpop.xlane.xlu0 %1775
    %v1777 = vsel %vm68, %v1731, 0.0
    %1778 = vadd.xlane.f32.xlu0 %v1777
    %v1779 = vpop.xlane.xlu0 %1778
    %v1780 = vmul.f32 %v1734, %v81
    %v1781 = vmul.f32 %v1737, %v81
    %v1782 = vmul.f32 %v1740, %v81
    %v1783 = vmul.f32 %v1743, %v81
    %v1784 = vmul.f32 %v1746, %v81
    %v1785 = vmul.f32 %v1749, %v81
    %v1786 = vmul.f32 %v1752, %v81
    %v1787 = vmul.f32 %v1755, %v81
    %v1788 = vmul.f32 %v1758, %v81
    %v1789 = vmul.f32 %v1761, %v81
    %v1790 = vmul.f32 %v1764, %v81
    %v1791 = vmul.f32 %v1767, %v81
    %v1792 = vmul.f32 %v1770, %v81
    %v1793 = vmul.f32 %v1773, %v81
    %v1794 = vmul.f32 %v1776, %v81
    %v1795 = vmul.f32 %v1779, %v81
    %v1796 = vadd.f32 %v1780, %v1781
    %v1797 = vadd.f32 %v1796, %v1782
    %v1798 = vadd.f32 %v1797, %v1783
    %v1799 = vrot.slane %v1798, 4
    %v1800 = vadd.f32 %v1798, %v1799
    %v1801 = vrot.slane %v1800, 2
    %v1802 = vadd.f32 %v1800, %v1801
    %v1803 = vrot.slane %v1802, 1
    %v1804 = vadd.f32 %v1802, %v1803
    %v1805 = vadd.f32 %v1784, %v1785
    %v1806 = vadd.f32 %v1805, %v1786
    %v1807 = vadd.f32 %v1806, %v1787
    %v1808 = vrot.slane %v1807, 4
    %v1809 = vadd.f32 %v1807, %v1808
    %v1810 = vrot.slane %v1809, 2
    %v1811 = vadd.f32 %v1809, %v1810
    %v1812 = vrot.slane %v1811, 1
    %v1813 = vadd.f32 %v1811, %v1812
    %v1814 = vadd.f32 %v1788, %v1789
    %v1815 = vadd.f32 %v1814, %v1790
    %v1816 = vadd.f32 %v1815, %v1791
    %v1817 = vrot.slane %v1816, 4
    %v1818 = vadd.f32 %v1816, %v1817
    %v1819 = vrot.slane %v1818, 2
    %v1820 = vadd.f32 %v1818, %v1819
    %v1821 = vrot.slane %v1820, 1
    %v1822 = vadd.f32 %v1820, %v1821
    %v1823 = vadd.f32 %v1792, %v1793
    %v1824 = vadd.f32 %v1823, %v1794
    %v1825 = vadd.f32 %v1824, %v1795
    %v1826 = vrot.slane %v1825, 4
    %v1827 = vadd.f32 %v1825, %v1826
    %v1828 = vrot.slane %v1827, 2
    %v1829 = vadd.f32 %v1827, %v1828
    %v1830 = vrot.slane %v1829, 1
    %v1831 = vadd.f32 %v1829, %v1830
    %v1832 = vmul.f32 %v1804, %v81
    %v1833 = vmul.f32 %v1813, %v81
    %v1834 = vmul.f32 %v1822, %v81
    %v1835 = vmul.f32 %v1831, %v81
    %v1836 = vadd.f32 %v1832, 1e-05
    %v1837 = vadd.f32 %v1833, 1e-05
    %v1838 = vadd.f32 %v1834, 1e-05
    %v1839 = vadd.f32 %v1835, 1e-05
    %v1840 = vrsqrt.pop %v1836
    %v1841 = vrsqrt.pop %v1837
    %v1842 = vrsqrt.pop %v1838
    %v1843 = vrsqrt.pop %v1839
    %v1844 = vmul.f32 %v1700, %v1840
    %v1845 = vmul.f32 %v1701, %v1840
    %v1846 = vmul.f32 %v1702, %v1840
    %v1847 = vmul.f32 %v1703, %v1840
    %v1848 = vmul.f32 %v1704, %v1841
    %v1849 = vmul.f32 %v1705, %v1841
    %v1850 = vmul.f32 %v1706, %v1841
    %v1851 = vmul.f32 %v1707, %v1841
    %v1852 = vmul.f32 %v1708, %v1842
    %v1853 = vmul.f32 %v1709, %v1842
    %v1854 = vmul.f32 %v1710, %v1842
    %v1855 = vmul.f32 %v1711, %v1842
    %v1856 = vmul.f32 %v1712, %v1843
    %v1857 = vmul.f32 %v1713, %v1843
    %v1858 = vmul.f32 %v1714, %v1843
    %v1859 = vmul.f32 %v1715, %v1843
    %v1860 = vsel %vm68, %v1844, -inf
    %1861 = vmax.xlane.f32.xlu0 %v1860
    %v1862 = vpop.xlane.xlu0 %1861
    %v1863 = vsel %vm68, %v1845, -inf
    %1864 = vmax.xlane.f32.xlu0 %v1863
    %v1865 = vpop.xlane.xlu0 %1864
    %v1866 = vsel %vm68, %v1846, -inf
    %1867 = vmax.xlane.f32.xlu0 %v1866
    %v1868 = vpop.xlane.xlu0 %1867
    %v1869 = vsel %vm68, %v1847, -inf
    %1870 = vmax.xlane.f32.xlu0 %v1869
    %v1871 = vpop.xlane.xlu0 %1870
    %v1872 = vsel %vm68, %v1848, -inf
    %1873 = vmax.xlane.f32.xlu0 %v1872
    %v1874 = vpop.xlane.xlu0 %1873
    %v1875 = vsel %vm68, %v1849, -inf
    %1876 = vmax.xlane.f32.xlu0 %v1875
    %v1877 = vpop.xlane.xlu0 %1876
    %v1878 = vsel %vm68, %v1850, -inf
    %1879 = vmax.xlane.f32.xlu0 %v1878
    %v1880 = vpop.xlane.xlu0 %1879
    %v1881 = vsel %vm68, %v1851, -inf
    %1882 = vmax.xlane.f32.xlu0 %v1881
    %v1883 = vpop.xlane.xlu0 %1882
    %v1884 = vsel %vm68, %v1852, -inf
    %1885 = vmax.xlane.f32.xlu0 %v1884
    %v1886 = vpop.xlane.xlu0 %1885
    %v1887 = vsel %vm68, %v1853, -inf
    %1888 = vmax.xlane.f32.xlu0 %v1887
    %v1889 = vpop.xlane.xlu0 %1888
    %v1890 = vsel %vm68, %v1854, -inf
    %1891 = vmax.xlane.f32.xlu0 %v1890
    %v1892 = vpop.xlane.xlu0 %1891
    %v1893 = vsel %vm68, %v1855, -inf
    %1894 = vmax.xlane.f32.xlu0 %v1893
    %v1895 = vpop.xlane.xlu0 %1894
    %v1896 = vsel %vm68, %v1856, -inf
    %1897 = vmax.xlane.f32.xlu0 %v1896
    %v1898 = vpop.xlane.xlu0 %1897
    %v1899 = vsel %vm68, %v1857, -inf
    %1900 = vmax.xlane.f32.xlu0 %v1899
    %v1901 = vpop.xlane.xlu0 %1900
    %v1902 = vsel %vm68, %v1858, -inf
    %1903 = vmax.xlane.f32.xlu0 %v1902
    %v1904 = vpop.xlane.xlu0 %1903
    %v1905 = vsel %vm68, %v1859, -inf
    %1906 = vmax.xlane.f32.xlu0 %v1905
    %v1907 = vpop.xlane.xlu0 %1906
    %v1908 = vsub.f32 %v1844, %v1862
    %v1909 = vsub.f32 %v1845, %v1865
    %v1910 = vsub.f32 %v1846, %v1868
    %v1911 = vsub.f32 %v1847, %v1871
    %v1912 = vsub.f32 %v1848, %v1874
    %v1913 = vsub.f32 %v1849, %v1877
    %v1914 = vsub.f32 %v1850, %v1880
    %v1915 = vsub.f32 %v1851, %v1883
    %v1916 = vsub.f32 %v1852, %v1886
    %v1917 = vsub.f32 %v1853, %v1889
    %v1918 = vsub.f32 %v1854, %v1892
    %v1919 = vsub.f32 %v1855, %v1895
    %v1920 = vsub.f32 %v1856, %v1898
    %v1921 = vsub.f32 %v1857, %v1901
    %v1922 = vsub.f32 %v1858, %v1904
    %v1923 = vsub.f32 %v1859, %v1907
    %v1924 = vmul.f32 %v1908, 1.442695
    %v1925 = vpow.pop %v1924
    %v1926 = vmul.f32 %v1909, 1.442695
    %v1927 = vpow.pop %v1926
    %v1928 = vmul.f32 %v1910, 1.442695
    %v1929 = vpow.pop %v1928
    %v1930 = vmul.f32 %v1911, 1.442695
    %v1931 = vpow.pop %v1930
    %v1932 = vmul.f32 %v1912, 1.442695
    %v1933 = vpow.pop %v1932
    %v1934 = vmul.f32 %v1913, 1.442695
    %v1935 = vpow.pop %v1934
    %v1936 = vmul.f32 %v1914, 1.442695
    %v1937 = vpow.pop %v1936
    %v1938 = vmul.f32 %v1915, 1.442695
    %v1939 = vpow.pop %v1938
    %v1940 = vmul.f32 %v1916, 1.442695
    %v1941 = vpow.pop %v1940
    %v1942 = vmul.f32 %v1917, 1.442695
    %v1943 = vpow.pop %v1942
    %v1944 = vmul.f32 %v1918, 1.442695
    %v1945 = vpow.pop %v1944
    %v1946 = vmul.f32 %v1919, 1.442695
    %v1947 = vpow.pop %v1946
    %v1948 = vmul.f32 %v1920, 1.442695
    %v1949 = vpow.pop %v1948
    %v1950 = vmul.f32 %v1921, 1.442695
    %v1951 = vpow.pop %v1950
    %v1952 = vmul.f32 %v1922, 1.442695
    %v1953 = vpow.pop %v1952
    %v1954 = vmul.f32 %v1923, 1.442695
    %v1955 = vpow.pop %v1954
    %v1956 = vsel %vm68, %v1925, 0.0
    %1957 = vadd.xlane.f32.xlu0 %v1956
    %v1958 = vpop.xlane.xlu0 %1957
    %v1959 = vsel %vm68, %v1927, 0.0
    %1960 = vadd.xlane.f32.xlu0 %v1959
    %v1961 = vpop.xlane.xlu0 %1960
    %v1962 = vsel %vm68, %v1929, 0.0
    %1963 = vadd.xlane.f32.xlu0 %v1962
    %v1964 = vpop.xlane.xlu0 %1963
    %v1965 = vsel %vm68, %v1931, 0.0
    %1966 = vadd.xlane.f32.xlu0 %v1965
    %v1967 = vpop.xlane.xlu0 %1966
    %v1968 = vsel %vm68, %v1933, 0.0
    %1969 = vadd.xlane.f32.xlu0 %v1968
    %v1970 = vpop.xlane.xlu0 %1969
    %v1971 = vsel %vm68, %v1935, 0.0
    %1972 = vadd.xlane.f32.xlu0 %v1971
    %v1973 = vpop.xlane.xlu0 %1972
    %v1974 = vsel %vm68, %v1937, 0.0
    %1975 = vadd.xlane.f32.xlu0 %v1974
    %v1976 = vpop.xlane.xlu0 %1975
    %v1977 = vsel %vm68, %v1939, 0.0
    %1978 = vadd.xlane.f32.xlu0 %v1977
    %v1979 = vpop.xlane.xlu0 %1978
    %v1980 = vsel %vm68, %v1941, 0.0
    %1981 = vadd.xlane.f32.xlu0 %v1980
    %v1982 = vpop.xlane.xlu0 %1981
    %v1983 = vsel %vm68, %v1943, 0.0
    %1984 = vadd.xlane.f32.xlu0 %v1983
    %v1985 = vpop.xlane.xlu0 %1984
    %v1986 = vsel %vm68, %v1945, 0.0
    %1987 = vadd.xlane.f32.xlu0 %v1986
    %v1988 = vpop.xlane.xlu0 %1987
    %v1989 = vsel %vm68, %v1947, 0.0
    %1990 = vadd.xlane.f32.xlu0 %v1989
    %v1991 = vpop.xlane.xlu0 %1990
    %v1992 = vsel %vm68, %v1949, 0.0
    %1993 = vadd.xlane.f32.xlu0 %v1992
    %v1994 = vpop.xlane.xlu0 %1993
    %v1995 = vsel %vm68, %v1951, 0.0
    %1996 = vadd.xlane.f32.xlu0 %v1995
    %v1997 = vpop.xlane.xlu0 %1996
    %v1998 = vsel %vm68, %v1953, 0.0
    %1999 = vadd.xlane.f32.xlu0 %v1998
    %v2000 = vpop.xlane.xlu0 %1999
    %v2001 = vsel %vm68, %v1955, 0.0
    %2002 = vadd.xlane.f32.xlu0 %v2001
    %v2003 = vpop.xlane.xlu0 %2002
    %v2004 = vrcp.pop %v1958
    %v2005 = vrcp.pop %v1961
    %v2006 = vrcp.pop %v1964
    %v2007 = vrcp.pop %v1967
    %v2008 = vrcp.pop %v1970
    %v2009 = vrcp.pop %v1973
    %v2010 = vrcp.pop %v1976
    %v2011 = vrcp.pop %v1979
    %v2012 = vrcp.pop %v1982
    %v2013 = vrcp.pop %v1985
    %v2014 = vrcp.pop %v1988
    %v2015 = vrcp.pop %v1991
    %v2016 = vrcp.pop %v1994
    %v2017 = vrcp.pop %v1997
    %v2018 = vrcp.pop %v2000
    %v2019 = vrcp.pop %v2003
    %v2020 = vmul.f32 %v1925, %v2004
    %v2021 = vmul.f32 %v1927, %v2005
    %v2022 = vmul.f32 %v1929, %v2006
    %v2023 = vmul.f32 %v1931, %v2007
    %v2024 = vmul.f32 %v1933, %v2008
    %v2025 = vmul.f32 %v1935, %v2009
    %v2026 = vmul.f32 %v1937, %v2010
    %v2027 = vmul.f32 %v1939, %v2011
    %v2028 = vmul.f32 %v1941, %v2012
    %v2029 = vmul.f32 %v1943, %v2013
    %v2030 = vmul.f32 %v1945, %v2014
    %v2031 = vmul.f32 %v1947, %v2015
    %v2032 = vmul.f32 %v1949, %v2016
    %v2033 = vmul.f32 %v1951, %v2017
    %v2034 = vmul.f32 %v1953, %v2018
    %v2035 = vmul.f32 %v1955, %v2019
    %v2036 = vsel %vm68, %v2020, 0.0
    %v2037 = vsel %vm68, %v2024, 0.0
    %v2038 = vadd.f32 %v2036, %v2037
    %v2039 = vsel %vm68, %v2028, 0.0
    %v2040 = vadd.f32 %v2038, %v2039
    %v2041 = vsel %vm68, %v2032, 0.0
    %v2042 = vadd.f32 %v2040, %v2041
    %v2043 = vsel %vm68, %v2021, 0.0
    %v2044 = vsel %vm68, %v2025, 0.0
    %v2045 = vadd.f32 %v2043, %v2044
    %v2046 = vsel %vm68, %v2029, 0.0
    %v2047 = vadd.f32 %v2045, %v2046
    %v2048 = vsel %vm68, %v2033, 0.0
    %v2049 = vadd.f32 %v2047, %v2048
    %v2050 = vsel %vm68, %v2022, 0.0
    %v2051 = vsel %vm68, %v2026, 0.0
    %v2052 = vadd.f32 %v2050, %v2051
    %v2053 = vsel %vm68, %v2030, 0.0
    %v2054 = vadd.f32 %v2052, %v2053
    %v2055 = vsel %vm68, %v2034, 0.0
    %v2056 = vadd.f32 %v2054, %v2055
    %v2057 = vsel %vm68, %v2023, 0.0
    %v2058 = vsel %vm68, %v2027, 0.0
    %v2059 = vadd.f32 %v2057, %v2058
    %v2060 = vsel %vm68, %v2031, 0.0
    %v2061 = vadd.f32 %v2059, %v2060
    %v2062 = vsel %vm68, %v2035, 0.0
    %v2063 = vadd.f32 %v2061, %v2062
    %v2064 = vmul.f32 %v2042, %v1098
    %v2065 = vmul.f32 %v2049, %v1098
    %v2066 = vmul.f32 %v2056, %v1098
    %v2067 = vmul.f32 %v2063, %v1098
    %s2068 = scalar_lea.vmem [#allocation7], 32
    %2069 = vst.msk [vmem:[%s2068] sm:$0xff] %vm68, %v2064
    %2070 = vst.msk [vmem:[%s2068 + $0x8] sm:$0xff] %vm68, %v2065
    %2071 = vst.msk [vmem:[%s2068 + $0x10] sm:$0xff] %vm68, %v2066
    %2072 = vst.msk [vmem:[%s2068 + $0x18] sm:$0xff] %vm68, %v2067
    %2073 = vxpose.xlu0.b32.start [1/16] %v2020, 128
    %2074 = vxpose.xlu0.b32.cont [2/16] %v2021, 128
    %2075 = vxpose.xlu0.b32.cont [3/16] %v2022, 128
    %2076 = vxpose.xlu0.b32.cont [4/16] %v2023, 128
    %2077 = vxpose.xlu0.b32.cont [5/16] 0.0, 128
    %2078 = vxpose.xlu0.b32.cont [6/16] 0.0, 128
    %2079 = vxpose.xlu0.b32.cont [7/16] 0.0, 128
    %2080 = vxpose.xlu0.b32.cont [8/16] 0.0, 128
    %2081 = vxpose.xlu0.b32.cont [9/16] 0.0, 128
    %2082 = vxpose.xlu0.b32.cont [10/16] 0.0, 128
    %2083 = vxpose.xlu0.b32.cont [11/16] 0.0, 128
    %2084 = vxpose.xlu0.b32.cont [12/16] 0.0, 128
    %2085 = vxpose.xlu0.b32.cont [13/16] 0.0, 128
    %2086 = vxpose.xlu0.b32.cont [14/16] 0.0, 128
    %2087 = vxpose.xlu0.b32.cont [15/16] 0.0, 128
    %2088 = vxpose.xlu0.b32.end [16/16] 0.0, 128
    %v2089 = vpop.trf.xlu0
    %v2090 = vpop.trf.xlu0
    %v2091 = vpop.trf.xlu0
    %v2092 = vpop.trf.xlu0
    %v2093 = vpop.trf.xlu0
    %v2094 = vpop.trf.xlu0
    %v2095 = vpop.trf.xlu0
    %v2096 = vpop.trf.xlu0
    %v2097 = vpop.trf.xlu0
    %v2098 = vpop.trf.xlu0
    %v2099 = vpop.trf.xlu0
    %v2100 = vpop.trf.xlu0
    %v2101 = vpop.trf.xlu0
    %v2102 = vpop.trf.xlu0
    %v2103 = vpop.trf.xlu0
    %v2104 = vpop.trf.xlu0
    %2105 = vxpose.xlu0.b32.start [1/16] %v2024, 128
    %2106 = vxpose.xlu0.b32.cont [2/16] %v2025, 128
    %2107 = vxpose.xlu0.b32.cont [3/16] %v2026, 128
    %2108 = vxpose.xlu0.b32.cont [4/16] %v2027, 128
    %2109 = vxpose.xlu0.b32.cont [5/16] 0.0, 128
    %2110 = vxpose.xlu0.b32.cont [6/16] 0.0, 128
    %2111 = vxpose.xlu0.b32.cont [7/16] 0.0, 128
    %2112 = vxpose.xlu0.b32.cont [8/16] 0.0, 128
    %2113 = vxpose.xlu0.b32.cont [9/16] 0.0, 128
    %2114 = vxpose.xlu0.b32.cont [10/16] 0.0, 128
    %2115 = vxpose.xlu0.b32.cont [11/16] 0.0, 128
    %2116 = vxpose.xlu0.b32.cont [12/16] 0.0, 128
    %2117 = vxpose.xlu0.b32.cont [13/16] 0.0, 128
    %2118 = vxpose.xlu0.b32.cont [14/16] 0.0, 128
    %2119 = vxpose.xlu0.b32.cont [15/16] 0.0, 128
    %2120 = vxpose.xlu0.b32.end [16/16] 0.0, 128
    %v2121 = vpop.trf.xlu0
    %v2122 = vpop.trf.xlu0
    %v2123 = vpop.trf.xlu0
    %v2124 = vpop.trf.xlu0
    %v2125 = vpop.trf.xlu0
    %v2126 = vpop.trf.xlu0
    %v2127 = vpop.trf.xlu0
    %v2128 = vpop.trf.xlu0
    %v2129 = vpop.trf.xlu0
    %v2130 = vpop.trf.xlu0
    %v2131 = vpop.trf.xlu0
    %v2132 = vpop.trf.xlu0
    %v2133 = vpop.trf.xlu0
    %v2134 = vpop.trf.xlu0
    %v2135 = vpop.trf.xlu0
    %v2136 = vpop.trf.xlu0
    %2137 = vxpose.xlu0.b32.start [1/16] %v2028, 128
    %2138 = vxpose.xlu0.b32.cont [2/16] %v2029, 128
    %2139 = vxpose.xlu0.b32.cont [3/16] %v2030, 128
    %2140 = vxpose.xlu0.b32.cont [4/16] %v2031, 128
    %2141 = vxpose.xlu0.b32.cont [5/16] 0.0, 128
    %2142 = vxpose.xlu0.b32.cont [6/16] 0.0, 128
    %2143 = vxpose.xlu0.b32.cont [7/16] 0.0, 128
    %2144 = vxpose.xlu0.b32.cont [8/16] 0.0, 128
    %2145 = vxpose.xlu0.b32.cont [9/16] 0.0, 128
    %2146 = vxpose.xlu0.b32.cont [10/16] 0.0, 128
    %2147 = vxpose.xlu0.b32.cont [11/16] 0.0, 128
    %2148 = vxpose.xlu0.b32.cont [12/16] 0.0, 128
    %2149 = vxpose.xlu0.b32.cont [13/16] 0.0, 128
    %2150 = vxpose.xlu0.b32.cont [14/16] 0.0, 128
    %2151 = vxpose.xlu0.b32.cont [15/16] 0.0, 128
    %2152 = vxpose.xlu0.b32.end [16/16] 0.0, 128
    %v2153 = vpop.trf.xlu0
    %v2154 = vpop.trf.xlu0
    %v2155 = vpop.trf.xlu0
    %v2156 = vpop.trf.xlu0
    %v2157 = vpop.trf.xlu0
    %v2158 = vpop.trf.xlu0
    %v2159 = vpop.trf.xlu0
    %v2160 = vpop.trf.xlu0
    %v2161 = vpop.trf.xlu0
    %v2162 = vpop.trf.xlu0
    %v2163 = vpop.trf.xlu0
    %v2164 = vpop.trf.xlu0
    %v2165 = vpop.trf.xlu0
    %v2166 = vpop.trf.xlu0
    %v2167 = vpop.trf.xlu0
    %v2168 = vpop.trf.xlu0
    %2169 = vxpose.xlu0.b32.start [1/16] %v2032, 128
    %2170 = vxpose.xlu0.b32.cont [2/16] %v2033, 128
    %2171 = vxpose.xlu0.b32.cont [3/16] %v2034, 128
    %2172 = vxpose.xlu0.b32.cont [4/16] %v2035, 128
    %2173 = vxpose.xlu0.b32.cont [5/16] 0.0, 128
    %2174 = vxpose.xlu0.b32.cont [6/16] 0.0, 128
    %2175 = vxpose.xlu0.b32.cont [7/16] 0.0, 128
    %2176 = vxpose.xlu0.b32.cont [8/16] 0.0, 128
    %2177 = vxpose.xlu0.b32.cont [9/16] 0.0, 128
    %2178 = vxpose.xlu0.b32.cont [10/16] 0.0, 128
    %2179 = vxpose.xlu0.b32.cont [11/16] 0.0, 128
    %2180 = vxpose.xlu0.b32.cont [12/16] 0.0, 128
    %2181 = vxpose.xlu0.b32.cont [13/16] 0.0, 128
    %2182 = vxpose.xlu0.b32.cont [14/16] 0.0, 128
    %2183 = vxpose.xlu0.b32.cont [15/16] 0.0, 128
    %2184 = vxpose.xlu0.b32.end [16/16] 0.0, 128
    %v2185 = vpop.trf.xlu0
    %v2186 = vpop.trf.xlu0
    %v2187 = vpop.trf.xlu0
    %v2188 = vpop.trf.xlu0
    %v2189 = vpop.trf.xlu0
    %v2190 = vpop.trf.xlu0
    %v2191 = vpop.trf.xlu0
    %v2192 = vpop.trf.xlu0
    %v2193 = vpop.trf.xlu0
    %v2194 = vpop.trf.xlu0
    %v2195 = vpop.trf.xlu0
    %v2196 = vpop.trf.xlu0
    %v2197 = vpop.trf.xlu0
    %v2198 = vpop.trf.xlu0
    %v2199 = vpop.trf.xlu0
    %v2200 = vpop.trf.xlu0
    %2201 = vmatprep.subr.mxu0 0.0
    %2202 = vmatpush1.msra.mxu0 %v2089
    %2203 = vmatprep.subr.mxu0 0.0
    %2204 = vmatpush1.msra.mxu0 %v2090
    %2205 = vmatprep.subr.mxu0 0.0
    %2206 = vmatpush1.msra.mxu0 %v2091
    %2207 = vmatprep.subr.mxu0 0.0
    %2208 = vmatpush1.msra.mxu0 %v2092
    %2209 = vmatprep.subr.mxu0 0.0
    %2210 = vmatpush1.msra.mxu0 %v2121
    %2211 = vmatprep.subr.mxu0 0.0
    %2212 = vmatpush1.msra.mxu0 %v2122
    %2213 = vmatprep.subr.mxu0 0.0
    %2214 = vmatpush1.msra.mxu0 %v2123
    %2215 = vmatprep.subr.mxu0 0.0
    %2216 = vmatpush1.msra.mxu0 %v2124
    %2217 = vmatprep.subr.mxu0 0.0
    %2218 = vmatpush1.msra.mxu0 %v2153
    %2219 = vmatprep.subr.mxu0 0.0
    %2220 = vmatpush1.msra.mxu0 %v2154
    %2221 = vmatprep.subr.mxu0 0.0
    %2222 = vmatpush1.msra.mxu0 %v2155
    %2223 = vmatprep.subr.mxu0 0.0
    %2224 = vmatpush1.msra.mxu0 %v2156
    %2225 = vmatprep.subr.mxu0 0.0
    %2226 = vmatpush1.msra.mxu0 %v2185
    %2227 = vmatprep.subr.mxu0 0.0
    %2228 = vmatpush1.msra.mxu0 %v2186
    %2229 = vmatprep.subr.mxu0 0.0
    %2230 = vmatpush1.msra.mxu0 %v2187
    %2231 = vmatprep.subr.mxu0 0.0
    %2232 = vmatpush1.msra.mxu0 %v2188
    %2233 = vmatprep.subr.mxu0 0.0
    %2234 = vmatpush1.msra.mxu0 0.0
    %2235 = vmatprep.subr.mxu0 0.0
    %2236 = vmatpush1.msra.mxu0 0.0
    %2237 = vmatprep.subr.mxu0 0.0
    %2238 = vmatpush1.msra.mxu0 0.0
    %2239 = vmatprep.subr.mxu0 0.0
    %2240 = vmatpush1.msra.mxu0 0.0
    %2241 = vmatprep.subr.mxu0 0.0
    %2242 = vmatpush1.msra.mxu0 0.0
    %2243 = vmatprep.subr.mxu0 0.0
    %2244 = vmatpush1.msra.mxu0 0.0
    %2245 = vmatprep.subr.mxu0 0.0
    %2246 = vmatpush1.msra.mxu0 0.0
    %2247 = vmatprep.subr.mxu0 0.0
    %2248 = vmatpush1.msra.mxu0 0.0
    %2249 = vmatprep.subr.mxu0 0.0
    %2250 = vmatpush1.msra.mxu0 0.0
    %2251 = vmatprep.subr.mxu0 0.0
    %2252 = vmatpush1.msra.mxu0 0.0
    %2253 = vmatprep.subr.mxu0 0.0
    %2254 = vmatpush1.msra.mxu0 0.0
    %2255 = vmatprep.subr.mxu0 0.0
    %2256 = vmatpush1.msra.mxu0 0.0
    %2257 = vmatprep.subr.mxu0 0.0
    %2258 = vmatpush1.msra.mxu0 0.0
    %2259 = vmatprep.subr.mxu0 0.0
    %2260 = vmatpush1.msra.mxu0 0.0
    %2261 = vmatprep.subr.mxu0 0.0
    %2262 = vmatpush1.msra.mxu0 0.0
    %2263 = vmatprep.subr.mxu0 0.0
    %2264 = vmatpush1.msra.mxu0 0.0
    %2265 = vmatprep.mubr.f32.mxu0 0.0
    %2266 = vmatmul.mubr.f32.gmra.mrb[0].mxu0 %v327
    %v2267 = vpop.f32.mrb[0].mxu0
    %v2268 = vadd.f32 0.0, %v2267
    %v2269 = vpop.f32.mrb[0].mxu0
    %2270 = vdwg.mxu0
    %v2271 = vmul.f32 %v2268, 0.25
    %2272 = vst.msk [vmem:[#allocation2 + $0x8] sm:$0xff] %vm68, %v2271
    %2273 = vxpose.xlu0.b32.start [1/16] %v245, 128
    %2274 = vxpose.xlu0.b32.cont [2/16] 0.0, 128
    %2275 = vxpose.xlu0.b32.cont [3/16] 0.0, 128
    %2276 = vxpose.xlu0.b32.cont [4/16] 0.0, 128
    %2277 = vxpose.xlu0.b32.cont [5/16] 0.0, 128
    %2278 = vxpose.xlu0.b32.cont [6/16] 0.0, 128
    %2279 = vxpose.xlu0.b32.cont [7/16] 0.0, 128
    %2280 = vxpose.xlu0.b32.cont [8/16] 0.0, 128
    %2281 = vxpose.xlu0.b32.cont [9/16] 0.0, 128
    %2282 = vxpose.xlu0.b32.cont [10/16] 0.0, 128
    %2283 = vxpose.xlu0.b32.cont [11/16] 0.0, 128
    %2284 = vxpose.xlu0.b32.cont [12/16] 0.0, 128
    %2285 = vxpose.xlu0.b32.cont [13/16] 0.0, 128
    %2286 = vxpose.xlu0.b32.cont [14/16] 0.0, 128
    %2287 = vxpose.xlu0.b32.cont [15/16] 0.0, 128
    %2288 = vxpose.xlu0.b32.end [16/16] 0.0, 128
    %v2289 = vpop.trf.xlu0
    %v2290 = vpop.trf.xlu0
    %v2291 = vpop.trf.xlu0
    %v2292 = vpop.trf.xlu0
    %v2293 = vpop.trf.xlu0
    %v2294 = vpop.trf.xlu0
    %v2295 = vpop.trf.xlu0
    %v2296 = vpop.trf.xlu0
    %v2297 = vpop.trf.xlu0
    %v2298 = vpop.trf.xlu0
    %v2299 = vpop.trf.xlu0
    %v2300 = vpop.trf.xlu0
    %v2301 = vpop.trf.xlu0
    %v2302 = vpop.trf.xlu0
    %v2303 = vpop.trf.xlu0
    %v2304 = vpop.trf.xlu0
    %v2306 = vsel %vm372, %v2289, 0
    %v2309 = vsel %vm372, %v2290, 0
    %v2312 = vsel %vm372, %v2291, 0
    %v2315 = vsel %vm372, %v2292, 0
    %v2318 = vsel %vm372, %v2293, 0
    %v2321 = vsel %vm372, %v2294, 0
    %v2324 = vsel %vm372, %v2295, 0
    %v2327 = vsel %vm372, %v2296, 0
    %v2330 = vsel %vm372, %v2297, 0
    %v2333 = vsel %vm372, %v2298, 0
    %v2336 = vsel %vm372, %v2299, 0
    %v2339 = vsel %vm372, %v2300, 0
    %v2342 = vsel %vm372, %v2301, 0
    %v2345 = vsel %vm372, %v2302, 0
    %v2348 = vsel %vm372, %v2303, 0
    %v2351 = vsel %vm372, %v2304, 0
    %2353 = vmatprep.subr.mxu0 0.0
    %2354 = vmatpush1.msra.mxu0 %v247
    %2355 = vmatprep.subr.mxu0 0.0
    %2356 = vmatpush1.msra.mxu0 0.0
    %2357 = vmatprep.subr.mxu0 0.0
    %2358 = vmatpush1.msra.mxu0 0.0
    %2359 = vmatprep.subr.mxu0 0.0
    %2360 = vmatpush1.msra.mxu0 0.0
    %2361 = vmatprep.subr.mxu0 0.0
    %2362 = vmatpush1.msra.mxu0 0.0
    %2363 = vmatprep.subr.mxu0 0.0
    %2364 = vmatpush1.msra.mxu0 0.0
    %2365 = vmatprep.subr.mxu0 0.0
    %2366 = vmatpush1.msra.mxu0 0.0
    %2367 = vmatprep.subr.mxu0 0.0
    %2368 = vmatpush1.msra.mxu0 0.0
    %2369 = vmatprep.subr.mxu0 0.0
    %2370 = vmatpush1.msra.mxu0 0.0
    %2371 = vmatprep.subr.mxu0 0.0
    %2372 = vmatpush1.msra.mxu0 0.0
    %2373 = vmatprep.subr.mxu0 0.0
    %2374 = vmatpush1.msra.mxu0 0.0
    %2375 = vmatprep.subr.mxu0 0.0
    %2376 = vmatpush1.msra.mxu0 0.0
    %2377 = vmatprep.subr.mxu0 0.0
    %2378 = vmatpush1.msra.mxu0 0.0
    %2379 = vmatprep.subr.mxu0 0.0
    %2380 = vmatpush1.msra.mxu0 0.0
    %2381 = vmatprep.subr.mxu0 0.0
    %2382 = vmatpush1.msra.mxu0 0.0
    %2383 = vmatprep.subr.mxu0 0.0
    %2384 = vmatpush1.msra.mxu0 0.0
    %2385 = vmatprep.subr.mxu0 0.0
    %2386 = vmatpush1.msra.mxu0 0.0
    %2387 = vmatprep.subr.mxu0 0.0
    %2388 = vmatpush1.msra.mxu0 0.0
    %2389 = vmatprep.subr.mxu0 0.0
    %2390 = vmatpush1.msra.mxu0 0.0
    %2391 = vmatprep.subr.mxu0 0.0
    %2392 = vmatpush1.msra.mxu0 0.0
    %2393 = vmatprep.subr.mxu0 0.0
    %2394 = vmatpush1.msra.mxu0 0.0
    %2395 = vmatprep.subr.mxu0 0.0
    %2396 = vmatpush1.msra.mxu0 0.0
    %2397 = vmatprep.subr.mxu0 0.0
    %2398 = vmatpush1.msra.mxu0 0.0
    %2399 = vmatprep.subr.mxu0 0.0
    %2400 = vmatpush1.msra.mxu0 0.0
    %2401 = vmatprep.subr.mxu0 0.0
    %2402 = vmatpush1.msra.mxu0 0.0
    %2403 = vmatprep.subr.mxu0 0.0
    %2404 = vmatpush1.msra.mxu0 0.0
    %2405 = vmatprep.subr.mxu0 0.0
    %2406 = vmatpush1.msra.mxu0 0.0
    %2407 = vmatprep.subr.mxu0 0.0
    %2408 = vmatpush1.msra.mxu0 0.0
    %2409 = vmatprep.subr.mxu0 0.0
    %2410 = vmatpush1.msra.mxu0 0.0
    %2411 = vmatprep.subr.mxu0 0.0
    %2412 = vmatpush1.msra.mxu0 0.0
    %2413 = vmatprep.subr.mxu0 0.0
    %2414 = vmatpush1.msra.mxu0 0.0
    %2415 = vmatprep.subr.mxu0 0.0
    %2416 = vmatpush1.msra.mxu0 0.0
    %2417 = vmatprep.mubr.f32.mxu0 0.0
    %2418 = vmatmul.mubr.f32.gmra.mrb[0].mxu0 %v2306
    %v2419 = vpop.f32.mrb[0].mxu0
    %v2420 = vadd.f32 0.0, %v2419
    %v2421 = vpop.f32.mrb[0].mxu0
    %2422 = vmatprep.mubr.f32.mxu0 0.0
    %2423 = vmatmul.mubr.f32.gmra.mrb[0].mxu0 %v2309
    %v2424 = vpop.f32.mrb[0].mxu0
    %v2425 = vadd.f32 0.0, %v2424
    %v2426 = vpop.f32.mrb[0].mxu0
    %2427 = vmatprep.mubr.f32.mxu0 0.0
    %2428 = vmatmul.mubr.f32.gmra.mrb[0].mxu0 %v2312
    %v2429 = vpop.f32.mrb[0].mxu0
    %v2430 = vadd.f32 0.0, %v2429
    %v2431 = vpop.f32.mrb[0].mxu0
    %2432 = vmatprep.mubr.f32.mxu0 0.0
    %2433 = vmatmul.mubr.f32.gmra.mrb[0].mxu0 %v2315
    %v2434 = vpop.f32.mrb[0].mxu0
    %v2435 = vadd.f32 0.0, %v2434
    %v2436 = vpop.f32.mrb[0].mxu0
    %2437 = vmatprep.mubr.f32.mxu0 0.0
    %2438 = vmatmul.mubr.f32.gmra.mrb[0].mxu0 %v2318
    %v2439 = vpop.f32.mrb[0].mxu0
    %v2440 = vadd.f32 0.0, %v2439
    %v2441 = vpop.f32.mrb[0].mxu0
    %2442 = vmatprep.mubr.f32.mxu0 0.0
    %2443 = vmatmul.mubr.f32.gmra.mrb[0].mxu0 %v2321
    %v2444 = vpop.f32.mrb[0].mxu0
    %v2445 = vadd.f32 0.0, %v2444
    %v2446 = vpop.f32.mrb[0].mxu0
    %2447 = vmatprep.mubr.f32.mxu0 0.0
    %2448 = vmatmul.mubr.f32.gmra.mrb[0].mxu0 %v2324
    %v2449 = vpop.f32.mrb[0].mxu0
    %v2450 = vadd.f32 0.0, %v2449
    %v2451 = vpop.f32.mrb[0].mxu0
    %2452 = vmatprep.mubr.f32.mxu0 0.0
    %2453 = vmatmul.mubr.f32.gmra.mrb[0].mxu0 %v2327
    %v2454 = vpop.f32.mrb[0].mxu0
    %v2455 = vadd.f32 0.0, %v2454
    %v2456 = vpop.f32.mrb[0].mxu0
    %2457 = vmatprep.mubr.f32.mxu0 0.0
    %2458 = vmatmul.mubr.f32.gmra.mrb[0].mxu0 %v2330
    %v2459 = vpop.f32.mrb[0].mxu0
    %v2460 = vadd.f32 0.0, %v2459
    %v2461 = vpop.f32.mrb[0].mxu0
    %2462 = vmatprep.mubr.f32.mxu0 0.0
    %2463 = vmatmul.mubr.f32.gmra.mrb[0].mxu0 %v2333
    %v2464 = vpop.f32.mrb[0].mxu0
    %v2465 = vadd.f32 0.0, %v2464
    %v2466 = vpop.f32.mrb[0].mxu0
    %2467 = vmatprep.mubr.f32.mxu0 0.0
    %2468 = vmatmul.mubr.f32.gmra.mrb[0].mxu0 %v2336
    %v2469 = vpop.f32.mrb[0].mxu0
    %v2470 = vadd.f32 0.0, %v2469
    %v2471 = vpop.f32.mrb[0].mxu0
    %2472 = vmatprep.mubr.f32.mxu0 0.0
    %2473 = vmatmul.mubr.f32.gmra.mrb[0].mxu0 %v2339
    %v2474 = vpop.f32.mrb[0].mxu0
    %v2475 = vadd.f32 0.0, %v2474
    %v2476 = vpop.f32.mrb[0].mxu0
    %2477 = vmatprep.mubr.f32.mxu0 0.0
    %2478 = vmatmul.mubr.f32.gmra.mrb[0].mxu0 %v2342
    %v2479 = vpop.f32.mrb[0].mxu0
    %v2480 = vadd.f32 0.0, %v2479
    %v2481 = vpop.f32.mrb[0].mxu0
    %2482 = vmatprep.mubr.f32.mxu0 0.0
    %2483 = vmatmul.mubr.f32.gmra.mrb[0].mxu0 %v2345
    %v2484 = vpop.f32.mrb[0].mxu0
    %v2485 = vadd.f32 0.0, %v2484
    %v2486 = vpop.f32.mrb[0].mxu0
    %2487 = vmatprep.mubr.f32.mxu0 0.0
    %2488 = vmatmul.mubr.f32.gmra.mrb[0].mxu0 %v2348
    %v2489 = vpop.f32.mrb[0].mxu0
    %v2490 = vadd.f32 0.0, %v2489
    %v2491 = vpop.f32.mrb[0].mxu0
    %2492 = vmatprep.mubr.f32.mxu0 0.0
    %2493 = vmatmul.mubr.f32.gmra.mrb[0].mxu0 %v2351
    %v2494 = vpop.f32.mrb[0].mxu0
    %v2495 = vadd.f32 0.0, %v2494
    %v2496 = vpop.f32.mrb[0].mxu0
    %2497 = vdwg.mxu0
    %2502 = vrot.lane.b32.xlu0 %v2440, 96
    %v2503 = vpop.permute.xlu0 %2502
    %2504 = vrot.lane.b32.xlu0 %v2445, 96
    %v2505 = vpop.permute.xlu0 %2504
    %2506 = vrot.lane.b32.xlu0 %v2450, 96
    %v2507 = vpop.permute.xlu0 %2506
    %2508 = vrot.lane.b32.xlu0 %v2455, 96
    %v2509 = vpop.permute.xlu0 %2508
    %2518 = vrot.lane.b32.xlu0 %v2460, 64
    %v2519 = vpop.permute.xlu0 %2518
    %2520 = vrot.lane.b32.xlu0 %v2465, 64
    %v2521 = vpop.permute.xlu0 %2520
    %2522 = vrot.lane.b32.xlu0 %v2470, 64
    %v2523 = vpop.permute.xlu0 %2522
    %2524 = vrot.lane.b32.xlu0 %v2475, 64
    %v2525 = vpop.permute.xlu0 %2524
    %2534 = vrot.lane.b32.xlu0 %v2480, 32
    %v2535 = vpop.permute.xlu0 %2534
    %2536 = vrot.lane.b32.xlu0 %v2485, 32
    %v2537 = vpop.permute.xlu0 %2536
    %2538 = vrot.lane.b32.xlu0 %v2490, 32
    %v2539 = vpop.permute.xlu0 %2538
    %2540 = vrot.lane.b32.xlu0 %v2495, 32
    %v2541 = vpop.permute.xlu0 %2540
    %v2546 = vmul.f32 %v2420, 0.17677669
    %v2547 = vmul.f32 %v2425, 0.17677669
    %v2548 = vmul.f32 %v2430, 0.17677669
    %v2549 = vmul.f32 %v2435, 0.17677669
    %v2550 = vmul.f32 %v2503, 0.17677669
    %v2551 = vmul.f32 %v2505, 0.17677669
    %v2552 = vmul.f32 %v2507, 0.17677669
    %v2553 = vmul.f32 %v2509, 0.17677669
    %v2554 = vmul.f32 %v2519, 0.17677669
    %v2555 = vmul.f32 %v2521, 0.17677669
    %v2556 = vmul.f32 %v2523, 0.17677669
    %v2557 = vmul.f32 %v2525, 0.17677669
    %v2558 = vmul.f32 %v2535, 0.17677669
    %v2559 = vmul.f32 %v2537, 0.17677669
    %v2560 = vmul.f32 %v2539, 0.17677669
    %v2561 = vmul.f32 %v2541, 0.17677669
    %v2562 = vsel %vm68, %v2546, 0.0
    %2563 = vadd.xlane.f32.xlu0 %v2562
    %v2564 = vpop.xlane.xlu0 %2563
    %v2565 = vsel %vm68, %v2547, 0.0
    %2566 = vadd.xlane.f32.xlu0 %v2565
    %v2567 = vpop.xlane.xlu0 %2566
    %v2568 = vsel %vm68, %v2548, 0.0
    %2569 = vadd.xlane.f32.xlu0 %v2568
    %v2570 = vpop.xlane.xlu0 %2569
    %v2571 = vsel %vm68, %v2549, 0.0
    %2572 = vadd.xlane.f32.xlu0 %v2571
    %v2573 = vpop.xlane.xlu0 %2572
    %v2574 = vsel %vm68, %v2550, 0.0
    %2575 = vadd.xlane.f32.xlu0 %v2574
    %v2576 = vpop.xlane.xlu0 %2575
    %v2577 = vsel %vm68, %v2551, 0.0
    %2578 = vadd.xlane.f32.xlu0 %v2577
    %v2579 = vpop.xlane.xlu0 %2578
    %v2580 = vsel %vm68, %v2552, 0.0
    %2581 = vadd.xlane.f32.xlu0 %v2580
    %v2582 = vpop.xlane.xlu0 %2581
    %v2583 = vsel %vm68, %v2553, 0.0
    %2584 = vadd.xlane.f32.xlu0 %v2583
    %v2585 = vpop.xlane.xlu0 %2584
    %v2586 = vsel %vm68, %v2554, 0.0
    %2587 = vadd.xlane.f32.xlu0 %v2586
    %v2588 = vpop.xlane.xlu0 %2587
    %v2589 = vsel %vm68, %v2555, 0.0
    %2590 = vadd.xlane.f32.xlu0 %v2589
    %v2591 = vpop.xlane.xlu0 %2590
    %v2592 = vsel %vm68, %v2556, 0.0
    %2593 = vadd.xlane.f32.xlu0 %v2592
    %v2594 = vpop.xlane.xlu0 %2593
    %v2595 = vsel %vm68, %v2557, 0.0
    %2596 = vadd.xlane.f32.xlu0 %v2595
    %v2597 = vpop.xlane.xlu0 %2596
    %v2598 = vsel %vm68, %v2558, 0.0
    %2599 = vadd.xlane.f32.xlu0 %v2598
    %v2600 = vpop.xlane.xlu0 %2599
    %v2601 = vsel %vm68, %v2559, 0.0
    %2602 = vadd.xlane.f32.xlu0 %v2601
    %v2603 = vpop.xlane.xlu0 %2602
    %v2604 = vsel %vm68, %v2560, 0.0
    %2605 = vadd.xlane.f32.xlu0 %v2604
    %v2606 = vpop.xlane.xlu0 %2605
    %v2607 = vsel %vm68, %v2561, 0.0
    %2608 = vadd.xlane.f32.xlu0 %v2607
    %v2609 = vpop.xlane.xlu0 %2608
    %v2610 = vmul.f32 %v2564, %v81
    %v2611 = vmul.f32 %v2567, %v81
    %v2612 = vmul.f32 %v2570, %v81
    %v2613 = vmul.f32 %v2573, %v81
    %v2614 = vmul.f32 %v2576, %v81
    %v2615 = vmul.f32 %v2579, %v81
    %v2616 = vmul.f32 %v2582, %v81
    %v2617 = vmul.f32 %v2585, %v81
    %v2618 = vmul.f32 %v2588, %v81
    %v2619 = vmul.f32 %v2591, %v81
    %v2620 = vmul.f32 %v2594, %v81
    %v2621 = vmul.f32 %v2597, %v81
    %v2622 = vmul.f32 %v2600, %v81
    %v2623 = vmul.f32 %v2603, %v81
    %v2624 = vmul.f32 %v2606, %v81
    %v2625 = vmul.f32 %v2609, %v81
    %v2626 = vadd.f32 %v2610, %v2611
    %v2627 = vadd.f32 %v2626, %v2612
    %v2628 = vadd.f32 %v2627, %v2613
    %v2629 = vrot.slane %v2628, 4
    %v2630 = vadd.f32 %v2628, %v2629
    %v2631 = vrot.slane %v2630, 2
    %v2632 = vadd.f32 %v2630, %v2631
    %v2633 = vrot.slane %v2632, 1
    %v2634 = vadd.f32 %v2632, %v2633
    %v2635 = vadd.f32 %v2614, %v2615
    %v2636 = vadd.f32 %v2635, %v2616
    %v2637 = vadd.f32 %v2636, %v2617
    %v2638 = vrot.slane %v2637, 4
    %v2639 = vadd.f32 %v2637, %v2638
    %v2640 = vrot.slane %v2639, 2
    %v2641 = vadd.f32 %v2639, %v2640
    %v2642 = vrot.slane %v2641, 1
    %v2643 = vadd.f32 %v2641, %v2642
    %v2644 = vadd.f32 %v2618, %v2619
    %v2645 = vadd.f32 %v2644, %v2620
    %v2646 = vadd.f32 %v2645, %v2621
    %v2647 = vrot.slane %v2646, 4
    %v2648 = vadd.f32 %v2646, %v2647
    %v2649 = vrot.slane %v2648, 2
    %v2650 = vadd.f32 %v2648, %v2649
    %v2651 = vrot.slane %v2650, 1
    %v2652 = vadd.f32 %v2650, %v2651
    %v2653 = vadd.f32 %v2622, %v2623
    %v2654 = vadd.f32 %v2653, %v2624
    %v2655 = vadd.f32 %v2654, %v2625
    %v2656 = vrot.slane %v2655, 4
    %v2657 = vadd.f32 %v2655, %v2656
    %v2658 = vrot.slane %v2657, 2
    %v2659 = vadd.f32 %v2657, %v2658
    %v2660 = vrot.slane %v2659, 1
    %v2661 = vadd.f32 %v2659, %v2660
    %v2662 = vmul.f32 %v2634, %v81
    %v2663 = vmul.f32 %v2643, %v81
    %v2664 = vmul.f32 %v2652, %v81
    %v2665 = vmul.f32 %v2661, %v81
    %v2666 = vsub.f32 %v2546, %v2662
    %v2667 = vsub.f32 %v2547, %v2662
    %v2668 = vsub.f32 %v2548, %v2662
    %v2669 = vsub.f32 %v2549, %v2662
    %v2670 = vsub.f32 %v2550, %v2663
    %v2671 = vsub.f32 %v2551, %v2663
    %v2672 = vsub.f32 %v2552, %v2663
    %v2673 = vsub.f32 %v2553, %v2663
    %v2674 = vsub.f32 %v2554, %v2664
    %v2675 = vsub.f32 %v2555, %v2664
    %v2676 = vsub.f32 %v2556, %v2664
    %v2677 = vsub.f32 %v2557, %v2664
    %v2678 = vsub.f32 %v2558, %v2665
    %v2679 = vsub.f32 %v2559, %v2665
    %v2680 = vsub.f32 %v2560, %v2665
    %v2681 = vsub.f32 %v2561, %v2665
    %v2682 = vmul.f32 %v2666, %v2666
    %v2683 = vmul.f32 %v2667, %v2667
    %v2684 = vmul.f32 %v2668, %v2668
    %v2685 = vmul.f32 %v2669, %v2669
    %v2686 = vmul.f32 %v2670, %v2670
    %v2687 = vmul.f32 %v2671, %v2671
    %v2688 = vmul.f32 %v2672, %v2672
    %v2689 = vmul.f32 %v2673, %v2673
    %v2690 = vmul.f32 %v2674, %v2674
    %v2691 = vmul.f32 %v2675, %v2675
    %v2692 = vmul.f32 %v2676, %v2676
    %v2693 = vmul.f32 %v2677, %v2677
    %v2694 = vmul.f32 %v2678, %v2678
    %v2695 = vmul.f32 %v2679, %v2679
    %v2696 = vmul.f32 %v2680, %v2680
    %v2697 = vmul.f32 %v2681, %v2681
    %v2698 = vsel %vm68, %v2682, 0.0
    %2699 = vadd.xlane.f32.xlu0 %v2698
    %v2700 = vpop.xlane.xlu0 %2699
    %v2701 = vsel %vm68, %v2683, 0.0
    %2702 = vadd.xlane.f32.xlu0 %v2701
    %v2703 = vpop.xlane.xlu0 %2702
    %v2704 = vsel %vm68, %v2684, 0.0
    %2705 = vadd.xlane.f32.xlu0 %v2704
    %v2706 = vpop.xlane.xlu0 %2705
    %v2707 = vsel %vm68, %v2685, 0.0
    %2708 = vadd.xlane.f32.xlu0 %v2707
    %v2709 = vpop.xlane.xlu0 %2708
    %v2710 = vsel %vm68, %v2686, 0.0
    %2711 = vadd.xlane.f32.xlu0 %v2710
    %v2712 = vpop.xlane.xlu0 %2711
    %v2713 = vsel %vm68, %v2687, 0.0
    %2714 = vadd.xlane.f32.xlu0 %v2713
    %v2715 = vpop.xlane.xlu0 %2714
    %v2716 = vsel %vm68, %v2688, 0.0
    %2717 = vadd.xlane.f32.xlu0 %v2716
    %v2718 = vpop.xlane.xlu0 %2717
    %v2719 = vsel %vm68, %v2689, 0.0
    %2720 = vadd.xlane.f32.xlu0 %v2719
    %v2721 = vpop.xlane.xlu0 %2720
    %v2722 = vsel %vm68, %v2690, 0.0
    %2723 = vadd.xlane.f32.xlu0 %v2722
    %v2724 = vpop.xlane.xlu0 %2723
    %v2725 = vsel %vm68, %v2691, 0.0
    %2726 = vadd.xlane.f32.xlu0 %v2725
    %v2727 = vpop.xlane.xlu0 %2726
    %v2728 = vsel %vm68, %v2692, 0.0
    %2729 = vadd.xlane.f32.xlu0 %v2728
    %v2730 = vpop.xlane.xlu0 %2729
    %v2731 = vsel %vm68, %v2693, 0.0
    %2732 = vadd.xlane.f32.xlu0 %v2731
    %v2733 = vpop.xlane.xlu0 %2732
    %v2734 = vsel %vm68, %v2694, 0.0
    %2735 = vadd.xlane.f32.xlu0 %v2734
    %v2736 = vpop.xlane.xlu0 %2735
    %v2737 = vsel %vm68, %v2695, 0.0
    %2738 = vadd.xlane.f32.xlu0 %v2737
    %v2739 = vpop.xlane.xlu0 %2738
    %v2740 = vsel %vm68, %v2696, 0.0
    %2741 = vadd.xlane.f32.xlu0 %v2740
    %v2742 = vpop.xlane.xlu0 %2741
    %v2743 = vsel %vm68, %v2697, 0.0
    %2744 = vadd.xlane.f32.xlu0 %v2743
    %v2745 = vpop.xlane.xlu0 %2744
    %v2746 = vmul.f32 %v2700, %v81
    %v2747 = vmul.f32 %v2703, %v81
    %v2748 = vmul.f32 %v2706, %v81
    %v2749 = vmul.f32 %v2709, %v81
    %v2750 = vmul.f32 %v2712, %v81
    %v2751 = vmul.f32 %v2715, %v81
    %v2752 = vmul.f32 %v2718, %v81
    %v2753 = vmul.f32 %v2721, %v81
    %v2754 = vmul.f32 %v2724, %v81
    %v2755 = vmul.f32 %v2727, %v81
    %v2756 = vmul.f32 %v2730, %v81
    %v2757 = vmul.f32 %v2733, %v81
    %v2758 = vmul.f32 %v2736, %v81
    %v2759 = vmul.f32 %v2739, %v81
    %v2760 = vmul.f32 %v2742, %v81
    %v2761 = vmul.f32 %v2745, %v81
    %v2762 = vadd.f32 %v2746, %v2747
    %v2763 = vadd.f32 %v2762, %v2748
    %v2764 = vadd.f32 %v2763, %v2749
    %v2765 = vrot.slane %v2764, 4
    %v2766 = vadd.f32 %v2764, %v2765
    %v2767 = vrot.slane %v2766, 2
    %v2768 = vadd.f32 %v2766, %v2767
    %v2769 = vrot.slane %v2768, 1
    %v2770 = vadd.f32 %v2768, %v2769
    %v2771 = vadd.f32 %v2750, %v2751
    %v2772 = vadd.f32 %v2771, %v2752
    %v2773 = vadd.f32 %v2772, %v2753
    %v2774 = vrot.slane %v2773, 4
    %v2775 = vadd.f32 %v2773, %v2774
    %v2776 = vrot.slane %v2775, 2
    %v2777 = vadd.f32 %v2775, %v2776
    %v2778 = vrot.slane %v2777, 1
    %v2779 = vadd.f32 %v2777, %v2778
    %v2780 = vadd.f32 %v2754, %v2755
    %v2781 = vadd.f32 %v2780, %v2756
    %v2782 = vadd.f32 %v2781, %v2757
    %v2783 = vrot.slane %v2782, 4
    %v2784 = vadd.f32 %v2782, %v2783
    %v2785 = vrot.slane %v2784, 2
    %v2786 = vadd.f32 %v2784, %v2785
    %v2787 = vrot.slane %v2786, 1
    %v2788 = vadd.f32 %v2786, %v2787
    %v2789 = vadd.f32 %v2758, %v2759
    %v2790 = vadd.f32 %v2789, %v2760
    %v2791 = vadd.f32 %v2790, %v2761
    %v2792 = vrot.slane %v2791, 4
    %v2793 = vadd.f32 %v2791, %v2792
    %v2794 = vrot.slane %v2793, 2
    %v2795 = vadd.f32 %v2793, %v2794
    %v2796 = vrot.slane %v2795, 1
    %v2797 = vadd.f32 %v2795, %v2796
    %v2798 = vmul.f32 %v2770, %v81
    %v2799 = vmul.f32 %v2779, %v81
    %v2800 = vmul.f32 %v2788, %v81
    %v2801 = vmul.f32 %v2797, %v81
    %v2802 = vadd.f32 %v2798, 1e-05
    %v2803 = vadd.f32 %v2799, 1e-05
    %v2804 = vadd.f32 %v2800, 1e-05
    %v2805 = vadd.f32 %v2801, 1e-05
    %v2806 = vrsqrt.pop %v2802
    %v2807 = vrsqrt.pop %v2803
    %v2808 = vrsqrt.pop %v2804
    %v2809 = vrsqrt.pop %v2805
    %v2810 = vmul.f32 %v2666, %v2806
    %v2811 = vmul.f32 %v2667, %v2806
    %v2812 = vmul.f32 %v2668, %v2806
    %v2813 = vmul.f32 %v2669, %v2806
    %v2814 = vmul.f32 %v2670, %v2807
    %v2815 = vmul.f32 %v2671, %v2807
    %v2816 = vmul.f32 %v2672, %v2807
    %v2817 = vmul.f32 %v2673, %v2807
    %v2818 = vmul.f32 %v2674, %v2808
    %v2819 = vmul.f32 %v2675, %v2808
    %v2820 = vmul.f32 %v2676, %v2808
    %v2821 = vmul.f32 %v2677, %v2808
    %v2822 = vmul.f32 %v2678, %v2809
    %v2823 = vmul.f32 %v2679, %v2809
    %v2824 = vmul.f32 %v2680, %v2809
    %v2825 = vmul.f32 %v2681, %v2809
    %v2826 = vsel %vm68, %v2810, -inf
    %2827 = vmax.xlane.f32.xlu0 %v2826
    %v2828 = vpop.xlane.xlu0 %2827
    %v2829 = vsel %vm68, %v2811, -inf
    %2830 = vmax.xlane.f32.xlu0 %v2829
    %v2831 = vpop.xlane.xlu0 %2830
    %v2832 = vsel %vm68, %v2812, -inf
    %2833 = vmax.xlane.f32.xlu0 %v2832
    %v2834 = vpop.xlane.xlu0 %2833
    %v2835 = vsel %vm68, %v2813, -inf
    %2836 = vmax.xlane.f32.xlu0 %v2835
    %v2837 = vpop.xlane.xlu0 %2836
    %v2838 = vsel %vm68, %v2814, -inf
    %2839 = vmax.xlane.f32.xlu0 %v2838
    %v2840 = vpop.xlane.xlu0 %2839
    %v2841 = vsel %vm68, %v2815, -inf
    %2842 = vmax.xlane.f32.xlu0 %v2841
    %v2843 = vpop.xlane.xlu0 %2842
    %v2844 = vsel %vm68, %v2816, -inf
    %2845 = vmax.xlane.f32.xlu0 %v2844
    %v2846 = vpop.xlane.xlu0 %2845
    %v2847 = vsel %vm68, %v2817, -inf
    %2848 = vmax.xlane.f32.xlu0 %v2847
    %v2849 = vpop.xlane.xlu0 %2848
    %v2850 = vsel %vm68, %v2818, -inf
    %2851 = vmax.xlane.f32.xlu0 %v2850
    %v2852 = vpop.xlane.xlu0 %2851
    %v2853 = vsel %vm68, %v2819, -inf
    %2854 = vmax.xlane.f32.xlu0 %v2853
    %v2855 = vpop.xlane.xlu0 %2854
    %v2856 = vsel %vm68, %v2820, -inf
    %2857 = vmax.xlane.f32.xlu0 %v2856
    %v2858 = vpop.xlane.xlu0 %2857
    %v2859 = vsel %vm68, %v2821, -inf
    %2860 = vmax.xlane.f32.xlu0 %v2859
    %v2861 = vpop.xlane.xlu0 %2860
    %v2862 = vsel %vm68, %v2822, -inf
    %2863 = vmax.xlane.f32.xlu0 %v2862
    %v2864 = vpop.xlane.xlu0 %2863
    %v2865 = vsel %vm68, %v2823, -inf
    %2866 = vmax.xlane.f32.xlu0 %v2865
    %v2867 = vpop.xlane.xlu0 %2866
    %v2868 = vsel %vm68, %v2824, -inf
    %2869 = vmax.xlane.f32.xlu0 %v2868
    %v2870 = vpop.xlane.xlu0 %2869
    %v2871 = vsel %vm68, %v2825, -inf
    %2872 = vmax.xlane.f32.xlu0 %v2871
    %v2873 = vpop.xlane.xlu0 %2872
    %v2874 = vsub.f32 %v2810, %v2828
    %v2875 = vsub.f32 %v2811, %v2831
    %v2876 = vsub.f32 %v2812, %v2834
    %v2877 = vsub.f32 %v2813, %v2837
    %v2878 = vsub.f32 %v2814, %v2840
    %v2879 = vsub.f32 %v2815, %v2843
    %v2880 = vsub.f32 %v2816, %v2846
    %v2881 = vsub.f32 %v2817, %v2849
    %v2882 = vsub.f32 %v2818, %v2852
    %v2883 = vsub.f32 %v2819, %v2855
    %v2884 = vsub.f32 %v2820, %v2858
    %v2885 = vsub.f32 %v2821, %v2861
    %v2886 = vsub.f32 %v2822, %v2864
    %v2887 = vsub.f32 %v2823, %v2867
    %v2888 = vsub.f32 %v2824, %v2870
    %v2889 = vsub.f32 %v2825, %v2873
    %v2890 = vmul.f32 %v2874, 1.442695
    %v2891 = vpow.pop %v2890
    %v2892 = vmul.f32 %v2875, 1.442695
    %v2893 = vpow.pop %v2892
    %v2894 = vmul.f32 %v2876, 1.442695
    %v2895 = vpow.pop %v2894
    %v2896 = vmul.f32 %v2877, 1.442695
    %v2897 = vpow.pop %v2896
    %v2898 = vmul.f32 %v2878, 1.442695
    %v2899 = vpow.pop %v2898
    %v2900 = vmul.f32 %v2879, 1.442695
    %v2901 = vpow.pop %v2900
    %v2902 = vmul.f32 %v2880, 1.442695
    %v2903 = vpow.pop %v2902
    %v2904 = vmul.f32 %v2881, 1.442695
    %v2905 = vpow.pop %v2904
    %v2906 = vmul.f32 %v2882, 1.442695
    %v2907 = vpow.pop %v2906
    %v2908 = vmul.f32 %v2883, 1.442695
    %v2909 = vpow.pop %v2908
    %v2910 = vmul.f32 %v2884, 1.442695
    %v2911 = vpow.pop %v2910
    %v2912 = vmul.f32 %v2885, 1.442695
    %v2913 = vpow.pop %v2912
    %v2914 = vmul.f32 %v2886, 1.442695
    %v2915 = vpow.pop %v2914
    %v2916 = vmul.f32 %v2887, 1.442695
    %v2917 = vpow.pop %v2916
    %v2918 = vmul.f32 %v2888, 1.442695
    %v2919 = vpow.pop %v2918
    %v2920 = vmul.f32 %v2889, 1.442695
    %v2921 = vpow.pop %v2920
    %v2922 = vsel %vm68, %v2891, 0.0
    %2923 = vadd.xlane.f32.xlu0 %v2922
    %v2924 = vpop.xlane.xlu0 %2923
    %v2925 = vsel %vm68, %v2893, 0.0
    %2926 = vadd.xlane.f32.xlu0 %v2925
    %v2927 = vpop.xlane.xlu0 %2926
    %v2928 = vsel %vm68, %v2895, 0.0
    %2929 = vadd.xlane.f32.xlu0 %v2928
    %v2930 = vpop.xlane.xlu0 %2929
    %v2931 = vsel %vm68, %v2897, 0.0
    %2932 = vadd.xlane.f32.xlu0 %v2931
    %v2933 = vpop.xlane.xlu0 %2932
    %v2934 = vsel %vm68, %v2899, 0.0
    %2935 = vadd.xlane.f32.xlu0 %v2934
    %v2936 = vpop.xlane.xlu0 %2935
    %v2937 = vsel %vm68, %v2901, 0.0
    %2938 = vadd.xlane.f32.xlu0 %v2937
    %v2939 = vpop.xlane.xlu0 %2938
    %v2940 = vsel %vm68, %v2903, 0.0
    %2941 = vadd.xlane.f32.xlu0 %v2940
    %v2942 = vpop.xlane.xlu0 %2941
    %v2943 = vsel %vm68, %v2905, 0.0
    %2944 = vadd.xlane.f32.xlu0 %v2943
    %v2945 = vpop.xlane.xlu0 %2944
    %v2946 = vsel %vm68, %v2907, 0.0
    %2947 = vadd.xlane.f32.xlu0 %v2946
    %v2948 = vpop.xlane.xlu0 %2947
    %v2949 = vsel %vm68, %v2909, 0.0
    %2950 = vadd.xlane.f32.xlu0 %v2949
    %v2951 = vpop.xlane.xlu0 %2950
    %v2952 = vsel %vm68, %v2911, 0.0
    %2953 = vadd.xlane.f32.xlu0 %v2952
    %v2954 = vpop.xlane.xlu0 %2953
    %v2955 = vsel %vm68, %v2913, 0.0
    %2956 = vadd.xlane.f32.xlu0 %v2955
    %v2957 = vpop.xlane.xlu0 %2956
    %v2958 = vsel %vm68, %v2915, 0.0
    %2959 = vadd.xlane.f32.xlu0 %v2958
    %v2960 = vpop.xlane.xlu0 %2959
    %v2961 = vsel %vm68, %v2917, 0.0
    %2962 = vadd.xlane.f32.xlu0 %v2961
    %v2963 = vpop.xlane.xlu0 %2962
    %v2964 = vsel %vm68, %v2919, 0.0
    %2965 = vadd.xlane.f32.xlu0 %v2964
    %v2966 = vpop.xlane.xlu0 %2965
    %v2967 = vsel %vm68, %v2921, 0.0
    %2968 = vadd.xlane.f32.xlu0 %v2967
    %v2969 = vpop.xlane.xlu0 %2968
    %v2970 = vrcp.pop %v2924
    %v2971 = vrcp.pop %v2927
    %v2972 = vrcp.pop %v2930
    %v2973 = vrcp.pop %v2933
    %v2974 = vrcp.pop %v2936
    %v2975 = vrcp.pop %v2939
    %v2976 = vrcp.pop %v2942
    %v2977 = vrcp.pop %v2945
    %v2978 = vrcp.pop %v2948
    %v2979 = vrcp.pop %v2951
    %v2980 = vrcp.pop %v2954
    %v2981 = vrcp.pop %v2957
    %v2982 = vrcp.pop %v2960
    %v2983 = vrcp.pop %v2963
    %v2984 = vrcp.pop %v2966
    %v2985 = vrcp.pop %v2969
    %v2986 = vmul.f32 %v2891, %v2970
    %v2987 = vmul.f32 %v2893, %v2971
    %v2988 = vmul.f32 %v2895, %v2972
    %v2989 = vmul.f32 %v2897, %v2973
    %v2990 = vmul.f32 %v2899, %v2974
    %v2991 = vmul.f32 %v2901, %v2975
    %v2992 = vmul.f32 %v2903, %v2976
    %v2993 = vmul.f32 %v2905, %v2977
    %v2994 = vmul.f32 %v2907, %v2978
    %v2995 = vmul.f32 %v2909, %v2979
    %v2996 = vmul.f32 %v2911, %v2980
    %v2997 = vmul.f32 %v2913, %v2981
    %v2998 = vmul.f32 %v2915, %v2982
    %v2999 = vmul.f32 %v2917, %v2983
    %v3000 = vmul.f32 %v2919, %v2984
    %v3001 = vmul.f32 %v2921, %v2985
    %v3002 = vsel %vm68, %v2986, 0.0
    %v3003 = vsel %vm68, %v2990, 0.0
    %v3004 = vadd.f32 %v3002, %v3003
    %v3005 = vsel %vm68, %v2994, 0.0
    %v3006 = vadd.f32 %v3004, %v3005
    %v3007 = vsel %vm68, %v2998, 0.0
    %v3008 = vadd.f32 %v3006, %v3007
    %v3009 = vsel %vm68, %v2987, 0.0
    %v3010 = vsel %vm68, %v2991, 0.0
    %v3011 = vadd.f32 %v3009, %v3010
    %v3012 = vsel %vm68, %v2995, 0.0
    %v3013 = vadd.f32 %v3011, %v3012
    %v3014 = vsel %vm68, %v2999, 0.0
    %v3015 = vadd.f32 %v3013, %v3014
    %v3016 = vsel %vm68, %v2988, 0.0
    %v3017 = vsel %vm68, %v2992, 0.0
    %v3018 = vadd.f32 %v3016, %v3017
    %v3019 = vsel %vm68, %v2996, 0.0
    %v3020 = vadd.f32 %v3018, %v3019
    %v3021 = vsel %vm68, %v3000, 0.0
    %v3022 = vadd.f32 %v3020, %v3021
    %v3023 = vsel %vm68, %v2989, 0.0
    %v3024 = vsel %vm68, %v2993, 0.0
    %v3025 = vadd.f32 %v3023, %v3024
    %v3026 = vsel %vm68, %v2997, 0.0
    %v3027 = vadd.f32 %v3025, %v3026
    %v3028 = vsel %vm68, %v3001, 0.0
    %v3029 = vadd.f32 %v3027, %v3028
    %v3030 = vmul.f32 %v3008, %v1098
    %v3031 = vmul.f32 %v3015, %v1098
    %v3032 = vmul.f32 %v3022, %v1098
    %v3033 = vmul.f32 %v3029, %v1098
    %s3034 = scalar_lea.vmem [#allocation7], 64
    %3035 = vst.msk [vmem:[%s3034] sm:$0xff] %vm68, %v3030
    %3036 = vst.msk [vmem:[%s3034 + $0x8] sm:$0xff] %vm68, %v3031
    %3037 = vst.msk [vmem:[%s3034 + $0x10] sm:$0xff] %vm68, %v3032
    %3038 = vst.msk [vmem:[%s3034 + $0x18] sm:$0xff] %vm68, %v3033
    %3039 = vxpose.xlu0.b32.start [1/16] %v2986, 128
    %3040 = vxpose.xlu0.b32.cont [2/16] %v2987, 128
    %3041 = vxpose.xlu0.b32.cont [3/16] %v2988, 128
    %3042 = vxpose.xlu0.b32.cont [4/16] %v2989, 128
    %3043 = vxpose.xlu0.b32.cont [5/16] 0.0, 128
    %3044 = vxpose.xlu0.b32.cont [6/16] 0.0, 128
    %3045 = vxpose.xlu0.b32.cont [7/16] 0.0, 128
    %3046 = vxpose.xlu0.b32.cont [8/16] 0.0, 128
    %3047 = vxpose.xlu0.b32.cont [9/16] 0.0, 128
    %3048 = vxpose.xlu0.b32.cont [10/16] 0.0, 128
    %3049 = vxpose.xlu0.b32.cont [11/16] 0.0, 128
    %3050 = vxpose.xlu0.b32.cont [12/16] 0.0, 128
    %3051 = vxpose.xlu0.b32.cont [13/16] 0.0, 128
    %3052 = vxpose.xlu0.b32.cont [14/16] 0.0, 128
    %3053 = vxpose.xlu0.b32.cont [15/16] 0.0, 128
    %3054 = vxpose.xlu0.b32.end [16/16] 0.0, 128
    %v3055 = vpop.trf.xlu0
    %v3056 = vpop.trf.xlu0
    %v3057 = vpop.trf.xlu0
    %v3058 = vpop.trf.xlu0
    %v3059 = vpop.trf.xlu0
    %v3060 = vpop.trf.xlu0
    %v3061 = vpop.trf.xlu0
    %v3062 = vpop.trf.xlu0
    %v3063 = vpop.trf.xlu0
    %v3064 = vpop.trf.xlu0
    %v3065 = vpop.trf.xlu0
    %v3066 = vpop.trf.xlu0
    %v3067 = vpop.trf.xlu0
    %v3068 = vpop.trf.xlu0
    %v3069 = vpop.trf.xlu0
    %v3070 = vpop.trf.xlu0
    %3071 = vxpose.xlu0.b32.start [1/16] %v2990, 128
    %3072 = vxpose.xlu0.b32.cont [2/16] %v2991, 128
    %3073 = vxpose.xlu0.b32.cont [3/16] %v2992, 128
    %3074 = vxpose.xlu0.b32.cont [4/16] %v2993, 128
    %3075 = vxpose.xlu0.b32.cont [5/16] 0.0, 128
    %3076 = vxpose.xlu0.b32.cont [6/16] 0.0, 128
    %3077 = vxpose.xlu0.b32.cont [7/16] 0.0, 128
    %3078 = vxpose.xlu0.b32.cont [8/16] 0.0, 128
    %3079 = vxpose.xlu0.b32.cont [9/16] 0.0, 128
    %3080 = vxpose.xlu0.b32.cont [10/16] 0.0, 128
    %3081 = vxpose.xlu0.b32.cont [11/16] 0.0, 128
    %3082 = vxpose.xlu0.b32.cont [12/16] 0.0, 128
    %3083 = vxpose.xlu0.b32.cont [13/16] 0.0, 128
    %3084 = vxpose.xlu0.b32.cont [14/16] 0.0, 128
    %3085 = vxpose.xlu0.b32.cont [15/16] 0.0, 128
    %3086 = vxpose.xlu0.b32.end [16/16] 0.0, 128
    %v3087 = vpop.trf.xlu0
    %v3088 = vpop.trf.xlu0
    %v3089 = vpop.trf.xlu0
    %v3090 = vpop.trf.xlu0
    %v3091 = vpop.trf.xlu0
    %v3092 = vpop.trf.xlu0
    %v3093 = vpop.trf.xlu0
    %v3094 = vpop.trf.xlu0
    %v3095 = vpop.trf.xlu0
    %v3096 = vpop.trf.xlu0
    %v3097 = vpop.trf.xlu0
    %v3098 = vpop.trf.xlu0
    %v3099 = vpop.trf.xlu0
    %v3100 = vpop.trf.xlu0
    %v3101 = vpop.trf.xlu0
    %v3102 = vpop.trf.xlu0
    %3103 = vxpose.xlu0.b32.start [1/16] %v2994, 128
    %3104 = vxpose.xlu0.b32.cont [2/16] %v2995, 128
    %3105 = vxpose.xlu0.b32.cont [3/16] %v2996, 128
    %3106 = vxpose.xlu0.b32.cont [4/16] %v2997, 128
    %3107 = vxpose.xlu0.b32.cont [5/16] 0.0, 128
    %3108 = vxpose.xlu0.b32.cont [6/16] 0.0, 128
    %3109 = vxpose.xlu0.b32.cont [7/16] 0.0, 128
    %3110 = vxpose.xlu0.b32.cont [8/16] 0.0, 128
    %3111 = vxpose.xlu0.b32.cont [9/16] 0.0, 128
    %3112 = vxpose.xlu0.b32.cont [10/16] 0.0, 128
    %3113 = vxpose.xlu0.b32.cont [11/16] 0.0, 128
    %3114 = vxpose.xlu0.b32.cont [12/16] 0.0, 128
    %3115 = vxpose.xlu0.b32.cont [13/16] 0.0, 128
    %3116 = vxpose.xlu0.b32.cont [14/16] 0.0, 128
    %3117 = vxpose.xlu0.b32.cont [15/16] 0.0, 128
    %3118 = vxpose.xlu0.b32.end [16/16] 0.0, 128
    %v3119 = vpop.trf.xlu0
    %v3120 = vpop.trf.xlu0
    %v3121 = vpop.trf.xlu0
    %v3122 = vpop.trf.xlu0
    %v3123 = vpop.trf.xlu0
    %v3124 = vpop.trf.xlu0
    %v3125 = vpop.trf.xlu0
    %v3126 = vpop.trf.xlu0
    %v3127 = vpop.trf.xlu0
    %v3128 = vpop.trf.xlu0
    %v3129 = vpop.trf.xlu0
    %v3130 = vpop.trf.xlu0
    %v3131 = vpop.trf.xlu0
    %v3132 = vpop.trf.xlu0
    %v3133 = vpop.trf.xlu0
    %v3134 = vpop.trf.xlu0
    %3135 = vxpose.xlu0.b32.start [1/16] %v2998, 128
    %3136 = vxpose.xlu0.b32.cont [2/16] %v2999, 128
    %3137 = vxpose.xlu0.b32.cont [3/16] %v3000, 128
    %3138 = vxpose.xlu0.b32.cont [4/16] %v3001, 128
    %3139 = vxpose.xlu0.b32.cont [5/16] 0.0, 128
    %3140 = vxpose.xlu0.b32.cont [6/16] 0.0, 128
    %3141 = vxpose.xlu0.b32.cont [7/16] 0.0, 128
    %3142 = vxpose.xlu0.b32.cont [8/16] 0.0, 128
    %3143 = vxpose.xlu0.b32.cont [9/16] 0.0, 128
    %3144 = vxpose.xlu0.b32.cont [10/16] 0.0, 128
    %3145 = vxpose.xlu0.b32.cont [11/16] 0.0, 128
    %3146 = vxpose.xlu0.b32.cont [12/16] 0.0, 128
    %3147 = vxpose.xlu0.b32.cont [13/16] 0.0, 128
    %3148 = vxpose.xlu0.b32.cont [14/16] 0.0, 128
    %3149 = vxpose.xlu0.b32.cont [15/16] 0.0, 128
    %3150 = vxpose.xlu0.b32.end [16/16] 0.0, 128
    %v3151 = vpop.trf.xlu0
    %v3152 = vpop.trf.xlu0
    %v3153 = vpop.trf.xlu0
    %v3154 = vpop.trf.xlu0
    %v3155 = vpop.trf.xlu0
    %v3156 = vpop.trf.xlu0
    %v3157 = vpop.trf.xlu0
    %v3158 = vpop.trf.xlu0
    %v3159 = vpop.trf.xlu0
    %v3160 = vpop.trf.xlu0
    %v3161 = vpop.trf.xlu0
    %v3162 = vpop.trf.xlu0
    %v3163 = vpop.trf.xlu0
    %v3164 = vpop.trf.xlu0
    %v3165 = vpop.trf.xlu0
    %v3166 = vpop.trf.xlu0
    %3167 = vmatprep.subr.mxu0 0.0
    %3168 = vmatpush1.msra.mxu0 %v3055
    %3169 = vmatprep.subr.mxu0 0.0
    %3170 = vmatpush1.msra.mxu0 %v3056
    %3171 = vmatprep.subr.mxu0 0.0
    %3172 = vmatpush1.msra.mxu0 %v3057
    %3173 = vmatprep.subr.mxu0 0.0
    %3174 = vmatpush1.msra.mxu0 %v3058
    %3175 = vmatprep.subr.mxu0 0.0
    %3176 = vmatpush1.msra.mxu0 %v3087
    %3177 = vmatprep.subr.mxu0 0.0
    %3178 = vmatpush1.msra.mxu0 %v3088
    %3179 = vmatprep.subr.mxu0 0.0
    %3180 = vmatpush1.msra.mxu0 %v3089
    %3181 = vmatprep.subr.mxu0 0.0
    %3182 = vmatpush1.msra.mxu0 %v3090
    %3183 = vmatprep.subr.mxu0 0.0
    %3184 = vmatpush1.msra.mxu0 %v3119
    %3185 = vmatprep.subr.mxu0 0.0
    %3186 = vmatpush1.msra.mxu0 %v3120
    %3187 = vmatprep.subr.mxu0 0.0
    %3188 = vmatpush1.msra.mxu0 %v3121
    %3189 = vmatprep.subr.mxu0 0.0
    %3190 = vmatpush1.msra.mxu0 %v3122
    %3191 = vmatprep.subr.mxu0 0.0
    %3192 = vmatpush1.msra.mxu0 %v3151
    %3193 = vmatprep.subr.mxu0 0.0
    %3194 = vmatpush1.msra.mxu0 %v3152
    %3195 = vmatprep.subr.mxu0 0.0
    %3196 = vmatpush1.msra.mxu0 %v3153
    %3197 = vmatprep.subr.mxu0 0.0
    %3198 = vmatpush1.msra.mxu0 %v3154
    %3199 = vmatprep.subr.mxu0 0.0
    %3200 = vmatpush1.msra.mxu0 0.0
    %3201 = vmatprep.subr.mxu0 0.0
    %3202 = vmatpush1.msra.mxu0 0.0
    %3203 = vmatprep.subr.mxu0 0.0
    %3204 = vmatpush1.msra.mxu0 0.0
    %3205 = vmatprep.subr.mxu0 0.0
    %3206 = vmatpush1.msra.mxu0 0.0
    %3207 = vmatprep.subr.mxu0 0.0
    %3208 = vmatpush1.msra.mxu0 0.0
    %3209 = vmatprep.subr.mxu0 0.0
    %3210 = vmatpush1.msra.mxu0 0.0
    %3211 = vmatprep.subr.mxu0 0.0
    %3212 = vmatpush1.msra.mxu0 0.0
    %3213 = vmatprep.subr.mxu0 0.0
    %3214 = vmatpush1.msra.mxu0 0.0
    %3215 = vmatprep.subr.mxu0 0.0
    %3216 = vmatpush1.msra.mxu0 0.0
    %3217 = vmatprep.subr.mxu0 0.0
    %3218 = vmatpush1.msra.mxu0 0.0
    %3219 = vmatprep.subr.mxu0 0.0
    %3220 = vmatpush1.msra.mxu0 0.0
    %3221 = vmatprep.subr.mxu0 0.0
    %3222 = vmatpush1.msra.mxu0 0.0
    %3223 = vmatprep.subr.mxu0 0.0
    %3224 = vmatpush1.msra.mxu0 0.0
    %3225 = vmatprep.subr.mxu0 0.0
    %3226 = vmatpush1.msra.mxu0 0.0
    %3227 = vmatprep.subr.mxu0 0.0
    %3228 = vmatpush1.msra.mxu0 0.0
    %3229 = vmatprep.subr.mxu0 0.0
    %3230 = vmatpush1.msra.mxu0 0.0
    %3231 = vmatprep.mubr.f32.mxu0 0.0
    %3232 = vmatmul.mubr.f32.gmra.mrb[0].mxu0 %v332
    %v3233 = vpop.f32.mrb[0].mxu0
    %v3234 = vadd.f32 0.0, %v3233
    %v3235 = vpop.f32.mrb[0].mxu0
    %3236 = vdwg.mxu0
    %v3237 = vmul.f32 %v3234, 0.25
    %3238 = vst.msk [vmem:[#allocation2 + $0x10] sm:$0xff] %vm68, %v3237
    %3239 = vxpose.xlu0.b32.start [1/16] %v251, 128
    %3240 = vxpose.xlu0.b32.cont [2/16] 0.0, 128
    %3241 = vxpose.xlu0.b32.cont [3/16] 0.0, 128
    %3242 = vxpose.xlu0.b32.cont [4/16] 0.0, 128
    %3243 = vxpose.xlu0.b32.cont [5/16] 0.0, 128
    %3244 = vxpose.xlu0.b32.cont [6/16] 0.0, 128
    %3245 = vxpose.xlu0.b32.cont [7/16] 0.0, 128
    %3246 = vxpose.xlu0.b32.cont [8/16] 0.0, 128
    %3247 = vxpose.xlu0.b32.cont [9/16] 0.0, 128
    %3248 = vxpose.xlu0.b32.cont [10/16] 0.0, 128
    %3249 = vxpose.xlu0.b32.cont [11/16] 0.0, 128
    %3250 = vxpose.xlu0.b32.cont [12/16] 0.0, 128
    %3251 = vxpose.xlu0.b32.cont [13/16] 0.0, 128
    %3252 = vxpose.xlu0.b32.cont [14/16] 0.0, 128
    %3253 = vxpose.xlu0.b32.cont [15/16] 0.0, 128
    %3254 = vxpose.xlu0.b32.end [16/16] 0.0, 128
    %v3255 = vpop.trf.xlu0
    %v3256 = vpop.trf.xlu0
    %v3257 = vpop.trf.xlu0
    %v3258 = vpop.trf.xlu0
    %v3259 = vpop.trf.xlu0
    %v3260 = vpop.trf.xlu0
    %v3261 = vpop.trf.xlu0
    %v3262 = vpop.trf.xlu0
    %v3263 = vpop.trf.xlu0
    %v3264 = vpop.trf.xlu0
    %v3265 = vpop.trf.xlu0
    %v3266 = vpop.trf.xlu0
    %v3267 = vpop.trf.xlu0
    %v3268 = vpop.trf.xlu0
    %v3269 = vpop.trf.xlu0
    %v3270 = vpop.trf.xlu0
    %v3272 = vsel %vm372, %v3255, 0
    %v3275 = vsel %vm372, %v3256, 0
    %v3278 = vsel %vm372, %v3257, 0
    %v3281 = vsel %vm372, %v3258, 0
    %v3284 = vsel %vm372, %v3259, 0
    %v3287 = vsel %vm372, %v3260, 0
    %v3290 = vsel %vm372, %v3261, 0
    %v3293 = vsel %vm372, %v3262, 0
    %v3296 = vsel %vm372, %v3263, 0
    %v3299 = vsel %vm372, %v3264, 0
    %v3302 = vsel %vm372, %v3265, 0
    %v3305 = vsel %vm372, %v3266, 0
    %v3308 = vsel %vm372, %v3267, 0
    %v3311 = vsel %vm372, %v3268, 0
    %v3314 = vsel %vm372, %v3269, 0
    %v3317 = vsel %vm372, %v3270, 0
    %3319 = vmatprep.subr.mxu0 0.0
    %3320 = vmatpush1.msra.mxu0 %v253
    %3321 = vmatprep.subr.mxu0 0.0
    %3322 = vmatpush1.msra.mxu0 0.0
    %3323 = vmatprep.subr.mxu0 0.0
    %3324 = vmatpush1.msra.mxu0 0.0
    %3325 = vmatprep.subr.mxu0 0.0
    %3326 = vmatpush1.msra.mxu0 0.0
    %3327 = vmatprep.subr.mxu0 0.0
    %3328 = vmatpush1.msra.mxu0 0.0
    %3329 = vmatprep.subr.mxu0 0.0
    %3330 = vmatpush1.msra.mxu0 0.0
    %3331 = vmatprep.subr.mxu0 0.0
    %3332 = vmatpush1.msra.mxu0 0.0
    %3333 = vmatprep.subr.mxu0 0.0
    %3334 = vmatpush1.msra.mxu0 0.0
    %3335 = vmatprep.subr.mxu0 0.0
    %3336 = vmatpush1.msra.mxu0 0.0
    %3337 = vmatprep.subr.mxu0 0.0
    %3338 = vmatpush1.msra.mxu0 0.0
    %3339 = vmatprep.subr.mxu0 0.0
    %3340 = vmatpush1.msra.mxu0 0.0
    %3341 = vmatprep.subr.mxu0 0.0
    %3342 = vmatpush1.msra.mxu0 0.0
    %3343 = vmatprep.subr.mxu0 0.0
    %3344 = vmatpush1.msra.mxu0 0.0
    %3345 = vmatprep.subr.mxu0 0.0
    %3346 = vmatpush1.msra.mxu0 0.0
    %3347 = vmatprep.subr.mxu0 0.0
    %3348 = vmatpush1.msra.mxu0 0.0
    %3349 = vmatprep.subr.mxu0 0.0
    %3350 = vmatpush1.msra.mxu0 0.0
    %3351 = vmatprep.subr.mxu0 0.0
    %3352 = vmatpush1.msra.mxu0 0.0
    %3353 = vmatprep.subr.mxu0 0.0
    %3354 = vmatpush1.msra.mxu0 0.0
    %3355 = vmatprep.subr.mxu0 0.0
    %3356 = vmatpush1.msra.mxu0 0.0
    %3357 = vmatprep.subr.mxu0 0.0
    %3358 = vmatpush1.msra.mxu0 0.0
    %3359 = vmatprep.subr.mxu0 0.0
    %3360 = vmatpush1.msra.mxu0 0.0
    %3361 = vmatprep.subr.mxu0 0.0
    %3362 = vmatpush1.msra.mxu0 0.0
    %3363 = vmatprep.subr.mxu0 0.0
    %3364 = vmatpush1.msra.mxu0 0.0
    %3365 = vmatprep.subr.mxu0 0.0
    %3366 = vmatpush1.msra.mxu0 0.0
    %3367 = vmatprep.subr.mxu0 0.0
    %3368 = vmatpush1.msra.mxu0 0.0
    %3369 = vmatprep.subr.mxu0 0.0
    %3370 = vmatpush1.msra.mxu0 0.0
    %3371 = vmatprep.subr.mxu0 0.0
    %3372 = vmatpush1.msra.mxu0 0.0
    %3373 = vmatprep.subr.mxu0 0.0
    %3374 = vmatpush1.msra.mxu0 0.0
    %3375 = vmatprep.subr.mxu0 0.0
    %3376 = vmatpush1.msra.mxu0 0.0
    %3377 = vmatprep.subr.mxu0 0.0
    %3378 = vmatpush1.msra.mxu0 0.0
    %3379 = vmatprep.subr.mxu0 0.0
    %3380 = vmatpush1.msra.mxu0 0.0
    %3381 = vmatprep.subr.mxu0 0.0
    %3382 = vmatpush1.msra.mxu0 0.0
    %3383 = vmatprep.mubr.f32.mxu0 0.0
    %3384 = vmatmul.mubr.f32.gmra.mrb[0].mxu0 %v3272
    %v3385 = vpop.f32.mrb[0].mxu0
    %v3386 = vadd.f32 0.0, %v3385
    %v3387 = vpop.f32.mrb[0].mxu0
    %3388 = vmatprep.mubr.f32.mxu0 0.0
    %3389 = vmatmul.mubr.f32.gmra.mrb[0].mxu0 %v3275
    %v3390 = vpop.f32.mrb[0].mxu0
    %v3391 = vadd.f32 0.0, %v3390
    %v3392 = vpop.f32.mrb[0].mxu0
    %3393 = vmatprep.mubr.f32.mxu0 0.0
    %3394 = vmatmul.mubr.f32.gmra.mrb[0].mxu0 %v3278
    %v3395 = vpop.f32.mrb[0].mxu0
    %v3396 = vadd.f32 0.0, %v3395
    %v3397 = vpop.f32.mrb[0].mxu0
    %3398 = vmatprep.mubr.f32.mxu0 0.0
    %3399 = vmatmul.mubr.f32.gmra.mrb[0].mxu0 %v3281
    %v3400 = vpop.f32.mrb[0].mxu0
    %v3401 = vadd.f32 0.0, %v3400
    %v3402 = vpop.f32.mrb[0].mxu0
    %3403 = vmatprep.mubr.f32.mxu0 0.0
    %3404 = vmatmul.mubr.f32.gmra.mrb[0].mxu0 %v3284
    %v3405 = vpop.f32.mrb[0].mxu0
    %v3406 = vadd.f32 0.0, %v3405
    %v3407 = vpop.f32.mrb[0].mxu0
    %3408 = vmatprep.mubr.f32.mxu0 0.0
    %3409 = vmatmul.mubr.f32.gmra.mrb[0].mxu0 %v3287
    %v3410 = vpop.f32.mrb[0].mxu0
    %v3411 = vadd.f32 0.0, %v3410
    %v3412 = vpop.f32.mrb[0].mxu0
    %3413 = vmatprep.mubr.f32.mxu0 0.0
    %3414 = vmatmul.mubr.f32.gmra.mrb[0].mxu0 %v3290
    %v3415 = vpop.f32.mrb[0].mxu0
    %v3416 = vadd.f32 0.0, %v3415
    %v3417 = vpop.f32.mrb[0].mxu0
    %3418 = vmatprep.mubr.f32.mxu0 0.0
    %3419 = vmatmul.mubr.f32.gmra.mrb[0].mxu0 %v3293
    %v3420 = vpop.f32.mrb[0].mxu0
    %v3421 = vadd.f32 0.0, %v3420
    %v3422 = vpop.f32.mrb[0].mxu0
    %3423 = vmatprep.mubr.f32.mxu0 0.0
    %3424 = vmatmul.mubr.f32.gmra.mrb[0].mxu0 %v3296
    %v3425 = vpop.f32.mrb[0].mxu0
    %v3426 = vadd.f32 0.0, %v3425
    %v3427 = vpop.f32.mrb[0].mxu0
    %3428 = vmatprep.mubr.f32.mxu0 0.0
    %3429 = vmatmul.mubr.f32.gmra.mrb[0].mxu0 %v3299
    %v3430 = vpop.f32.mrb[0].mxu0
    %v3431 = vadd.f32 0.0, %v3430
    %v3432 = vpop.f32.mrb[0].mxu0
    %3433 = vmatprep.mubr.f32.mxu0 0.0
    %3434 = vmatmul.mubr.f32.gmra.mrb[0].mxu0 %v3302
    %v3435 = vpop.f32.mrb[0].mxu0
    %v3436 = vadd.f32 0.0, %v3435
    %v3437 = vpop.f32.mrb[0].mxu0
    %3438 = vmatprep.mubr.f32.mxu0 0.0
    %3439 = vmatmul.mubr.f32.gmra.mrb[0].mxu0 %v3305
    %v3440 = vpop.f32.mrb[0].mxu0
    %v3441 = vadd.f32 0.0, %v3440
    %v3442 = vpop.f32.mrb[0].mxu0
    %3443 = vmatprep.mubr.f32.mxu0 0.0
    %3444 = vmatmul.mubr.f32.gmra.mrb[0].mxu0 %v3308
    %v3445 = vpop.f32.mrb[0].mxu0
    %v3446 = vadd.f32 0.0, %v3445
    %v3447 = vpop.f32.mrb[0].mxu0
    %3448 = vmatprep.mubr.f32.mxu0 0.0
    %3449 = vmatmul.mubr.f32.gmra.mrb[0].mxu0 %v3311
    %v3450 = vpop.f32.mrb[0].mxu0
    %v3451 = vadd.f32 0.0, %v3450
    %v3452 = vpop.f32.mrb[0].mxu0
    %3453 = vmatprep.mubr.f32.mxu0 0.0
    %3454 = vmatmul.mubr.f32.gmra.mrb[0].mxu0 %v3314
    %v3455 = vpop.f32.mrb[0].mxu0
    %v3456 = vadd.f32 0.0, %v3455
    %v3457 = vpop.f32.mrb[0].mxu0
    %3458 = vmatprep.mubr.f32.mxu0 0.0
    %3459 = vmatmul.mubr.f32.gmra.mrb[0].mxu0 %v3317
    %v3460 = vpop.f32.mrb[0].mxu0
    %v3461 = vadd.f32 0.0, %v3460
    %v3462 = vpop.f32.mrb[0].mxu0
    %3463 = vdwg.mxu0
    %3468 = vrot.lane.b32.xlu0 %v3406, 96
    %v3469 = vpop.permute.xlu0 %3468
    %3470 = vrot.lane.b32.xlu0 %v3411, 96
    %v3471 = vpop.permute.xlu0 %3470
    %3472 = vrot.lane.b32.xlu0 %v3416, 96
    %v3473 = vpop.permute.xlu0 %3472
    %3474 = vrot.lane.b32.xlu0 %v3421, 96
    %v3475 = vpop.permute.xlu0 %3474
    %3484 = vrot.lane.b32.xlu0 %v3426, 64
    %v3485 = vpop.permute.xlu0 %3484
    %3486 = vrot.lane.b32.xlu0 %v3431, 64
    %v3487 = vpop.permute.xlu0 %3486
    %3488 = vrot.lane.b32.xlu0 %v3436, 64
    %v3489 = vpop.permute.xlu0 %3488
    %3490 = vrot.lane.b32.xlu0 %v3441, 64
    %v3491 = vpop.permute.xlu0 %3490
    %3500 = vrot.lane.b32.xlu0 %v3446, 32
    %v3501 = vpop.permute.xlu0 %3500
    %3502 = vrot.lane.b32.xlu0 %v3451, 32
    %v3503 = vpop.permute.xlu0 %3502
    %3504 = vrot.lane.b32.xlu0 %v3456, 32
    %v3505 = vpop.permute.xlu0 %3504
    %3506 = vrot.lane.b32.xlu0 %v3461, 32
    %v3507 = vpop.permute.xlu0 %3506
    %v3512 = vmul.f32 %v3386, 0.17677669
    %v3513 = vmul.f32 %v3391, 0.17677669
    %v3514 = vmul.f32 %v3396, 0.17677669
    %v3515 = vmul.f32 %v3401, 0.17677669
    %v3516 = vmul.f32 %v3469, 0.17677669
    %v3517 = vmul.f32 %v3471, 0.17677669
    %v3518 = vmul.f32 %v3473, 0.17677669
    %v3519 = vmul.f32 %v3475, 0.17677669
    %v3520 = vmul.f32 %v3485, 0.17677669
    %v3521 = vmul.f32 %v3487, 0.17677669
    %v3522 = vmul.f32 %v3489, 0.17677669
    %v3523 = vmul.f32 %v3491, 0.17677669
    %v3524 = vmul.f32 %v3501, 0.17677669
    %v3525 = vmul.f32 %v3503, 0.17677669
    %v3526 = vmul.f32 %v3505, 0.17677669
    %v3527 = vmul.f32 %v3507, 0.17677669
    %v3528 = vsel %vm68, %v3512, 0.0
    %3529 = vadd.xlane.f32.xlu0 %v3528
    %v3530 = vpop.xlane.xlu0 %3529
    %v3531 = vsel %vm68, %v3513, 0.0
    %3532 = vadd.xlane.f32.xlu0 %v3531
    %v3533 = vpop.xlane.xlu0 %3532
    %v3534 = vsel %vm68, %v3514, 0.0
    %3535 = vadd.xlane.f32.xlu0 %v3534
    %v3536 = vpop.xlane.xlu0 %3535
    %v3537 = vsel %vm68, %v3515, 0.0
    %3538 = vadd.xlane.f32.xlu0 %v3537
    %v3539 = vpop.xlane.xlu0 %3538
    %v3540 = vsel %vm68, %v3516, 0.0
    %3541 = vadd.xlane.f32.xlu0 %v3540
    %v3542 = vpop.xlane.xlu0 %3541
    %v3543 = vsel %vm68, %v3517, 0.0
    %3544 = vadd.xlane.f32.xlu0 %v3543
    %v3545 = vpop.xlane.xlu0 %3544
    %v3546 = vsel %vm68, %v3518, 0.0
    %3547 = vadd.xlane.f32.xlu0 %v3546
    %v3548 = vpop.xlane.xlu0 %3547
    %v3549 = vsel %vm68, %v3519, 0.0
    %3550 = vadd.xlane.f32.xlu0 %v3549
    %v3551 = vpop.xlane.xlu0 %3550
    %v3552 = vsel %vm68, %v3520, 0.0
    %3553 = vadd.xlane.f32.xlu0 %v3552
    %v3554 = vpop.xlane.xlu0 %3553
    %v3555 = vsel %vm68, %v3521, 0.0
    %3556 = vadd.xlane.f32.xlu0 %v3555
    %v3557 = vpop.xlane.xlu0 %3556
    %v3558 = vsel %vm68, %v3522, 0.0
    %3559 = vadd.xlane.f32.xlu0 %v3558
    %v3560 = vpop.xlane.xlu0 %3559
    %v3561 = vsel %vm68, %v3523, 0.0
    %3562 = vadd.xlane.f32.xlu0 %v3561
    %v3563 = vpop.xlane.xlu0 %3562
    %v3564 = vsel %vm68, %v3524, 0.0
    %3565 = vadd.xlane.f32.xlu0 %v3564
    %v3566 = vpop.xlane.xlu0 %3565
    %v3567 = vsel %vm68, %v3525, 0.0
    %3568 = vadd.xlane.f32.xlu0 %v3567
    %v3569 = vpop.xlane.xlu0 %3568
    %v3570 = vsel %vm68, %v3526, 0.0
    %3571 = vadd.xlane.f32.xlu0 %v3570
    %v3572 = vpop.xlane.xlu0 %3571
    %v3573 = vsel %vm68, %v3527, 0.0
    %3574 = vadd.xlane.f32.xlu0 %v3573
    %v3575 = vpop.xlane.xlu0 %3574
    %v3576 = vmul.f32 %v3530, %v81
    %v3577 = vmul.f32 %v3533, %v81
    %v3578 = vmul.f32 %v3536, %v81
    %v3579 = vmul.f32 %v3539, %v81
    %v3580 = vmul.f32 %v3542, %v81
    %v3581 = vmul.f32 %v3545, %v81
    %v3582 = vmul.f32 %v3548, %v81
    %v3583 = vmul.f32 %v3551, %v81
    %v3584 = vmul.f32 %v3554, %v81
    %v3585 = vmul.f32 %v3557, %v81
    %v3586 = vmul.f32 %v3560, %v81
    %v3587 = vmul.f32 %v3563, %v81
    %v3588 = vmul.f32 %v3566, %v81
    %v3589 = vmul.f32 %v3569, %v81
    %v3590 = vmul.f32 %v3572, %v81
    %v3591 = vmul.f32 %v3575, %v81
    %v3592 = vadd.f32 %v3576, %v3577
    %v3593 = vadd.f32 %v3592, %v3578
    %v3594 = vadd.f32 %v3593, %v3579
    %v3595 = vrot.slane %v3594, 4
    %v3596 = vadd.f32 %v3594, %v3595
    %v3597 = vrot.slane %v3596, 2
    %v3598 = vadd.f32 %v3596, %v3597
    %v3599 = vrot.slane %v3598, 1
    %v3600 = vadd.f32 %v3598, %v3599
    %v3601 = vadd.f32 %v3580, %v3581
    %v3602 = vadd.f32 %v3601, %v3582
    %v3603 = vadd.f32 %v3602, %v3583
    %v3604 = vrot.slane %v3603, 4
    %v3605 = vadd.f32 %v3603, %v3604
    %v3606 = vrot.slane %v3605, 2
    %v3607 = vadd.f32 %v3605, %v3606
    %v3608 = vrot.slane %v3607, 1
    %v3609 = vadd.f32 %v3607, %v3608
    %v3610 = vadd.f32 %v3584, %v3585
    %v3611 = vadd.f32 %v3610, %v3586
    %v3612 = vadd.f32 %v3611, %v3587
    %v3613 = vrot.slane %v3612, 4
    %v3614 = vadd.f32 %v3612, %v3613
    %v3615 = vrot.slane %v3614, 2
    %v3616 = vadd.f32 %v3614, %v3615
    %v3617 = vrot.slane %v3616, 1
    %v3618 = vadd.f32 %v3616, %v3617
    %v3619 = vadd.f32 %v3588, %v3589
    %v3620 = vadd.f32 %v3619, %v3590
    %v3621 = vadd.f32 %v3620, %v3591
    %v3622 = vrot.slane %v3621, 4
    %v3623 = vadd.f32 %v3621, %v3622
    %v3624 = vrot.slane %v3623, 2
    %v3625 = vadd.f32 %v3623, %v3624
    %v3626 = vrot.slane %v3625, 1
    %v3627 = vadd.f32 %v3625, %v3626
    %v3628 = vmul.f32 %v3600, %v81
    %v3629 = vmul.f32 %v3609, %v81
    %v3630 = vmul.f32 %v3618, %v81
    %v3631 = vmul.f32 %v3627, %v81
    %v3632 = vsub.f32 %v3512, %v3628
    %v3633 = vsub.f32 %v3513, %v3628
    %v3634 = vsub.f32 %v3514, %v3628
    %v3635 = vsub.f32 %v3515, %v3628
    %v3636 = vsub.f32 %v3516, %v3629
    %v3637 = vsub.f32 %v3517, %v3629
    %v3638 = vsub.f32 %v3518, %v3629
    %v3639 = vsub.f32 %v3519, %v3629
    %v3640 = vsub.f32 %v3520, %v3630
    %v3641 = vsub.f32 %v3521, %v3630
    %v3642 = vsub.f32 %v3522, %v3630
    %v3643 = vsub.f32 %v3523, %v3630
    %v3644 = vsub.f32 %v3524, %v3631
    %v3645 = vsub.f32 %v3525, %v3631
    %v3646 = vsub.f32 %v3526, %v3631
    %v3647 = vsub.f32 %v3527, %v3631
    %v3648 = vmul.f32 %v3632, %v3632
    %v3649 = vmul.f32 %v3633, %v3633
    %v3650 = vmul.f32 %v3634, %v3634
    %v3651 = vmul.f32 %v3635, %v3635
    %v3652 = vmul.f32 %v3636, %v3636
    %v3653 = vmul.f32 %v3637, %v3637
    %v3654 = vmul.f32 %v3638, %v3638
    %v3655 = vmul.f32 %v3639, %v3639
    %v3656 = vmul.f32 %v3640, %v3640
    %v3657 = vmul.f32 %v3641, %v3641
    %v3658 = vmul.f32 %v3642, %v3642
    %v3659 = vmul.f32 %v3643, %v3643
    %v3660 = vmul.f32 %v3644, %v3644
    %v3661 = vmul.f32 %v3645, %v3645
    %v3662 = vmul.f32 %v3646, %v3646
    %v3663 = vmul.f32 %v3647, %v3647
    %v3664 = vsel %vm68, %v3648, 0.0
    %3665 = vadd.xlane.f32.xlu0 %v3664
    %v3666 = vpop.xlane.xlu0 %3665
    %v3667 = vsel %vm68, %v3649, 0.0
    %3668 = vadd.xlane.f32.xlu0 %v3667
    %v3669 = vpop.xlane.xlu0 %3668
    %v3670 = vsel %vm68, %v3650, 0.0
    %3671 = vadd.xlane.f32.xlu0 %v3670
    %v3672 = vpop.xlane.xlu0 %3671
    %v3673 = vsel %vm68, %v3651, 0.0
    %3674 = vadd.xlane.f32.xlu0 %v3673
    %v3675 = vpop.xlane.xlu0 %3674
    %v3676 = vsel %vm68, %v3652, 0.0
    %3677 = vadd.xlane.f32.xlu0 %v3676
    %v3678 = vpop.xlane.xlu0 %3677
    %v3679 = vsel %vm68, %v3653, 0.0
    %3680 = vadd.xlane.f32.xlu0 %v3679
    %v3681 = vpop.xlane.xlu0 %3680
    %v3682 = vsel %vm68, %v3654, 0.0
    %3683 = vadd.xlane.f32.xlu0 %v3682
    %v3684 = vpop.xlane.xlu0 %3683
    %v3685 = vsel %vm68, %v3655, 0.0
    %3686 = vadd.xlane.f32.xlu0 %v3685
    %v3687 = vpop.xlane.xlu0 %3686
    %v3688 = vsel %vm68, %v3656, 0.0
    %3689 = vadd.xlane.f32.xlu0 %v3688
    %v3690 = vpop.xlane.xlu0 %3689
    %v3691 = vsel %vm68, %v3657, 0.0
    %3692 = vadd.xlane.f32.xlu0 %v3691
    %v3693 = vpop.xlane.xlu0 %3692
    %v3694 = vsel %vm68, %v3658, 0.0
    %3695 = vadd.xlane.f32.xlu0 %v3694
    %v3696 = vpop.xlane.xlu0 %3695
    %v3697 = vsel %vm68, %v3659, 0.0
    %3698 = vadd.xlane.f32.xlu0 %v3697
    %v3699 = vpop.xlane.xlu0 %3698
    %v3700 = vsel %vm68, %v3660, 0.0
    %3701 = vadd.xlane.f32.xlu0 %v3700
    %v3702 = vpop.xlane.xlu0 %3701
    %v3703 = vsel %vm68, %v3661, 0.0
    %3704 = vadd.xlane.f32.xlu0 %v3703
    %v3705 = vpop.xlane.xlu0 %3704
    %v3706 = vsel %vm68, %v3662, 0.0
    %3707 = vadd.xlane.f32.xlu0 %v3706
    %v3708 = vpop.xlane.xlu0 %3707
    %v3709 = vsel %vm68, %v3663, 0.0
    %3710 = vadd.xlane.f32.xlu0 %v3709
    %v3711 = vpop.xlane.xlu0 %3710
    %v3712 = vmul.f32 %v3666, %v81
    %v3713 = vmul.f32 %v3669, %v81
    %v3714 = vmul.f32 %v3672, %v81
    %v3715 = vmul.f32 %v3675, %v81
    %v3716 = vmul.f32 %v3678, %v81
    %v3717 = vmul.f32 %v3681, %v81
    %v3718 = vmul.f32 %v3684, %v81
    %v3719 = vmul.f32 %v3687, %v81
    %v3720 = vmul.f32 %v3690, %v81
    %v3721 = vmul.f32 %v3693, %v81
    %v3722 = vmul.f32 %v3696, %v81
    %v3723 = vmul.f32 %v3699, %v81
    %v3724 = vmul.f32 %v3702, %v81
    %v3725 = vmul.f32 %v3705, %v81
    %v3726 = vmul.f32 %v3708, %v81
    %v3727 = vmul.f32 %v3711, %v81
    %v3728 = vadd.f32 %v3712, %v3713
    %v3729 = vadd.f32 %v3728, %v3714
    %v3730 = vadd.f32 %v3729, %v3715
    %v3731 = vrot.slane %v3730, 4
    %v3732 = vadd.f32 %v3730, %v3731
    %v3733 = vrot.slane %v3732, 2
    %v3734 = vadd.f32 %v3732, %v3733
    %v3735 = vrot.slane %v3734, 1
    %v3736 = vadd.f32 %v3734, %v3735
    %v3737 = vadd.f32 %v3716, %v3717
    %v3738 = vadd.f32 %v3737, %v3718
    %v3739 = vadd.f32 %v3738, %v3719
    %v3740 = vrot.slane %v3739, 4
    %v3741 = vadd.f32 %v3739, %v3740
    %v3742 = vrot.slane %v3741, 2
    %v3743 = vadd.f32 %v3741, %v3742
    %v3744 = vrot.slane %v3743, 1
    %v3745 = vadd.f32 %v3743, %v3744
    %v3746 = vadd.f32 %v3720, %v3721
    %v3747 = vadd.f32 %v3746, %v3722
    %v3748 = vadd.f32 %v3747, %v3723
    %v3749 = vrot.slane %v3748, 4
    %v3750 = vadd.f32 %v3748, %v3749
    %v3751 = vrot.slane %v3750, 2
    %v3752 = vadd.f32 %v3750, %v3751
    %v3753 = vrot.slane %v3752, 1
    %v3754 = vadd.f32 %v3752, %v3753
    %v3755 = vadd.f32 %v3724, %v3725
    %v3756 = vadd.f32 %v3755, %v3726
    %v3757 = vadd.f32 %v3756, %v3727
    %v3758 = vrot.slane %v3757, 4
    %v3759 = vadd.f32 %v3757, %v3758
    %v3760 = vrot.slane %v3759, 2
    %v3761 = vadd.f32 %v3759, %v3760
    %v3762 = vrot.slane %v3761, 1
    %v3763 = vadd.f32 %v3761, %v3762
    %v3764 = vmul.f32 %v3736, %v81
    %v3765 = vmul.f32 %v3745, %v81
    %v3766 = vmul.f32 %v3754, %v81
    %v3767 = vmul.f32 %v3763, %v81
    %v3768 = vadd.f32 %v3764, 1e-05
    %v3769 = vadd.f32 %v3765, 1e-05
    %v3770 = vadd.f32 %v3766, 1e-05
    %v3771 = vadd.f32 %v3767, 1e-05
    %v3772 = vrsqrt.pop %v3768
    %v3773 = vrsqrt.pop %v3769
    %v3774 = vrsqrt.pop %v3770
    %v3775 = vrsqrt.pop %v3771
    %v3776 = vmul.f32 %v3632, %v3772
    %v3777 = vmul.f32 %v3633, %v3772
    %v3778 = vmul.f32 %v3634, %v3772
    %v3779 = vmul.f32 %v3635, %v3772
    %v3780 = vmul.f32 %v3636, %v3773
    %v3781 = vmul.f32 %v3637, %v3773
    %v3782 = vmul.f32 %v3638, %v3773
    %v3783 = vmul.f32 %v3639, %v3773
    %v3784 = vmul.f32 %v3640, %v3774
    %v3785 = vmul.f32 %v3641, %v3774
    %v3786 = vmul.f32 %v3642, %v3774
    %v3787 = vmul.f32 %v3643, %v3774
    %v3788 = vmul.f32 %v3644, %v3775
    %v3789 = vmul.f32 %v3645, %v3775
    %v3790 = vmul.f32 %v3646, %v3775
    %v3791 = vmul.f32 %v3647, %v3775
    %v3792 = vsel %vm68, %v3776, -inf
    %3793 = vmax.xlane.f32.xlu0 %v3792
    %v3794 = vpop.xlane.xlu0 %3793
    %v3795 = vsel %vm68, %v3777, -inf
    %3796 = vmax.xlane.f32.xlu0 %v3795
    %v3797 = vpop.xlane.xlu0 %3796
    %v3798 = vsel %vm68, %v3778, -inf
    %3799 = vmax.xlane.f32.xlu0 %v3798
    %v3800 = vpop.xlane.xlu0 %3799
    %v3801 = vsel %vm68, %v3779, -inf
    %3802 = vmax.xlane.f32.xlu0 %v3801
    %v3803 = vpop.xlane.xlu0 %3802
    %v3804 = vsel %vm68, %v3780, -inf
    %3805 = vmax.xlane.f32.xlu0 %v3804
    %v3806 = vpop.xlane.xlu0 %3805
    %v3807 = vsel %vm68, %v3781, -inf
    %3808 = vmax.xlane.f32.xlu0 %v3807
    %v3809 = vpop.xlane.xlu0 %3808
    %v3810 = vsel %vm68, %v3782, -inf
    %3811 = vmax.xlane.f32.xlu0 %v3810
    %v3812 = vpop.xlane.xlu0 %3811
    %v3813 = vsel %vm68, %v3783, -inf
    %3814 = vmax.xlane.f32.xlu0 %v3813
    %v3815 = vpop.xlane.xlu0 %3814
    %v3816 = vsel %vm68, %v3784, -inf
    %3817 = vmax.xlane.f32.xlu0 %v3816
    %v3818 = vpop.xlane.xlu0 %3817
    %v3819 = vsel %vm68, %v3785, -inf
    %3820 = vmax.xlane.f32.xlu0 %v3819
    %v3821 = vpop.xlane.xlu0 %3820
    %v3822 = vsel %vm68, %v3786, -inf
    %3823 = vmax.xlane.f32.xlu0 %v3822
    %v3824 = vpop.xlane.xlu0 %3823
    %v3825 = vsel %vm68, %v3787, -inf
    %3826 = vmax.xlane.f32.xlu0 %v3825
    %v3827 = vpop.xlane.xlu0 %3826
    %v3828 = vsel %vm68, %v3788, -inf
    %3829 = vmax.xlane.f32.xlu0 %v3828
    %v3830 = vpop.xlane.xlu0 %3829
    %v3831 = vsel %vm68, %v3789, -inf
    %3832 = vmax.xlane.f32.xlu0 %v3831
    %v3833 = vpop.xlane.xlu0 %3832
    %v3834 = vsel %vm68, %v3790, -inf
    %3835 = vmax.xlane.f32.xlu0 %v3834
    %v3836 = vpop.xlane.xlu0 %3835
    %v3837 = vsel %vm68, %v3791, -inf
    %3838 = vmax.xlane.f32.xlu0 %v3837
    %v3839 = vpop.xlane.xlu0 %3838
    %v3840 = vsub.f32 %v3776, %v3794
    %v3841 = vsub.f32 %v3777, %v3797
    %v3842 = vsub.f32 %v3778, %v3800
    %v3843 = vsub.f32 %v3779, %v3803
    %v3844 = vsub.f32 %v3780, %v3806
    %v3845 = vsub.f32 %v3781, %v3809
    %v3846 = vsub.f32 %v3782, %v3812
    %v3847 = vsub.f32 %v3783, %v3815
    %v3848 = vsub.f32 %v3784, %v3818
    %v3849 = vsub.f32 %v3785, %v3821
    %v3850 = vsub.f32 %v3786, %v3824
    %v3851 = vsub.f32 %v3787, %v3827
    %v3852 = vsub.f32 %v3788, %v3830
    %v3853 = vsub.f32 %v3789, %v3833
    %v3854 = vsub.f32 %v3790, %v3836
    %v3855 = vsub.f32 %v3791, %v3839
    %v3856 = vmul.f32 %v3840, 1.442695
    %v3857 = vpow.pop %v3856
    %v3858 = vmul.f32 %v3841, 1.442695
    %v3859 = vpow.pop %v3858
    %v3860 = vmul.f32 %v3842, 1.442695
    %v3861 = vpow.pop %v3860
    %v3862 = vmul.f32 %v3843, 1.442695
    %v3863 = vpow.pop %v3862
    %v3864 = vmul.f32 %v3844, 1.442695
    %v3865 = vpow.pop %v3864
    %v3866 = vmul.f32 %v3845, 1.442695
    %v3867 = vpow.pop %v3866
    %v3868 = vmul.f32 %v3846, 1.442695
    %v3869 = vpow.pop %v3868
    %v3870 = vmul.f32 %v3847, 1.442695
    %v3871 = vpow.pop %v3870
    %v3872 = vmul.f32 %v3848, 1.442695
    %v3873 = vpow.pop %v3872
    %v3874 = vmul.f32 %v3849, 1.442695
    %v3875 = vpow.pop %v3874
    %v3876 = vmul.f32 %v3850, 1.442695
    %v3877 = vpow.pop %v3876
    %v3878 = vmul.f32 %v3851, 1.442695
    %v3879 = vpow.pop %v3878
    %v3880 = vmul.f32 %v3852, 1.442695
    %v3881 = vpow.pop %v3880
    %v3882 = vmul.f32 %v3853, 1.442695
    %v3883 = vpow.pop %v3882
    %v3884 = vmul.f32 %v3854, 1.442695
    %v3885 = vpow.pop %v3884
    %v3886 = vmul.f32 %v3855, 1.442695
    %v3887 = vpow.pop %v3886
    %v3888 = vsel %vm68, %v3857, 0.0
    %3889 = vadd.xlane.f32.xlu0 %v3888
    %v3890 = vpop.xlane.xlu0 %3889
    %v3891 = vsel %vm68, %v3859, 0.0
    %3892 = vadd.xlane.f32.xlu0 %v3891
    %v3893 = vpop.xlane.xlu0 %3892
    %v3894 = vsel %vm68, %v3861, 0.0
    %3895 = vadd.xlane.f32.xlu0 %v3894
    %v3896 = vpop.xlane.xlu0 %3895
    %v3897 = vsel %vm68, %v3863, 0.0
    %3898 = vadd.xlane.f32.xlu0 %v3897
    %v3899 = vpop.xlane.xlu0 %3898
    %v3900 = vsel %vm68, %v3865, 0.0
    %3901 = vadd.xlane.f32.xlu0 %v3900
    %v3902 = vpop.xlane.xlu0 %3901
    %v3903 = vsel %vm68, %v3867, 0.0
    %3904 = vadd.xlane.f32.xlu0 %v3903
    %v3905 = vpop.xlane.xlu0 %3904
    %v3906 = vsel %vm68, %v3869, 0.0
    %3907 = vadd.xlane.f32.xlu0 %v3906
    %v3908 = vpop.xlane.xlu0 %3907
    %v3909 = vsel %vm68, %v3871, 0.0
    %3910 = vadd.xlane.f32.xlu0 %v3909
    %v3911 = vpop.xlane.xlu0 %3910
    %v3912 = vsel %vm68, %v3873, 0.0
    %3913 = vadd.xlane.f32.xlu0 %v3912
    %v3914 = vpop.xlane.xlu0 %3913
    %v3915 = vsel %vm68, %v3875, 0.0
    %3916 = vadd.xlane.f32.xlu0 %v3915
    %v3917 = vpop.xlane.xlu0 %3916
    %v3918 = vsel %vm68, %v3877, 0.0
    %3919 = vadd.xlane.f32.xlu0 %v3918
    %v3920 = vpop.xlane.xlu0 %3919
    %v3921 = vsel %vm68, %v3879, 0.0
    %3922 = vadd.xlane.f32.xlu0 %v3921
    %v3923 = vpop.xlane.xlu0 %3922
    %v3924 = vsel %vm68, %v3881, 0.0
    %3925 = vadd.xlane.f32.xlu0 %v3924
    %v3926 = vpop.xlane.xlu0 %3925
    %v3927 = vsel %vm68, %v3883, 0.0
    %3928 = vadd.xlane.f32.xlu0 %v3927
    %v3929 = vpop.xlane.xlu0 %3928
    %v3930 = vsel %vm68, %v3885, 0.0
    %3931 = vadd.xlane.f32.xlu0 %v3930
    %v3932 = vpop.xlane.xlu0 %3931
    %v3933 = vsel %vm68, %v3887, 0.0
    %3934 = vadd.xlane.f32.xlu0 %v3933
    %v3935 = vpop.xlane.xlu0 %3934
    %v3936 = vrcp.pop %v3890
    %v3937 = vrcp.pop %v3893
    %v3938 = vrcp.pop %v3896
    %v3939 = vrcp.pop %v3899
    %v3940 = vrcp.pop %v3902
    %v3941 = vrcp.pop %v3905
    %v3942 = vrcp.pop %v3908
    %v3943 = vrcp.pop %v3911
    %v3944 = vrcp.pop %v3914
    %v3945 = vrcp.pop %v3917
    %v3946 = vrcp.pop %v3920
    %v3947 = vrcp.pop %v3923
    %v3948 = vrcp.pop %v3926
    %v3949 = vrcp.pop %v3929
    %v3950 = vrcp.pop %v3932
    %v3951 = vrcp.pop %v3935
    %v3952 = vmul.f32 %v3857, %v3936
    %v3953 = vmul.f32 %v3859, %v3937
    %v3954 = vmul.f32 %v3861, %v3938
    %v3955 = vmul.f32 %v3863, %v3939
    %v3956 = vmul.f32 %v3865, %v3940
    %v3957 = vmul.f32 %v3867, %v3941
    %v3958 = vmul.f32 %v3869, %v3942
    %v3959 = vmul.f32 %v3871, %v3943
    %v3960 = vmul.f32 %v3873, %v3944
    %v3961 = vmul.f32 %v3875, %v3945
    %v3962 = vmul.f32 %v3877, %v3946
    %v3963 = vmul.f32 %v3879, %v3947
    %v3964 = vmul.f32 %v3881, %v3948
    %v3965 = vmul.f32 %v3883, %v3949
    %v3966 = vmul.f32 %v3885, %v3950
    %v3967 = vmul.f32 %v3887, %v3951
    %v3968 = vsel %vm68, %v3952, 0.0
    %v3969 = vsel %vm68, %v3956, 0.0
    %v3970 = vadd.f32 %v3968, %v3969
    %v3971 = vsel %vm68, %v3960, 0.0
    %v3972 = vadd.f32 %v3970, %v3971
    %v3973 = vsel %vm68, %v3964, 0.0
    %v3974 = vadd.f32 %v3972, %v3973
    %v3975 = vsel %vm68, %v3953, 0.0
    %v3976 = vsel %vm68, %v3957, 0.0
    %v3977 = vadd.f32 %v3975, %v3976
    %v3978 = vsel %vm68, %v3961, 0.0
    %v3979 = vadd.f32 %v3977, %v3978
    %v3980 = vsel %vm68, %v3965, 0.0
    %v3981 = vadd.f32 %v3979, %v3980
    %v3982 = vsel %vm68, %v3954, 0.0
    %v3983 = vsel %vm68, %v3958, 0.0
    %v3984 = vadd.f32 %v3982, %v3983
    %v3985 = vsel %vm68, %v3962, 0.0
    %v3986 = vadd.f32 %v3984, %v3985
    %v3987 = vsel %vm68, %v3966, 0.0
    %v3988 = vadd.f32 %v3986, %v3987
    %v3989 = vsel %vm68, %v3955, 0.0
    %v3990 = vsel %vm68, %v3959, 0.0
    %v3991 = vadd.f32 %v3989, %v3990
    %v3992 = vsel %vm68, %v3963, 0.0
    %v3993 = vadd.f32 %v3991, %v3992
    %v3994 = vsel %vm68, %v3967, 0.0
    %v3995 = vadd.f32 %v3993, %v3994
    %v3996 = vmul.f32 %v3974, %v1098
    %v3997 = vmul.f32 %v3981, %v1098
    %v3998 = vmul.f32 %v3988, %v1098
    %v3999 = vmul.f32 %v3995, %v1098
    %s4000 = scalar_lea.vmem [#allocation7], 96
    %4001 = vst.msk [vmem:[%s4000] sm:$0xff] %vm68, %v3996
    %4002 = vst.msk [vmem:[%s4000 + $0x8] sm:$0xff] %vm68, %v3997
    %4003 = vst.msk [vmem:[%s4000 + $0x10] sm:$0xff] %vm68, %v3998
    %4004 = vst.msk [vmem:[%s4000 + $0x18] sm:$0xff] %vm68, %v3999
    %4005 = vxpose.xlu0.b32.start [1/16] %v3952, 128
    %4006 = vxpose.xlu0.b32.cont [2/16] %v3953, 128
    %4007 = vxpose.xlu0.b32.cont [3/16] %v3954, 128
    %4008 = vxpose.xlu0.b32.cont [4/16] %v3955, 128
    %4009 = vxpose.xlu0.b32.cont [5/16] 0.0, 128
    %4010 = vxpose.xlu0.b32.cont [6/16] 0.0, 128
    %4011 = vxpose.xlu0.b32.cont [7/16] 0.0, 128
    %4012 = vxpose.xlu0.b32.cont [8/16] 0.0, 128
    %4013 = vxpose.xlu0.b32.cont [9/16] 0.0, 128
    %4014 = vxpose.xlu0.b32.cont [10/16] 0.0, 128
    %4015 = vxpose.xlu0.b32.cont [11/16] 0.0, 128
    %4016 = vxpose.xlu0.b32.cont [12/16] 0.0, 128
    %4017 = vxpose.xlu0.b32.cont [13/16] 0.0, 128
    %4018 = vxpose.xlu0.b32.cont [14/16] 0.0, 128
    %4019 = vxpose.xlu0.b32.cont [15/16] 0.0, 128
    %4020 = vxpose.xlu0.b32.end [16/16] 0.0, 128
    %v4021 = vpop.trf.xlu0
    %v4022 = vpop.trf.xlu0
    %v4023 = vpop.trf.xlu0
    %v4024 = vpop.trf.xlu0
    %v4025 = vpop.trf.xlu0
    %v4026 = vpop.trf.xlu0
    %v4027 = vpop.trf.xlu0
    %v4028 = vpop.trf.xlu0
    %v4029 = vpop.trf.xlu0
    %v4030 = vpop.trf.xlu0
    %v4031 = vpop.trf.xlu0
    %v4032 = vpop.trf.xlu0
    %v4033 = vpop.trf.xlu0
    %v4034 = vpop.trf.xlu0
    %v4035 = vpop.trf.xlu0
    %v4036 = vpop.trf.xlu0
    %4037 = vxpose.xlu0.b32.start [1/16] %v3956, 128
    %4038 = vxpose.xlu0.b32.cont [2/16] %v3957, 128
    %4039 = vxpose.xlu0.b32.cont [3/16] %v3958, 128
    %4040 = vxpose.xlu0.b32.cont [4/16] %v3959, 128
    %4041 = vxpose.xlu0.b32.cont [5/16] 0.0, 128
    %4042 = vxpose.xlu0.b32.cont [6/16] 0.0, 128
    %4043 = vxpose.xlu0.b32.cont [7/16] 0.0, 128
    %4044 = vxpose.xlu0.b32.cont [8/16] 0.0, 128
    %4045 = vxpose.xlu0.b32.cont [9/16] 0.0, 128
    %4046 = vxpose.xlu0.b32.cont [10/16] 0.0, 128
    %4047 = vxpose.xlu0.b32.cont [11/16] 0.0, 128
    %4048 = vxpose.xlu0.b32.cont [12/16] 0.0, 128
    %4049 = vxpose.xlu0.b32.cont [13/16] 0.0, 128
    %4050 = vxpose.xlu0.b32.cont [14/16] 0.0, 128
    %4051 = vxpose.xlu0.b32.cont [15/16] 0.0, 128
    %4052 = vxpose.xlu0.b32.end [16/16] 0.0, 128
    %v4053 = vpop.trf.xlu0
    %v4054 = vpop.trf.xlu0
    %v4055 = vpop.trf.xlu0
    %v4056 = vpop.trf.xlu0
    %v4057 = vpop.trf.xlu0
    %v4058 = vpop.trf.xlu0
    %v4059 = vpop.trf.xlu0
    %v4060 = vpop.trf.xlu0
    %v4061 = vpop.trf.xlu0
    %v4062 = vpop.trf.xlu0
    %v4063 = vpop.trf.xlu0
    %v4064 = vpop.trf.xlu0
    %v4065 = vpop.trf.xlu0
    %v4066 = vpop.trf.xlu0
    %v4067 = vpop.trf.xlu0
    %v4068 = vpop.trf.xlu0
    %4069 = vxpose.xlu0.b32.start [1/16] %v3960, 128
    %4070 = vxpose.xlu0.b32.cont [2/16] %v3961, 128
    %4071 = vxpose.xlu0.b32.cont [3/16] %v3962, 128
    %4072 = vxpose.xlu0.b32.cont [4/16] %v3963, 128
    %4073 = vxpose.xlu0.b32.cont [5/16] 0.0, 128
    %4074 = vxpose.xlu0.b32.cont [6/16] 0.0, 128
    %4075 = vxpose.xlu0.b32.cont [7/16] 0.0, 128
    %4076 = vxpose.xlu0.b32.cont [8/16] 0.0, 128
    %4077 = vxpose.xlu0.b32.cont [9/16] 0.0, 128
    %4078 = vxpose.xlu0.b32.cont [10/16] 0.0, 128
    %4079 = vxpose.xlu0.b32.cont [11/16] 0.0, 128
    %4080 = vxpose.xlu0.b32.cont [12/16] 0.0, 128
    %4081 = vxpose.xlu0.b32.cont [13/16] 0.0, 128
    %4082 = vxpose.xlu0.b32.cont [14/16] 0.0, 128
    %4083 = vxpose.xlu0.b32.cont [15/16] 0.0, 128
    %4084 = vxpose.xlu0.b32.end [16/16] 0.0, 128
    %v4085 = vpop.trf.xlu0
    %v4086 = vpop.trf.xlu0
    %v4087 = vpop.trf.xlu0
    %v4088 = vpop.trf.xlu0
    %v4089 = vpop.trf.xlu0
    %v4090 = vpop.trf.xlu0
    %v4091 = vpop.trf.xlu0
    %v4092 = vpop.trf.xlu0
    %v4093 = vpop.trf.xlu0
    %v4094 = vpop.trf.xlu0
    %v4095 = vpop.trf.xlu0
    %v4096 = vpop.trf.xlu0
    %v4097 = vpop.trf.xlu0
    %v4098 = vpop.trf.xlu0
    %v4099 = vpop.trf.xlu0
    %v4100 = vpop.trf.xlu0
    %4101 = vxpose.xlu0.b32.start [1/16] %v3964, 128
    %4102 = vxpose.xlu0.b32.cont [2/16] %v3965, 128
    %4103 = vxpose.xlu0.b32.cont [3/16] %v3966, 128
    %4104 = vxpose.xlu0.b32.cont [4/16] %v3967, 128
    %4105 = vxpose.xlu0.b32.cont [5/16] 0.0, 128
    %4106 = vxpose.xlu0.b32.cont [6/16] 0.0, 128
    %4107 = vxpose.xlu0.b32.cont [7/16] 0.0, 128
    %4108 = vxpose.xlu0.b32.cont [8/16] 0.0, 128
    %4109 = vxpose.xlu0.b32.cont [9/16] 0.0, 128
    %4110 = vxpose.xlu0.b32.cont [10/16] 0.0, 128
    %4111 = vxpose.xlu0.b32.cont [11/16] 0.0, 128
    %4112 = vxpose.xlu0.b32.cont [12/16] 0.0, 128
    %4113 = vxpose.xlu0.b32.cont [13/16] 0.0, 128
    %4114 = vxpose.xlu0.b32.cont [14/16] 0.0, 128
    %4115 = vxpose.xlu0.b32.cont [15/16] 0.0, 128
    %4116 = vxpose.xlu0.b32.end [16/16] 0.0, 128
    %v4117 = vpop.trf.xlu0
    %v4118 = vpop.trf.xlu0
    %v4119 = vpop.trf.xlu0
    %v4120 = vpop.trf.xlu0
    %v4121 = vpop.trf.xlu0
    %v4122 = vpop.trf.xlu0
    %v4123 = vpop.trf.xlu0
    %v4124 = vpop.trf.xlu0
    %v4125 = vpop.trf.xlu0
    %v4126 = vpop.trf.xlu0
    %v4127 = vpop.trf.xlu0
    %v4128 = vpop.trf.xlu0
    %v4129 = vpop.trf.xlu0
    %v4130 = vpop.trf.xlu0
    %v4131 = vpop.trf.xlu0
    %v4132 = vpop.trf.xlu0
    %4133 = vmatprep.subr.mxu0 0.0
    %4134 = vmatpush1.msra.mxu0 %v4021
    %4135 = vmatprep.subr.mxu0 0.0
    %4136 = vmatpush1.msra.mxu0 %v4022
    %4137 = vmatprep.subr.mxu0 0.0
    %4138 = vmatpush1.msra.mxu0 %v4023
    %4139 = vmatprep.subr.mxu0 0.0
    %4140 = vmatpush1.msra.mxu0 %v4024
    %4141 = vmatprep.subr.mxu0 0.0
    %4142 = vmatpush1.msra.mxu0 %v4053
    %4143 = vmatprep.subr.mxu0 0.0
    %4144 = vmatpush1.msra.mxu0 %v4054
    %4145 = vmatprep.subr.mxu0 0.0
    %4146 = vmatpush1.msra.mxu0 %v4055
    %4147 = vmatprep.subr.mxu0 0.0
    %4148 = vmatpush1.msra.mxu0 %v4056
    %4149 = vmatprep.subr.mxu0 0.0
    %4150 = vmatpush1.msra.mxu0 %v4085
    %4151 = vmatprep.subr.mxu0 0.0
    %4152 = vmatpush1.msra.mxu0 %v4086
    %4153 = vmatprep.subr.mxu0 0.0
    %4154 = vmatpush1.msra.mxu0 %v4087
    %4155 = vmatprep.subr.mxu0 0.0
    %4156 = vmatpush1.msra.mxu0 %v4088
    %4157 = vmatprep.subr.mxu0 0.0
    %4158 = vmatpush1.msra.mxu0 %v4117
    %4159 = vmatprep.subr.mxu0 0.0
    %4160 = vmatpush1.msra.mxu0 %v4118
    %4161 = vmatprep.subr.mxu0 0.0
    %4162 = vmatpush1.msra.mxu0 %v4119
    %4163 = vmatprep.subr.mxu0 0.0
    %4164 = vmatpush1.msra.mxu0 %v4120
    %4165 = vmatprep.subr.mxu0 0.0
    %4166 = vmatpush1.msra.mxu0 0.0
    %4167 = vmatprep.subr.mxu0 0.0
    %4168 = vmatpush1.msra.mxu0 0.0
    %4169 = vmatprep.subr.mxu0 0.0
    %4170 = vmatpush1.msra.mxu0 0.0
    %4171 = vmatprep.subr.mxu0 0.0
    %4172 = vmatpush1.msra.mxu0 0.0
    %4173 = vmatprep.subr.mxu0 0.0
    %4174 = vmatpush1.msra.mxu0 0.0
    %4175 = vmatprep.subr.mxu0 0.0
    %4176 = vmatpush1.msra.mxu0 0.0
    %4177 = vmatprep.subr.mxu0 0.0
    %4178 = vmatpush1.msra.mxu0 0.0
    %4179 = vmatprep.subr.mxu0 0.0
    %4180 = vmatpush1.msra.mxu0 0.0
    %4181 = vmatprep.subr.mxu0 0.0
    %4182 = vmatpush1.msra.mxu0 0.0
    %4183 = vmatprep.subr.mxu0 0.0
    %4184 = vmatpush1.msra.mxu0 0.0
    %4185 = vmatprep.subr.mxu0 0.0
    %4186 = vmatpush1.msra.mxu0 0.0
    %4187 = vmatprep.subr.mxu0 0.0
    %4188 = vmatpush1.msra.mxu0 0.0
    %4189 = vmatprep.subr.mxu0 0.0
    %4190 = vmatpush1.msra.mxu0 0.0
    %4191 = vmatprep.subr.mxu0 0.0
    %4192 = vmatpush1.msra.mxu0 0.0
    %4193 = vmatprep.subr.mxu0 0.0
    %4194 = vmatpush1.msra.mxu0 0.0
    %4195 = vmatprep.subr.mxu0 0.0
    %4196 = vmatpush1.msra.mxu0 0.0
    %4197 = vmatprep.mubr.f32.mxu0 0.0
    %4198 = vmatmul.mubr.f32.gmra.mrb[0].mxu0 %v337
    %v4199 = vpop.f32.mrb[0].mxu0
    %v4200 = vadd.f32 0.0, %v4199
    %v4201 = vpop.f32.mrb[0].mxu0
    %4202 = vdwg.mxu0
    %v4203 = vmul.f32 %v4200, 0.25
    %4204 = vst.msk [vmem:[#allocation2 + $0x18] sm:$0xff] %vm68, %v4203
    %v4205 = vld [vmem:[#allocation2] sm:$0xff]
    %v4206 = vld [vmem:[#allocation2 + $0x8] sm:$0xff]
    %v4207 = vld [vmem:[#allocation2 + $0x10] sm:$0xff]
    %v4208 = vld [vmem:[#allocation2 + $0x18] sm:$0xff]
    %v4209 = vld [vmem:[%s4] sm:$0xff]
    %v4210 = vld [vmem:[%s4 + $0x8] sm:$0xff]
    %v4211 = vld [vmem:[%s4 + $0x10] sm:$0xff]
    %v4212 = vld [vmem:[%s4 + $0x18] sm:$0xff]
    %v4214 = vsel %vm68, %v4205, 0
    %v4217 = vsel %vm68, %v4206, 0
    %v4220 = vsel %vm68, %v4207, 0
    %v4223 = vsel %vm68, %v4208, 0
    %4225 = vmatprep.subr.mxu0 0.0
    %4226 = vmatpush1.msra.mxu0 %v4209
    %4227 = vmatprep.subr.mxu0 0.0
    %4228 = vmatpush1.msra.mxu0 %v4210
    %4229 = vmatprep.subr.mxu0 0.0
    %4230 = vmatpush1.msra.mxu0 %v4211
    %4231 = vmatprep.subr.mxu0 0.0
    %4232 = vmatpush1.msra.mxu0 %v4212
    %4233 = vmatprep.subr.mxu0 0.0
    %4234 = vmatpush1.msra.mxu0 0.0
    %4235 = vmatprep.subr.mxu0 0.0
    %4236 = vmatpush1.msra.mxu0 0.0
    %4237 = vmatprep.subr.mxu0 0.0
    %4238 = vmatpush1.msra.mxu0 0.0
    %4239 = vmatprep.subr.mxu0 0.0
    %4240 = vmatpush1.msra.mxu0 0.0
    %4241 = vmatprep.subr.mxu0 0.0
    %4242 = vmatpush1.msra.mxu0 0.0
    %4243 = vmatprep.subr.mxu0 0.0
    %4244 = vmatpush1.msra.mxu0 0.0
    %4245 = vmatprep.subr.mxu0 0.0
    %4246 = vmatpush1.msra.mxu0 0.0
    %4247 = vmatprep.subr.mxu0 0.0
    %4248 = vmatpush1.msra.mxu0 0.0
    %4249 = vmatprep.subr.mxu0 0.0
    %4250 = vmatpush1.msra.mxu0 0.0
    %4251 = vmatprep.subr.mxu0 0.0
    %4252 = vmatpush1.msra.mxu0 0.0
    %4253 = vmatprep.subr.mxu0 0.0
    %4254 = vmatpush1.msra.mxu0 0.0
    %4255 = vmatprep.subr.mxu0 0.0
    %4256 = vmatpush1.msra.mxu0 0.0
    %4257 = vmatprep.subr.mxu0 0.0
    %4258 = vmatpush1.msra.mxu0 0.0
    %4259 = vmatprep.subr.mxu0 0.0
    %4260 = vmatpush1.msra.mxu0 0.0
    %4261 = vmatprep.subr.mxu0 0.0
    %4262 = vmatpush1.msra.mxu0 0.0
    %4263 = vmatprep.subr.mxu0 0.0
    %4264 = vmatpush1.msra.mxu0 0.0
    %4265 = vmatprep.subr.mxu0 0.0
    %4266 = vmatpush1.msra.mxu0 0.0
    %4267 = vmatprep.subr.mxu0 0.0
    %4268 = vmatpush1.msra.mxu0 0.0
    %4269 = vmatprep.subr.mxu0 0.0
    %4270 = vmatpush1.msra.mxu0 0.0
    %4271 = vmatprep.subr.mxu0 0.0
    %4272 = vmatpush1.msra.mxu0 0.0
    %4273 = vmatprep.subr.mxu0 0.0
    %4274 = vmatpush1.msra.mxu0 0.0
    %4275 = vmatprep.subr.mxu0 0.0
    %4276 = vmatpush1.msra.mxu0 0.0
    %4277 = vmatprep.subr.mxu0 0.0
    %4278 = vmatpush1.msra.mxu0 0.0
    %4279 = vmatprep.subr.mxu0 0.0
    %4280 = vmatpush1.msra.mxu0 0.0
    %4281 = vmatprep.subr.mxu0 0.0
    %4282 = vmatpush1.msra.mxu0 0.0
    %4283 = vmatprep.subr.mxu0 0.0
    %4284 = vmatpush1.msra.mxu0 0.0
    %4285 = vmatprep.subr.mxu0 0.0
    %4286 = vmatpush1.msra.mxu0 0.0
    %4287 = vmatprep.subr.mxu0 0.0
    %4288 = vmatpush1.msra.mxu0 0.0
    %4289 = vmatprep.mubr.f32.mxu0 0.0
    %4290 = vmatmul.mubr.f32.gmra.mrb[0].mxu0 %v4214
    %v4291 = vpop.f32.mrb[0].mxu0
    %v4292 = vadd.f32 0.0, %v4291
    %v4293 = vpop.f32.mrb[0].mxu0
    %4294 = vmatprep.mubr.f32.mxu0 0.0
    %4295 = vmatmul.mubr.f32.gmra.mrb[0].mxu0 %v4217
    %v4296 = vpop.f32.mrb[0].mxu0
    %v4297 = vadd.f32 0.0, %v4296
    %v4298 = vpop.f32.mrb[0].mxu0
    %4299 = vmatprep.mubr.f32.mxu0 0.0
    %4300 = vmatmul.mubr.f32.gmra.mrb[0].mxu0 %v4220
    %v4301 = vpop.f32.mrb[0].mxu0
    %v4302 = vadd.f32 0.0, %v4301
    %v4303 = vpop.f32.mrb[0].mxu0
    %4304 = vmatprep.mubr.f32.mxu0 0.0
    %4305 = vmatmul.mubr.f32.gmra.mrb[0].mxu0 %v4223
    %v4306 = vpop.f32.mrb[0].mxu0
    %v4307 = vadd.f32 0.0, %v4306
    %v4308 = vpop.f32.mrb[0].mxu0
    %4309 = vdwg.mxu0
    %v4310 = vadd.f32 %v62, %v4292
    %v4311 = vadd.f32 %v63, %v4297
    %v4312 = vadd.f32 %v64, %v4302
    %v4313 = vadd.f32 %v65, %v4307
    %v4314 = vld [vmem:[%s5] sm:$0x1]
    %v4315 = vld [vmem:[%s6] sm:$0x1]
    %v4316 = vsel %vm68, %v4310, 0.0
    %4317 = vadd.xlane.f32.xlu0 %v4316
    %v4318 = vpop.xlane.xlu0 %4317
    %v4319 = vsel %vm68, %v4311, 0.0
    %4320 = vadd.xlane.f32.xlu0 %v4319
    %v4321 = vpop.xlane.xlu0 %4320
    %v4322 = vsel %vm68, %v4312, 0.0
    %4323 = vadd.xlane.f32.xlu0 %v4322
    %v4324 = vpop.xlane.xlu0 %4323
    %v4325 = vsel %vm68, %v4313, 0.0
    %4326 = vadd.xlane.f32.xlu0 %v4325
    %v4327 = vpop.xlane.xlu0 %4326
    %v4328 = vmul.f32 %v4318, %v81
    %v4329 = vmul.f32 %v4321, %v81
    %v4330 = vmul.f32 %v4324, %v81
    %v4331 = vmul.f32 %v4327, %v81
    %v4332 = vsub.f32 %v4310, %v4328
    %v4333 = vsub.f32 %v4311, %v4329
    %v4334 = vsub.f32 %v4312, %v4330
    %v4335 = vsub.f32 %v4313, %v4331
    %v4336 = vmul.f32 %v4332, %v4332
    %v4337 = vmul.f32 %v4333, %v4333
    %v4338 = vmul.f32 %v4334, %v4334
    %v4339 = vmul.f32 %v4335, %v4335
    %v4340 = vsel %vm68, %v4336, 0.0
    %4341 = vadd.xlane.f32.xlu0 %v4340
    %v4342 = vpop.xlane.xlu0 %4341
    %v4343 = vsel %vm68, %v4337, 0.0
    %4344 = vadd.xlane.f32.xlu0 %v4343
    %v4345 = vpop.xlane.xlu0 %4344
    %v4346 = vsel %vm68, %v4338, 0.0
    %4347 = vadd.xlane.f32.xlu0 %v4346
    %v4348 = vpop.xlane.xlu0 %4347
    %v4349 = vsel %vm68, %v4339, 0.0
    %4350 = vadd.xlane.f32.xlu0 %v4349
    %v4351 = vpop.xlane.xlu0 %4350
    %v4352 = vmul.f32 %v4342, %v81
    %v4353 = vmul.f32 %v4345, %v81
    %v4354 = vmul.f32 %v4348, %v81
    %v4355 = vmul.f32 %v4351, %v81
    %v4356 = vadd.f32 %v4352, 1e-06
    %v4357 = vadd.f32 %v4353, 1e-06
    %v4358 = vadd.f32 %v4354, 1e-06
    %v4359 = vadd.f32 %v4355, 1e-06
    %v4360 = vrsqrt.pop %v4356
    %v4361 = vrsqrt.pop %v4357
    %v4362 = vrsqrt.pop %v4358
    %v4363 = vrsqrt.pop %v4359
    %v4364 = vmul.f32 %v4332, %v4360
    %v4365 = vmul.f32 %v4333, %v4361
    %v4366 = vmul.f32 %v4334, %v4362
    %v4367 = vmul.f32 %v4335, %v4363
    %v4369 = vlaneseq
    %v4370 = vshrl.u32 %v4369, 7
    %v4371 = vsub.s32 0, %v4370
    %v4372 = vrot.slane %v4314, %v4371
    %v4374 = vmul.f32 %v4364, %v4372
    %v4375 = vmul.f32 %v4365, %v4372
    %v4376 = vmul.f32 %v4366, %v4372
    %v4377 = vmul.f32 %v4367, %v4372
    %v4379 = vlaneseq
    %v4380 = vshrl.u32 %v4379, 7
    %v4381 = vsub.s32 0, %v4380
    %v4382 = vrot.slane %v4315, %v4381
    %v4384 = vadd.f32 %v4374, %v4382
    %v4385 = vadd.f32 %v4375, %v4382
    %v4386 = vadd.f32 %v4376, %v4382
    %v4387 = vadd.f32 %v4377, %v4382
    %v4388 = vld [vmem:[%s7] sm:$0xff]
    %v4389 = vld [vmem:[%s7 + $0x8] sm:$0xff]
    %v4390 = vld [vmem:[%s7 + $0x10] sm:$0xff]
    %v4391 = vld [vmem:[%s7 + $0x18] sm:$0xff]
    %v4392 = vld [vmem:[%s8] sm:$0x1]
    %v4394 = vlaneseq
    %v4395 = vshrl.u32 %v4394, 7
    %v4396 = vsub.s32 0, %v4395
    %v4397 = vrot.slane %v4392, %v4396
    %v4400 = vsel %vm68, %v4384, 0
    %v4403 = vsel %vm68, %v4385, 0
    %v4406 = vsel %vm68, %v4386, 0
    %v4409 = vsel %vm68, %v4387, 0
    %4411 = vmatprep.subr.mxu0 0.0
    %4412 = vmatpush1.msra.mxu0 %v4388
    %4413 = vmatprep.subr.mxu0 0.0
    %4414 = vmatpush1.msra.mxu0 %v4389
    %4415 = vmatprep.subr.mxu0 0.0
    %4416 = vmatpush1.msra.mxu0 %v4390
    %4417 = vmatprep.subr.mxu0 0.0
    %4418 = vmatpush1.msra.mxu0 %v4391
    %4419 = vmatprep.subr.mxu0 0.0
    %4420 = vmatpush1.msra.mxu0 0.0
    %4421 = vmatprep.subr.mxu0 0.0
    %4422 = vmatpush1.msra.mxu0 0.0
    %4423 = vmatprep.subr.mxu0 0.0
    %4424 = vmatpush1.msra.mxu0 0.0
    %4425 = vmatprep.subr.mxu0 0.0
    %4426 = vmatpush1.msra.mxu0 0.0
    %4427 = vmatprep.subr.mxu0 0.0
    %4428 = vmatpush1.msra.mxu0 0.0
    %4429 = vmatprep.subr.mxu0 0.0
    %4430 = vmatpush1.msra.mxu0 0.0
    %4431 = vmatprep.subr.mxu0 0.0
    %4432 = vmatpush1.msra.mxu0 0.0
    %4433 = vmatprep.subr.mxu0 0.0
    %4434 = vmatpush1.msra.mxu0 0.0
    %4435 = vmatprep.subr.mxu0 0.0
    %4436 = vmatpush1.msra.mxu0 0.0
    %4437 = vmatprep.subr.mxu0 0.0
    %4438 = vmatpush1.msra.mxu0 0.0
    %4439 = vmatprep.subr.mxu0 0.0
    %4440 = vmatpush1.msra.mxu0 0.0
    %4441 = vmatprep.subr.mxu0 0.0
    %4442 = vmatpush1.msra.mxu0 0.0
    %4443 = vmatprep.subr.mxu0 0.0
    %4444 = vmatpush1.msra.mxu0 0.0
    %4445 = vmatprep.subr.mxu0 0.0
    %4446 = vmatpush1.msra.mxu0 0.0
    %4447 = vmatprep.subr.mxu0 0.0
    %4448 = vmatpush1.msra.mxu0 0.0
    %4449 = vmatprep.subr.mxu0 0.0
    %4450 = vmatpush1.msra.mxu0 0.0
    %4451 = vmatprep.subr.mxu0 0.0
    %4452 = vmatpush1.msra.mxu0 0.0
    %4453 = vmatprep.subr.mxu0 0.0
    %4454 = vmatpush1.msra.mxu0 0.0
    %4455 = vmatprep.subr.mxu0 0.0
    %4456 = vmatpush1.msra.mxu0 0.0
    %4457 = vmatprep.subr.mxu0 0.0
    %4458 = vmatpush1.msra.mxu0 0.0
    %4459 = vmatprep.subr.mxu0 0.0
    %4460 = vmatpush1.msra.mxu0 0.0
    %4461 = vmatprep.subr.mxu0 0.0
    %4462 = vmatpush1.msra.mxu0 0.0
    %4463 = vmatprep.subr.mxu0 0.0
    %4464 = vmatpush1.msra.mxu0 0.0
    %4465 = vmatprep.subr.mxu0 0.0
    %4466 = vmatpush1.msra.mxu0 0.0
    %4467 = vmatprep.subr.mxu0 0.0
    %4468 = vmatpush1.msra.mxu0 0.0
    %4469 = vmatprep.subr.mxu0 0.0
    %4470 = vmatpush1.msra.mxu0 0.0
    %4471 = vmatprep.subr.mxu0 0.0
    %4472 = vmatpush1.msra.mxu0 0.0
    %4473 = vmatprep.subr.mxu0 0.0
    %4474 = vmatpush1.msra.mxu0 0.0
    %4475 = vmatprep.mubr.f32.mxu0 0.0
    %4476 = vmatmul.mubr.f32.gmra.mrb[0].mxu0 %v4400
    %v4477 = vpop.f32.mrb[0].mxu0
    %v4478 = vadd.f32 %v4397, %v4477
    %v4479 = vpop.f32.mrb[0].mxu0
    %4480 = vmatprep.mubr.f32.mxu0 0.0
    %4481 = vmatmul.mubr.f32.gmra.mrb[0].mxu0 %v4403
    %v4482 = vpop.f32.mrb[0].mxu0
    %v4483 = vadd.f32 %v4397, %v4482
    %v4484 = vpop.f32.mrb[0].mxu0
    %4485 = vmatprep.mubr.f32.mxu0 0.0
    %4486 = vmatmul.mubr.f32.gmra.mrb[0].mxu0 %v4406
    %v4487 = vpop.f32.mrb[0].mxu0
    %v4488 = vadd.f32 %v4397, %v4487
    %v4489 = vpop.f32.mrb[0].mxu0
    %4490 = vmatprep.mubr.f32.mxu0 0.0
    %4491 = vmatmul.mubr.f32.gmra.mrb[0].mxu0 %v4409
    %v4492 = vpop.f32.mrb[0].mxu0
    %v4493 = vadd.f32 %v4397, %v4492
    %v4494 = vpop.f32.mrb[0].mxu0
    %4495 = vdwg.mxu0
    %v4496 = vmul.f32 %v4478, 0.5
    %v4497 = vmul.f32 %v4483, 0.5
    %v4498 = vmul.f32 %v4488, 0.5
    %v4499 = vmul.f32 %v4493, 0.5
    %v4500 = vmul.f32 %v4478, 0.70710677
    %v4501 = vmul.f32 %v4483, 0.70710677
    %v4502 = vmul.f32 %v4488, 0.70710677
    %v4503 = vmul.f32 %v4493, 0.70710677
    %vm4504 = vcmp.lt.f32.partialorder %v4500, 0.0
    %vm4505 = vcmp.lt.f32.partialorder %v4501, 0.0
    %vm4506 = vcmp.lt.f32.partialorder %v4502, 0.0
    %vm4507 = vcmp.lt.f32.partialorder %v4503, 0.0
    %v4508 = vsel %vm4504, -1.0, 1.0
    %v4509 = vsel %vm4505, -1.0, 1.0
    %v4510 = vsel %vm4506, -1.0, 1.0
    %v4511 = vsel %vm4507, -1.0, 1.0
    %v4512 = vand.u32 2147483647, %v4500
    %v4513 = vand.u32 2147483647, %v4501
    %v4514 = vand.u32 2147483647, %v4502
    %v4515 = vand.u32 2147483647, %v4503
    %v4516 = vmul.f32 %v4512, 0.3275911
    %v4517 = vmul.f32 %v4513, 0.3275911
    %v4518 = vmul.f32 %v4514, 0.3275911
    %v4519 = vmul.f32 %v4515, 0.3275911
    %v4520 = vadd.f32 %v4516, 1.0
    %v4521 = vadd.f32 %v4517, 1.0
    %v4522 = vadd.f32 %v4518, 1.0
    %v4523 = vadd.f32 %v4519, 1.0
    %v4524 = vrcp.pop %v4520
    %v4525 = vrcp.pop %v4521
    %v4526 = vrcp.pop %v4522
    %v4527 = vrcp.pop %v4523
    %v4528 = vmul.f32 %v4524, 1.0614054
    %v4529 = vmul.f32 %v4525, 1.0614054
    %v4530 = vmul.f32 %v4526, 1.0614054
    %v4531 = vmul.f32 %v4527, 1.0614054
    %v4532 = vadd.f32 %v4528, -1.4531521
    %v4533 = vadd.f32 %v4529, -1.4531521
    %v4534 = vadd.f32 %v4530, -1.4531521
    %v4535 = vadd.f32 %v4531, -1.4531521
    %v4536 = vmul.f32 %v4532, %v4524
    %v4537 = vmul.f32 %v4533, %v4525
    %v4538 = vmul.f32 %v4534, %v4526
    %v4539 = vmul.f32 %v4535, %v4527
    %v4540 = vadd.f32 %v4536, 1.4214138
    %v4541 = vadd.f32 %v4537, 1.4214138
    %v4542 = vadd.f32 %v4538, 1.4214138
    %v4543 = vadd.f32 %v4539, 1.4214138
    %v4544 = vmul.f32 %v4540, %v4524
    %v4545 = vmul.f32 %v4541, %v4525
    %v4546 = vmul.f32 %v4542, %v4526
    %v4547 = vmul.f32 %v4543, %v4527
    %v4548 = vadd.f32 %v4544, -0.28449672
    %v4549 = vadd.f32 %v4545, -0.28449672
    %v4550 = vadd.f32 %v4546, -0.28449672
    %v4551 = vadd.f32 %v4547, -0.28449672
    %v4552 = vmul.f32 %v4548, %v4524
    %v4553 = vmul.f32 %v4549, %v4525
    %v4554 = vmul.f32 %v4550, %v4526
    %v4555 = vmul.f32 %v4551, %v4527
    %v4556 = vadd.f32 %v4552, 0.2548296
    %v4557 = vadd.f32 %v4553, 0.2548296
    %v4558 = vadd.f32 %v4554, 0.2548296
    %v4559 = vadd.f32 %v4555, 0.2548296
    %v4560 = vmul.f32 %v4556, %v4524
    %v4561 = vmul.f32 %v4557, %v4525
    %v4562 = vmul.f32 %v4558, %v4526
    %v4563 = vmul.f32 %v4559, %v4527
    %v4564 = vsub.f32 0.0, %v4512
    %v4565 = vsub.f32 0.0, %v4513
    %v4566 = vsub.f32 0.0, %v4514
    %v4567 = vsub.f32 0.0, %v4515
    %v4568 = vmul.f32 %v4564, %v4512
    %v4569 = vmul.f32 %v4565, %v4513
    %v4570 = vmul.f32 %v4566, %v4514
    %v4571 = vmul.f32 %v4567, %v4515
    %v4572 = vmul.f32 %v4568, 1.442695
    %v4573 = vpow.pop %v4572
    %v4574 = vmul.f32 %v4569, 1.442695
    %v4575 = vpow.pop %v4574
    %v4576 = vmul.f32 %v4570, 1.442695
    %v4577 = vpow.pop %v4576
    %v4578 = vmul.f32 %v4571, 1.442695
    %v4579 = vpow.pop %v4578
    %v4580 = vmul.f32 %v4560, %v4573
    %v4581 = vmul.f32 %v4561, %v4575
    %v4582 = vmul.f32 %v4562, %v4577
    %v4583 = vmul.f32 %v4563, %v4579
    %v4584 = vsub.f32 1.0, %v4580
    %v4585 = vsub.f32 1.0, %v4581
    %v4586 = vsub.f32 1.0, %v4582
    %v4587 = vsub.f32 1.0, %v4583
    %v4588 = vmul.f32 %v4508, %v4584
    %v4589 = vmul.f32 %v4509, %v4585
    %v4590 = vmul.f32 %v4510, %v4586
    %v4591 = vmul.f32 %v4511, %v4587
    %v4592 = vadd.f32 %v4588, 1.0
    %v4593 = vadd.f32 %v4589, 1.0
    %v4594 = vadd.f32 %v4590, 1.0
    %v4595 = vadd.f32 %v4591, 1.0
    %v4596 = vmul.f32 %v4496, %v4592
    %v4597 = vmul.f32 %v4497, %v4593
    %v4598 = vmul.f32 %v4498, %v4594
    %v4599 = vmul.f32 %v4499, %v4595
    %v4600 = vld [vmem:[%s9] sm:$0xff]
    %v4601 = vld [vmem:[%s9 + $0x8] sm:$0xff]
    %v4602 = vld [vmem:[%s9 + $0x10] sm:$0xff]
    %v4603 = vld [vmem:[%s9 + $0x18] sm:$0xff]
    %v4604 = vld [vmem:[%s9 + $0x20] sm:$0xff]
    %v4605 = vld [vmem:[%s9 + $0x28] sm:$0xff]
    %v4606 = vld [vmem:[%s9 + $0x30] sm:$0xff]
    %v4607 = vld [vmem:[%s9 + $0x38] sm:$0xff]
    %v4608 = vld [vmem:[%s9 + $0x40] sm:$0xff]
    %v4609 = vld [vmem:[%s9 + $0x48] sm:$0xff]
    %v4610 = vld [vmem:[%s9 + $0x50] sm:$0xff]
    %v4611 = vld [vmem:[%s9 + $0x58] sm:$0xff]
    %v4612 = vld [vmem:[%s9 + $0x60] sm:$0xff]
    %v4613 = vld [vmem:[%s9 + $0x68] sm:$0xff]
    %v4614 = vld [vmem:[%s9 + $0x70] sm:$0xff]
    %v4615 = vld [vmem:[%s9 + $0x78] sm:$0xff]
    %v4616 = vld [vmem:[%s10] sm:$0x1]
    %v4618 = vlaneseq
    %v4619 = vshrl.u32 %v4618, 7
    %v4620 = vsub.s32 0, %v4619
    %v4621 = vrot.slane %v4616, %v4620
    %4623 = vmatprep.subr.mxu0 0.0
    %4624 = vmatpush1.msra.mxu0 %v4600
    %4625 = vmatprep.subr.mxu0 0.0
    %4626 = vmatpush1.msra.mxu0 %v4601
    %4627 = vmatprep.subr.mxu0 0.0
    %4628 = vmatpush1.msra.mxu0 %v4602
    %4629 = vmatprep.subr.mxu0 0.0
    %4630 = vmatpush1.msra.mxu0 %v4603
    %4631 = vmatprep.subr.mxu0 0.0
    %4632 = vmatpush1.msra.mxu0 %v4604
    %4633 = vmatprep.subr.mxu0 0.0
    %4634 = vmatpush1.msra.mxu0 %v4605
    %4635 = vmatprep.subr.mxu0 0.0
    %4636 = vmatpush1.msra.mxu0 %v4606
    %4637 = vmatprep.subr.mxu0 0.0
    %4638 = vmatpush1.msra.mxu0 %v4607
    %4639 = vmatprep.subr.mxu0 0.0
    %4640 = vmatpush1.msra.mxu0 %v4608
    %4641 = vmatprep.subr.mxu0 0.0
    %4642 = vmatpush1.msra.mxu0 %v4609
    %4643 = vmatprep.subr.mxu0 0.0
    %4644 = vmatpush1.msra.mxu0 %v4610
    %4645 = vmatprep.subr.mxu0 0.0
    %4646 = vmatpush1.msra.mxu0 %v4611
    %4647 = vmatprep.subr.mxu0 0.0
    %4648 = vmatpush1.msra.mxu0 %v4612
    %4649 = vmatprep.subr.mxu0 0.0
    %4650 = vmatpush1.msra.mxu0 %v4613
    %4651 = vmatprep.subr.mxu0 0.0
    %4652 = vmatpush1.msra.mxu0 %v4614
    %4653 = vmatprep.subr.mxu0 0.0
    %4654 = vmatpush1.msra.mxu0 %v4615
    %4655 = vmatprep.subr.mxu0 0.0
    %4656 = vmatpush1.msra.mxu0 0.0
    %4657 = vmatprep.subr.mxu0 0.0
    %4658 = vmatpush1.msra.mxu0 0.0
    %4659 = vmatprep.subr.mxu0 0.0
    %4660 = vmatpush1.msra.mxu0 0.0
    %4661 = vmatprep.subr.mxu0 0.0
    %4662 = vmatpush1.msra.mxu0 0.0
    %4663 = vmatprep.subr.mxu0 0.0
    %4664 = vmatpush1.msra.mxu0 0.0
    %4665 = vmatprep.subr.mxu0 0.0
    %4666 = vmatpush1.msra.mxu0 0.0
    %4667 = vmatprep.subr.mxu0 0.0
    %4668 = vmatpush1.msra.mxu0 0.0
    %4669 = vmatprep.subr.mxu0 0.0
    %4670 = vmatpush1.msra.mxu0 0.0
    %4671 = vmatprep.subr.mxu0 0.0
    %4672 = vmatpush1.msra.mxu0 0.0
    %4673 = vmatprep.subr.mxu0 0.0
    %4674 = vmatpush1.msra.mxu0 0.0
    %4675 = vmatprep.subr.mxu0 0.0
    %4676 = vmatpush1.msra.mxu0 0.0
    %4677 = vmatprep.subr.mxu0 0.0
    %4678 = vmatpush1.msra.mxu0 0.0
    %4679 = vmatprep.subr.mxu0 0.0
    %4680 = vmatpush1.msra.mxu0 0.0
    %4681 = vmatprep.subr.mxu0 0.0
    %4682 = vmatpush1.msra.mxu0 0.0
    %4683 = vmatprep.subr.mxu0 0.0
    %4684 = vmatpush1.msra.mxu0 0.0
    %4685 = vmatprep.subr.mxu0 0.0
    %4686 = vmatpush1.msra.mxu0 0.0
    %4687 = vmatprep.mubr.f32.mxu0 0.0
    %4688 = vmatmul.mubr.f32.gmra.mrb[0].mxu0 %v4596
    %v4689 = vpop.f32.mrb[0].mxu0
    %v4690 = vadd.f32 %v4621, %v4689
    %v4691 = vpop.f32.mrb[0].mxu0
    %4692 = vmatprep.mubr.f32.mxu0 0.0
    %4693 = vmatmul.mubr.f32.gmra.mrb[0].mxu0 %v4597
    %v4694 = vpop.f32.mrb[0].mxu0
    %v4695 = vadd.f32 %v4621, %v4694
    %v4696 = vpop.f32.mrb[0].mxu0
    %4697 = vmatprep.mubr.f32.mxu0 0.0
    %4698 = vmatmul.mubr.f32.gmra.mrb[0].mxu0 %v4598
    %v4699 = vpop.f32.mrb[0].mxu0
    %v4700 = vadd.f32 %v4621, %v4699
    %v4701 = vpop.f32.mrb[0].mxu0
    %4702 = vmatprep.mubr.f32.mxu0 0.0
    %4703 = vmatmul.mubr.f32.gmra.mrb[0].mxu0 %v4599
    %v4704 = vpop.f32.mrb[0].mxu0
    %v4705 = vadd.f32 %v4621, %v4704
    %v4706 = vpop.f32.mrb[0].mxu0
    %4707 = vdwg.mxu0
    %v4708 = vadd.f32 %v4690, %v4310
    %v4709 = vadd.f32 %v4695, %v4311
    %v4710 = vadd.f32 %v4700, %v4312
    %v4711 = vadd.f32 %v4705, %v4313
    %s4712 = scalar_lea.vmem %s1, 1
    %v4713 = vld [vmem:[%s4712] sm:$0x1]
    %s4714 = scalar_lea.vmem %s2, 1
    %v4715 = vld [vmem:[%s4714] sm:$0x1]
    %v4716 = vsel %vm68, %v4708, 0.0
    %4717 = vadd.xlane.f32.xlu0 %v4716
    %v4718 = vpop.xlane.xlu0 %4717
    %v4719 = vsel %vm68, %v4709, 0.0
    %4720 = vadd.xlane.f32.xlu0 %v4719
    %v4721 = vpop.xlane.xlu0 %4720
    %v4722 = vsel %vm68, %v4710, 0.0
    %4723 = vadd.xlane.f32.xlu0 %v4722
    %v4724 = vpop.xlane.xlu0 %4723
    %v4725 = vsel %vm68, %v4711, 0.0
    %4726 = vadd.xlane.f32.xlu0 %v4725
    %v4727 = vpop.xlane.xlu0 %4726
    %v4728 = vmul.f32 %v4718, %v81
    %v4729 = vmul.f32 %v4721, %v81
    %v4730 = vmul.f32 %v4724, %v81
    %v4731 = vmul.f32 %v4727, %v81
    %v4732 = vsub.f32 %v4708, %v4728
    %v4733 = vsub.f32 %v4709, %v4729
    %v4734 = vsub.f32 %v4710, %v4730
    %v4735 = vsub.f32 %v4711, %v4731
    %v4736 = vmul.f32 %v4732, %v4732
    %v4737 = vmul.f32 %v4733, %v4733
    %v4738 = vmul.f32 %v4734, %v4734
    %v4739 = vmul.f32 %v4735, %v4735
    %v4740 = vsel %vm68, %v4736, 0.0
    %4741 = vadd.xlane.f32.xlu0 %v4740
    %v4742 = vpop.xlane.xlu0 %4741
    %v4743 = vsel %vm68, %v4737, 0.0
    %4744 = vadd.xlane.f32.xlu0 %v4743
    %v4745 = vpop.xlane.xlu0 %4744
    %v4746 = vsel %vm68, %v4738, 0.0
    %4747 = vadd.xlane.f32.xlu0 %v4746
    %v4748 = vpop.xlane.xlu0 %4747
    %v4749 = vsel %vm68, %v4739, 0.0
    %4750 = vadd.xlane.f32.xlu0 %v4749
    %v4751 = vpop.xlane.xlu0 %4750
    %v4752 = vmul.f32 %v4742, %v81
    %v4753 = vmul.f32 %v4745, %v81
    %v4754 = vmul.f32 %v4748, %v81
    %v4755 = vmul.f32 %v4751, %v81
    %v4756 = vadd.f32 %v4752, 1e-06
    %v4757 = vadd.f32 %v4753, 1e-06
    %v4758 = vadd.f32 %v4754, 1e-06
    %v4759 = vadd.f32 %v4755, 1e-06
    %v4760 = vrsqrt.pop %v4756
    %v4761 = vrsqrt.pop %v4757
    %v4762 = vrsqrt.pop %v4758
    %v4763 = vrsqrt.pop %v4759
    %v4764 = vmul.f32 %v4732, %v4760
    %v4765 = vmul.f32 %v4733, %v4761
    %v4766 = vmul.f32 %v4734, %v4762
    %v4767 = vmul.f32 %v4735, %v4763
    %v4769 = vlaneseq
    %v4770 = vshrl.u32 %v4769, 7
    %v4771 = vsub.s32 0, %v4770
    %v4772 = vrot.slane %v4713, %v4771
    %v4774 = vmul.f32 %v4764, %v4772
    %v4775 = vmul.f32 %v4765, %v4772
    %v4776 = vmul.f32 %v4766, %v4772
    %v4777 = vmul.f32 %v4767, %v4772
    %v4779 = vlaneseq
    %v4780 = vshrl.u32 %v4779, 7
    %v4781 = vsub.s32 0, %v4780
    %v4782 = vrot.slane %v4715, %v4781
    %v4784 = vadd.f32 %v4774, %v4782
    %v4785 = vadd.f32 %v4775, %v4782
    %v4786 = vadd.f32 %v4776, %v4782
    %v4787 = vadd.f32 %v4777, %v4782
    %s4788 = scalar_lea.vmem %s3, 96
    %v4789 = vld [vmem:[%s4788] sm:$0xff]
    %v4790 = vld [vmem:[%s4788 + $0x8] sm:$0xff]
    %v4791 = vld [vmem:[%s4788 + $0x10] sm:$0xff]
    %v4792 = vld [vmem:[%s4788 + $0x18] sm:$0xff]
    %v4793 = vld [vmem:[%s4788 + $0x20] sm:$0xff]
    %v4794 = vld [vmem:[%s4788 + $0x28] sm:$0xff]
    %v4795 = vld [vmem:[%s4788 + $0x30] sm:$0xff]
    %v4796 = vld [vmem:[%s4788 + $0x38] sm:$0xff]
    %v4797 = vld [vmem:[%s4788 + $0x40] sm:$0xff]
    %v4798 = vld [vmem:[%s4788 + $0x48] sm:$0xff]
    %v4799 = vld [vmem:[%s4788 + $0x50] sm:$0xff]
    %v4800 = vld [vmem:[%s4788 + $0x58] sm:$0xff]
    %v4802 = vsel %vm68, %v4784, 0
    %v4805 = vsel %vm68, %v4785, 0
    %v4808 = vsel %vm68, %v4786, 0
    %v4811 = vsel %vm68, %v4787, 0
    %4813 = vmatprep.subr.mxu0 %v4790
    %4814 = vmatpush1.msra.mxu0 %v4789
    %4815 = vmatprep.subr.mxu0 %v4793
    %4816 = vmatpush1.msra.mxu0 %v4792
    %4817 = vmatprep.subr.mxu0 %v4796
    %4818 = vmatpush1.msra.mxu0 %v4795
    %4819 = vmatprep.subr.mxu0 %v4799
    %4820 = vmatpush1.msra.mxu0 %v4798
    %4821 = vmatprep.subr.mxu0 0.0
    %4822 = vmatpush1.msra.mxu0 0.0
    %4823 = vmatprep.subr.mxu0 0.0
    %4824 = vmatpush1.msra.mxu0 0.0
    %4825 = vmatprep.subr.mxu0 0.0
    %4826 = vmatpush1.msra.mxu0 0.0
    %4827 = vmatprep.subr.mxu0 0.0
    %4828 = vmatpush1.msra.mxu0 0.0
    %4829 = vmatprep.subr.mxu0 0.0
    %4830 = vmatpush1.msra.mxu0 0.0
    %4831 = vmatprep.subr.mxu0 0.0
    %4832 = vmatpush1.msra.mxu0 0.0
    %4833 = vmatprep.subr.mxu0 0.0
    %4834 = vmatpush1.msra.mxu0 0.0
    %4835 = vmatprep.subr.mxu0 0.0
    %4836 = vmatpush1.msra.mxu0 0.0
    %4837 = vmatprep.subr.mxu0 0.0
    %4838 = vmatpush1.msra.mxu0 0.0
    %4839 = vmatprep.subr.mxu0 0.0
    %4840 = vmatpush1.msra.mxu0 0.0
    %4841 = vmatprep.subr.mxu0 0.0
    %4842 = vmatpush1.msra.mxu0 0.0
    %4843 = vmatprep.subr.mxu0 0.0
    %4844 = vmatpush1.msra.mxu0 0.0
    %4845 = vmatprep.subr.mxu0 0.0
    %4846 = vmatpush1.msra.mxu0 0.0
    %4847 = vmatprep.subr.mxu0 0.0
    %4848 = vmatpush1.msra.mxu0 0.0
    %4849 = vmatprep.subr.mxu0 0.0
    %4850 = vmatpush1.msra.mxu0 0.0
    %4851 = vmatprep.subr.mxu0 0.0
    %4852 = vmatpush1.msra.mxu0 0.0
    %4853 = vmatprep.subr.mxu0 0.0
    %4854 = vmatpush1.msra.mxu0 0.0
    %4855 = vmatprep.subr.mxu0 0.0
    %4856 = vmatpush1.msra.mxu0 0.0
    %4857 = vmatprep.subr.mxu0 0.0
    %4858 = vmatpush1.msra.mxu0 0.0
    %4859 = vmatprep.subr.mxu0 0.0
    %4860 = vmatpush1.msra.mxu0 0.0
    %4861 = vmatprep.subr.mxu0 0.0
    %4862 = vmatpush1.msra.mxu0 0.0
    %4863 = vmatprep.subr.mxu0 0.0
    %4864 = vmatpush1.msra.mxu0 0.0
    %4865 = vmatprep.subr.mxu0 0.0
    %4866 = vmatpush1.msra.mxu0 0.0
    %4867 = vmatprep.subr.mxu0 0.0
    %4868 = vmatpush1.msra.mxu0 0.0
    %4869 = vmatprep.subr.mxu0 0.0
    %4870 = vmatpush1.msra.mxu0 0.0
    %4871 = vmatprep.subr.mxu0 0.0
    %4872 = vmatpush1.msra.mxu0 0.0
    %4873 = vmatprep.subr.mxu0 0.0
    %4874 = vmatpush1.msra.mxu0 0.0
    %4875 = vmatprep.subr.mxu0 0.0
    %4876 = vmatpush1.msra.mxu0 0.0
    %4877 = vmatprep.mubr.f32.mxu0 0.0
    %4878 = vmatmul.mubr.f32.gmra.mrb[0].mxu0 %v4802
    %v4879 = vpop.f32.mrb[0].mxu0
    %v4880 = vadd.f32 0.0, %v4879
    %v4881 = vpop.f32.mrb[0].mxu0
    %v4882 = vadd.f32 0.0, %v4881
    %4883 = vmatprep.mubr.f32.mxu0 0.0
    %4884 = vmatmul.mubr.f32.gmra.mrb[0].mxu0 %v4805
    %v4885 = vpop.f32.mrb[0].mxu0
    %v4886 = vadd.f32 0.0, %v4885
    %v4887 = vpop.f32.mrb[0].mxu0
    %v4888 = vadd.f32 0.0, %v4887
    %4889 = vmatprep.mubr.f32.mxu0 0.0
    %4890 = vmatmul.mubr.f32.gmra.mrb[0].mxu0 %v4808
    %v4891 = vpop.f32.mrb[0].mxu0
    %v4892 = vadd.f32 0.0, %v4891
    %v4893 = vpop.f32.mrb[0].mxu0
    %v4894 = vadd.f32 0.0, %v4893
    %4895 = vmatprep.mubr.f32.mxu0 0.0
    %4896 = vmatmul.mubr.f32.gmra.mrb[0].mxu0 %v4811
    %v4897 = vpop.f32.mrb[0].mxu0
    %v4898 = vadd.f32 0.0, %v4897
    %v4899 = vpop.f32.mrb[0].mxu0
    %v4900 = vadd.f32 0.0, %v4899
    %4901 = vdwg.mxu0
    %4902 = vmatprep.subr.mxu0 0.0
    %4903 = vmatpush1.msra.mxu0 %v4791
    %4904 = vmatprep.subr.mxu0 0.0
    %4905 = vmatpush1.msra.mxu0 %v4794
    %4906 = vmatprep.subr.mxu0 0.0
    %4907 = vmatpush1.msra.mxu0 %v4797
    %4908 = vmatprep.subr.mxu0 0.0
    %4909 = vmatpush1.msra.mxu0 %v4800
    %4910 = vmatprep.subr.mxu0 0.0
    %4911 = vmatpush1.msra.mxu0 0.0
    %4912 = vmatprep.subr.mxu0 0.0
    %4913 = vmatpush1.msra.mxu0 0.0
    %4914 = vmatprep.subr.mxu0 0.0
    %4915 = vmatpush1.msra.mxu0 0.0
    %4916 = vmatprep.subr.mxu0 0.0
    %4917 = vmatpush1.msra.mxu0 0.0
    %4918 = vmatprep.subr.mxu0 0.0
    %4919 = vmatpush1.msra.mxu0 0.0
    %4920 = vmatprep.subr.mxu0 0.0
    %4921 = vmatpush1.msra.mxu0 0.0
    %4922 = vmatprep.subr.mxu0 0.0
    %4923 = vmatpush1.msra.mxu0 0.0
    %4924 = vmatprep.subr.mxu0 0.0
    %4925 = vmatpush1.msra.mxu0 0.0
    %4926 = vmatprep.subr.mxu0 0.0
    %4927 = vmatpush1.msra.mxu0 0.0
    %4928 = vmatprep.subr.mxu0 0.0
    %4929 = vmatpush1.msra.mxu0 0.0
    %4930 = vmatprep.subr.mxu0 0.0
    %4931 = vmatpush1.msra.mxu0 0.0
    %4932 = vmatprep.subr.mxu0 0.0
    %4933 = vmatpush1.msra.mxu0 0.0
    %4934 = vmatprep.subr.mxu0 0.0
    %4935 = vmatpush1.msra.mxu0 0.0
    %4936 = vmatprep.subr.mxu0 0.0
    %4937 = vmatpush1.msra.mxu0 0.0
    %4938 = vmatprep.subr.mxu0 0.0
    %4939 = vmatpush1.msra.mxu0 0.0
    %4940 = vmatprep.subr.mxu0 0.0
    %4941 = vmatpush1.msra.mxu0 0.0
    %4942 = vmatprep.subr.mxu0 0.0
    %4943 = vmatpush1.msra.mxu0 0.0
    %4944 = vmatprep.subr.mxu0 0.0
    %4945 = vmatpush1.msra.mxu0 0.0
    %4946 = vmatprep.subr.mxu0 0.0
    %4947 = vmatpush1.msra.mxu0 0.0
    %4948 = vmatprep.subr.mxu0 0.0
    %4949 = vmatpush1.msra.mxu0 0.0
    %4950 = vmatprep.subr.mxu0 0.0
    %4951 = vmatpush1.msra.mxu0 0.0
    %4952 = vmatprep.subr.mxu0 0.0
    %4953 = vmatpush1.msra.mxu0 0.0
    %4954 = vmatprep.subr.mxu0 0.0
    %4955 = vmatpush1.msra.mxu0 0.0
    %4956 = vmatprep.subr.mxu0 0.0
    %4957 = vmatpush1.msra.mxu0 0.0
    %4958 = vmatprep.subr.mxu0 0.0
    %4959 = vmatpush1.msra.mxu0 0.0
    %4960 = vmatprep.subr.mxu0 0.0
    %4961 = vmatpush1.msra.mxu0 0.0
    %4962 = vmatprep.subr.mxu0 0.0
    %4963 = vmatpush1.msra.mxu0 0.0
    %4964 = vmatprep.subr.mxu0 0.0
    %4965 = vmatpush1.msra.mxu0 0.0
    %4966 = vmatprep.mubr.f32.mxu0 0.0
    %4967 = vmatmul.mubr.f32.gmra.mrb[0].mxu0 %v4802
    %v4968 = vpop.f32.mrb[0].mxu0
    %v4969 = vadd.f32 0.0, %v4968
    %v4970 = vpop.f32.mrb[0].mxu0
    %4971 = vmatprep.mubr.f32.mxu0 0.0
    %4972 = vmatmul.mubr.f32.gmra.mrb[0].mxu0 %v4805
    %v4973 = vpop.f32.mrb[0].mxu0
    %v4974 = vadd.f32 0.0, %v4973
    %v4975 = vpop.f32.mrb[0].mxu0
    %4976 = vmatprep.mubr.f32.mxu0 0.0
    %4977 = vmatmul.mubr.f32.gmra.mrb[0].mxu0 %v4808
    %v4978 = vpop.f32.mrb[0].mxu0
    %v4979 = vadd.f32 0.0, %v4978
    %v4980 = vpop.f32.mrb[0].mxu0
    %4981 = vmatprep.mubr.f32.mxu0 0.0
    %4982 = vmatmul.mubr.f32.gmra.mrb[0].mxu0 %v4811
    %v4983 = vpop.f32.mrb[0].mxu0
    %v4984 = vadd.f32 0.0, %v4983
    %v4985 = vpop.f32.mrb[0].mxu0
    %4986 = vdwg.mxu0
    %4987 = vxpose.xlu0.b32.start [1/16] %v4880, 128
    %4988 = vxpose.xlu0.b32.cont [2/16] 0.0, 128
    %4989 = vxpose.xlu0.b32.cont [3/16] 0.0, 128
    %4990 = vxpose.xlu0.b32.cont [4/16] 0.0, 128
    %4991 = vxpose.xlu0.b32.cont [5/16] 0.0, 128
    %4992 = vxpose.xlu0.b32.cont [6/16] 0.0, 128
    %4993 = vxpose.xlu0.b32.cont [7/16] 0.0, 128
    %4994 = vxpose.xlu0.b32.cont [8/16] 0.0, 128
    %4995 = vxpose.xlu0.b32.cont [9/16] 0.0, 128
    %4996 = vxpose.xlu0.b32.cont [10/16] 0.0, 128
    %4997 = vxpose.xlu0.b32.cont [11/16] 0.0, 128
    %4998 = vxpose.xlu0.b32.cont [12/16] 0.0, 128
    %4999 = vxpose.xlu0.b32.cont [13/16] 0.0, 128
    %5000 = vxpose.xlu0.b32.cont [14/16] 0.0, 128
    %5001 = vxpose.xlu0.b32.cont [15/16] 0.0, 128
    %5002 = vxpose.xlu0.b32.end [16/16] 0.0, 128
    %v5003 = vpop.trf.xlu0
    %v5004 = vpop.trf.xlu0
    %v5005 = vpop.trf.xlu0
    %v5006 = vpop.trf.xlu0
    %v5007 = vpop.trf.xlu0
    %v5008 = vpop.trf.xlu0
    %v5009 = vpop.trf.xlu0
    %v5010 = vpop.trf.xlu0
    %v5011 = vpop.trf.xlu0
    %v5012 = vpop.trf.xlu0
    %v5013 = vpop.trf.xlu0
    %v5014 = vpop.trf.xlu0
    %v5015 = vpop.trf.xlu0
    %v5016 = vpop.trf.xlu0
    %v5017 = vpop.trf.xlu0
    %v5018 = vpop.trf.xlu0
    %v5020 = vsel %vm372, %v5003, 0
    %v5023 = vsel %vm372, %v5004, 0
    %v5026 = vsel %vm372, %v5005, 0
    %v5029 = vsel %vm372, %v5006, 0
    %v5032 = vsel %vm372, %v5007, 0
    %v5035 = vsel %vm372, %v5008, 0
    %v5038 = vsel %vm372, %v5009, 0
    %v5041 = vsel %vm372, %v5010, 0
    %v5044 = vsel %vm372, %v5011, 0
    %v5047 = vsel %vm372, %v5012, 0
    %v5050 = vsel %vm372, %v5013, 0
    %v5053 = vsel %vm372, %v5014, 0
    %v5056 = vsel %vm372, %v5015, 0
    %v5059 = vsel %vm372, %v5016, 0
    %v5062 = vsel %vm372, %v5017, 0
    %v5065 = vsel %vm372, %v5018, 0
    %5067 = vmatprep.subr.mxu0 0.0
    %5068 = vmatpush1.msra.mxu0 %v4882
    %5069 = vmatprep.subr.mxu0 0.0
    %5070 = vmatpush1.msra.mxu0 0.0
    %5071 = vmatprep.subr.mxu0 0.0
    %5072 = vmatpush1.msra.mxu0 0.0
    %5073 = vmatprep.subr.mxu0 0.0
    %5074 = vmatpush1.msra.mxu0 0.0
    %5075 = vmatprep.subr.mxu0 0.0
    %5076 = vmatpush1.msra.mxu0 0.0
    %5077 = vmatprep.subr.mxu0 0.0
    %5078 = vmatpush1.msra.mxu0 0.0
    %5079 = vmatprep.subr.mxu0 0.0
    %5080 = vmatpush1.msra.mxu0 0.0
    %5081 = vmatprep.subr.mxu0 0.0
    %5082 = vmatpush1.msra.mxu0 0.0
    %5083 = vmatprep.subr.mxu0 0.0
    %5084 = vmatpush1.msra.mxu0 0.0
    %5085 = vmatprep.subr.mxu0 0.0
    %5086 = vmatpush1.msra.mxu0 0.0
    %5087 = vmatprep.subr.mxu0 0.0
    %5088 = vmatpush1.msra.mxu0 0.0
    %5089 = vmatprep.subr.mxu0 0.0
    %5090 = vmatpush1.msra.mxu0 0.0
    %5091 = vmatprep.subr.mxu0 0.0
    %5092 = vmatpush1.msra.mxu0 0.0
    %5093 = vmatprep.subr.mxu0 0.0
    %5094 = vmatpush1.msra.mxu0 0.0
    %5095 = vmatprep.subr.mxu0 0.0
    %5096 = vmatpush1.msra.mxu0 0.0
    %5097 = vmatprep.subr.mxu0 0.0
    %5098 = vmatpush1.msra.mxu0 0.0
    %5099 = vmatprep.subr.mxu0 0.0
    %5100 = vmatpush1.msra.mxu0 0.0
    %5101 = vmatprep.subr.mxu0 0.0
    %5102 = vmatpush1.msra.mxu0 0.0
    %5103 = vmatprep.subr.mxu0 0.0
    %5104 = vmatpush1.msra.mxu0 0.0
    %5105 = vmatprep.subr.mxu0 0.0
    %5106 = vmatpush1.msra.mxu0 0.0
    %5107 = vmatprep.subr.mxu0 0.0
    %5108 = vmatpush1.msra.mxu0 0.0
    %5109 = vmatprep.subr.mxu0 0.0
    %5110 = vmatpush1.msra.mxu0 0.0
    %5111 = vmatprep.subr.mxu0 0.0
    %5112 = vmatpush1.msra.mxu0 0.0
    %5113 = vmatprep.subr.mxu0 0.0
    %5114 = vmatpush1.msra.mxu0 0.0
    %5115 = vmatprep.subr.mxu0 0.0
    %5116 = vmatpush1.msra.mxu0 0.0
    %5117 = vmatprep.subr.mxu0 0.0
    %5118 = vmatpush1.msra.mxu0 0.0
    %5119 = vmatprep.subr.mxu0 0.0
    %5120 = vmatpush1.msra.mxu0 0.0
    %5121 = vmatprep.subr.mxu0 0.0
    %5122 = vmatpush1.msra.mxu0 0.0
    %5123 = vmatprep.subr.mxu0 0.0
    %5124 = vmatpush1.msra.mxu0 0.0
    %5125 = vmatprep.subr.mxu0 0.0
    %5126 = vmatpush1.msra.mxu0 0.0
    %5127 = vmatprep.subr.mxu0 0.0
    %5128 = vmatpush1.msra.mxu0 0.0
    %5129 = vmatprep.subr.mxu0 0.0
    %5130 = vmatpush1.msra.mxu0 0.0
    %5131 = vmatprep.mubr.f32.mxu0 0.0
    %5132 = vmatmul.mubr.f32.gmra.mrb[0].mxu0 %v5020
    %v5133 = vpop.f32.mrb[0].mxu0
    %v5134 = vadd.f32 0.0, %v5133
    %v5135 = vpop.f32.mrb[0].mxu0
    %5136 = vmatprep.mubr.f32.mxu0 0.0
    %5137 = vmatmul.mubr.f32.gmra.mrb[0].mxu0 %v5023
    %v5138 = vpop.f32.mrb[0].mxu0
    %v5139 = vadd.f32 0.0, %v5138
    %v5140 = vpop.f32.mrb[0].mxu0
    %5141 = vmatprep.mubr.f32.mxu0 0.0
    %5142 = vmatmul.mubr.f32.gmra.mrb[0].mxu0 %v5026
    %v5143 = vpop.f32.mrb[0].mxu0
    %v5144 = vadd.f32 0.0, %v5143
    %v5145 = vpop.f32.mrb[0].mxu0
    %5146 = vmatprep.mubr.f32.mxu0 0.0
    %5147 = vmatmul.mubr.f32.gmra.mrb[0].mxu0 %v5029
    %v5148 = vpop.f32.mrb[0].mxu0
    %v5149 = vadd.f32 0.0, %v5148
    %v5150 = vpop.f32.mrb[0].mxu0
    %5151 = vmatprep.mubr.f32.mxu0 0.0
    %5152 = vmatmul.mubr.f32.gmra.mrb[0].mxu0 %v5032
    %v5153 = vpop.f32.mrb[0].mxu0
    %v5154 = vadd.f32 0.0, %v5153
    %v5155 = vpop.f32.mrb[0].mxu0
    %5156 = vmatprep.mubr.f32.mxu0 0.0
    %5157 = vmatmul.mubr.f32.gmra.mrb[0].mxu0 %v5035
    %v5158 = vpop.f32.mrb[0].mxu0
    %v5159 = vadd.f32 0.0, %v5158
    %v5160 = vpop.f32.mrb[0].mxu0
    %5161 = vmatprep.mubr.f32.mxu0 0.0
    %5162 = vmatmul.mubr.f32.gmra.mrb[0].mxu0 %v5038
    %v5163 = vpop.f32.mrb[0].mxu0
    %v5164 = vadd.f32 0.0, %v5163
    %v5165 = vpop.f32.mrb[0].mxu0
    %5166 = vmatprep.mubr.f32.mxu0 0.0
    %5167 = vmatmul.mubr.f32.gmra.mrb[0].mxu0 %v5041
    %v5168 = vpop.f32.mrb[0].mxu0
    %v5169 = vadd.f32 0.0, %v5168
    %v5170 = vpop.f32.mrb[0].mxu0
    %5171 = vmatprep.mubr.f32.mxu0 0.0
    %5172 = vmatmul.mubr.f32.gmra.mrb[0].mxu0 %v5044
    %v5173 = vpop.f32.mrb[0].mxu0
    %v5174 = vadd.f32 0.0, %v5173
    %v5175 = vpop.f32.mrb[0].mxu0
    %5176 = vmatprep.mubr.f32.mxu0 0.0
    %5177 = vmatmul.mubr.f32.gmra.mrb[0].mxu0 %v5047
    %v5178 = vpop.f32.mrb[0].mxu0
    %v5179 = vadd.f32 0.0, %v5178
    %v5180 = vpop.f32.mrb[0].mxu0
    %5181 = vmatprep.mubr.f32.mxu0 0.0
    %5182 = vmatmul.mubr.f32.gmra.mrb[0].mxu0 %v5050
    %v5183 = vpop.f32.mrb[0].mxu0
    %v5184 = vadd.f32 0.0, %v5183
    %v5185 = vpop.f32.mrb[0].mxu0
    %5186 = vmatprep.mubr.f32.mxu0 0.0
    %5187 = vmatmul.mubr.f32.gmra.mrb[0].mxu0 %v5053
    %v5188 = vpop.f32.mrb[0].mxu0
    %v5189 = vadd.f32 0.0, %v5188
    %v5190 = vpop.f32.mrb[0].mxu0
    %5191 = vmatprep.mubr.f32.mxu0 0.0
    %5192 = vmatmul.mubr.f32.gmra.mrb[0].mxu0 %v5056
    %v5193 = vpop.f32.mrb[0].mxu0
    %v5194 = vadd.f32 0.0, %v5193
    %v5195 = vpop.f32.mrb[0].mxu0
    %5196 = vmatprep.mubr.f32.mxu0 0.0
    %5197 = vmatmul.mubr.f32.gmra.mrb[0].mxu0 %v5059
    %v5198 = vpop.f32.mrb[0].mxu0
    %v5199 = vadd.f32 0.0, %v5198
    %v5200 = vpop.f32.mrb[0].mxu0
    %5201 = vmatprep.mubr.f32.mxu0 0.0
    %5202 = vmatmul.mubr.f32.gmra.mrb[0].mxu0 %v5062
    %v5203 = vpop.f32.mrb[0].mxu0
    %v5204 = vadd.f32 0.0, %v5203
    %v5205 = vpop.f32.mrb[0].mxu0
    %5206 = vmatprep.mubr.f32.mxu0 0.0
    %5207 = vmatmul.mubr.f32.gmra.mrb[0].mxu0 %v5065
    %v5208 = vpop.f32.mrb[0].mxu0
    %v5209 = vadd.f32 0.0, %v5208
    %v5210 = vpop.f32.mrb[0].mxu0
    %5211 = vdwg.mxu0
    %5216 = vrot.lane.b32.xlu0 %v5154, 96
    %v5217 = vpop.permute.xlu0 %5216
    %5218 = vrot.lane.b32.xlu0 %v5159, 96
    %v5219 = vpop.permute.xlu0 %5218
    %5220 = vrot.lane.b32.xlu0 %v5164, 96
    %v5221 = vpop.permute.xlu0 %5220
    %5222 = vrot.lane.b32.xlu0 %v5169, 96
    %v5223 = vpop.permute.xlu0 %5222
    %5232 = vrot.lane.b32.xlu0 %v5174, 64
    %v5233 = vpop.permute.xlu0 %5232
    %5234 = vrot.lane.b32.xlu0 %v5179, 64
    %v5235 = vpop.permute.xlu0 %5234
    %5236 = vrot.lane.b32.xlu0 %v5184, 64
    %v5237 = vpop.permute.xlu0 %5236
    %5238 = vrot.lane.b32.xlu0 %v5189, 64
    %v5239 = vpop.permute.xlu0 %5238
    %5248 = vrot.lane.b32.xlu0 %v5194, 32
    %v5249 = vpop.permute.xlu0 %5248
    %5250 = vrot.lane.b32.xlu0 %v5199, 32
    %v5251 = vpop.permute.xlu0 %5250
    %5252 = vrot.lane.b32.xlu0 %v5204, 32
    %v5253 = vpop.permute.xlu0 %5252
    %5254 = vrot.lane.b32.xlu0 %v5209, 32
    %v5255 = vpop.permute.xlu0 %5254
    %v5260 = vmul.f32 %v5134, 0.17677669
    %v5261 = vmul.f32 %v5139, 0.17677669
    %v5262 = vmul.f32 %v5144, 0.17677669
    %v5263 = vmul.f32 %v5149, 0.17677669
    %v5264 = vmul.f32 %v5217, 0.17677669
    %v5265 = vmul.f32 %v5219, 0.17677669
    %v5266 = vmul.f32 %v5221, 0.17677669
    %v5267 = vmul.f32 %v5223, 0.17677669
    %v5268 = vmul.f32 %v5233, 0.17677669
    %v5269 = vmul.f32 %v5235, 0.17677669
    %v5270 = vmul.f32 %v5237, 0.17677669
    %v5271 = vmul.f32 %v5239, 0.17677669
    %v5272 = vmul.f32 %v5249, 0.17677669
    %v5273 = vmul.f32 %v5251, 0.17677669
    %v5274 = vmul.f32 %v5253, 0.17677669
    %v5275 = vmul.f32 %v5255, 0.17677669
    %v5276 = vsel %vm68, %v5260, 0.0
    %5277 = vadd.xlane.f32.xlu0 %v5276
    %v5278 = vpop.xlane.xlu0 %5277
    %v5279 = vsel %vm68, %v5261, 0.0
    %5280 = vadd.xlane.f32.xlu0 %v5279
    %v5281 = vpop.xlane.xlu0 %5280
    %v5282 = vsel %vm68, %v5262, 0.0
    %5283 = vadd.xlane.f32.xlu0 %v5282
    %v5284 = vpop.xlane.xlu0 %5283
    %v5285 = vsel %vm68, %v5263, 0.0
    %5286 = vadd.xlane.f32.xlu0 %v5285
    %v5287 = vpop.xlane.xlu0 %5286
    %v5288 = vsel %vm68, %v5264, 0.0
    %5289 = vadd.xlane.f32.xlu0 %v5288
    %v5290 = vpop.xlane.xlu0 %5289
    %v5291 = vsel %vm68, %v5265, 0.0
    %5292 = vadd.xlane.f32.xlu0 %v5291
    %v5293 = vpop.xlane.xlu0 %5292
    %v5294 = vsel %vm68, %v5266, 0.0
    %5295 = vadd.xlane.f32.xlu0 %v5294
    %v5296 = vpop.xlane.xlu0 %5295
    %v5297 = vsel %vm68, %v5267, 0.0
    %5298 = vadd.xlane.f32.xlu0 %v5297
    %v5299 = vpop.xlane.xlu0 %5298
    %v5300 = vsel %vm68, %v5268, 0.0
    %5301 = vadd.xlane.f32.xlu0 %v5300
    %v5302 = vpop.xlane.xlu0 %5301
    %v5303 = vsel %vm68, %v5269, 0.0
    %5304 = vadd.xlane.f32.xlu0 %v5303
    %v5305 = vpop.xlane.xlu0 %5304
    %v5306 = vsel %vm68, %v5270, 0.0
    %5307 = vadd.xlane.f32.xlu0 %v5306
    %v5308 = vpop.xlane.xlu0 %5307
    %v5309 = vsel %vm68, %v5271, 0.0
    %5310 = vadd.xlane.f32.xlu0 %v5309
    %v5311 = vpop.xlane.xlu0 %5310
    %v5312 = vsel %vm68, %v5272, 0.0
    %5313 = vadd.xlane.f32.xlu0 %v5312
    %v5314 = vpop.xlane.xlu0 %5313
    %v5315 = vsel %vm68, %v5273, 0.0
    %5316 = vadd.xlane.f32.xlu0 %v5315
    %v5317 = vpop.xlane.xlu0 %5316
    %v5318 = vsel %vm68, %v5274, 0.0
    %5319 = vadd.xlane.f32.xlu0 %v5318
    %v5320 = vpop.xlane.xlu0 %5319
    %v5321 = vsel %vm68, %v5275, 0.0
    %5322 = vadd.xlane.f32.xlu0 %v5321
    %v5323 = vpop.xlane.xlu0 %5322
    %v5324 = vmul.f32 %v5278, %v81
    %v5325 = vmul.f32 %v5281, %v81
    %v5326 = vmul.f32 %v5284, %v81
    %v5327 = vmul.f32 %v5287, %v81
    %v5328 = vmul.f32 %v5290, %v81
    %v5329 = vmul.f32 %v5293, %v81
    %v5330 = vmul.f32 %v5296, %v81
    %v5331 = vmul.f32 %v5299, %v81
    %v5332 = vmul.f32 %v5302, %v81
    %v5333 = vmul.f32 %v5305, %v81
    %v5334 = vmul.f32 %v5308, %v81
    %v5335 = vmul.f32 %v5311, %v81
    %v5336 = vmul.f32 %v5314, %v81
    %v5337 = vmul.f32 %v5317, %v81
    %v5338 = vmul.f32 %v5320, %v81
    %v5339 = vmul.f32 %v5323, %v81
    %v5340 = vadd.f32 %v5324, %v5325
    %v5341 = vadd.f32 %v5340, %v5326
    %v5342 = vadd.f32 %v5341, %v5327
    %v5343 = vrot.slane %v5342, 4
    %v5344 = vadd.f32 %v5342, %v5343
    %v5345 = vrot.slane %v5344, 2
    %v5346 = vadd.f32 %v5344, %v5345
    %v5347 = vrot.slane %v5346, 1
    %v5348 = vadd.f32 %v5346, %v5347
    %v5349 = vadd.f32 %v5328, %v5329
    %v5350 = vadd.f32 %v5349, %v5330
    %v5351 = vadd.f32 %v5350, %v5331
    %v5352 = vrot.slane %v5351, 4
    %v5353 = vadd.f32 %v5351, %v5352
    %v5354 = vrot.slane %v5353, 2
    %v5355 = vadd.f32 %v5353, %v5354
    %v5356 = vrot.slane %v5355, 1
    %v5357 = vadd.f32 %v5355, %v5356
    %v5358 = vadd.f32 %v5332, %v5333
    %v5359 = vadd.f32 %v5358, %v5334
    %v5360 = vadd.f32 %v5359, %v5335
    %v5361 = vrot.slane %v5360, 4
    %v5362 = vadd.f32 %v5360, %v5361
    %v5363 = vrot.slane %v5362, 2
    %v5364 = vadd.f32 %v5362, %v5363
    %v5365 = vrot.slane %v5364, 1
    %v5366 = vadd.f32 %v5364, %v5365
    %v5367 = vadd.f32 %v5336, %v5337
    %v5368 = vadd.f32 %v5367, %v5338
    %v5369 = vadd.f32 %v5368, %v5339
    %v5370 = vrot.slane %v5369, 4
    %v5371 = vadd.f32 %v5369, %v5370
    %v5372 = vrot.slane %v5371, 2
    %v5373 = vadd.f32 %v5371, %v5372
    %v5374 = vrot.slane %v5373, 1
    %v5375 = vadd.f32 %v5373, %v5374
    %v5376 = vmul.f32 %v5348, %v81
    %v5377 = vmul.f32 %v5357, %v81
    %v5378 = vmul.f32 %v5366, %v81
    %v5379 = vmul.f32 %v5375, %v81
    %v5380 = vsub.f32 %v5260, %v5376
    %v5381 = vsub.f32 %v5261, %v5376
    %v5382 = vsub.f32 %v5262, %v5376
    %v5383 = vsub.f32 %v5263, %v5376
    %v5384 = vsub.f32 %v5264, %v5377
    %v5385 = vsub.f32 %v5265, %v5377
    %v5386 = vsub.f32 %v5266, %v5377
    %v5387 = vsub.f32 %v5267, %v5377
    %v5388 = vsub.f32 %v5268, %v5378
    %v5389 = vsub.f32 %v5269, %v5378
    %v5390 = vsub.f32 %v5270, %v5378
    %v5391 = vsub.f32 %v5271, %v5378
    %v5392 = vsub.f32 %v5272, %v5379
    %v5393 = vsub.f32 %v5273, %v5379
    %v5394 = vsub.f32 %v5274, %v5379
    %v5395 = vsub.f32 %v5275, %v5379
    %v5396 = vmul.f32 %v5380, %v5380
    %v5397 = vmul.f32 %v5381, %v5381
    %v5398 = vmul.f32 %v5382, %v5382
    %v5399 = vmul.f32 %v5383, %v5383
    %v5400 = vmul.f32 %v5384, %v5384
    %v5401 = vmul.f32 %v5385, %v5385
    %v5402 = vmul.f32 %v5386, %v5386
    %v5403 = vmul.f32 %v5387, %v5387
    %v5404 = vmul.f32 %v5388, %v5388
    %v5405 = vmul.f32 %v5389, %v5389
    %v5406 = vmul.f32 %v5390, %v5390
    %v5407 = vmul.f32 %v5391, %v5391
    %v5408 = vmul.f32 %v5392, %v5392
    %v5409 = vmul.f32 %v5393, %v5393
    %v5410 = vmul.f32 %v5394, %v5394
    %v5411 = vmul.f32 %v5395, %v5395
    %v5412 = vsel %vm68, %v5396, 0.0
    %5413 = vadd.xlane.f32.xlu0 %v5412
    %v5414 = vpop.xlane.xlu0 %5413
    %v5415 = vsel %vm68, %v5397, 0.0
    %5416 = vadd.xlane.f32.xlu0 %v5415
    %v5417 = vpop.xlane.xlu0 %5416
    %v5418 = vsel %vm68, %v5398, 0.0
    %5419 = vadd.xlane.f32.xlu0 %v5418
    %v5420 = vpop.xlane.xlu0 %5419
    %v5421 = vsel %vm68, %v5399, 0.0
    %5422 = vadd.xlane.f32.xlu0 %v5421
    %v5423 = vpop.xlane.xlu0 %5422
    %v5424 = vsel %vm68, %v5400, 0.0
    %5425 = vadd.xlane.f32.xlu0 %v5424
    %v5426 = vpop.xlane.xlu0 %5425
    %v5427 = vsel %vm68, %v5401, 0.0
    %5428 = vadd.xlane.f32.xlu0 %v5427
    %v5429 = vpop.xlane.xlu0 %5428
    %v5430 = vsel %vm68, %v5402, 0.0
    %5431 = vadd.xlane.f32.xlu0 %v5430
    %v5432 = vpop.xlane.xlu0 %5431
    %v5433 = vsel %vm68, %v5403, 0.0
    %5434 = vadd.xlane.f32.xlu0 %v5433
    %v5435 = vpop.xlane.xlu0 %5434
    %v5436 = vsel %vm68, %v5404, 0.0
    %5437 = vadd.xlane.f32.xlu0 %v5436
    %v5438 = vpop.xlane.xlu0 %5437
    %v5439 = vsel %vm68, %v5405, 0.0
    %5440 = vadd.xlane.f32.xlu0 %v5439
    %v5441 = vpop.xlane.xlu0 %5440
    %v5442 = vsel %vm68, %v5406, 0.0
    %5443 = vadd.xlane.f32.xlu0 %v5442
    %v5444 = vpop.xlane.xlu0 %5443
    %v5445 = vsel %vm68, %v5407, 0.0
    %5446 = vadd.xlane.f32.xlu0 %v5445
    %v5447 = vpop.xlane.xlu0 %5446
    %v5448 = vsel %vm68, %v5408, 0.0
    %5449 = vadd.xlane.f32.xlu0 %v5448
    %v5450 = vpop.xlane.xlu0 %5449
    %v5451 = vsel %vm68, %v5409, 0.0
    %5452 = vadd.xlane.f32.xlu0 %v5451
    %v5453 = vpop.xlane.xlu0 %5452
    %v5454 = vsel %vm68, %v5410, 0.0
    %5455 = vadd.xlane.f32.xlu0 %v5454
    %v5456 = vpop.xlane.xlu0 %5455
    %v5457 = vsel %vm68, %v5411, 0.0
    %5458 = vadd.xlane.f32.xlu0 %v5457
    %v5459 = vpop.xlane.xlu0 %5458
    %v5460 = vmul.f32 %v5414, %v81
    %v5461 = vmul.f32 %v5417, %v81
    %v5462 = vmul.f32 %v5420, %v81
    %v5463 = vmul.f32 %v5423, %v81
    %v5464 = vmul.f32 %v5426, %v81
    %v5465 = vmul.f32 %v5429, %v81
    %v5466 = vmul.f32 %v5432, %v81
    %v5467 = vmul.f32 %v5435, %v81
    %v5468 = vmul.f32 %v5438, %v81
    %v5469 = vmul.f32 %v5441, %v81
    %v5470 = vmul.f32 %v5444, %v81
    %v5471 = vmul.f32 %v5447, %v81
    %v5472 = vmul.f32 %v5450, %v81
    %v5473 = vmul.f32 %v5453, %v81
    %v5474 = vmul.f32 %v5456, %v81
    %v5475 = vmul.f32 %v5459, %v81
    %v5476 = vadd.f32 %v5460, %v5461
    %v5477 = vadd.f32 %v5476, %v5462
    %v5478 = vadd.f32 %v5477, %v5463
    %v5479 = vrot.slane %v5478, 4
    %v5480 = vadd.f32 %v5478, %v5479
    %v5481 = vrot.slane %v5480, 2
    %v5482 = vadd.f32 %v5480, %v5481
    %v5483 = vrot.slane %v5482, 1
    %v5484 = vadd.f32 %v5482, %v5483
    %v5485 = vadd.f32 %v5464, %v5465
    %v5486 = vadd.f32 %v5485, %v5466
    %v5487 = vadd.f32 %v5486, %v5467
    %v5488 = vrot.slane %v5487, 4
    %v5489 = vadd.f32 %v5487, %v5488
    %v5490 = vrot.slane %v5489, 2
    %v5491 = vadd.f32 %v5489, %v5490
    %v5492 = vrot.slane %v5491, 1
    %v5493 = vadd.f32 %v5491, %v5492
    %v5494 = vadd.f32 %v5468, %v5469
    %v5495 = vadd.f32 %v5494, %v5470
    %v5496 = vadd.f32 %v5495, %v5471
    %v5497 = vrot.slane %v5496, 4
    %v5498 = vadd.f32 %v5496, %v5497
    %v5499 = vrot.slane %v5498, 2
    %v5500 = vadd.f32 %v5498, %v5499
    %v5501 = vrot.slane %v5500, 1
    %v5502 = vadd.f32 %v5500, %v5501
    %v5503 = vadd.f32 %v5472, %v5473
    %v5504 = vadd.f32 %v5503, %v5474
    %v5505 = vadd.f32 %v5504, %v5475
    %v5506 = vrot.slane %v5505, 4
    %v5507 = vadd.f32 %v5505, %v5506
    %v5508 = vrot.slane %v5507, 2
    %v5509 = vadd.f32 %v5507, %v5508
    %v5510 = vrot.slane %v5509, 1
    %v5511 = vadd.f32 %v5509, %v5510
    %v5512 = vmul.f32 %v5484, %v81
    %v5513 = vmul.f32 %v5493, %v81
    %v5514 = vmul.f32 %v5502, %v81
    %v5515 = vmul.f32 %v5511, %v81
    %v5516 = vadd.f32 %v5512, 1e-05
    %v5517 = vadd.f32 %v5513, 1e-05
    %v5518 = vadd.f32 %v5514, 1e-05
    %v5519 = vadd.f32 %v5515, 1e-05
    %v5520 = vrsqrt.pop %v5516
    %v5521 = vrsqrt.pop %v5517
    %v5522 = vrsqrt.pop %v5518
    %v5523 = vrsqrt.pop %v5519
    %v5524 = vmul.f32 %v5380, %v5520
    %v5525 = vmul.f32 %v5381, %v5520
    %v5526 = vmul.f32 %v5382, %v5520
    %v5527 = vmul.f32 %v5383, %v5520
    %v5528 = vmul.f32 %v5384, %v5521
    %v5529 = vmul.f32 %v5385, %v5521
    %v5530 = vmul.f32 %v5386, %v5521
    %v5531 = vmul.f32 %v5387, %v5521
    %v5532 = vmul.f32 %v5388, %v5522
    %v5533 = vmul.f32 %v5389, %v5522
    %v5534 = vmul.f32 %v5390, %v5522
    %v5535 = vmul.f32 %v5391, %v5522
    %v5536 = vmul.f32 %v5392, %v5523
    %v5537 = vmul.f32 %v5393, %v5523
    %v5538 = vmul.f32 %v5394, %v5523
    %v5539 = vmul.f32 %v5395, %v5523
    %v5540 = vsel %vm68, %v5524, -inf
    %5541 = vmax.xlane.f32.xlu0 %v5540
    %v5542 = vpop.xlane.xlu0 %5541
    %v5543 = vsel %vm68, %v5525, -inf
    %5544 = vmax.xlane.f32.xlu0 %v5543
    %v5545 = vpop.xlane.xlu0 %5544
    %v5546 = vsel %vm68, %v5526, -inf
    %5547 = vmax.xlane.f32.xlu0 %v5546
    %v5548 = vpop.xlane.xlu0 %5547
    %v5549 = vsel %vm68, %v5527, -inf
    %5550 = vmax.xlane.f32.xlu0 %v5549
    %v5551 = vpop.xlane.xlu0 %5550
    %v5552 = vsel %vm68, %v5528, -inf
    %5553 = vmax.xlane.f32.xlu0 %v5552
    %v5554 = vpop.xlane.xlu0 %5553
    %v5555 = vsel %vm68, %v5529, -inf
    %5556 = vmax.xlane.f32.xlu0 %v5555
    %v5557 = vpop.xlane.xlu0 %5556
    %v5558 = vsel %vm68, %v5530, -inf
    %5559 = vmax.xlane.f32.xlu0 %v5558
    %v5560 = vpop.xlane.xlu0 %5559
    %v5561 = vsel %vm68, %v5531, -inf
    %5562 = vmax.xlane.f32.xlu0 %v5561
    %v5563 = vpop.xlane.xlu0 %5562
    %v5564 = vsel %vm68, %v5532, -inf
    %5565 = vmax.xlane.f32.xlu0 %v5564
    %v5566 = vpop.xlane.xlu0 %5565
    %v5567 = vsel %vm68, %v5533, -inf
    %5568 = vmax.xlane.f32.xlu0 %v5567
    %v5569 = vpop.xlane.xlu0 %5568
    %v5570 = vsel %vm68, %v5534, -inf
    %5571 = vmax.xlane.f32.xlu0 %v5570
    %v5572 = vpop.xlane.xlu0 %5571
    %v5573 = vsel %vm68, %v5535, -inf
    %5574 = vmax.xlane.f32.xlu0 %v5573
    %v5575 = vpop.xlane.xlu0 %5574
    %v5576 = vsel %vm68, %v5536, -inf
    %5577 = vmax.xlane.f32.xlu0 %v5576
    %v5578 = vpop.xlane.xlu0 %5577
    %v5579 = vsel %vm68, %v5537, -inf
    %5580 = vmax.xlane.f32.xlu0 %v5579
    %v5581 = vpop.xlane.xlu0 %5580
    %v5582 = vsel %vm68, %v5538, -inf
    %5583 = vmax.xlane.f32.xlu0 %v5582
    %v5584 = vpop.xlane.xlu0 %5583
    %v5585 = vsel %vm68, %v5539, -inf
    %5586 = vmax.xlane.f32.xlu0 %v5585
    %v5587 = vpop.xlane.xlu0 %5586
    %v5588 = vsub.f32 %v5524, %v5542
    %v5589 = vsub.f32 %v5525, %v5545
    %v5590 = vsub.f32 %v5526, %v5548
    %v5591 = vsub.f32 %v5527, %v5551
    %v5592 = vsub.f32 %v5528, %v5554
    %v5593 = vsub.f32 %v5529, %v5557
    %v5594 = vsub.f32 %v5530, %v5560
    %v5595 = vsub.f32 %v5531, %v5563
    %v5596 = vsub.f32 %v5532, %v5566
    %v5597 = vsub.f32 %v5533, %v5569
    %v5598 = vsub.f32 %v5534, %v5572
    %v5599 = vsub.f32 %v5535, %v5575
    %v5600 = vsub.f32 %v5536, %v5578
    %v5601 = vsub.f32 %v5537, %v5581
    %v5602 = vsub.f32 %v5538, %v5584
    %v5603 = vsub.f32 %v5539, %v5587
    %v5604 = vmul.f32 %v5588, 1.442695
    %v5605 = vpow.pop %v5604
    %v5606 = vmul.f32 %v5589, 1.442695
    %v5607 = vpow.pop %v5606
    %v5608 = vmul.f32 %v5590, 1.442695
    %v5609 = vpow.pop %v5608
    %v5610 = vmul.f32 %v5591, 1.442695
    %v5611 = vpow.pop %v5610
    %v5612 = vmul.f32 %v5592, 1.442695
    %v5613 = vpow.pop %v5612
    %v5614 = vmul.f32 %v5593, 1.442695
    %v5615 = vpow.pop %v5614
    %v5616 = vmul.f32 %v5594, 1.442695
    %v5617 = vpow.pop %v5616
    %v5618 = vmul.f32 %v5595, 1.442695
    %v5619 = vpow.pop %v5618
    %v5620 = vmul.f32 %v5596, 1.442695
    %v5621 = vpow.pop %v5620
    %v5622 = vmul.f32 %v5597, 1.442695
    %v5623 = vpow.pop %v5622
    %v5624 = vmul.f32 %v5598, 1.442695
    %v5625 = vpow.pop %v5624
    %v5626 = vmul.f32 %v5599, 1.442695
    %v5627 = vpow.pop %v5626
    %v5628 = vmul.f32 %v5600, 1.442695
    %v5629 = vpow.pop %v5628
    %v5630 = vmul.f32 %v5601, 1.442695
    %v5631 = vpow.pop %v5630
    %v5632 = vmul.f32 %v5602, 1.442695
    %v5633 = vpow.pop %v5632
    %v5634 = vmul.f32 %v5603, 1.442695
    %v5635 = vpow.pop %v5634
    %v5636 = vsel %vm68, %v5605, 0.0
    %5637 = vadd.xlane.f32.xlu0 %v5636
    %v5638 = vpop.xlane.xlu0 %5637
    %v5639 = vsel %vm68, %v5607, 0.0
    %5640 = vadd.xlane.f32.xlu0 %v5639
    %v5641 = vpop.xlane.xlu0 %5640
    %v5642 = vsel %vm68, %v5609, 0.0
    %5643 = vadd.xlane.f32.xlu0 %v5642
    %v5644 = vpop.xlane.xlu0 %5643
    %v5645 = vsel %vm68, %v5611, 0.0
    %5646 = vadd.xlane.f32.xlu0 %v5645
    %v5647 = vpop.xlane.xlu0 %5646
    %v5648 = vsel %vm68, %v5613, 0.0
    %5649 = vadd.xlane.f32.xlu0 %v5648
    %v5650 = vpop.xlane.xlu0 %5649
    %v5651 = vsel %vm68, %v5615, 0.0
    %5652 = vadd.xlane.f32.xlu0 %v5651
    %v5653 = vpop.xlane.xlu0 %5652
    %v5654 = vsel %vm68, %v5617, 0.0
    %5655 = vadd.xlane.f32.xlu0 %v5654
    %v5656 = vpop.xlane.xlu0 %5655
    %v5657 = vsel %vm68, %v5619, 0.0
    %5658 = vadd.xlane.f32.xlu0 %v5657
    %v5659 = vpop.xlane.xlu0 %5658
    %v5660 = vsel %vm68, %v5621, 0.0
    %5661 = vadd.xlane.f32.xlu0 %v5660
    %v5662 = vpop.xlane.xlu0 %5661
    %v5663 = vsel %vm68, %v5623, 0.0
    %5664 = vadd.xlane.f32.xlu0 %v5663
    %v5665 = vpop.xlane.xlu0 %5664
    %v5666 = vsel %vm68, %v5625, 0.0
    %5667 = vadd.xlane.f32.xlu0 %v5666
    %v5668 = vpop.xlane.xlu0 %5667
    %v5669 = vsel %vm68, %v5627, 0.0
    %5670 = vadd.xlane.f32.xlu0 %v5669
    %v5671 = vpop.xlane.xlu0 %5670
    %v5672 = vsel %vm68, %v5629, 0.0
    %5673 = vadd.xlane.f32.xlu0 %v5672
    %v5674 = vpop.xlane.xlu0 %5673
    %v5675 = vsel %vm68, %v5631, 0.0
    %5676 = vadd.xlane.f32.xlu0 %v5675
    %v5677 = vpop.xlane.xlu0 %5676
    %v5678 = vsel %vm68, %v5633, 0.0
    %5679 = vadd.xlane.f32.xlu0 %v5678
    %v5680 = vpop.xlane.xlu0 %5679
    %v5681 = vsel %vm68, %v5635, 0.0
    %5682 = vadd.xlane.f32.xlu0 %v5681
    %v5683 = vpop.xlane.xlu0 %5682
    %v5684 = vrcp.pop %v5638
    %v5685 = vrcp.pop %v5641
    %v5686 = vrcp.pop %v5644
    %v5687 = vrcp.pop %v5647
    %v5688 = vrcp.pop %v5650
    %v5689 = vrcp.pop %v5653
    %v5690 = vrcp.pop %v5656
    %v5691 = vrcp.pop %v5659
    %v5692 = vrcp.pop %v5662
    %v5693 = vrcp.pop %v5665
    %v5694 = vrcp.pop %v5668
    %v5695 = vrcp.pop %v5671
    %v5696 = vrcp.pop %v5674
    %v5697 = vrcp.pop %v5677
    %v5698 = vrcp.pop %v5680
    %v5699 = vrcp.pop %v5683
    %v5700 = vmul.f32 %v5605, %v5684
    %v5701 = vmul.f32 %v5607, %v5685
    %v5702 = vmul.f32 %v5609, %v5686
    %v5703 = vmul.f32 %v5611, %v5687
    %v5704 = vmul.f32 %v5613, %v5688
    %v5705 = vmul.f32 %v5615, %v5689
    %v5706 = vmul.f32 %v5617, %v5690
    %v5707 = vmul.f32 %v5619, %v5691
    %v5708 = vmul.f32 %v5621, %v5692
    %v5709 = vmul.f32 %v5623, %v5693
    %v5710 = vmul.f32 %v5625, %v5694
    %v5711 = vmul.f32 %v5627, %v5695
    %v5712 = vmul.f32 %v5629, %v5696
    %v5713 = vmul.f32 %v5631, %v5697
    %v5714 = vmul.f32 %v5633, %v5698
    %v5715 = vmul.f32 %v5635, %v5699
    %v5716 = vsel %vm68, %v5700, 0.0
    %v5717 = vsel %vm68, %v5704, 0.0
    %v5718 = vadd.f32 %v5716, %v5717
    %v5719 = vsel %vm68, %v5708, 0.0
    %v5720 = vadd.f32 %v5718, %v5719
    %v5721 = vsel %vm68, %v5712, 0.0
    %v5722 = vadd.f32 %v5720, %v5721
    %v5723 = vsel %vm68, %v5701, 0.0
    %v5724 = vsel %vm68, %v5705, 0.0
    %v5725 = vadd.f32 %v5723, %v5724
    %v5726 = vsel %vm68, %v5709, 0.0
    %v5727 = vadd.f32 %v5725, %v5726
    %v5728 = vsel %vm68, %v5713, 0.0
    %v5729 = vadd.f32 %v5727, %v5728
    %v5730 = vsel %vm68, %v5702, 0.0
    %v5731 = vsel %vm68, %v5706, 0.0
    %v5732 = vadd.f32 %v5730, %v5731
    %v5733 = vsel %vm68, %v5710, 0.0
    %v5734 = vadd.f32 %v5732, %v5733
    %v5735 = vsel %vm68, %v5714, 0.0
    %v5736 = vadd.f32 %v5734, %v5735
    %v5737 = vsel %vm68, %v5703, 0.0
    %v5738 = vsel %vm68, %v5707, 0.0
    %v5739 = vadd.f32 %v5737, %v5738
    %v5740 = vsel %vm68, %v5711, 0.0
    %v5741 = vadd.f32 %v5739, %v5740
    %v5742 = vsel %vm68, %v5715, 0.0
    %v5743 = vadd.f32 %v5741, %v5742
    %v5744 = vmul.f32 %v5722, %v1098
    %v5745 = vmul.f32 %v5729, %v1098
    %v5746 = vmul.f32 %v5736, %v1098
    %v5747 = vmul.f32 %v5743, %v1098
    %s5748 = scalar_lea.vmem [#allocation7], 128
    %5749 = vst.msk [vmem:[%s5748] sm:$0xff] %vm68, %v5744
    %5750 = vst.msk [vmem:[%s5748 + $0x8] sm:$0xff] %vm68, %v5745
    %5751 = vst.msk [vmem:[%s5748 + $0x10] sm:$0xff] %vm68, %v5746
    %5752 = vst.msk [vmem:[%s5748 + $0x18] sm:$0xff] %vm68, %v5747
    %5753 = vxpose.xlu0.b32.start [1/16] %v5700, 128
    %5754 = vxpose.xlu0.b32.cont [2/16] %v5701, 128
    %5755 = vxpose.xlu0.b32.cont [3/16] %v5702, 128
    %5756 = vxpose.xlu0.b32.cont [4/16] %v5703, 128
    %5757 = vxpose.xlu0.b32.cont [5/16] 0.0, 128
    %5758 = vxpose.xlu0.b32.cont [6/16] 0.0, 128
    %5759 = vxpose.xlu0.b32.cont [7/16] 0.0, 128
    %5760 = vxpose.xlu0.b32.cont [8/16] 0.0, 128
    %5761 = vxpose.xlu0.b32.cont [9/16] 0.0, 128
    %5762 = vxpose.xlu0.b32.cont [10/16] 0.0, 128
    %5763 = vxpose.xlu0.b32.cont [11/16] 0.0, 128
    %5764 = vxpose.xlu0.b32.cont [12/16] 0.0, 128
    %5765 = vxpose.xlu0.b32.cont [13/16] 0.0, 128
    %5766 = vxpose.xlu0.b32.cont [14/16] 0.0, 128
    %5767 = vxpose.xlu0.b32.cont [15/16] 0.0, 128
    %5768 = vxpose.xlu0.b32.end [16/16] 0.0, 128
    %v5769 = vpop.trf.xlu0
    %v5770 = vpop.trf.xlu0
    %v5771 = vpop.trf.xlu0
    %v5772 = vpop.trf.xlu0
    %v5773 = vpop.trf.xlu0
    %v5774 = vpop.trf.xlu0
    %v5775 = vpop.trf.xlu0
    %v5776 = vpop.trf.xlu0
    %v5777 = vpop.trf.xlu0
    %v5778 = vpop.trf.xlu0
    %v5779 = vpop.trf.xlu0
    %v5780 = vpop.trf.xlu0
    %v5781 = vpop.trf.xlu0
    %v5782 = vpop.trf.xlu0
    %v5783 = vpop.trf.xlu0
    %v5784 = vpop.trf.xlu0
    %5785 = vxpose.xlu0.b32.start [1/16] %v5704, 128
    %5786 = vxpose.xlu0.b32.cont [2/16] %v5705, 128
    %5787 = vxpose.xlu0.b32.cont [3/16] %v5706, 128
    %5788 = vxpose.xlu0.b32.cont [4/16] %v5707, 128
    %5789 = vxpose.xlu0.b32.cont [5/16] 0.0, 128
    %5790 = vxpose.xlu0.b32.cont [6/16] 0.0, 128
    %5791 = vxpose.xlu0.b32.cont [7/16] 0.0, 128
    %5792 = vxpose.xlu0.b32.cont [8/16] 0.0, 128
    %5793 = vxpose.xlu0.b32.cont [9/16] 0.0, 128
    %5794 = vxpose.xlu0.b32.cont [10/16] 0.0, 128
    %5795 = vxpose.xlu0.b32.cont [11/16] 0.0, 128
    %5796 = vxpose.xlu0.b32.cont [12/16] 0.0, 128
    %5797 = vxpose.xlu0.b32.cont [13/16] 0.0, 128
    %5798 = vxpose.xlu0.b32.cont [14/16] 0.0, 128
    %5799 = vxpose.xlu0.b32.cont [15/16] 0.0, 128
    %5800 = vxpose.xlu0.b32.end [16/16] 0.0, 128
    %v5801 = vpop.trf.xlu0
    %v5802 = vpop.trf.xlu0
    %v5803 = vpop.trf.xlu0
    %v5804 = vpop.trf.xlu0
    %v5805 = vpop.trf.xlu0
    %v5806 = vpop.trf.xlu0
    %v5807 = vpop.trf.xlu0
    %v5808 = vpop.trf.xlu0
    %v5809 = vpop.trf.xlu0
    %v5810 = vpop.trf.xlu0
    %v5811 = vpop.trf.xlu0
    %v5812 = vpop.trf.xlu0
    %v5813 = vpop.trf.xlu0
    %v5814 = vpop.trf.xlu0
    %v5815 = vpop.trf.xlu0
    %v5816 = vpop.trf.xlu0
    %5817 = vxpose.xlu0.b32.start [1/16] %v5708, 128
    %5818 = vxpose.xlu0.b32.cont [2/16] %v5709, 128
    %5819 = vxpose.xlu0.b32.cont [3/16] %v5710, 128
    %5820 = vxpose.xlu0.b32.cont [4/16] %v5711, 128
    %5821 = vxpose.xlu0.b32.cont [5/16] 0.0, 128
    %5822 = vxpose.xlu0.b32.cont [6/16] 0.0, 128
    %5823 = vxpose.xlu0.b32.cont [7/16] 0.0, 128
    %5824 = vxpose.xlu0.b32.cont [8/16] 0.0, 128
    %5825 = vxpose.xlu0.b32.cont [9/16] 0.0, 128
    %5826 = vxpose.xlu0.b32.cont [10/16] 0.0, 128
    %5827 = vxpose.xlu0.b32.cont [11/16] 0.0, 128
    %5828 = vxpose.xlu0.b32.cont [12/16] 0.0, 128
    %5829 = vxpose.xlu0.b32.cont [13/16] 0.0, 128
    %5830 = vxpose.xlu0.b32.cont [14/16] 0.0, 128
    %5831 = vxpose.xlu0.b32.cont [15/16] 0.0, 128
    %5832 = vxpose.xlu0.b32.end [16/16] 0.0, 128
    %v5833 = vpop.trf.xlu0
    %v5834 = vpop.trf.xlu0
    %v5835 = vpop.trf.xlu0
    %v5836 = vpop.trf.xlu0
    %v5837 = vpop.trf.xlu0
    %v5838 = vpop.trf.xlu0
    %v5839 = vpop.trf.xlu0
    %v5840 = vpop.trf.xlu0
    %v5841 = vpop.trf.xlu0
    %v5842 = vpop.trf.xlu0
    %v5843 = vpop.trf.xlu0
    %v5844 = vpop.trf.xlu0
    %v5845 = vpop.trf.xlu0
    %v5846 = vpop.trf.xlu0
    %v5847 = vpop.trf.xlu0
    %v5848 = vpop.trf.xlu0
    %5849 = vxpose.xlu0.b32.start [1/16] %v5712, 128
    %5850 = vxpose.xlu0.b32.cont [2/16] %v5713, 128
    %5851 = vxpose.xlu0.b32.cont [3/16] %v5714, 128
    %5852 = vxpose.xlu0.b32.cont [4/16] %v5715, 128
    %5853 = vxpose.xlu0.b32.cont [5/16] 0.0, 128
    %5854 = vxpose.xlu0.b32.cont [6/16] 0.0, 128
    %5855 = vxpose.xlu0.b32.cont [7/16] 0.0, 128
    %5856 = vxpose.xlu0.b32.cont [8/16] 0.0, 128
    %5857 = vxpose.xlu0.b32.cont [9/16] 0.0, 128
    %5858 = vxpose.xlu0.b32.cont [10/16] 0.0, 128
    %5859 = vxpose.xlu0.b32.cont [11/16] 0.0, 128
    %5860 = vxpose.xlu0.b32.cont [12/16] 0.0, 128
    %5861 = vxpose.xlu0.b32.cont [13/16] 0.0, 128
    %5862 = vxpose.xlu0.b32.cont [14/16] 0.0, 128
    %5863 = vxpose.xlu0.b32.cont [15/16] 0.0, 128
    %5864 = vxpose.xlu0.b32.end [16/16] 0.0, 128
    %v5865 = vpop.trf.xlu0
    %v5866 = vpop.trf.xlu0
    %v5867 = vpop.trf.xlu0
    %v5868 = vpop.trf.xlu0
    %v5869 = vpop.trf.xlu0
    %v5870 = vpop.trf.xlu0
    %v5871 = vpop.trf.xlu0
    %v5872 = vpop.trf.xlu0
    %v5873 = vpop.trf.xlu0
    %v5874 = vpop.trf.xlu0
    %v5875 = vpop.trf.xlu0
    %v5876 = vpop.trf.xlu0
    %v5877 = vpop.trf.xlu0
    %v5878 = vpop.trf.xlu0
    %v5879 = vpop.trf.xlu0
    %v5880 = vpop.trf.xlu0
    %5881 = vmatprep.subr.mxu0 0.0
    %5882 = vmatpush1.msra.mxu0 %v5769
    %5883 = vmatprep.subr.mxu0 0.0
    %5884 = vmatpush1.msra.mxu0 %v5770
    %5885 = vmatprep.subr.mxu0 0.0
    %5886 = vmatpush1.msra.mxu0 %v5771
    %5887 = vmatprep.subr.mxu0 0.0
    %5888 = vmatpush1.msra.mxu0 %v5772
    %5889 = vmatprep.subr.mxu0 0.0
    %5890 = vmatpush1.msra.mxu0 %v5801
    %5891 = vmatprep.subr.mxu0 0.0
    %5892 = vmatpush1.msra.mxu0 %v5802
    %5893 = vmatprep.subr.mxu0 0.0
    %5894 = vmatpush1.msra.mxu0 %v5803
    %5895 = vmatprep.subr.mxu0 0.0
    %5896 = vmatpush1.msra.mxu0 %v5804
    %5897 = vmatprep.subr.mxu0 0.0
    %5898 = vmatpush1.msra.mxu0 %v5833
    %5899 = vmatprep.subr.mxu0 0.0
    %5900 = vmatpush1.msra.mxu0 %v5834
    %5901 = vmatprep.subr.mxu0 0.0
    %5902 = vmatpush1.msra.mxu0 %v5835
    %5903 = vmatprep.subr.mxu0 0.0
    %5904 = vmatpush1.msra.mxu0 %v5836
    %5905 = vmatprep.subr.mxu0 0.0
    %5906 = vmatpush1.msra.mxu0 %v5865
    %5907 = vmatprep.subr.mxu0 0.0
    %5908 = vmatpush1.msra.mxu0 %v5866
    %5909 = vmatprep.subr.mxu0 0.0
    %5910 = vmatpush1.msra.mxu0 %v5867
    %5911 = vmatprep.subr.mxu0 0.0
    %5912 = vmatpush1.msra.mxu0 %v5868
    %5913 = vmatprep.subr.mxu0 0.0
    %5914 = vmatpush1.msra.mxu0 0.0
    %5915 = vmatprep.subr.mxu0 0.0
    %5916 = vmatpush1.msra.mxu0 0.0
    %5917 = vmatprep.subr.mxu0 0.0
    %5918 = vmatpush1.msra.mxu0 0.0
    %5919 = vmatprep.subr.mxu0 0.0
    %5920 = vmatpush1.msra.mxu0 0.0
    %5921 = vmatprep.subr.mxu0 0.0
    %5922 = vmatpush1.msra.mxu0 0.0
    %5923 = vmatprep.subr.mxu0 0.0
    %5924 = vmatpush1.msra.mxu0 0.0
    %5925 = vmatprep.subr.mxu0 0.0
    %5926 = vmatpush1.msra.mxu0 0.0
    %5927 = vmatprep.subr.mxu0 0.0
    %5928 = vmatpush1.msra.mxu0 0.0
    %5929 = vmatprep.subr.mxu0 0.0
    %5930 = vmatpush1.msra.mxu0 0.0
    %5931 = vmatprep.subr.mxu0 0.0
    %5932 = vmatpush1.msra.mxu0 0.0
    %5933 = vmatprep.subr.mxu0 0.0
    %5934 = vmatpush1.msra.mxu0 0.0
    %5935 = vmatprep.subr.mxu0 0.0
    %5936 = vmatpush1.msra.mxu0 0.0
    %5937 = vmatprep.subr.mxu0 0.0
    %5938 = vmatpush1.msra.mxu0 0.0
    %5939 = vmatprep.subr.mxu0 0.0
    %5940 = vmatpush1.msra.mxu0 0.0
    %5941 = vmatprep.subr.mxu0 0.0
    %5942 = vmatpush1.msra.mxu0 0.0
    %5943 = vmatprep.subr.mxu0 0.0
    %5944 = vmatpush1.msra.mxu0 0.0
    %5945 = vmatprep.mubr.f32.mxu0 0.0
    %5946 = vmatmul.mubr.f32.gmra.mrb[0].mxu0 %v4969
    %v5947 = vpop.f32.mrb[0].mxu0
    %v5948 = vadd.f32 0.0, %v5947
    %v5949 = vpop.f32.mrb[0].mxu0
    %5950 = vdwg.mxu0
    %v5951 = vmul.f32 %v5948, 0.25
    %5952 = vst.msk [vmem:[#allocation2] sm:$0xff] %vm68, %v5951
    %5953 = vxpose.xlu0.b32.start [1/16] %v4886, 128
    %5954 = vxpose.xlu0.b32.cont [2/16] 0.0, 128
    %5955 = vxpose.xlu0.b32.cont [3/16] 0.0, 128
    %5956 = vxpose.xlu0.b32.cont [4/16] 0.0, 128
    %5957 = vxpose.xlu0.b32.cont [5/16] 0.0, 128
    %5958 = vxpose.xlu0.b32.cont [6/16] 0.0, 128
    %5959 = vxpose.xlu0.b32.cont [7/16] 0.0, 128
    %5960 = vxpose.xlu0.b32.cont [8/16] 0.0, 128
    %5961 = vxpose.xlu0.b32.cont [9/16] 0.0, 128
    %5962 = vxpose.xlu0.b32.cont [10/16] 0.0, 128
    %5963 = vxpose.xlu0.b32.cont [11/16] 0.0, 128
    %5964 = vxpose.xlu0.b32.cont [12/16] 0.0, 128
    %5965 = vxpose.xlu0.b32.cont [13/16] 0.0, 128
    %5966 = vxpose.xlu0.b32.cont [14/16] 0.0, 128
    %5967 = vxpose.xlu0.b32.cont [15/16] 0.0, 128
    %5968 = vxpose.xlu0.b32.end [16/16] 0.0, 128
    %v5969 = vpop.trf.xlu0
    %v5970 = vpop.trf.xlu0
    %v5971 = vpop.trf.xlu0
    %v5972 = vpop.trf.xlu0
    %v5973 = vpop.trf.xlu0
    %v5974 = vpop.trf.xlu0
    %v5975 = vpop.trf.xlu0
    %v5976 = vpop.trf.xlu0
    %v5977 = vpop.trf.xlu0
    %v5978 = vpop.trf.xlu0
    %v5979 = vpop.trf.xlu0
    %v5980 = vpop.trf.xlu0
    %v5981 = vpop.trf.xlu0
    %v5982 = vpop.trf.xlu0
    %v5983 = vpop.trf.xlu0
    %v5984 = vpop.trf.xlu0
    %v5986 = vsel %vm372, %v5969, 0
    %v5989 = vsel %vm372, %v5970, 0
    %v5992 = vsel %vm372, %v5971, 0
    %v5995 = vsel %vm372, %v5972, 0
    %v5998 = vsel %vm372, %v5973, 0
    %v6001 = vsel %vm372, %v5974, 0
    %v6004 = vsel %vm372, %v5975, 0
    %v6007 = vsel %vm372, %v5976, 0
    %v6010 = vsel %vm372, %v5977, 0
    %v6013 = vsel %vm372, %v5978, 0
    %v6016 = vsel %vm372, %v5979, 0
    %v6019 = vsel %vm372, %v5980, 0
    %v6022 = vsel %vm372, %v5981, 0
    %v6025 = vsel %vm372, %v5982, 0
    %v6028 = vsel %vm372, %v5983, 0
    %v6031 = vsel %vm372, %v5984, 0
    %6033 = vmatprep.subr.mxu0 0.0
    %6034 = vmatpush1.msra.mxu0 %v4888
    %6035 = vmatprep.subr.mxu0 0.0
    %6036 = vmatpush1.msra.mxu0 0.0
    %6037 = vmatprep.subr.mxu0 0.0
    %6038 = vmatpush1.msra.mxu0 0.0
    %6039 = vmatprep.subr.mxu0 0.0
    %6040 = vmatpush1.msra.mxu0 0.0
    %6041 = vmatprep.subr.mxu0 0.0
    %6042 = vmatpush1.msra.mxu0 0.0
    %6043 = vmatprep.subr.mxu0 0.0
    %6044 = vmatpush1.msra.mxu0 0.0
    %6045 = vmatprep.subr.mxu0 0.0
    %6046 = vmatpush1.msra.mxu0 0.0
    %6047 = vmatprep.subr.mxu0 0.0
    %6048 = vmatpush1.msra.mxu0 0.0
    %6049 = vmatprep.subr.mxu0 0.0
    %6050 = vmatpush1.msra.mxu0 0.0
    %6051 = vmatprep.subr.mxu0 0.0
    %6052 = vmatpush1.msra.mxu0 0.0
    %6053 = vmatprep.subr.mxu0 0.0
    %6054 = vmatpush1.msra.mxu0 0.0
    %6055 = vmatprep.subr.mxu0 0.0
    %6056 = vmatpush1.msra.mxu0 0.0
    %6057 = vmatprep.subr.mxu0 0.0
    %6058 = vmatpush1.msra.mxu0 0.0
    %6059 = vmatprep.subr.mxu0 0.0
    %6060 = vmatpush1.msra.mxu0 0.0
    %6061 = vmatprep.subr.mxu0 0.0
    %6062 = vmatpush1.msra.mxu0 0.0
    %6063 = vmatprep.subr.mxu0 0.0
    %6064 = vmatpush1.msra.mxu0 0.0
    %6065 = vmatprep.subr.mxu0 0.0
    %6066 = vmatpush1.msra.mxu0 0.0
    %6067 = vmatprep.subr.mxu0 0.0
    %6068 = vmatpush1.msra.mxu0 0.0
    %6069 = vmatprep.subr.mxu0 0.0
    %6070 = vmatpush1.msra.mxu0 0.0
    %6071 = vmatprep.subr.mxu0 0.0
    %6072 = vmatpush1.msra.mxu0 0.0
    %6073 = vmatprep.subr.mxu0 0.0
    %6074 = vmatpush1.msra.mxu0 0.0
    %6075 = vmatprep.subr.mxu0 0.0
    %6076 = vmatpush1.msra.mxu0 0.0
    %6077 = vmatprep.subr.mxu0 0.0
    %6078 = vmatpush1.msra.mxu0 0.0
    %6079 = vmatprep.subr.mxu0 0.0
    %6080 = vmatpush1.msra.mxu0 0.0
    %6081 = vmatprep.subr.mxu0 0.0
    %6082 = vmatpush1.msra.mxu0 0.0
    %6083 = vmatprep.subr.mxu0 0.0
    %6084 = vmatpush1.msra.mxu0 0.0
    %6085 = vmatprep.subr.mxu0 0.0
    %6086 = vmatpush1.msra.mxu0 0.0
    %6087 = vmatprep.subr.mxu0 0.0
    %6088 = vmatpush1.msra.mxu0 0.0
    %6089 = vmatprep.subr.mxu0 0.0
    %6090 = vmatpush1.msra.mxu0 0.0
    %6091 = vmatprep.subr.mxu0 0.0
    %6092 = vmatpush1.msra.mxu0 0.0
    %6093 = vmatprep.subr.mxu0 0.0
    %6094 = vmatpush1.msra.mxu0 0.0
    %6095 = vmatprep.subr.mxu0 0.0
    %6096 = vmatpush1.msra.mxu0 0.0
    %6097 = vmatprep.mubr.f32.mxu0 0.0
    %6098 = vmatmul.mubr.f32.gmra.mrb[0].mxu0 %v5986
    %v6099 = vpop.f32.mrb[0].mxu0
    %v6100 = vadd.f32 0.0, %v6099
    %v6101 = vpop.f32.mrb[0].mxu0
    %6102 = vmatprep.mubr.f32.mxu0 0.0
    %6103 = vmatmul.mubr.f32.gmra.mrb[0].mxu0 %v5989
    %v6104 = vpop.f32.mrb[0].mxu0
    %v6105 = vadd.f32 0.0, %v6104
    %v6106 = vpop.f32.mrb[0].mxu0
    %6107 = vmatprep.mubr.f32.mxu0 0.0
    %6108 = vmatmul.mubr.f32.gmra.mrb[0].mxu0 %v5992
    %v6109 = vpop.f32.mrb[0].mxu0
    %v6110 = vadd.f32 0.0, %v6109
    %v6111 = vpop.f32.mrb[0].mxu0
    %6112 = vmatprep.mubr.f32.mxu0 0.0
    %6113 = vmatmul.mubr.f32.gmra.mrb[0].mxu0 %v5995
    %v6114 = vpop.f32.mrb[0].mxu0
    %v6115 = vadd.f32 0.0, %v6114
    %v6116 = vpop.f32.mrb[0].mxu0
    %6117 = vmatprep.mubr.f32.mxu0 0.0
    %6118 = vmatmul.mubr.f32.gmra.mrb[0].mxu0 %v5998
    %v6119 = vpop.f32.mrb[0].mxu0
    %v6120 = vadd.f32 0.0, %v6119
    %v6121 = vpop.f32.mrb[0].mxu0
    %6122 = vmatprep.mubr.f32.mxu0 0.0
    %6123 = vmatmul.mubr.f32.gmra.mrb[0].mxu0 %v6001
    %v6124 = vpop.f32.mrb[0].mxu0
    %v6125 = vadd.f32 0.0, %v6124
    %v6126 = vpop.f32.mrb[0].mxu0
    %6127 = vmatprep.mubr.f32.mxu0 0.0
    %6128 = vmatmul.mubr.f32.gmra.mrb[0].mxu0 %v6004
    %v6129 = vpop.f32.mrb[0].mxu0
    %v6130 = vadd.f32 0.0, %v6129
    %v6131 = vpop.f32.mrb[0].mxu0
    %6132 = vmatprep.mubr.f32.mxu0 0.0
    %6133 = vmatmul.mubr.f32.gmra.mrb[0].mxu0 %v6007
    %v6134 = vpop.f32.mrb[0].mxu0
    %v6135 = vadd.f32 0.0, %v6134
    %v6136 = vpop.f32.mrb[0].mxu0
    %6137 = vmatprep.mubr.f32.mxu0 0.0
    %6138 = vmatmul.mubr.f32.gmra.mrb[0].mxu0 %v6010
    %v6139 = vpop.f32.mrb[0].mxu0
    %v6140 = vadd.f32 0.0, %v6139
    %v6141 = vpop.f32.mrb[0].mxu0
    %6142 = vmatprep.mubr.f32.mxu0 0.0
    %6143 = vmatmul.mubr.f32.gmra.mrb[0].mxu0 %v6013
    %v6144 = vpop.f32.mrb[0].mxu0
    %v6145 = vadd.f32 0.0, %v6144
    %v6146 = vpop.f32.mrb[0].mxu0
    %6147 = vmatprep.mubr.f32.mxu0 0.0
    %6148 = vmatmul.mubr.f32.gmra.mrb[0].mxu0 %v6016
    %v6149 = vpop.f32.mrb[0].mxu0
    %v6150 = vadd.f32 0.0, %v6149
    %v6151 = vpop.f32.mrb[0].mxu0
    %6152 = vmatprep.mubr.f32.mxu0 0.0
    %6153 = vmatmul.mubr.f32.gmra.mrb[0].mxu0 %v6019
    %v6154 = vpop.f32.mrb[0].mxu0
    %v6155 = vadd.f32 0.0, %v6154
    %v6156 = vpop.f32.mrb[0].mxu0
    %6157 = vmatprep.mubr.f32.mxu0 0.0
    %6158 = vmatmul.mubr.f32.gmra.mrb[0].mxu0 %v6022
    %v6159 = vpop.f32.mrb[0].mxu0
    %v6160 = vadd.f32 0.0, %v6159
    %v6161 = vpop.f32.mrb[0].mxu0
    %6162 = vmatprep.mubr.f32.mxu0 0.0
    %6163 = vmatmul.mubr.f32.gmra.mrb[0].mxu0 %v6025
    %v6164 = vpop.f32.mrb[0].mxu0
    %v6165 = vadd.f32 0.0, %v6164
    %v6166 = vpop.f32.mrb[0].mxu0
    %6167 = vmatprep.mubr.f32.mxu0 0.0
    %6168 = vmatmul.mubr.f32.gmra.mrb[0].mxu0 %v6028
    %v6169 = vpop.f32.mrb[0].mxu0
    %v6170 = vadd.f32 0.0, %v6169
    %v6171 = vpop.f32.mrb[0].mxu0
    %6172 = vmatprep.mubr.f32.mxu0 0.0
    %6173 = vmatmul.mubr.f32.gmra.mrb[0].mxu0 %v6031
    %v6174 = vpop.f32.mrb[0].mxu0
    %v6175 = vadd.f32 0.0, %v6174
    %v6176 = vpop.f32.mrb[0].mxu0
    %6177 = vdwg.mxu0
    %6182 = vrot.lane.b32.xlu0 %v6120, 96
    %v6183 = vpop.permute.xlu0 %6182
    %6184 = vrot.lane.b32.xlu0 %v6125, 96
    %v6185 = vpop.permute.xlu0 %6184
    %6186 = vrot.lane.b32.xlu0 %v6130, 96
    %v6187 = vpop.permute.xlu0 %6186
    %6188 = vrot.lane.b32.xlu0 %v6135, 96
    %v6189 = vpop.permute.xlu0 %6188
    %6198 = vrot.lane.b32.xlu0 %v6140, 64
    %v6199 = vpop.permute.xlu0 %6198
    %6200 = vrot.lane.b32.xlu0 %v6145, 64
    %v6201 = vpop.permute.xlu0 %6200
    %6202 = vrot.lane.b32.xlu0 %v6150, 64
    %v6203 = vpop.permute.xlu0 %6202
    %6204 = vrot.lane.b32.xlu0 %v6155, 64
    %v6205 = vpop.permute.xlu0 %6204
    %6214 = vrot.lane.b32.xlu0 %v6160, 32
    %v6215 = vpop.permute.xlu0 %6214
    %6216 = vrot.lane.b32.xlu0 %v6165, 32
    %v6217 = vpop.permute.xlu0 %6216
    %6218 = vrot.lane.b32.xlu0 %v6170, 32
    %v6219 = vpop.permute.xlu0 %6218
    %6220 = vrot.lane.b32.xlu0 %v6175, 32
    %v6221 = vpop.permute.xlu0 %6220
    %v6226 = vmul.f32 %v6100, 0.17677669
    %v6227 = vmul.f32 %v6105, 0.17677669
    %v6228 = vmul.f32 %v6110, 0.17677669
    %v6229 = vmul.f32 %v6115, 0.17677669
    %v6230 = vmul.f32 %v6183, 0.17677669
    %v6231 = vmul.f32 %v6185, 0.17677669
    %v6232 = vmul.f32 %v6187, 0.17677669
    %v6233 = vmul.f32 %v6189, 0.17677669
    %v6234 = vmul.f32 %v6199, 0.17677669
    %v6235 = vmul.f32 %v6201, 0.17677669
    %v6236 = vmul.f32 %v6203, 0.17677669
    %v6237 = vmul.f32 %v6205, 0.17677669
    %v6238 = vmul.f32 %v6215, 0.17677669
    %v6239 = vmul.f32 %v6217, 0.17677669
    %v6240 = vmul.f32 %v6219, 0.17677669
    %v6241 = vmul.f32 %v6221, 0.17677669
    %v6242 = vsel %vm68, %v6226, 0.0
    %6243 = vadd.xlane.f32.xlu0 %v6242
    %v6244 = vpop.xlane.xlu0 %6243
    %v6245 = vsel %vm68, %v6227, 0.0
    %6246 = vadd.xlane.f32.xlu0 %v6245
    %v6247 = vpop.xlane.xlu0 %6246
    %v6248 = vsel %vm68, %v6228, 0.0
    %6249 = vadd.xlane.f32.xlu0 %v6248
    %v6250 = vpop.xlane.xlu0 %6249
    %v6251 = vsel %vm68, %v6229, 0.0
    %6252 = vadd.xlane.f32.xlu0 %v6251
    %v6253 = vpop.xlane.xlu0 %6252
    %v6254 = vsel %vm68, %v6230, 0.0
    %6255 = vadd.xlane.f32.xlu0 %v6254
    %v6256 = vpop.xlane.xlu0 %6255
    %v6257 = vsel %vm68, %v6231, 0.0
    %6258 = vadd.xlane.f32.xlu0 %v6257
    %v6259 = vpop.xlane.xlu0 %6258
    %v6260 = vsel %vm68, %v6232, 0.0
    %6261 = vadd.xlane.f32.xlu0 %v6260
    %v6262 = vpop.xlane.xlu0 %6261
    %v6263 = vsel %vm68, %v6233, 0.0
    %6264 = vadd.xlane.f32.xlu0 %v6263
    %v6265 = vpop.xlane.xlu0 %6264
    %v6266 = vsel %vm68, %v6234, 0.0
    %6267 = vadd.xlane.f32.xlu0 %v6266
    %v6268 = vpop.xlane.xlu0 %6267
    %v6269 = vsel %vm68, %v6235, 0.0
    %6270 = vadd.xlane.f32.xlu0 %v6269
    %v6271 = vpop.xlane.xlu0 %6270
    %v6272 = vsel %vm68, %v6236, 0.0
    %6273 = vadd.xlane.f32.xlu0 %v6272
    %v6274 = vpop.xlane.xlu0 %6273
    %v6275 = vsel %vm68, %v6237, 0.0
    %6276 = vadd.xlane.f32.xlu0 %v6275
    %v6277 = vpop.xlane.xlu0 %6276
    %v6278 = vsel %vm68, %v6238, 0.0
    %6279 = vadd.xlane.f32.xlu0 %v6278
    %v6280 = vpop.xlane.xlu0 %6279
    %v6281 = vsel %vm68, %v6239, 0.0
    %6282 = vadd.xlane.f32.xlu0 %v6281
    %v6283 = vpop.xlane.xlu0 %6282
    %v6284 = vsel %vm68, %v6240, 0.0
    %6285 = vadd.xlane.f32.xlu0 %v6284
    %v6286 = vpop.xlane.xlu0 %6285
    %v6287 = vsel %vm68, %v6241, 0.0
    %6288 = vadd.xlane.f32.xlu0 %v6287
    %v6289 = vpop.xlane.xlu0 %6288
    %v6290 = vmul.f32 %v6244, %v81
    %v6291 = vmul.f32 %v6247, %v81
    %v6292 = vmul.f32 %v6250, %v81
    %v6293 = vmul.f32 %v6253, %v81
    %v6294 = vmul.f32 %v6256, %v81
    %v6295 = vmul.f32 %v6259, %v81
    %v6296 = vmul.f32 %v6262, %v81
    %v6297 = vmul.f32 %v6265, %v81
    %v6298 = vmul.f32 %v6268, %v81
    %v6299 = vmul.f32 %v6271, %v81
    %v6300 = vmul.f32 %v6274, %v81
    %v6301 = vmul.f32 %v6277, %v81
    %v6302 = vmul.f32 %v6280, %v81
    %v6303 = vmul.f32 %v6283, %v81
    %v6304 = vmul.f32 %v6286, %v81
    %v6305 = vmul.f32 %v6289, %v81
    %v6306 = vadd.f32 %v6290, %v6291
    %v6307 = vadd.f32 %v6306, %v6292
    %v6308 = vadd.f32 %v6307, %v6293
    %v6309 = vrot.slane %v6308, 4
    %v6310 = vadd.f32 %v6308, %v6309
    %v6311 = vrot.slane %v6310, 2
    %v6312 = vadd.f32 %v6310, %v6311
    %v6313 = vrot.slane %v6312, 1
    %v6314 = vadd.f32 %v6312, %v6313
    %v6315 = vadd.f32 %v6294, %v6295
    %v6316 = vadd.f32 %v6315, %v6296
    %v6317 = vadd.f32 %v6316, %v6297
    %v6318 = vrot.slane %v6317, 4
    %v6319 = vadd.f32 %v6317, %v6318
    %v6320 = vrot.slane %v6319, 2
    %v6321 = vadd.f32 %v6319, %v6320
    %v6322 = vrot.slane %v6321, 1
    %v6323 = vadd.f32 %v6321, %v6322
    %v6324 = vadd.f32 %v6298, %v6299
    %v6325 = vadd.f32 %v6324, %v6300
    %v6326 = vadd.f32 %v6325, %v6301
    %v6327 = vrot.slane %v6326, 4
    %v6328 = vadd.f32 %v6326, %v6327
    %v6329 = vrot.slane %v6328, 2
    %v6330 = vadd.f32 %v6328, %v6329
    %v6331 = vrot.slane %v6330, 1
    %v6332 = vadd.f32 %v6330, %v6331
    %v6333 = vadd.f32 %v6302, %v6303
    %v6334 = vadd.f32 %v6333, %v6304
    %v6335 = vadd.f32 %v6334, %v6305
    %v6336 = vrot.slane %v6335, 4
    %v6337 = vadd.f32 %v6335, %v6336
    %v6338 = vrot.slane %v6337, 2
    %v6339 = vadd.f32 %v6337, %v6338
    %v6340 = vrot.slane %v6339, 1
    %v6341 = vadd.f32 %v6339, %v6340
    %v6342 = vmul.f32 %v6314, %v81
    %v6343 = vmul.f32 %v6323, %v81
    %v6344 = vmul.f32 %v6332, %v81
    %v6345 = vmul.f32 %v6341, %v81
    %v6346 = vsub.f32 %v6226, %v6342
    %v6347 = vsub.f32 %v6227, %v6342
    %v6348 = vsub.f32 %v6228, %v6342
    %v6349 = vsub.f32 %v6229, %v6342
    %v6350 = vsub.f32 %v6230, %v6343
    %v6351 = vsub.f32 %v6231, %v6343
    %v6352 = vsub.f32 %v6232, %v6343
    %v6353 = vsub.f32 %v6233, %v6343
    %v6354 = vsub.f32 %v6234, %v6344
    %v6355 = vsub.f32 %v6235, %v6344
    %v6356 = vsub.f32 %v6236, %v6344
    %v6357 = vsub.f32 %v6237, %v6344
    %v6358 = vsub.f32 %v6238, %v6345
    %v6359 = vsub.f32 %v6239, %v6345
    %v6360 = vsub.f32 %v6240, %v6345
    %v6361 = vsub.f32 %v6241, %v6345
    %v6362 = vmul.f32 %v6346, %v6346
    %v6363 = vmul.f32 %v6347, %v6347
    %v6364 = vmul.f32 %v6348, %v6348
    %v6365 = vmul.f32 %v6349, %v6349
    %v6366 = vmul.f32 %v6350, %v6350
    %v6367 = vmul.f32 %v6351, %v6351
    %v6368 = vmul.f32 %v6352, %v6352
    %v6369 = vmul.f32 %v6353, %v6353
    %v6370 = vmul.f32 %v6354, %v6354
    %v6371 = vmul.f32 %v6355, %v6355
    %v6372 = vmul.f32 %v6356, %v6356
    %v6373 = vmul.f32 %v6357, %v6357
    %v6374 = vmul.f32 %v6358, %v6358
    %v6375 = vmul.f32 %v6359, %v6359
    %v6376 = vmul.f32 %v6360, %v6360
    %v6377 = vmul.f32 %v6361, %v6361
    %v6378 = vsel %vm68, %v6362, 0.0
    %6379 = vadd.xlane.f32.xlu0 %v6378
    %v6380 = vpop.xlane.xlu0 %6379
    %v6381 = vsel %vm68, %v6363, 0.0
    %6382 = vadd.xlane.f32.xlu0 %v6381
    %v6383 = vpop.xlane.xlu0 %6382
    %v6384 = vsel %vm68, %v6364, 0.0
    %6385 = vadd.xlane.f32.xlu0 %v6384
    %v6386 = vpop.xlane.xlu0 %6385
    %v6387 = vsel %vm68, %v6365, 0.0
    %6388 = vadd.xlane.f32.xlu0 %v6387
    %v6389 = vpop.xlane.xlu0 %6388
    %v6390 = vsel %vm68, %v6366, 0.0
    %6391 = vadd.xlane.f32.xlu0 %v6390
    %v6392 = vpop.xlane.xlu0 %6391
    %v6393 = vsel %vm68, %v6367, 0.0
    %6394 = vadd.xlane.f32.xlu0 %v6393
    %v6395 = vpop.xlane.xlu0 %6394
    %v6396 = vsel %vm68, %v6368, 0.0
    %6397 = vadd.xlane.f32.xlu0 %v6396
    %v6398 = vpop.xlane.xlu0 %6397
    %v6399 = vsel %vm68, %v6369, 0.0
    %6400 = vadd.xlane.f32.xlu0 %v6399
    %v6401 = vpop.xlane.xlu0 %6400
    %v6402 = vsel %vm68, %v6370, 0.0
    %6403 = vadd.xlane.f32.xlu0 %v6402
    %v6404 = vpop.xlane.xlu0 %6403
    %v6405 = vsel %vm68, %v6371, 0.0
    %6406 = vadd.xlane.f32.xlu0 %v6405
    %v6407 = vpop.xlane.xlu0 %6406
    %v6408 = vsel %vm68, %v6372, 0.0
    %6409 = vadd.xlane.f32.xlu0 %v6408
    %v6410 = vpop.xlane.xlu0 %6409
    %v6411 = vsel %vm68, %v6373, 0.0
    %6412 = vadd.xlane.f32.xlu0 %v6411
    %v6413 = vpop.xlane.xlu0 %6412
    %v6414 = vsel %vm68, %v6374, 0.0
    %6415 = vadd.xlane.f32.xlu0 %v6414
    %v6416 = vpop.xlane.xlu0 %6415
    %v6417 = vsel %vm68, %v6375, 0.0
    %6418 = vadd.xlane.f32.xlu0 %v6417
    %v6419 = vpop.xlane.xlu0 %6418
    %v6420 = vsel %vm68, %v6376, 0.0
    %6421 = vadd.xlane.f32.xlu0 %v6420
    %v6422 = vpop.xlane.xlu0 %6421
    %v6423 = vsel %vm68, %v6377, 0.0
    %6424 = vadd.xlane.f32.xlu0 %v6423
    %v6425 = vpop.xlane.xlu0 %6424
    %v6426 = vmul.f32 %v6380, %v81
    %v6427 = vmul.f32 %v6383, %v81
    %v6428 = vmul.f32 %v6386, %v81
    %v6429 = vmul.f32 %v6389, %v81
    %v6430 = vmul.f32 %v6392, %v81
    %v6431 = vmul.f32 %v6395, %v81
    %v6432 = vmul.f32 %v6398, %v81
    %v6433 = vmul.f32 %v6401, %v81
    %v6434 = vmul.f32 %v6404, %v81
    %v6435 = vmul.f32 %v6407, %v81
    %v6436 = vmul.f32 %v6410, %v81
    %v6437 = vmul.f32 %v6413, %v81
    %v6438 = vmul.f32 %v6416, %v81
    %v6439 = vmul.f32 %v6419, %v81
    %v6440 = vmul.f32 %v6422, %v81
    %v6441 = vmul.f32 %v6425, %v81
    %v6442 = vadd.f32 %v6426, %v6427
    %v6443 = vadd.f32 %v6442, %v6428
    %v6444 = vadd.f32 %v6443, %v6429
    %v6445 = vrot.slane %v6444, 4
    %v6446 = vadd.f32 %v6444, %v6445
    %v6447 = vrot.slane %v6446, 2
    %v6448 = vadd.f32 %v6446, %v6447
    %v6449 = vrot.slane %v6448, 1
    %v6450 = vadd.f32 %v6448, %v6449
    %v6451 = vadd.f32 %v6430, %v6431
    %v6452 = vadd.f32 %v6451, %v6432
    %v6453 = vadd.f32 %v6452, %v6433
    %v6454 = vrot.slane %v6453, 4
    %v6455 = vadd.f32 %v6453, %v6454
    %v6456 = vrot.slane %v6455, 2
    %v6457 = vadd.f32 %v6455, %v6456
    %v6458 = vrot.slane %v6457, 1
    %v6459 = vadd.f32 %v6457, %v6458
    %v6460 = vadd.f32 %v6434, %v6435
    %v6461 = vadd.f32 %v6460, %v6436
    %v6462 = vadd.f32 %v6461, %v6437
    %v6463 = vrot.slane %v6462, 4
    %v6464 = vadd.f32 %v6462, %v6463
    %v6465 = vrot.slane %v6464, 2
    %v6466 = vadd.f32 %v6464, %v6465
    %v6467 = vrot.slane %v6466, 1
    %v6468 = vadd.f32 %v6466, %v6467
    %v6469 = vadd.f32 %v6438, %v6439
    %v6470 = vadd.f32 %v6469, %v6440
    %v6471 = vadd.f32 %v6470, %v6441
    %v6472 = vrot.slane %v6471, 4
    %v6473 = vadd.f32 %v6471, %v6472
    %v6474 = vrot.slane %v6473, 2
    %v6475 = vadd.f32 %v6473, %v6474
    %v6476 = vrot.slane %v6475, 1
    %v6477 = vadd.f32 %v6475, %v6476
    %v6478 = vmul.f32 %v6450, %v81
    %v6479 = vmul.f32 %v6459, %v81
    %v6480 = vmul.f32 %v6468, %v81
    %v6481 = vmul.f32 %v6477, %v81
    %v6482 = vadd.f32 %v6478, 1e-05
    %v6483 = vadd.f32 %v6479, 1e-05
    %v6484 = vadd.f32 %v6480, 1e-05
    %v6485 = vadd.f32 %v6481, 1e-05
    %v6486 = vrsqrt.pop %v6482
    %v6487 = vrsqrt.pop %v6483
    %v6488 = vrsqrt.pop %v6484
    %v6489 = vrsqrt.pop %v6485
    %v6490 = vmul.f32 %v6346, %v6486
    %v6491 = vmul.f32 %v6347, %v6486
    %v6492 = vmul.f32 %v6348, %v6486
    %v6493 = vmul.f32 %v6349, %v6486
    %v6494 = vmul.f32 %v6350, %v6487
    %v6495 = vmul.f32 %v6351, %v6487
    %v6496 = vmul.f32 %v6352, %v6487
    %v6497 = vmul.f32 %v6353, %v6487
    %v6498 = vmul.f32 %v6354, %v6488
    %v6499 = vmul.f32 %v6355, %v6488
    %v6500 = vmul.f32 %v6356, %v6488
    %v6501 = vmul.f32 %v6357, %v6488
    %v6502 = vmul.f32 %v6358, %v6489
    %v6503 = vmul.f32 %v6359, %v6489
    %v6504 = vmul.f32 %v6360, %v6489
    %v6505 = vmul.f32 %v6361, %v6489
    %v6506 = vsel %vm68, %v6490, -inf
    %6507 = vmax.xlane.f32.xlu0 %v6506
    %v6508 = vpop.xlane.xlu0 %6507
    %v6509 = vsel %vm68, %v6491, -inf
    %6510 = vmax.xlane.f32.xlu0 %v6509
    %v6511 = vpop.xlane.xlu0 %6510
    %v6512 = vsel %vm68, %v6492, -inf
    %6513 = vmax.xlane.f32.xlu0 %v6512
    %v6514 = vpop.xlane.xlu0 %6513
    %v6515 = vsel %vm68, %v6493, -inf
    %6516 = vmax.xlane.f32.xlu0 %v6515
    %v6517 = vpop.xlane.xlu0 %6516
    %v6518 = vsel %vm68, %v6494, -inf
    %6519 = vmax.xlane.f32.xlu0 %v6518
    %v6520 = vpop.xlane.xlu0 %6519
    %v6521 = vsel %vm68, %v6495, -inf
    %6522 = vmax.xlane.f32.xlu0 %v6521
    %v6523 = vpop.xlane.xlu0 %6522
    %v6524 = vsel %vm68, %v6496, -inf
    %6525 = vmax.xlane.f32.xlu0 %v6524
    %v6526 = vpop.xlane.xlu0 %6525
    %v6527 = vsel %vm68, %v6497, -inf
    %6528 = vmax.xlane.f32.xlu0 %v6527
    %v6529 = vpop.xlane.xlu0 %6528
    %v6530 = vsel %vm68, %v6498, -inf
    %6531 = vmax.xlane.f32.xlu0 %v6530
    %v6532 = vpop.xlane.xlu0 %6531
    %v6533 = vsel %vm68, %v6499, -inf
    %6534 = vmax.xlane.f32.xlu0 %v6533
    %v6535 = vpop.xlane.xlu0 %6534
    %v6536 = vsel %vm68, %v6500, -inf
    %6537 = vmax.xlane.f32.xlu0 %v6536
    %v6538 = vpop.xlane.xlu0 %6537
    %v6539 = vsel %vm68, %v6501, -inf
    %6540 = vmax.xlane.f32.xlu0 %v6539
    %v6541 = vpop.xlane.xlu0 %6540
    %v6542 = vsel %vm68, %v6502, -inf
    %6543 = vmax.xlane.f32.xlu0 %v6542
    %v6544 = vpop.xlane.xlu0 %6543
    %v6545 = vsel %vm68, %v6503, -inf
    %6546 = vmax.xlane.f32.xlu0 %v6545
    %v6547 = vpop.xlane.xlu0 %6546
    %v6548 = vsel %vm68, %v6504, -inf
    %6549 = vmax.xlane.f32.xlu0 %v6548
    %v6550 = vpop.xlane.xlu0 %6549
    %v6551 = vsel %vm68, %v6505, -inf
    %6552 = vmax.xlane.f32.xlu0 %v6551
    %v6553 = vpop.xlane.xlu0 %6552
    %v6554 = vsub.f32 %v6490, %v6508
    %v6555 = vsub.f32 %v6491, %v6511
    %v6556 = vsub.f32 %v6492, %v6514
    %v6557 = vsub.f32 %v6493, %v6517
    %v6558 = vsub.f32 %v6494, %v6520
    %v6559 = vsub.f32 %v6495, %v6523
    %v6560 = vsub.f32 %v6496, %v6526
    %v6561 = vsub.f32 %v6497, %v6529
    %v6562 = vsub.f32 %v6498, %v6532
    %v6563 = vsub.f32 %v6499, %v6535
    %v6564 = vsub.f32 %v6500, %v6538
    %v6565 = vsub.f32 %v6501, %v6541
    %v6566 = vsub.f32 %v6502, %v6544
    %v6567 = vsub.f32 %v6503, %v6547
    %v6568 = vsub.f32 %v6504, %v6550
    %v6569 = vsub.f32 %v6505, %v6553
    %v6570 = vmul.f32 %v6554, 1.442695
    %v6571 = vpow.pop %v6570
    %v6572 = vmul.f32 %v6555, 1.442695
    %v6573 = vpow.pop %v6572
    %v6574 = vmul.f32 %v6556, 1.442695
    %v6575 = vpow.pop %v6574
    %v6576 = vmul.f32 %v6557, 1.442695
    %v6577 = vpow.pop %v6576
    %v6578 = vmul.f32 %v6558, 1.442695
    %v6579 = vpow.pop %v6578
    %v6580 = vmul.f32 %v6559, 1.442695
    %v6581 = vpow.pop %v6580
    %v6582 = vmul.f32 %v6560, 1.442695
    %v6583 = vpow.pop %v6582
    %v6584 = vmul.f32 %v6561, 1.442695
    %v6585 = vpow.pop %v6584
    %v6586 = vmul.f32 %v6562, 1.442695
    %v6587 = vpow.pop %v6586
    %v6588 = vmul.f32 %v6563, 1.442695
    %v6589 = vpow.pop %v6588
    %v6590 = vmul.f32 %v6564, 1.442695
    %v6591 = vpow.pop %v6590
    %v6592 = vmul.f32 %v6565, 1.442695
    %v6593 = vpow.pop %v6592
    %v6594 = vmul.f32 %v6566, 1.442695
    %v6595 = vpow.pop %v6594
    %v6596 = vmul.f32 %v6567, 1.442695
    %v6597 = vpow.pop %v6596
    %v6598 = vmul.f32 %v6568, 1.442695
    %v6599 = vpow.pop %v6598
    %v6600 = vmul.f32 %v6569, 1.442695
    %v6601 = vpow.pop %v6600
    %v6602 = vsel %vm68, %v6571, 0.0
    %6603 = vadd.xlane.f32.xlu0 %v6602
    %v6604 = vpop.xlane.xlu0 %6603
    %v6605 = vsel %vm68, %v6573, 0.0
    %6606 = vadd.xlane.f32.xlu0 %v6605
    %v6607 = vpop.xlane.xlu0 %6606
    %v6608 = vsel %vm68, %v6575, 0.0
    %6609 = vadd.xlane.f32.xlu0 %v6608
    %v6610 = vpop.xlane.xlu0 %6609
    %v6611 = vsel %vm68, %v6577, 0.0
    %6612 = vadd.xlane.f32.xlu0 %v6611
    %v6613 = vpop.xlane.xlu0 %6612
    %v6614 = vsel %vm68, %v6579, 0.0
    %6615 = vadd.xlane.f32.xlu0 %v6614
    %v6616 = vpop.xlane.xlu0 %6615
    %v6617 = vsel %vm68, %v6581, 0.0
    %6618 = vadd.xlane.f32.xlu0 %v6617
    %v6619 = vpop.xlane.xlu0 %6618
    %v6620 = vsel %vm68, %v6583, 0.0
    %6621 = vadd.xlane.f32.xlu0 %v6620
    %v6622 = vpop.xlane.xlu0 %6621
    %v6623 = vsel %vm68, %v6585, 0.0
    %6624 = vadd.xlane.f32.xlu0 %v6623
    %v6625 = vpop.xlane.xlu0 %6624
    %v6626 = vsel %vm68, %v6587, 0.0
    %6627 = vadd.xlane.f32.xlu0 %v6626
    %v6628 = vpop.xlane.xlu0 %6627
    %v6629 = vsel %vm68, %v6589, 0.0
    %6630 = vadd.xlane.f32.xlu0 %v6629
    %v6631 = vpop.xlane.xlu0 %6630
    %v6632 = vsel %vm68, %v6591, 0.0
    %6633 = vadd.xlane.f32.xlu0 %v6632
    %v6634 = vpop.xlane.xlu0 %6633
    %v6635 = vsel %vm68, %v6593, 0.0
    %6636 = vadd.xlane.f32.xlu0 %v6635
    %v6637 = vpop.xlane.xlu0 %6636
    %v6638 = vsel %vm68, %v6595, 0.0
    %6639 = vadd.xlane.f32.xlu0 %v6638
    %v6640 = vpop.xlane.xlu0 %6639
    %v6641 = vsel %vm68, %v6597, 0.0
    %6642 = vadd.xlane.f32.xlu0 %v6641
    %v6643 = vpop.xlane.xlu0 %6642
    %v6644 = vsel %vm68, %v6599, 0.0
    %6645 = vadd.xlane.f32.xlu0 %v6644
    %v6646 = vpop.xlane.xlu0 %6645
    %v6647 = vsel %vm68, %v6601, 0.0
    %6648 = vadd.xlane.f32.xlu0 %v6647
    %v6649 = vpop.xlane.xlu0 %6648
    %v6650 = vrcp.pop %v6604
    %v6651 = vrcp.pop %v6607
    %v6652 = vrcp.pop %v6610
    %v6653 = vrcp.pop %v6613
    %v6654 = vrcp.pop %v6616
    %v6655 = vrcp.pop %v6619
    %v6656 = vrcp.pop %v6622
    %v6657 = vrcp.pop %v6625
    %v6658 = vrcp.pop %v6628
    %v6659 = vrcp.pop %v6631
    %v6660 = vrcp.pop %v6634
    %v6661 = vrcp.pop %v6637
    %v6662 = vrcp.pop %v6640
    %v6663 = vrcp.pop %v6643
    %v6664 = vrcp.pop %v6646
    %v6665 = vrcp.pop %v6649
    %v6666 = vmul.f32 %v6571, %v6650
    %v6667 = vmul.f32 %v6573, %v6651
    %v6668 = vmul.f32 %v6575, %v6652
    %v6669 = vmul.f32 %v6577, %v6653
    %v6670 = vmul.f32 %v6579, %v6654
    %v6671 = vmul.f32 %v6581, %v6655
    %v6672 = vmul.f32 %v6583, %v6656
    %v6673 = vmul.f32 %v6585, %v6657
    %v6674 = vmul.f32 %v6587, %v6658
    %v6675 = vmul.f32 %v6589, %v6659
    %v6676 = vmul.f32 %v6591, %v6660
    %v6677 = vmul.f32 %v6593, %v6661
    %v6678 = vmul.f32 %v6595, %v6662
    %v6679 = vmul.f32 %v6597, %v6663
    %v6680 = vmul.f32 %v6599, %v6664
    %v6681 = vmul.f32 %v6601, %v6665
    %v6682 = vsel %vm68, %v6666, 0.0
    %v6683 = vsel %vm68, %v6670, 0.0
    %v6684 = vadd.f32 %v6682, %v6683
    %v6685 = vsel %vm68, %v6674, 0.0
    %v6686 = vadd.f32 %v6684, %v6685
    %v6687 = vsel %vm68, %v6678, 0.0
    %v6688 = vadd.f32 %v6686, %v6687
    %v6689 = vsel %vm68, %v6667, 0.0
    %v6690 = vsel %vm68, %v6671, 0.0
    %v6691 = vadd.f32 %v6689, %v6690
    %v6692 = vsel %vm68, %v6675, 0.0
    %v6693 = vadd.f32 %v6691, %v6692
    %v6694 = vsel %vm68, %v6679, 0.0
    %v6695 = vadd.f32 %v6693, %v6694
    %v6696 = vsel %vm68, %v6668, 0.0
    %v6697 = vsel %vm68, %v6672, 0.0
    %v6698 = vadd.f32 %v6696, %v6697
    %v6699 = vsel %vm68, %v6676, 0.0
    %v6700 = vadd.f32 %v6698, %v6699
    %v6701 = vsel %vm68, %v6680, 0.0
    %v6702 = vadd.f32 %v6700, %v6701
    %v6703 = vsel %vm68, %v6669, 0.0
    %v6704 = vsel %vm68, %v6673, 0.0
    %v6705 = vadd.f32 %v6703, %v6704
    %v6706 = vsel %vm68, %v6677, 0.0
    %v6707 = vadd.f32 %v6705, %v6706
    %v6708 = vsel %vm68, %v6681, 0.0
    %v6709 = vadd.f32 %v6707, %v6708
    %v6710 = vmul.f32 %v6688, %v1098
    %v6711 = vmul.f32 %v6695, %v1098
    %v6712 = vmul.f32 %v6702, %v1098
    %v6713 = vmul.f32 %v6709, %v1098
    %s6714 = scalar_lea.vmem [#allocation7], 160
    %6715 = vst.msk [vmem:[%s6714] sm:$0xff] %vm68, %v6710
    %6716 = vst.msk [vmem:[%s6714 + $0x8] sm:$0xff] %vm68, %v6711
    %6717 = vst.msk [vmem:[%s6714 + $0x10] sm:$0xff] %vm68, %v6712
    %6718 = vst.msk [vmem:[%s6714 + $0x18] sm:$0xff] %vm68, %v6713
    %6719 = vxpose.xlu0.b32.start [1/16] %v6666, 128
    %6720 = vxpose.xlu0.b32.cont [2/16] %v6667, 128
    %6721 = vxpose.xlu0.b32.cont [3/16] %v6668, 128
    %6722 = vxpose.xlu0.b32.cont [4/16] %v6669, 128
    %6723 = vxpose.xlu0.b32.cont [5/16] 0.0, 128
    %6724 = vxpose.xlu0.b32.cont [6/16] 0.0, 128
    %6725 = vxpose.xlu0.b32.cont [7/16] 0.0, 128
    %6726 = vxpose.xlu0.b32.cont [8/16] 0.0, 128
    %6727 = vxpose.xlu0.b32.cont [9/16] 0.0, 128
    %6728 = vxpose.xlu0.b32.cont [10/16] 0.0, 128
    %6729 = vxpose.xlu0.b32.cont [11/16] 0.0, 128
    %6730 = vxpose.xlu0.b32.cont [12/16] 0.0, 128
    %6731 = vxpose.xlu0.b32.cont [13/16] 0.0, 128
    %6732 = vxpose.xlu0.b32.cont [14/16] 0.0, 128
    %6733 = vxpose.xlu0.b32.cont [15/16] 0.0, 128
    %6734 = vxpose.xlu0.b32.end [16/16] 0.0, 128
    %v6735 = vpop.trf.xlu0
    %v6736 = vpop.trf.xlu0
    %v6737 = vpop.trf.xlu0
    %v6738 = vpop.trf.xlu0
    %v6739 = vpop.trf.xlu0
    %v6740 = vpop.trf.xlu0
    %v6741 = vpop.trf.xlu0
    %v6742 = vpop.trf.xlu0
    %v6743 = vpop.trf.xlu0
    %v6744 = vpop.trf.xlu0
    %v6745 = vpop.trf.xlu0
    %v6746 = vpop.trf.xlu0
    %v6747 = vpop.trf.xlu0
    %v6748 = vpop.trf.xlu0
    %v6749 = vpop.trf.xlu0
    %v6750 = vpop.trf.xlu0
    %6751 = vxpose.xlu0.b32.start [1/16] %v6670, 128
    %6752 = vxpose.xlu0.b32.cont [2/16] %v6671, 128
    %6753 = vxpose.xlu0.b32.cont [3/16] %v6672, 128
    %6754 = vxpose.xlu0.b32.cont [4/16] %v6673, 128
    %6755 = vxpose.xlu0.b32.cont [5/16] 0.0, 128
    %6756 = vxpose.xlu0.b32.cont [6/16] 0.0, 128
    %6757 = vxpose.xlu0.b32.cont [7/16] 0.0, 128
    %6758 = vxpose.xlu0.b32.cont [8/16] 0.0, 128
    %6759 = vxpose.xlu0.b32.cont [9/16] 0.0, 128
    %6760 = vxpose.xlu0.b32.cont [10/16] 0.0, 128
    %6761 = vxpose.xlu0.b32.cont [11/16] 0.0, 128
    %6762 = vxpose.xlu0.b32.cont [12/16] 0.0, 128
    %6763 = vxpose.xlu0.b32.cont [13/16] 0.0, 128
    %6764 = vxpose.xlu0.b32.cont [14/16] 0.0, 128
    %6765 = vxpose.xlu0.b32.cont [15/16] 0.0, 128
    %6766 = vxpose.xlu0.b32.end [16/16] 0.0, 128
    %v6767 = vpop.trf.xlu0
    %v6768 = vpop.trf.xlu0
    %v6769 = vpop.trf.xlu0
    %v6770 = vpop.trf.xlu0
    %v6771 = vpop.trf.xlu0
    %v6772 = vpop.trf.xlu0
    %v6773 = vpop.trf.xlu0
    %v6774 = vpop.trf.xlu0
    %v6775 = vpop.trf.xlu0
    %v6776 = vpop.trf.xlu0
    %v6777 = vpop.trf.xlu0
    %v6778 = vpop.trf.xlu0
    %v6779 = vpop.trf.xlu0
    %v6780 = vpop.trf.xlu0
    %v6781 = vpop.trf.xlu0
    %v6782 = vpop.trf.xlu0
    %6783 = vxpose.xlu0.b32.start [1/16] %v6674, 128
    %6784 = vxpose.xlu0.b32.cont [2/16] %v6675, 128
    %6785 = vxpose.xlu0.b32.cont [3/16] %v6676, 128
    %6786 = vxpose.xlu0.b32.cont [4/16] %v6677, 128
    %6787 = vxpose.xlu0.b32.cont [5/16] 0.0, 128
    %6788 = vxpose.xlu0.b32.cont [6/16] 0.0, 128
    %6789 = vxpose.xlu0.b32.cont [7/16] 0.0, 128
    %6790 = vxpose.xlu0.b32.cont [8/16] 0.0, 128
    %6791 = vxpose.xlu0.b32.cont [9/16] 0.0, 128
    %6792 = vxpose.xlu0.b32.cont [10/16] 0.0, 128
    %6793 = vxpose.xlu0.b32.cont [11/16] 0.0, 128
    %6794 = vxpose.xlu0.b32.cont [12/16] 0.0, 128
    %6795 = vxpose.xlu0.b32.cont [13/16] 0.0, 128
    %6796 = vxpose.xlu0.b32.cont [14/16] 0.0, 128
    %6797 = vxpose.xlu0.b32.cont [15/16] 0.0, 128
    %6798 = vxpose.xlu0.b32.end [16/16] 0.0, 128
    %v6799 = vpop.trf.xlu0
    %v6800 = vpop.trf.xlu0
    %v6801 = vpop.trf.xlu0
    %v6802 = vpop.trf.xlu0
    %v6803 = vpop.trf.xlu0
    %v6804 = vpop.trf.xlu0
    %v6805 = vpop.trf.xlu0
    %v6806 = vpop.trf.xlu0
    %v6807 = vpop.trf.xlu0
    %v6808 = vpop.trf.xlu0
    %v6809 = vpop.trf.xlu0
    %v6810 = vpop.trf.xlu0
    %v6811 = vpop.trf.xlu0
    %v6812 = vpop.trf.xlu0
    %v6813 = vpop.trf.xlu0
    %v6814 = vpop.trf.xlu0
    %6815 = vxpose.xlu0.b32.start [1/16] %v6678, 128
    %6816 = vxpose.xlu0.b32.cont [2/16] %v6679, 128
    %6817 = vxpose.xlu0.b32.cont [3/16] %v6680, 128
    %6818 = vxpose.xlu0.b32.cont [4/16] %v6681, 128
    %6819 = vxpose.xlu0.b32.cont [5/16] 0.0, 128
    %6820 = vxpose.xlu0.b32.cont [6/16] 0.0, 128
    %6821 = vxpose.xlu0.b32.cont [7/16] 0.0, 128
    %6822 = vxpose.xlu0.b32.cont [8/16] 0.0, 128
    %6823 = vxpose.xlu0.b32.cont [9/16] 0.0, 128
    %6824 = vxpose.xlu0.b32.cont [10/16] 0.0, 128
    %6825 = vxpose.xlu0.b32.cont [11/16] 0.0, 128
    %6826 = vxpose.xlu0.b32.cont [12/16] 0.0, 128
    %6827 = vxpose.xlu0.b32.cont [13/16] 0.0, 128
    %6828 = vxpose.xlu0.b32.cont [14/16] 0.0, 128
    %6829 = vxpose.xlu0.b32.cont [15/16] 0.0, 128
    %6830 = vxpose.xlu0.b32.end [16/16] 0.0, 128
    %v6831 = vpop.trf.xlu0
    %v6832 = vpop.trf.xlu0
    %v6833 = vpop.trf.xlu0
    %v6834 = vpop.trf.xlu0
    %v6835 = vpop.trf.xlu0
    %v6836 = vpop.trf.xlu0
    %v6837 = vpop.trf.xlu0
    %v6838 = vpop.trf.xlu0
    %v6839 = vpop.trf.xlu0
    %v6840 = vpop.trf.xlu0
    %v6841 = vpop.trf.xlu0
    %v6842 = vpop.trf.xlu0
    %v6843 = vpop.trf.xlu0
    %v6844 = vpop.trf.xlu0
    %v6845 = vpop.trf.xlu0
    %v6846 = vpop.trf.xlu0
    %6847 = vmatprep.subr.mxu0 0.0
    %6848 = vmatpush1.msra.mxu0 %v6735
    %6849 = vmatprep.subr.mxu0 0.0
    %6850 = vmatpush1.msra.mxu0 %v6736
    %6851 = vmatprep.subr.mxu0 0.0
    %6852 = vmatpush1.msra.mxu0 %v6737
    %6853 = vmatprep.subr.mxu0 0.0
    %6854 = vmatpush1.msra.mxu0 %v6738
    %6855 = vmatprep.subr.mxu0 0.0
    %6856 = vmatpush1.msra.mxu0 %v6767
    %6857 = vmatprep.subr.mxu0 0.0
    %6858 = vmatpush1.msra.mxu0 %v6768
    %6859 = vmatprep.subr.mxu0 0.0
    %6860 = vmatpush1.msra.mxu0 %v6769
    %6861 = vmatprep.subr.mxu0 0.0
    %6862 = vmatpush1.msra.mxu0 %v6770
    %6863 = vmatprep.subr.mxu0 0.0
    %6864 = vmatpush1.msra.mxu0 %v6799
    %6865 = vmatprep.subr.mxu0 0.0
    %6866 = vmatpush1.msra.mxu0 %v6800
    %6867 = vmatprep.subr.mxu0 0.0
    %6868 = vmatpush1.msra.mxu0 %v6801
    %6869 = vmatprep.subr.mxu0 0.0
    %6870 = vmatpush1.msra.mxu0 %v6802
    %6871 = vmatprep.subr.mxu0 0.0
    %6872 = vmatpush1.msra.mxu0 %v6831
    %6873 = vmatprep.subr.mxu0 0.0
    %6874 = vmatpush1.msra.mxu0 %v6832
    %6875 = vmatprep.subr.mxu0 0.0
    %6876 = vmatpush1.msra.mxu0 %v6833
    %6877 = vmatprep.subr.mxu0 0.0
    %6878 = vmatpush1.msra.mxu0 %v6834
    %6879 = vmatprep.subr.mxu0 0.0
    %6880 = vmatpush1.msra.mxu0 0.0
    %6881 = vmatprep.subr.mxu0 0.0
    %6882 = vmatpush1.msra.mxu0 0.0
    %6883 = vmatprep.subr.mxu0 0.0
    %6884 = vmatpush1.msra.mxu0 0.0
    %6885 = vmatprep.subr.mxu0 0.0
    %6886 = vmatpush1.msra.mxu0 0.0
    %6887 = vmatprep.subr.mxu0 0.0
    %6888 = vmatpush1.msra.mxu0 0.0
    %6889 = vmatprep.subr.mxu0 0.0
    %6890 = vmatpush1.msra.mxu0 0.0
    %6891 = vmatprep.subr.mxu0 0.0
    %6892 = vmatpush1.msra.mxu0 0.0
    %6893 = vmatprep.subr.mxu0 0.0
    %6894 = vmatpush1.msra.mxu0 0.0
    %6895 = vmatprep.subr.mxu0 0.0
    %6896 = vmatpush1.msra.mxu0 0.0
    %6897 = vmatprep.subr.mxu0 0.0
    %6898 = vmatpush1.msra.mxu0 0.0
    %6899 = vmatprep.subr.mxu0 0.0
    %6900 = vmatpush1.msra.mxu0 0.0
    %6901 = vmatprep.subr.mxu0 0.0
    %6902 = vmatpush1.msra.mxu0 0.0
    %6903 = vmatprep.subr.mxu0 0.0
    %6904 = vmatpush1.msra.mxu0 0.0
    %6905 = vmatprep.subr.mxu0 0.0
    %6906 = vmatpush1.msra.mxu0 0.0
    %6907 = vmatprep.subr.mxu0 0.0
    %6908 = vmatpush1.msra.mxu0 0.0
    %6909 = vmatprep.subr.mxu0 0.0
    %6910 = vmatpush1.msra.mxu0 0.0
    %6911 = vmatprep.mubr.f32.mxu0 0.0
    %6912 = vmatmul.mubr.f32.gmra.mrb[0].mxu0 %v4974
    %v6913 = vpop.f32.mrb[0].mxu0
    %v6914 = vadd.f32 0.0, %v6913
    %v6915 = vpop.f32.mrb[0].mxu0
    %6916 = vdwg.mxu0
    %v6917 = vmul.f32 %v6914, 0.25
    %6918 = vst.msk [vmem:[#allocation2 + $0x8] sm:$0xff] %vm68, %v6917
    %6919 = vxpose.xlu0.b32.start [1/16] %v4892, 128
    %6920 = vxpose.xlu0.b32.cont [2/16] 0.0, 128
    %6921 = vxpose.xlu0.b32.cont [3/16] 0.0, 128
    %6922 = vxpose.xlu0.b32.cont [4/16] 0.0, 128
    %6923 = vxpose.xlu0.b32.cont [5/16] 0.0, 128
    %6924 = vxpose.xlu0.b32.cont [6/16] 0.0, 128
    %6925 = vxpose.xlu0.b32.cont [7/16] 0.0, 128
    %6926 = vxpose.xlu0.b32.cont [8/16] 0.0, 128
    %6927 = vxpose.xlu0.b32.cont [9/16] 0.0, 128
    %6928 = vxpose.xlu0.b32.cont [10/16] 0.0, 128
    %6929 = vxpose.xlu0.b32.cont [11/16] 0.0, 128
    %6930 = vxpose.xlu0.b32.cont [12/16] 0.0, 128
    %6931 = vxpose.xlu0.b32.cont [13/16] 0.0, 128
    %6932 = vxpose.xlu0.b32.cont [14/16] 0.0, 128
    %6933 = vxpose.xlu0.b32.cont [15/16] 0.0, 128
    %6934 = vxpose.xlu0.b32.end [16/16] 0.0, 128
    %v6935 = vpop.trf.xlu0
    %v6936 = vpop.trf.xlu0
    %v6937 = vpop.trf.xlu0
    %v6938 = vpop.trf.xlu0
    %v6939 = vpop.trf.xlu0
    %v6940 = vpop.trf.xlu0
    %v6941 = vpop.trf.xlu0
    %v6942 = vpop.trf.xlu0
    %v6943 = vpop.trf.xlu0
    %v6944 = vpop.trf.xlu0
    %v6945 = vpop.trf.xlu0
    %v6946 = vpop.trf.xlu0
    %v6947 = vpop.trf.xlu0
    %v6948 = vpop.trf.xlu0
    %v6949 = vpop.trf.xlu0
    %v6950 = vpop.trf.xlu0
    %v6952 = vsel %vm372, %v6935, 0
    %v6955 = vsel %vm372, %v6936, 0
    %v6958 = vsel %vm372, %v6937, 0
    %v6961 = vsel %vm372, %v6938, 0
    %v6964 = vsel %vm372, %v6939, 0
    %v6967 = vsel %vm372, %v6940, 0
    %v6970 = vsel %vm372, %v6941, 0
    %v6973 = vsel %vm372, %v6942, 0
    %v6976 = vsel %vm372, %v6943, 0
    %v6979 = vsel %vm372, %v6944, 0
    %v6982 = vsel %vm372, %v6945, 0
    %v6985 = vsel %vm372, %v6946, 0
    %v6988 = vsel %vm372, %v6947, 0
    %v6991 = vsel %vm372, %v6948, 0
    %v6994 = vsel %vm372, %v6949, 0
    %v6997 = vsel %vm372, %v6950, 0
    %6999 = vmatprep.subr.mxu0 0.0
    %7000 = vmatpush1.msra.mxu0 %v4894
    %7001 = vmatprep.subr.mxu0 0.0
    %7002 = vmatpush1.msra.mxu0 0.0
    %7003 = vmatprep.subr.mxu0 0.0
    %7004 = vmatpush1.msra.mxu0 0.0
    %7005 = vmatprep.subr.mxu0 0.0
    %7006 = vmatpush1.msra.mxu0 0.0
    %7007 = vmatprep.subr.mxu0 0.0
    %7008 = vmatpush1.msra.mxu0 0.0
    %7009 = vmatprep.subr.mxu0 0.0
    %7010 = vmatpush1.msra.mxu0 0.0
    %7011 = vmatprep.subr.mxu0 0.0
    %7012 = vmatpush1.msra.mxu0 0.0
    %7013 = vmatprep.subr.mxu0 0.0
    %7014 = vmatpush1.msra.mxu0 0.0
    %7015 = vmatprep.subr.mxu0 0.0
    %7016 = vmatpush1.msra.mxu0 0.0
    %7017 = vmatprep.subr.mxu0 0.0
    %7018 = vmatpush1.msra.mxu0 0.0
    %7019 = vmatprep.subr.mxu0 0.0
    %7020 = vmatpush1.msra.mxu0 0.0
    %7021 = vmatprep.subr.mxu0 0.0
    %7022 = vmatpush1.msra.mxu0 0.0
    %7023 = vmatprep.subr.mxu0 0.0
    %7024 = vmatpush1.msra.mxu0 0.0
    %7025 = vmatprep.subr.mxu0 0.0
    %7026 = vmatpush1.msra.mxu0 0.0
    %7027 = vmatprep.subr.mxu0 0.0
    %7028 = vmatpush1.msra.mxu0 0.0
    %7029 = vmatprep.subr.mxu0 0.0
    %7030 = vmatpush1.msra.mxu0 0.0
    %7031 = vmatprep.subr.mxu0 0.0
    %7032 = vmatpush1.msra.mxu0 0.0
    %7033 = vmatprep.subr.mxu0 0.0
    %7034 = vmatpush1.msra.mxu0 0.0
    %7035 = vmatprep.subr.mxu0 0.0
    %7036 = vmatpush1.msra.mxu0 0.0
    %7037 = vmatprep.subr.mxu0 0.0
    %7038 = vmatpush1.msra.mxu0 0.0
    %7039 = vmatprep.subr.mxu0 0.0
    %7040 = vmatpush1.msra.mxu0 0.0
    %7041 = vmatprep.subr.mxu0 0.0
    %7042 = vmatpush1.msra.mxu0 0.0
    %7043 = vmatprep.subr.mxu0 0.0
    %7044 = vmatpush1.msra.mxu0 0.0
    %7045 = vmatprep.subr.mxu0 0.0
    %7046 = vmatpush1.msra.mxu0 0.0
    %7047 = vmatprep.subr.mxu0 0.0
    %7048 = vmatpush1.msra.mxu0 0.0
    %7049 = vmatprep.subr.mxu0 0.0
    %7050 = vmatpush1.msra.mxu0 0.0
    %7051 = vmatprep.subr.mxu0 0.0
    %7052 = vmatpush1.msra.mxu0 0.0
    %7053 = vmatprep.subr.mxu0 0.0
    %7054 = vmatpush1.msra.mxu0 0.0
    %7055 = vmatprep.subr.mxu0 0.0
    %7056 = vmatpush1.msra.mxu0 0.0
    %7057 = vmatprep.subr.mxu0 0.0
    %7058 = vmatpush1.msra.mxu0 0.0
    %7059 = vmatprep.subr.mxu0 0.0
    %7060 = vmatpush1.msra.mxu0 0.0
    %7061 = vmatprep.subr.mxu0 0.0
    %7062 = vmatpush1.msra.mxu0 0.0
    %7063 = vmatprep.mubr.f32.mxu0 0.0
    %7064 = vmatmul.mubr.f32.gmra.mrb[0].mxu0 %v6952
    %v7065 = vpop.f32.mrb[0].mxu0
    %v7066 = vadd.f32 0.0, %v7065
    %v7067 = vpop.f32.mrb[0].mxu0
    %7068 = vmatprep.mubr.f32.mxu0 0.0
    %7069 = vmatmul.mubr.f32.gmra.mrb[0].mxu0 %v6955
    %v7070 = vpop.f32.mrb[0].mxu0
    %v7071 = vadd.f32 0.0, %v7070
    %v7072 = vpop.f32.mrb[0].mxu0
    %7073 = vmatprep.mubr.f32.mxu0 0.0
    %7074 = vmatmul.mubr.f32.gmra.mrb[0].mxu0 %v6958
    %v7075 = vpop.f32.mrb[0].mxu0
    %v7076 = vadd.f32 0.0, %v7075
    %v7077 = vpop.f32.mrb[0].mxu0
    %7078 = vmatprep.mubr.f32.mxu0 0.0
    %7079 = vmatmul.mubr.f32.gmra.mrb[0].mxu0 %v6961
    %v7080 = vpop.f32.mrb[0].mxu0
    %v7081 = vadd.f32 0.0, %v7080
    %v7082 = vpop.f32.mrb[0].mxu0
    %7083 = vmatprep.mubr.f32.mxu0 0.0
    %7084 = vmatmul.mubr.f32.gmra.mrb[0].mxu0 %v6964
    %v7085 = vpop.f32.mrb[0].mxu0
    %v7086 = vadd.f32 0.0, %v7085
    %v7087 = vpop.f32.mrb[0].mxu0
    %7088 = vmatprep.mubr.f32.mxu0 0.0
    %7089 = vmatmul.mubr.f32.gmra.mrb[0].mxu0 %v6967
    %v7090 = vpop.f32.mrb[0].mxu0
    %v7091 = vadd.f32 0.0, %v7090
    %v7092 = vpop.f32.mrb[0].mxu0
    %7093 = vmatprep.mubr.f32.mxu0 0.0
    %7094 = vmatmul.mubr.f32.gmra.mrb[0].mxu0 %v6970
    %v7095 = vpop.f32.mrb[0].mxu0
    %v7096 = vadd.f32 0.0, %v7095
    %v7097 = vpop.f32.mrb[0].mxu0
    %7098 = vmatprep.mubr.f32.mxu0 0.0
    %7099 = vmatmul.mubr.f32.gmra.mrb[0].mxu0 %v6973
    %v7100 = vpop.f32.mrb[0].mxu0
    %v7101 = vadd.f32 0.0, %v7100
    %v7102 = vpop.f32.mrb[0].mxu0
    %7103 = vmatprep.mubr.f32.mxu0 0.0
    %7104 = vmatmul.mubr.f32.gmra.mrb[0].mxu0 %v6976
    %v7105 = vpop.f32.mrb[0].mxu0
    %v7106 = vadd.f32 0.0, %v7105
    %v7107 = vpop.f32.mrb[0].mxu0
    %7108 = vmatprep.mubr.f32.mxu0 0.0
    %7109 = vmatmul.mubr.f32.gmra.mrb[0].mxu0 %v6979
    %v7110 = vpop.f32.mrb[0].mxu0
    %v7111 = vadd.f32 0.0, %v7110
    %v7112 = vpop.f32.mrb[0].mxu0
    %7113 = vmatprep.mubr.f32.mxu0 0.0
    %7114 = vmatmul.mubr.f32.gmra.mrb[0].mxu0 %v6982
    %v7115 = vpop.f32.mrb[0].mxu0
    %v7116 = vadd.f32 0.0, %v7115
    %v7117 = vpop.f32.mrb[0].mxu0
    %7118 = vmatprep.mubr.f32.mxu0 0.0
    %7119 = vmatmul.mubr.f32.gmra.mrb[0].mxu0 %v6985
    %v7120 = vpop.f32.mrb[0].mxu0
    %v7121 = vadd.f32 0.0, %v7120
    %v7122 = vpop.f32.mrb[0].mxu0
    %7123 = vmatprep.mubr.f32.mxu0 0.0
    %7124 = vmatmul.mubr.f32.gmra.mrb[0].mxu0 %v6988
    %v7125 = vpop.f32.mrb[0].mxu0
    %v7126 = vadd.f32 0.0, %v7125
    %v7127 = vpop.f32.mrb[0].mxu0
    %7128 = vmatprep.mubr.f32.mxu0 0.0
    %7129 = vmatmul.mubr.f32.gmra.mrb[0].mxu0 %v6991
    %v7130 = vpop.f32.mrb[0].mxu0
    %v7131 = vadd.f32 0.0, %v7130
    %v7132 = vpop.f32.mrb[0].mxu0
    %7133 = vmatprep.mubr.f32.mxu0 0.0
    %7134 = vmatmul.mubr.f32.gmra.mrb[0].mxu0 %v6994
    %v7135 = vpop.f32.mrb[0].mxu0
    %v7136 = vadd.f32 0.0, %v7135
    %v7137 = vpop.f32.mrb[0].mxu0
    %7138 = vmatprep.mubr.f32.mxu0 0.0
    %7139 = vmatmul.mubr.f32.gmra.mrb[0].mxu0 %v6997
    %v7140 = vpop.f32.mrb[0].mxu0
    %v7141 = vadd.f32 0.0, %v7140
    %v7142 = vpop.f32.mrb[0].mxu0
    %7143 = vdwg.mxu0
    %7148 = vrot.lane.b32.xlu0 %v7086, 96
    %v7149 = vpop.permute.xlu0 %7148
    %7150 = vrot.lane.b32.xlu0 %v7091, 96
    %v7151 = vpop.permute.xlu0 %7150
    %7152 = vrot.lane.b32.xlu0 %v7096, 96
    %v7153 = vpop.permute.xlu0 %7152
    %7154 = vrot.lane.b32.xlu0 %v7101, 96
    %v7155 = vpop.permute.xlu0 %7154
    %7164 = vrot.lane.b32.xlu0 %v7106, 64
    %v7165 = vpop.permute.xlu0 %7164
    %7166 = vrot.lane.b32.xlu0 %v7111, 64
    %v7167 = vpop.permute.xlu0 %7166
    %7168 = vrot.lane.b32.xlu0 %v7116, 64
    %v7169 = vpop.permute.xlu0 %7168
    %7170 = vrot.lane.b32.xlu0 %v7121, 64
    %v7171 = vpop.permute.xlu0 %7170
    %7180 = vrot.lane.b32.xlu0 %v7126, 32
    %v7181 = vpop.permute.xlu0 %7180
    %7182 = vrot.lane.b32.xlu0 %v7131, 32
    %v7183 = vpop.permute.xlu0 %7182
    %7184 = vrot.lane.b32.xlu0 %v7136, 32
    %v7185 = vpop.permute.xlu0 %7184
    %7186 = vrot.lane.b32.xlu0 %v7141, 32
    %v7187 = vpop.permute.xlu0 %7186
    %v7192 = vmul.f32 %v7066, 0.17677669
    %v7193 = vmul.f32 %v7071, 0.17677669
    %v7194 = vmul.f32 %v7076, 0.17677669
    %v7195 = vmul.f32 %v7081, 0.17677669
    %v7196 = vmul.f32 %v7149, 0.17677669
    %v7197 = vmul.f32 %v7151, 0.17677669
    %v7198 = vmul.f32 %v7153, 0.17677669
    %v7199 = vmul.f32 %v7155, 0.17677669
    %v7200 = vmul.f32 %v7165, 0.17677669
    %v7201 = vmul.f32 %v7167, 0.17677669
    %v7202 = vmul.f32 %v7169, 0.17677669
    %v7203 = vmul.f32 %v7171, 0.17677669
    %v7204 = vmul.f32 %v7181, 0.17677669
    %v7205 = vmul.f32 %v7183, 0.17677669
    %v7206 = vmul.f32 %v7185, 0.17677669
    %v7207 = vmul.f32 %v7187, 0.17677669
    %v7208 = vsel %vm68, %v7192, 0.0
    %7209 = vadd.xlane.f32.xlu0 %v7208
    %v7210 = vpop.xlane.xlu0 %7209
    %v7211 = vsel %vm68, %v7193, 0.0
    %7212 = vadd.xlane.f32.xlu0 %v7211
    %v7213 = vpop.xlane.xlu0 %7212
    %v7214 = vsel %vm68, %v7194, 0.0
    %7215 = vadd.xlane.f32.xlu0 %v7214
    %v7216 = vpop.xlane.xlu0 %7215
    %v7217 = vsel %vm68, %v7195, 0.0
    %7218 = vadd.xlane.f32.xlu0 %v7217
    %v7219 = vpop.xlane.xlu0 %7218
    %v7220 = vsel %vm68, %v7196, 0.0
    %7221 = vadd.xlane.f32.xlu0 %v7220
    %v7222 = vpop.xlane.xlu0 %7221
    %v7223 = vsel %vm68, %v7197, 0.0
    %7224 = vadd.xlane.f32.xlu0 %v7223
    %v7225 = vpop.xlane.xlu0 %7224
    %v7226 = vsel %vm68, %v7198, 0.0
    %7227 = vadd.xlane.f32.xlu0 %v7226
    %v7228 = vpop.xlane.xlu0 %7227
    %v7229 = vsel %vm68, %v7199, 0.0
    %7230 = vadd.xlane.f32.xlu0 %v7229
    %v7231 = vpop.xlane.xlu0 %7230
    %v7232 = vsel %vm68, %v7200, 0.0
    %7233 = vadd.xlane.f32.xlu0 %v7232
    %v7234 = vpop.xlane.xlu0 %7233
    %v7235 = vsel %vm68, %v7201, 0.0
    %7236 = vadd.xlane.f32.xlu0 %v7235
    %v7237 = vpop.xlane.xlu0 %7236
    %v7238 = vsel %vm68, %v7202, 0.0
    %7239 = vadd.xlane.f32.xlu0 %v7238
    %v7240 = vpop.xlane.xlu0 %7239
    %v7241 = vsel %vm68, %v7203, 0.0
    %7242 = vadd.xlane.f32.xlu0 %v7241
    %v7243 = vpop.xlane.xlu0 %7242
    %v7244 = vsel %vm68, %v7204, 0.0
    %7245 = vadd.xlane.f32.xlu0 %v7244
    %v7246 = vpop.xlane.xlu0 %7245
    %v7247 = vsel %vm68, %v7205, 0.0
    %7248 = vadd.xlane.f32.xlu0 %v7247
    %v7249 = vpop.xlane.xlu0 %7248
    %v7250 = vsel %vm68, %v7206, 0.0
    %7251 = vadd.xlane.f32.xlu0 %v7250
    %v7252 = vpop.xlane.xlu0 %7251
    %v7253 = vsel %vm68, %v7207, 0.0
    %7254 = vadd.xlane.f32.xlu0 %v7253
    %v7255 = vpop.xlane.xlu0 %7254
    %v7256 = vmul.f32 %v7210, %v81
    %v7257 = vmul.f32 %v7213, %v81
    %v7258 = vmul.f32 %v7216, %v81
    %v7259 = vmul.f32 %v7219, %v81
    %v7260 = vmul.f32 %v7222, %v81
    %v7261 = vmul.f32 %v7225, %v81
    %v7262 = vmul.f32 %v7228, %v81
    %v7263 = vmul.f32 %v7231, %v81
    %v7264 = vmul.f32 %v7234, %v81
    %v7265 = vmul.f32 %v7237, %v81
    %v7266 = vmul.f32 %v7240, %v81
    %v7267 = vmul.f32 %v7243, %v81
    %v7268 = vmul.f32 %v7246, %v81
    %v7269 = vmul.f32 %v7249, %v81
    %v7270 = vmul.f32 %v7252, %v81
    %v7271 = vmul.f32 %v7255, %v81
    %v7272 = vadd.f32 %v7256, %v7257
    %v7273 = vadd.f32 %v7272, %v7258
    %v7274 = vadd.f32 %v7273, %v7259
    %v7275 = vrot.slane %v7274, 4
    %v7276 = vadd.f32 %v7274, %v7275
    %v7277 = vrot.slane %v7276, 2
    %v7278 = vadd.f32 %v7276, %v7277
    %v7279 = vrot.slane %v7278, 1
    %v7280 = vadd.f32 %v7278, %v7279
    %v7281 = vadd.f32 %v7260, %v7261
    %v7282 = vadd.f32 %v7281, %v7262
    %v7283 = vadd.f32 %v7282, %v7263
    %v7284 = vrot.slane %v7283, 4
    %v7285 = vadd.f32 %v7283, %v7284
    %v7286 = vrot.slane %v7285, 2
    %v7287 = vadd.f32 %v7285, %v7286
    %v7288 = vrot.slane %v7287, 1
    %v7289 = vadd.f32 %v7287, %v7288
    %v7290 = vadd.f32 %v7264, %v7265
    %v7291 = vadd.f32 %v7290, %v7266
    %v7292 = vadd.f32 %v7291, %v7267
    %v7293 = vrot.slane %v7292, 4
    %v7294 = vadd.f32 %v7292, %v7293
    %v7295 = vrot.slane %v7294, 2
    %v7296 = vadd.f32 %v7294, %v7295
    %v7297 = vrot.slane %v7296, 1
    %v7298 = vadd.f32 %v7296, %v7297
    %v7299 = vadd.f32 %v7268, %v7269
    %v7300 = vadd.f32 %v7299, %v7270
    %v7301 = vadd.f32 %v7300, %v7271
    %v7302 = vrot.slane %v7301, 4
    %v7303 = vadd.f32 %v7301, %v7302
    %v7304 = vrot.slane %v7303, 2
    %v7305 = vadd.f32 %v7303, %v7304
    %v7306 = vrot.slane %v7305, 1
    %v7307 = vadd.f32 %v7305, %v7306
    %v7308 = vmul.f32 %v7280, %v81
    %v7309 = vmul.f32 %v7289, %v81
    %v7310 = vmul.f32 %v7298, %v81
    %v7311 = vmul.f32 %v7307, %v81
    %v7312 = vsub.f32 %v7192, %v7308
    %v7313 = vsub.f32 %v7193, %v7308
    %v7314 = vsub.f32 %v7194, %v7308
    %v7315 = vsub.f32 %v7195, %v7308
    %v7316 = vsub.f32 %v7196, %v7309
    %v7317 = vsub.f32 %v7197, %v7309
    %v7318 = vsub.f32 %v7198, %v7309
    %v7319 = vsub.f32 %v7199, %v7309
    %v7320 = vsub.f32 %v7200, %v7310
    %v7321 = vsub.f32 %v7201, %v7310
    %v7322 = vsub.f32 %v7202, %v7310
    %v7323 = vsub.f32 %v7203, %v7310
    %v7324 = vsub.f32 %v7204, %v7311
    %v7325 = vsub.f32 %v7205, %v7311
    %v7326 = vsub.f32 %v7206, %v7311
    %v7327 = vsub.f32 %v7207, %v7311
    %v7328 = vmul.f32 %v7312, %v7312
    %v7329 = vmul.f32 %v7313, %v7313
    %v7330 = vmul.f32 %v7314, %v7314
    %v7331 = vmul.f32 %v7315, %v7315
    %v7332 = vmul.f32 %v7316, %v7316
    %v7333 = vmul.f32 %v7317, %v7317
    %v7334 = vmul.f32 %v7318, %v7318
    %v7335 = vmul.f32 %v7319, %v7319
    %v7336 = vmul.f32 %v7320, %v7320
    %v7337 = vmul.f32 %v7321, %v7321
    %v7338 = vmul.f32 %v7322, %v7322
    %v7339 = vmul.f32 %v7323, %v7323
    %v7340 = vmul.f32 %v7324, %v7324
    %v7341 = vmul.f32 %v7325, %v7325
    %v7342 = vmul.f32 %v7326, %v7326
    %v7343 = vmul.f32 %v7327, %v7327
    %v7344 = vsel %vm68, %v7328, 0.0
    %7345 = vadd.xlane.f32.xlu0 %v7344
    %v7346 = vpop.xlane.xlu0 %7345
    %v7347 = vsel %vm68, %v7329, 0.0
    %7348 = vadd.xlane.f32.xlu0 %v7347
    %v7349 = vpop.xlane.xlu0 %7348
    %v7350 = vsel %vm68, %v7330, 0.0
    %7351 = vadd.xlane.f32.xlu0 %v7350
    %v7352 = vpop.xlane.xlu0 %7351
    %v7353 = vsel %vm68, %v7331, 0.0
    %7354 = vadd.xlane.f32.xlu0 %v7353
    %v7355 = vpop.xlane.xlu0 %7354
    %v7356 = vsel %vm68, %v7332, 0.0
    %7357 = vadd.xlane.f32.xlu0 %v7356
    %v7358 = vpop.xlane.xlu0 %7357
    %v7359 = vsel %vm68, %v7333, 0.0
    %7360 = vadd.xlane.f32.xlu0 %v7359
    %v7361 = vpop.xlane.xlu0 %7360
    %v7362 = vsel %vm68, %v7334, 0.0
    %7363 = vadd.xlane.f32.xlu0 %v7362
    %v7364 = vpop.xlane.xlu0 %7363
    %v7365 = vsel %vm68, %v7335, 0.0
    %7366 = vadd.xlane.f32.xlu0 %v7365
    %v7367 = vpop.xlane.xlu0 %7366
    %v7368 = vsel %vm68, %v7336, 0.0
    %7369 = vadd.xlane.f32.xlu0 %v7368
    %v7370 = vpop.xlane.xlu0 %7369
    %v7371 = vsel %vm68, %v7337, 0.0
    %7372 = vadd.xlane.f32.xlu0 %v7371
    %v7373 = vpop.xlane.xlu0 %7372
    %v7374 = vsel %vm68, %v7338, 0.0
    %7375 = vadd.xlane.f32.xlu0 %v7374
    %v7376 = vpop.xlane.xlu0 %7375
    %v7377 = vsel %vm68, %v7339, 0.0
    %7378 = vadd.xlane.f32.xlu0 %v7377
    %v7379 = vpop.xlane.xlu0 %7378
    %v7380 = vsel %vm68, %v7340, 0.0
    %7381 = vadd.xlane.f32.xlu0 %v7380
    %v7382 = vpop.xlane.xlu0 %7381
    %v7383 = vsel %vm68, %v7341, 0.0
    %7384 = vadd.xlane.f32.xlu0 %v7383
    %v7385 = vpop.xlane.xlu0 %7384
    %v7386 = vsel %vm68, %v7342, 0.0
    %7387 = vadd.xlane.f32.xlu0 %v7386
    %v7388 = vpop.xlane.xlu0 %7387
    %v7389 = vsel %vm68, %v7343, 0.0
    %7390 = vadd.xlane.f32.xlu0 %v7389
    %v7391 = vpop.xlane.xlu0 %7390
    %v7392 = vmul.f32 %v7346, %v81
    %v7393 = vmul.f32 %v7349, %v81
    %v7394 = vmul.f32 %v7352, %v81
    %v7395 = vmul.f32 %v7355, %v81
    %v7396 = vmul.f32 %v7358, %v81
    %v7397 = vmul.f32 %v7361, %v81
    %v7398 = vmul.f32 %v7364, %v81
    %v7399 = vmul.f32 %v7367, %v81
    %v7400 = vmul.f32 %v7370, %v81
    %v7401 = vmul.f32 %v7373, %v81
    %v7402 = vmul.f32 %v7376, %v81
    %v7403 = vmul.f32 %v7379, %v81
    %v7404 = vmul.f32 %v7382, %v81
    %v7405 = vmul.f32 %v7385, %v81
    %v7406 = vmul.f32 %v7388, %v81
    %v7407 = vmul.f32 %v7391, %v81
    %v7408 = vadd.f32 %v7392, %v7393
    %v7409 = vadd.f32 %v7408, %v7394
    %v7410 = vadd.f32 %v7409, %v7395
    %v7411 = vrot.slane %v7410, 4
    %v7412 = vadd.f32 %v7410, %v7411
    %v7413 = vrot.slane %v7412, 2
    %v7414 = vadd.f32 %v7412, %v7413
    %v7415 = vrot.slane %v7414, 1
    %v7416 = vadd.f32 %v7414, %v7415
    %v7417 = vadd.f32 %v7396, %v7397
    %v7418 = vadd.f32 %v7417, %v7398
    %v7419 = vadd.f32 %v7418, %v7399
    %v7420 = vrot.slane %v7419, 4
    %v7421 = vadd.f32 %v7419, %v7420
    %v7422 = vrot.slane %v7421, 2
    %v7423 = vadd.f32 %v7421, %v7422
    %v7424 = vrot.slane %v7423, 1
    %v7425 = vadd.f32 %v7423, %v7424
    %v7426 = vadd.f32 %v7400, %v7401
    %v7427 = vadd.f32 %v7426, %v7402
    %v7428 = vadd.f32 %v7427, %v7403
    %v7429 = vrot.slane %v7428, 4
    %v7430 = vadd.f32 %v7428, %v7429
    %v7431 = vrot.slane %v7430, 2
    %v7432 = vadd.f32 %v7430, %v7431
    %v7433 = vrot.slane %v7432, 1
    %v7434 = vadd.f32 %v7432, %v7433
    %v7435 = vadd.f32 %v7404, %v7405
    %v7436 = vadd.f32 %v7435, %v7406
    %v7437 = vadd.f32 %v7436, %v7407
    %v7438 = vrot.slane %v7437, 4
    %v7439 = vadd.f32 %v7437, %v7438
    %v7440 = vrot.slane %v7439, 2
    %v7441 = vadd.f32 %v7439, %v7440
    %v7442 = vrot.slane %v7441, 1
    %v7443 = vadd.f32 %v7441, %v7442
    %v7444 = vmul.f32 %v7416, %v81
    %v7445 = vmul.f32 %v7425, %v81
    %v7446 = vmul.f32 %v7434, %v81
    %v7447 = vmul.f32 %v7443, %v81
    %v7448 = vadd.f32 %v7444, 1e-05
    %v7449 = vadd.f32 %v7445, 1e-05
    %v7450 = vadd.f32 %v7446, 1e-05
    %v7451 = vadd.f32 %v7447, 1e-05
    %v7452 = vrsqrt.pop %v7448
    %v7453 = vrsqrt.pop %v7449
    %v7454 = vrsqrt.pop %v7450
    %v7455 = vrsqrt.pop %v7451
    %v7456 = vmul.f32 %v7312, %v7452
    %v7457 = vmul.f32 %v7313, %v7452
    %v7458 = vmul.f32 %v7314, %v7452
    %v7459 = vmul.f32 %v7315, %v7452
    %v7460 = vmul.f32 %v7316, %v7453
    %v7461 = vmul.f32 %v7317, %v7453
    %v7462 = vmul.f32 %v7318, %v7453
    %v7463 = vmul.f32 %v7319, %v7453
    %v7464 = vmul.f32 %v7320, %v7454
    %v7465 = vmul.f32 %v7321, %v7454
    %v7466 = vmul.f32 %v7322, %v7454
    %v7467 = vmul.f32 %v7323, %v7454
    %v7468 = vmul.f32 %v7324, %v7455
    %v7469 = vmul.f32 %v7325, %v7455
    %v7470 = vmul.f32 %v7326, %v7455
    %v7471 = vmul.f32 %v7327, %v7455
    %v7472 = vsel %vm68, %v7456, -inf
    %7473 = vmax.xlane.f32.xlu0 %v7472
    %v7474 = vpop.xlane.xlu0 %7473
    %v7475 = vsel %vm68, %v7457, -inf
    %7476 = vmax.xlane.f32.xlu0 %v7475
    %v7477 = vpop.xlane.xlu0 %7476
    %v7478 = vsel %vm68, %v7458, -inf
    %7479 = vmax.xlane.f32.xlu0 %v7478
    %v7480 = vpop.xlane.xlu0 %7479
    %v7481 = vsel %vm68, %v7459, -inf
    %7482 = vmax.xlane.f32.xlu0 %v7481
    %v7483 = vpop.xlane.xlu0 %7482
    %v7484 = vsel %vm68, %v7460, -inf
    %7485 = vmax.xlane.f32.xlu0 %v7484
    %v7486 = vpop.xlane.xlu0 %7485
    %v7487 = vsel %vm68, %v7461, -inf
    %7488 = vmax.xlane.f32.xlu0 %v7487
    %v7489 = vpop.xlane.xlu0 %7488
    %v7490 = vsel %vm68, %v7462, -inf
    %7491 = vmax.xlane.f32.xlu0 %v7490
    %v7492 = vpop.xlane.xlu0 %7491
    %v7493 = vsel %vm68, %v7463, -inf
    %7494 = vmax.xlane.f32.xlu0 %v7493
    %v7495 = vpop.xlane.xlu0 %7494
    %v7496 = vsel %vm68, %v7464, -inf
    %7497 = vmax.xlane.f32.xlu0 %v7496
    %v7498 = vpop.xlane.xlu0 %7497
    %v7499 = vsel %vm68, %v7465, -inf
    %7500 = vmax.xlane.f32.xlu0 %v7499
    %v7501 = vpop.xlane.xlu0 %7500
    %v7502 = vsel %vm68, %v7466, -inf
    %7503 = vmax.xlane.f32.xlu0 %v7502
    %v7504 = vpop.xlane.xlu0 %7503
    %v7505 = vsel %vm68, %v7467, -inf
    %7506 = vmax.xlane.f32.xlu0 %v7505
    %v7507 = vpop.xlane.xlu0 %7506
    %v7508 = vsel %vm68, %v7468, -inf
    %7509 = vmax.xlane.f32.xlu0 %v7508
    %v7510 = vpop.xlane.xlu0 %7509
    %v7511 = vsel %vm68, %v7469, -inf
    %7512 = vmax.xlane.f32.xlu0 %v7511
    %v7513 = vpop.xlane.xlu0 %7512
    %v7514 = vsel %vm68, %v7470, -inf
    %7515 = vmax.xlane.f32.xlu0 %v7514
    %v7516 = vpop.xlane.xlu0 %7515
    %v7517 = vsel %vm68, %v7471, -inf
    %7518 = vmax.xlane.f32.xlu0 %v7517
    %v7519 = vpop.xlane.xlu0 %7518
    %v7520 = vsub.f32 %v7456, %v7474
    %v7521 = vsub.f32 %v7457, %v7477
    %v7522 = vsub.f32 %v7458, %v7480
    %v7523 = vsub.f32 %v7459, %v7483
    %v7524 = vsub.f32 %v7460, %v7486
    %v7525 = vsub.f32 %v7461, %v7489
    %v7526 = vsub.f32 %v7462, %v7492
    %v7527 = vsub.f32 %v7463, %v7495
    %v7528 = vsub.f32 %v7464, %v7498
    %v7529 = vsub.f32 %v7465, %v7501
    %v7530 = vsub.f32 %v7466, %v7504
    %v7531 = vsub.f32 %v7467, %v7507
    %v7532 = vsub.f32 %v7468, %v7510
    %v7533 = vsub.f32 %v7469, %v7513
    %v7534 = vsub.f32 %v7470, %v7516
    %v7535 = vsub.f32 %v7471, %v7519
    %v7536 = vmul.f32 %v7520, 1.442695
    %v7537 = vpow.pop %v7536
    %v7538 = vmul.f32 %v7521, 1.442695
    %v7539 = vpow.pop %v7538
    %v7540 = vmul.f32 %v7522, 1.442695
    %v7541 = vpow.pop %v7540
    %v7542 = vmul.f32 %v7523, 1.442695
    %v7543 = vpow.pop %v7542
    %v7544 = vmul.f32 %v7524, 1.442695
    %v7545 = vpow.pop %v7544
    %v7546 = vmul.f32 %v7525, 1.442695
    %v7547 = vpow.pop %v7546
    %v7548 = vmul.f32 %v7526, 1.442695
    %v7549 = vpow.pop %v7548
    %v7550 = vmul.f32 %v7527, 1.442695
    %v7551 = vpow.pop %v7550
    %v7552 = vmul.f32 %v7528, 1.442695
    %v7553 = vpow.pop %v7552
    %v7554 = vmul.f32 %v7529, 1.442695
    %v7555 = vpow.pop %v7554
    %v7556 = vmul.f32 %v7530, 1.442695
    %v7557 = vpow.pop %v7556
    %v7558 = vmul.f32 %v7531, 1.442695
    %v7559 = vpow.pop %v7558
    %v7560 = vmul.f32 %v7532, 1.442695
    %v7561 = vpow.pop %v7560
    %v7562 = vmul.f32 %v7533, 1.442695
    %v7563 = vpow.pop %v7562
    %v7564 = vmul.f32 %v7534, 1.442695
    %v7565 = vpow.pop %v7564
    %v7566 = vmul.f32 %v7535, 1.442695
    %v7567 = vpow.pop %v7566
    %v7568 = vsel %vm68, %v7537, 0.0
    %7569 = vadd.xlane.f32.xlu0 %v7568
    %v7570 = vpop.xlane.xlu0 %7569
    %v7571 = vsel %vm68, %v7539, 0.0
    %7572 = vadd.xlane.f32.xlu0 %v7571
    %v7573 = vpop.xlane.xlu0 %7572
    %v7574 = vsel %vm68, %v7541, 0.0
    %7575 = vadd.xlane.f32.xlu0 %v7574
    %v7576 = vpop.xlane.xlu0 %7575
    %v7577 = vsel %vm68, %v7543, 0.0
    %7578 = vadd.xlane.f32.xlu0 %v7577
    %v7579 = vpop.xlane.xlu0 %7578
    %v7580 = vsel %vm68, %v7545, 0.0
    %7581 = vadd.xlane.f32.xlu0 %v7580
    %v7582 = vpop.xlane.xlu0 %7581
    %v7583 = vsel %vm68, %v7547, 0.0
    %7584 = vadd.xlane.f32.xlu0 %v7583
    %v7585 = vpop.xlane.xlu0 %7584
    %v7586 = vsel %vm68, %v7549, 0.0
    %7587 = vadd.xlane.f32.xlu0 %v7586
    %v7588 = vpop.xlane.xlu0 %7587
    %v7589 = vsel %vm68, %v7551, 0.0
    %7590 = vadd.xlane.f32.xlu0 %v7589
    %v7591 = vpop.xlane.xlu0 %7590
    %v7592 = vsel %vm68, %v7553, 0.0
    %7593 = vadd.xlane.f32.xlu0 %v7592
    %v7594 = vpop.xlane.xlu0 %7593
    %v7595 = vsel %vm68, %v7555, 0.0
    %7596 = vadd.xlane.f32.xlu0 %v7595
    %v7597 = vpop.xlane.xlu0 %7596
    %v7598 = vsel %vm68, %v7557, 0.0
    %7599 = vadd.xlane.f32.xlu0 %v7598
    %v7600 = vpop.xlane.xlu0 %7599
    %v7601 = vsel %vm68, %v7559, 0.0
    %7602 = vadd.xlane.f32.xlu0 %v7601
    %v7603 = vpop.xlane.xlu0 %7602
    %v7604 = vsel %vm68, %v7561, 0.0
    %7605 = vadd.xlane.f32.xlu0 %v7604
    %v7606 = vpop.xlane.xlu0 %7605
    %v7607 = vsel %vm68, %v7563, 0.0
    %7608 = vadd.xlane.f32.xlu0 %v7607
    %v7609 = vpop.xlane.xlu0 %7608
    %v7610 = vsel %vm68, %v7565, 0.0
    %7611 = vadd.xlane.f32.xlu0 %v7610
    %v7612 = vpop.xlane.xlu0 %7611
    %v7613 = vsel %vm68, %v7567, 0.0
    %7614 = vadd.xlane.f32.xlu0 %v7613
    %v7615 = vpop.xlane.xlu0 %7614
    %v7616 = vrcp.pop %v7570
    %v7617 = vrcp.pop %v7573
    %v7618 = vrcp.pop %v7576
    %v7619 = vrcp.pop %v7579
    %v7620 = vrcp.pop %v7582
    %v7621 = vrcp.pop %v7585
    %v7622 = vrcp.pop %v7588
    %v7623 = vrcp.pop %v7591
    %v7624 = vrcp.pop %v7594
    %v7625 = vrcp.pop %v7597
    %v7626 = vrcp.pop %v7600
    %v7627 = vrcp.pop %v7603
    %v7628 = vrcp.pop %v7606
    %v7629 = vrcp.pop %v7609
    %v7630 = vrcp.pop %v7612
    %v7631 = vrcp.pop %v7615
    %v7632 = vmul.f32 %v7537, %v7616
    %v7633 = vmul.f32 %v7539, %v7617
    %v7634 = vmul.f32 %v7541, %v7618
    %v7635 = vmul.f32 %v7543, %v7619
    %v7636 = vmul.f32 %v7545, %v7620
    %v7637 = vmul.f32 %v7547, %v7621
    %v7638 = vmul.f32 %v7549, %v7622
    %v7639 = vmul.f32 %v7551, %v7623
    %v7640 = vmul.f32 %v7553, %v7624
    %v7641 = vmul.f32 %v7555, %v7625
    %v7642 = vmul.f32 %v7557, %v7626
    %v7643 = vmul.f32 %v7559, %v7627
    %v7644 = vmul.f32 %v7561, %v7628
    %v7645 = vmul.f32 %v7563, %v7629
    %v7646 = vmul.f32 %v7565, %v7630
    %v7647 = vmul.f32 %v7567, %v7631
    %v7648 = vsel %vm68, %v7632, 0.0
    %v7649 = vsel %vm68, %v7636, 0.0
    %v7650 = vadd.f32 %v7648, %v7649
    %v7651 = vsel %vm68, %v7640, 0.0
    %v7652 = vadd.f32 %v7650, %v7651
    %v7653 = vsel %vm68, %v7644, 0.0
    %v7654 = vadd.f32 %v7652, %v7653
    %v7655 = vsel %vm68, %v7633, 0.0
    %v7656 = vsel %vm68, %v7637, 0.0
    %v7657 = vadd.f32 %v7655, %v7656
    %v7658 = vsel %vm68, %v7641, 0.0
    %v7659 = vadd.f32 %v7657, %v7658
    %v7660 = vsel %vm68, %v7645, 0.0
    %v7661 = vadd.f32 %v7659, %v7660
    %v7662 = vsel %vm68, %v7634, 0.0
    %v7663 = vsel %vm68, %v7638, 0.0
    %v7664 = vadd.f32 %v7662, %v7663
    %v7665 = vsel %vm68, %v7642, 0.0
    %v7666 = vadd.f32 %v7664, %v7665
    %v7667 = vsel %vm68, %v7646, 0.0
    %v7668 = vadd.f32 %v7666, %v7667
    %v7669 = vsel %vm68, %v7635, 0.0
    %v7670 = vsel %vm68, %v7639, 0.0
    %v7671 = vadd.f32 %v7669, %v7670
    %v7672 = vsel %vm68, %v7643, 0.0
    %v7673 = vadd.f32 %v7671, %v7672
    %v7674 = vsel %vm68, %v7647, 0.0
    %v7675 = vadd.f32 %v7673, %v7674
    %v7676 = vmul.f32 %v7654, %v1098
    %v7677 = vmul.f32 %v7661, %v1098
    %v7678 = vmul.f32 %v7668, %v1098
    %v7679 = vmul.f32 %v7675, %v1098
    %s7680 = scalar_lea.vmem [#allocation7], 192
    %7681 = vst.msk [vmem:[%s7680] sm:$0xff] %vm68, %v7676
    %7682 = vst.msk [vmem:[%s7680 + $0x8] sm:$0xff] %vm68, %v7677
    %7683 = vst.msk [vmem:[%s7680 + $0x10] sm:$0xff] %vm68, %v7678
    %7684 = vst.msk [vmem:[%s7680 + $0x18] sm:$0xff] %vm68, %v7679
    %7685 = vxpose.xlu0.b32.start [1/16] %v7632, 128
    %7686 = vxpose.xlu0.b32.cont [2/16] %v7633, 128
    %7687 = vxpose.xlu0.b32.cont [3/16] %v7634, 128
    %7688 = vxpose.xlu0.b32.cont [4/16] %v7635, 128
    %7689 = vxpose.xlu0.b32.cont [5/16] 0.0, 128
    %7690 = vxpose.xlu0.b32.cont [6/16] 0.0, 128
    %7691 = vxpose.xlu0.b32.cont [7/16] 0.0, 128
    %7692 = vxpose.xlu0.b32.cont [8/16] 0.0, 128
    %7693 = vxpose.xlu0.b32.cont [9/16] 0.0, 128
    %7694 = vxpose.xlu0.b32.cont [10/16] 0.0, 128
    %7695 = vxpose.xlu0.b32.cont [11/16] 0.0, 128
    %7696 = vxpose.xlu0.b32.cont [12/16] 0.0, 128
    %7697 = vxpose.xlu0.b32.cont [13/16] 0.0, 128
    %7698 = vxpose.xlu0.b32.cont [14/16] 0.0, 128
    %7699 = vxpose.xlu0.b32.cont [15/16] 0.0, 128
    %7700 = vxpose.xlu0.b32.end [16/16] 0.0, 128
    %v7701 = vpop.trf.xlu0
    %v7702 = vpop.trf.xlu0
    %v7703 = vpop.trf.xlu0
    %v7704 = vpop.trf.xlu0
    %v7705 = vpop.trf.xlu0
    %v7706 = vpop.trf.xlu0
    %v7707 = vpop.trf.xlu0
    %v7708 = vpop.trf.xlu0
    %v7709 = vpop.trf.xlu0
    %v7710 = vpop.trf.xlu0
    %v7711 = vpop.trf.xlu0
    %v7712 = vpop.trf.xlu0
    %v7713 = vpop.trf.xlu0
    %v7714 = vpop.trf.xlu0
    %v7715 = vpop.trf.xlu0
    %v7716 = vpop.trf.xlu0
    %7717 = vxpose.xlu0.b32.start [1/16] %v7636, 128
    %7718 = vxpose.xlu0.b32.cont [2/16] %v7637, 128
    %7719 = vxpose.xlu0.b32.cont [3/16] %v7638, 128
    %7720 = vxpose.xlu0.b32.cont [4/16] %v7639, 128
    %7721 = vxpose.xlu0.b32.cont [5/16] 0.0, 128
    %7722 = vxpose.xlu0.b32.cont [6/16] 0.0, 128
    %7723 = vxpose.xlu0.b32.cont [7/16] 0.0, 128
    %7724 = vxpose.xlu0.b32.cont [8/16] 0.0, 128
    %7725 = vxpose.xlu0.b32.cont [9/16] 0.0, 128
    %7726 = vxpose.xlu0.b32.cont [10/16] 0.0, 128
    %7727 = vxpose.xlu0.b32.cont [11/16] 0.0, 128
    %7728 = vxpose.xlu0.b32.cont [12/16] 0.0, 128
    %7729 = vxpose.xlu0.b32.cont [13/16] 0.0, 128
    %7730 = vxpose.xlu0.b32.cont [14/16] 0.0, 128
    %7731 = vxpose.xlu0.b32.cont [15/16] 0.0, 128
    %7732 = vxpose.xlu0.b32.end [16/16] 0.0, 128
    %v7733 = vpop.trf.xlu0
    %v7734 = vpop.trf.xlu0
    %v7735 = vpop.trf.xlu0
    %v7736 = vpop.trf.xlu0
    %v7737 = vpop.trf.xlu0
    %v7738 = vpop.trf.xlu0
    %v7739 = vpop.trf.xlu0
    %v7740 = vpop.trf.xlu0
    %v7741 = vpop.trf.xlu0
    %v7742 = vpop.trf.xlu0
    %v7743 = vpop.trf.xlu0
    %v7744 = vpop.trf.xlu0
    %v7745 = vpop.trf.xlu0
    %v7746 = vpop.trf.xlu0
    %v7747 = vpop.trf.xlu0
    %v7748 = vpop.trf.xlu0
    %7749 = vxpose.xlu0.b32.start [1/16] %v7640, 128
    %7750 = vxpose.xlu0.b32.cont [2/16] %v7641, 128
    %7751 = vxpose.xlu0.b32.cont [3/16] %v7642, 128
    %7752 = vxpose.xlu0.b32.cont [4/16] %v7643, 128
    %7753 = vxpose.xlu0.b32.cont [5/16] 0.0, 128
    %7754 = vxpose.xlu0.b32.cont [6/16] 0.0, 128
    %7755 = vxpose.xlu0.b32.cont [7/16] 0.0, 128
    %7756 = vxpose.xlu0.b32.cont [8/16] 0.0, 128
    %7757 = vxpose.xlu0.b32.cont [9/16] 0.0, 128
    %7758 = vxpose.xlu0.b32.cont [10/16] 0.0, 128
    %7759 = vxpose.xlu0.b32.cont [11/16] 0.0, 128
    %7760 = vxpose.xlu0.b32.cont [12/16] 0.0, 128
    %7761 = vxpose.xlu0.b32.cont [13/16] 0.0, 128
    %7762 = vxpose.xlu0.b32.cont [14/16] 0.0, 128
    %7763 = vxpose.xlu0.b32.cont [15/16] 0.0, 128
    %7764 = vxpose.xlu0.b32.end [16/16] 0.0, 128
    %v7765 = vpop.trf.xlu0
    %v7766 = vpop.trf.xlu0
    %v7767 = vpop.trf.xlu0
    %v7768 = vpop.trf.xlu0
    %v7769 = vpop.trf.xlu0
    %v7770 = vpop.trf.xlu0
    %v7771 = vpop.trf.xlu0
    %v7772 = vpop.trf.xlu0
    %v7773 = vpop.trf.xlu0
    %v7774 = vpop.trf.xlu0
    %v7775 = vpop.trf.xlu0
    %v7776 = vpop.trf.xlu0
    %v7777 = vpop.trf.xlu0
    %v7778 = vpop.trf.xlu0
    %v7779 = vpop.trf.xlu0
    %v7780 = vpop.trf.xlu0
    %7781 = vxpose.xlu0.b32.start [1/16] %v7644, 128
    %7782 = vxpose.xlu0.b32.cont [2/16] %v7645, 128
    %7783 = vxpose.xlu0.b32.cont [3/16] %v7646, 128
    %7784 = vxpose.xlu0.b32.cont [4/16] %v7647, 128
    %7785 = vxpose.xlu0.b32.cont [5/16] 0.0, 128
    %7786 = vxpose.xlu0.b32.cont [6/16] 0.0, 128
    %7787 = vxpose.xlu0.b32.cont [7/16] 0.0, 128
    %7788 = vxpose.xlu0.b32.cont [8/16] 0.0, 128
    %7789 = vxpose.xlu0.b32.cont [9/16] 0.0, 128
    %7790 = vxpose.xlu0.b32.cont [10/16] 0.0, 128
    %7791 = vxpose.xlu0.b32.cont [11/16] 0.0, 128
    %7792 = vxpose.xlu0.b32.cont [12/16] 0.0, 128
    %7793 = vxpose.xlu0.b32.cont [13/16] 0.0, 128
    %7794 = vxpose.xlu0.b32.cont [14/16] 0.0, 128
    %7795 = vxpose.xlu0.b32.cont [15/16] 0.0, 128
    %7796 = vxpose.xlu0.b32.end [16/16] 0.0, 128
    %v7797 = vpop.trf.xlu0
    %v7798 = vpop.trf.xlu0
    %v7799 = vpop.trf.xlu0
    %v7800 = vpop.trf.xlu0
    %v7801 = vpop.trf.xlu0
    %v7802 = vpop.trf.xlu0
    %v7803 = vpop.trf.xlu0
    %v7804 = vpop.trf.xlu0
    %v7805 = vpop.trf.xlu0
    %v7806 = vpop.trf.xlu0
    %v7807 = vpop.trf.xlu0
    %v7808 = vpop.trf.xlu0
    %v7809 = vpop.trf.xlu0
    %v7810 = vpop.trf.xlu0
    %v7811 = vpop.trf.xlu0
    %v7812 = vpop.trf.xlu0
    %7813 = vmatprep.subr.mxu0 0.0
    %7814 = vmatpush1.msra.mxu0 %v7701
    %7815 = vmatprep.subr.mxu0 0.0
    %7816 = vmatpush1.msra.mxu0 %v7702
    %7817 = vmatprep.subr.mxu0 0.0
    %7818 = vmatpush1.msra.mxu0 %v7703
    %7819 = vmatprep.subr.mxu0 0.0
    %7820 = vmatpush1.msra.mxu0 %v7704
    %7821 = vmatprep.subr.mxu0 0.0
    %7822 = vmatpush1.msra.mxu0 %v7733
    %7823 = vmatprep.subr.mxu0 0.0
    %7824 = vmatpush1.msra.mxu0 %v7734
    %7825 = vmatprep.subr.mxu0 0.0
    %7826 = vmatpush1.msra.mxu0 %v7735
    %7827 = vmatprep.subr.mxu0 0.0
    %7828 = vmatpush1.msra.mxu0 %v7736
    %7829 = vmatprep.subr.mxu0 0.0
    %7830 = vmatpush1.msra.mxu0 %v7765
    %7831 = vmatprep.subr.mxu0 0.0
    %7832 = vmatpush1.msra.mxu0 %v7766
    %7833 = vmatprep.subr.mxu0 0.0
    %7834 = vmatpush1.msra.mxu0 %v7767
    %7835 = vmatprep.subr.mxu0 0.0
    %7836 = vmatpush1.msra.mxu0 %v7768
    %7837 = vmatprep.subr.mxu0 0.0
    %7838 = vmatpush1.msra.mxu0 %v7797
    %7839 = vmatprep.subr.mxu0 0.0
    %7840 = vmatpush1.msra.mxu0 %v7798
    %7841 = vmatprep.subr.mxu0 0.0
    %7842 = vmatpush1.msra.mxu0 %v7799
    %7843 = vmatprep.subr.mxu0 0.0
    %7844 = vmatpush1.msra.mxu0 %v7800
    %7845 = vmatprep.subr.mxu0 0.0
    %7846 = vmatpush1.msra.mxu0 0.0
    %7847 = vmatprep.subr.mxu0 0.0
    %7848 = vmatpush1.msra.mxu0 0.0
    %7849 = vmatprep.subr.mxu0 0.0
    %7850 = vmatpush1.msra.mxu0 0.0
    %7851 = vmatprep.subr.mxu0 0.0
    %7852 = vmatpush1.msra.mxu0 0.0
    %7853 = vmatprep.subr.mxu0 0.0
    %7854 = vmatpush1.msra.mxu0 0.0
    %7855 = vmatprep.subr.mxu0 0.0
    %7856 = vmatpush1.msra.mxu0 0.0
    %7857 = vmatprep.subr.mxu0 0.0
    %7858 = vmatpush1.msra.mxu0 0.0
    %7859 = vmatprep.subr.mxu0 0.0
    %7860 = vmatpush1.msra.mxu0 0.0
    %7861 = vmatprep.subr.mxu0 0.0
    %7862 = vmatpush1.msra.mxu0 0.0
    %7863 = vmatprep.subr.mxu0 0.0
    %7864 = vmatpush1.msra.mxu0 0.0
    %7865 = vmatprep.subr.mxu0 0.0
    %7866 = vmatpush1.msra.mxu0 0.0
    %7867 = vmatprep.subr.mxu0 0.0
    %7868 = vmatpush1.msra.mxu0 0.0
    %7869 = vmatprep.subr.mxu0 0.0
    %7870 = vmatpush1.msra.mxu0 0.0
    %7871 = vmatprep.subr.mxu0 0.0
    %7872 = vmatpush1.msra.mxu0 0.0
    %7873 = vmatprep.subr.mxu0 0.0
    %7874 = vmatpush1.msra.mxu0 0.0
    %7875 = vmatprep.subr.mxu0 0.0
    %7876 = vmatpush1.msra.mxu0 0.0
    %7877 = vmatprep.mubr.f32.mxu0 0.0
    %7878 = vmatmul.mubr.f32.gmra.mrb[0].mxu0 %v4979
    %v7879 = vpop.f32.mrb[0].mxu0
    %v7880 = vadd.f32 0.0, %v7879
    %v7881 = vpop.f32.mrb[0].mxu0
    %7882 = vdwg.mxu0
    %v7883 = vmul.f32 %v7880, 0.25
    %7884 = vst.msk [vmem:[#allocation2 + $0x10] sm:$0xff] %vm68, %v7883
    %7885 = vxpose.xlu0.b32.start [1/16] %v4898, 128
    %7886 = vxpose.xlu0.b32.cont [2/16] 0.0, 128
    %7887 = vxpose.xlu0.b32.cont [3/16] 0.0, 128
    %7888 = vxpose.xlu0.b32.cont [4/16] 0.0, 128
    %7889 = vxpose.xlu0.b32.cont [5/16] 0.0, 128
    %7890 = vxpose.xlu0.b32.cont [6/16] 0.0, 128
    %7891 = vxpose.xlu0.b32.cont [7/16] 0.0, 128
    %7892 = vxpose.xlu0.b32.cont [8/16] 0.0, 128
    %7893 = vxpose.xlu0.b32.cont [9/16] 0.0, 128
    %7894 = vxpose.xlu0.b32.cont [10/16] 0.0, 128
    %7895 = vxpose.xlu0.b32.cont [11/16] 0.0, 128
    %7896 = vxpose.xlu0.b32.cont [12/16] 0.0, 128
    %7897 = vxpose.xlu0.b32.cont [13/16] 0.0, 128
    %7898 = vxpose.xlu0.b32.cont [14/16] 0.0, 128
    %7899 = vxpose.xlu0.b32.cont [15/16] 0.0, 128
    %7900 = vxpose.xlu0.b32.end [16/16] 0.0, 128
    %v7901 = vpop.trf.xlu0
    %v7902 = vpop.trf.xlu0
    %v7903 = vpop.trf.xlu0
    %v7904 = vpop.trf.xlu0
    %v7905 = vpop.trf.xlu0
    %v7906 = vpop.trf.xlu0
    %v7907 = vpop.trf.xlu0
    %v7908 = vpop.trf.xlu0
    %v7909 = vpop.trf.xlu0
    %v7910 = vpop.trf.xlu0
    %v7911 = vpop.trf.xlu0
    %v7912 = vpop.trf.xlu0
    %v7913 = vpop.trf.xlu0
    %v7914 = vpop.trf.xlu0
    %v7915 = vpop.trf.xlu0
    %v7916 = vpop.trf.xlu0
    %v7918 = vsel %vm372, %v7901, 0
    %v7921 = vsel %vm372, %v7902, 0
    %v7924 = vsel %vm372, %v7903, 0
    %v7927 = vsel %vm372, %v7904, 0
    %v7930 = vsel %vm372, %v7905, 0
    %v7933 = vsel %vm372, %v7906, 0
    %v7936 = vsel %vm372, %v7907, 0
    %v7939 = vsel %vm372, %v7908, 0
    %v7942 = vsel %vm372, %v7909, 0
    %v7945 = vsel %vm372, %v7910, 0
    %v7948 = vsel %vm372, %v7911, 0
    %v7951 = vsel %vm372, %v7912, 0
    %v7954 = vsel %vm372, %v7913, 0
    %v7957 = vsel %vm372, %v7914, 0
    %v7960 = vsel %vm372, %v7915, 0
    %v7963 = vsel %vm372, %v7916, 0
    %7965 = vmatprep.subr.mxu0 0.0
    %7966 = vmatpush1.msra.mxu0 %v4900
    %7967 = vmatprep.subr.mxu0 0.0
    %7968 = vmatpush1.msra.mxu0 0.0
    %7969 = vmatprep.subr.mxu0 0.0
    %7970 = vmatpush1.msra.mxu0 0.0
    %7971 = vmatprep.subr.mxu0 0.0
    %7972 = vmatpush1.msra.mxu0 0.0
    %7973 = vmatprep.subr.mxu0 0.0
    %7974 = vmatpush1.msra.mxu0 0.0
    %7975 = vmatprep.subr.mxu0 0.0
    %7976 = vmatpush1.msra.mxu0 0.0
    %7977 = vmatprep.subr.mxu0 0.0
    %7978 = vmatpush1.msra.mxu0 0.0
    %7979 = vmatprep.subr.mxu0 0.0
    %7980 = vmatpush1.msra.mxu0 0.0
    %7981 = vmatprep.subr.mxu0 0.0
    %7982 = vmatpush1.msra.mxu0 0.0
    %7983 = vmatprep.subr.mxu0 0.0
    %7984 = vmatpush1.msra.mxu0 0.0
    %7985 = vmatprep.subr.mxu0 0.0
    %7986 = vmatpush1.msra.mxu0 0.0
    %7987 = vmatprep.subr.mxu0 0.0
    %7988 = vmatpush1.msra.mxu0 0.0
    %7989 = vmatprep.subr.mxu0 0.0
    %7990 = vmatpush1.msra.mxu0 0.0
    %7991 = vmatprep.subr.mxu0 0.0
    %7992 = vmatpush1.msra.mxu0 0.0
    %7993 = vmatprep.subr.mxu0 0.0
    %7994 = vmatpush1.msra.mxu0 0.0
    %7995 = vmatprep.subr.mxu0 0.0
    %7996 = vmatpush1.msra.mxu0 0.0
    %7997 = vmatprep.subr.mxu0 0.0
    %7998 = vmatpush1.msra.mxu0 0.0
    %7999 = vmatprep.subr.mxu0 0.0
    %8000 = vmatpush1.msra.mxu0 0.0
    %8001 = vmatprep.subr.mxu0 0.0
    %8002 = vmatpush1.msra.mxu0 0.0
    %8003 = vmatprep.subr.mxu0 0.0
    %8004 = vmatpush1.msra.mxu0 0.0
    %8005 = vmatprep.subr.mxu0 0.0
    %8006 = vmatpush1.msra.mxu0 0.0
    %8007 = vmatprep.subr.mxu0 0.0
    %8008 = vmatpush1.msra.mxu0 0.0
    %8009 = vmatprep.subr.mxu0 0.0
    %8010 = vmatpush1.msra.mxu0 0.0
    %8011 = vmatprep.subr.mxu0 0.0
    %8012 = vmatpush1.msra.mxu0 0.0
    %8013 = vmatprep.subr.mxu0 0.0
    %8014 = vmatpush1.msra.mxu0 0.0
    %8015 = vmatprep.subr.mxu0 0.0
    %8016 = vmatpush1.msra.mxu0 0.0
    %8017 = vmatprep.subr.mxu0 0.0
    %8018 = vmatpush1.msra.mxu0 0.0
    %8019 = vmatprep.subr.mxu0 0.0
    %8020 = vmatpush1.msra.mxu0 0.0
    %8021 = vmatprep.subr.mxu0 0.0
    %8022 = vmatpush1.msra.mxu0 0.0
    %8023 = vmatprep.subr.mxu0 0.0
    %8024 = vmatpush1.msra.mxu0 0.0
    %8025 = vmatprep.subr.mxu0 0.0
    %8026 = vmatpush1.msra.mxu0 0.0
    %8027 = vmatprep.subr.mxu0 0.0
    %8028 = vmatpush1.msra.mxu0 0.0
    %8029 = vmatprep.mubr.f32.mxu0 0.0
    %8030 = vmatmul.mubr.f32.gmra.mrb[0].mxu0 %v7918
    %v8031 = vpop.f32.mrb[0].mxu0
    %v8032 = vadd.f32 0.0, %v8031
    %v8033 = vpop.f32.mrb[0].mxu0
    %8034 = vmatprep.mubr.f32.mxu0 0.0
    %8035 = vmatmul.mubr.f32.gmra.mrb[0].mxu0 %v7921
    %v8036 = vpop.f32.mrb[0].mxu0
    %v8037 = vadd.f32 0.0, %v8036
    %v8038 = vpop.f32.mrb[0].mxu0
    %8039 = vmatprep.mubr.f32.mxu0 0.0
    %8040 = vmatmul.mubr.f32.gmra.mrb[0].mxu0 %v7924
    %v8041 = vpop.f32.mrb[0].mxu0
    %v8042 = vadd.f32 0.0, %v8041
    %v8043 = vpop.f32.mrb[0].mxu0
    %8044 = vmatprep.mubr.f32.mxu0 0.0
    %8045 = vmatmul.mubr.f32.gmra.mrb[0].mxu0 %v7927
    %v8046 = vpop.f32.mrb[0].mxu0
    %v8047 = vadd.f32 0.0, %v8046
    %v8048 = vpop.f32.mrb[0].mxu0
    %8049 = vmatprep.mubr.f32.mxu0 0.0
    %8050 = vmatmul.mubr.f32.gmra.mrb[0].mxu0 %v7930
    %v8051 = vpop.f32.mrb[0].mxu0
    %v8052 = vadd.f32 0.0, %v8051
    %v8053 = vpop.f32.mrb[0].mxu0
    %8054 = vmatprep.mubr.f32.mxu0 0.0
    %8055 = vmatmul.mubr.f32.gmra.mrb[0].mxu0 %v7933
    %v8056 = vpop.f32.mrb[0].mxu0
    %v8057 = vadd.f32 0.0, %v8056
    %v8058 = vpop.f32.mrb[0].mxu0
    %8059 = vmatprep.mubr.f32.mxu0 0.0
    %8060 = vmatmul.mubr.f32.gmra.mrb[0].mxu0 %v7936
    %v8061 = vpop.f32.mrb[0].mxu0
    %v8062 = vadd.f32 0.0, %v8061
    %v8063 = vpop.f32.mrb[0].mxu0
    %8064 = vmatprep.mubr.f32.mxu0 0.0
    %8065 = vmatmul.mubr.f32.gmra.mrb[0].mxu0 %v7939
    %v8066 = vpop.f32.mrb[0].mxu0
    %v8067 = vadd.f32 0.0, %v8066
    %v8068 = vpop.f32.mrb[0].mxu0
    %8069 = vmatprep.mubr.f32.mxu0 0.0
    %8070 = vmatmul.mubr.f32.gmra.mrb[0].mxu0 %v7942
    %v8071 = vpop.f32.mrb[0].mxu0
    %v8072 = vadd.f32 0.0, %v8071
    %v8073 = vpop.f32.mrb[0].mxu0
    %8074 = vmatprep.mubr.f32.mxu0 0.0
    %8075 = vmatmul.mubr.f32.gmra.mrb[0].mxu0 %v7945
    %v8076 = vpop.f32.mrb[0].mxu0
    %v8077 = vadd.f32 0.0, %v8076
    %v8078 = vpop.f32.mrb[0].mxu0
    %8079 = vmatprep.mubr.f32.mxu0 0.0
    %8080 = vmatmul.mubr.f32.gmra.mrb[0].mxu0 %v7948
    %v8081 = vpop.f32.mrb[0].mxu0
    %v8082 = vadd.f32 0.0, %v8081
    %v8083 = vpop.f32.mrb[0].mxu0
    %8084 = vmatprep.mubr.f32.mxu0 0.0
    %8085 = vmatmul.mubr.f32.gmra.mrb[0].mxu0 %v7951
    %v8086 = vpop.f32.mrb[0].mxu0
    %v8087 = vadd.f32 0.0, %v8086
    %v8088 = vpop.f32.mrb[0].mxu0
    %8089 = vmatprep.mubr.f32.mxu0 0.0
    %8090 = vmatmul.mubr.f32.gmra.mrb[0].mxu0 %v7954
    %v8091 = vpop.f32.mrb[0].mxu0
    %v8092 = vadd.f32 0.0, %v8091
    %v8093 = vpop.f32.mrb[0].mxu0
    %8094 = vmatprep.mubr.f32.mxu0 0.0
    %8095 = vmatmul.mubr.f32.gmra.mrb[0].mxu0 %v7957
    %v8096 = vpop.f32.mrb[0].mxu0
    %v8097 = vadd.f32 0.0, %v8096
    %v8098 = vpop.f32.mrb[0].mxu0
    %8099 = vmatprep.mubr.f32.mxu0 0.0
    %8100 = vmatmul.mubr.f32.gmra.mrb[0].mxu0 %v7960
    %v8101 = vpop.f32.mrb[0].mxu0
    %v8102 = vadd.f32 0.0, %v8101
    %v8103 = vpop.f32.mrb[0].mxu0
    %8104 = vmatprep.mubr.f32.mxu0 0.0
    %8105 = vmatmul.mubr.f32.gmra.mrb[0].mxu0 %v7963
    %v8106 = vpop.f32.mrb[0].mxu0
    %v8107 = vadd.f32 0.0, %v8106
    %v8108 = vpop.f32.mrb[0].mxu0
    %8109 = vdwg.mxu0
    %8114 = vrot.lane.b32.xlu0 %v8052, 96
    %v8115 = vpop.permute.xlu0 %8114
    %8116 = vrot.lane.b32.xlu0 %v8057, 96
    %v8117 = vpop.permute.xlu0 %8116
    %8118 = vrot.lane.b32.xlu0 %v8062, 96
    %v8119 = vpop.permute.xlu0 %8118
    %8120 = vrot.lane.b32.xlu0 %v8067, 96
    %v8121 = vpop.permute.xlu0 %8120
    %8130 = vrot.lane.b32.xlu0 %v8072, 64
    %v8131 = vpop.permute.xlu0 %8130
    %8132 = vrot.lane.b32.xlu0 %v8077, 64
    %v8133 = vpop.permute.xlu0 %8132
    %8134 = vrot.lane.b32.xlu0 %v8082, 64
    %v8135 = vpop.permute.xlu0 %8134
    %8136 = vrot.lane.b32.xlu0 %v8087, 64
    %v8137 = vpop.permute.xlu0 %8136
    %8146 = vrot.lane.b32.xlu0 %v8092, 32
    %v8147 = vpop.permute.xlu0 %8146
    %8148 = vrot.lane.b32.xlu0 %v8097, 32
    %v8149 = vpop.permute.xlu0 %8148
    %8150 = vrot.lane.b32.xlu0 %v8102, 32
    %v8151 = vpop.permute.xlu0 %8150
    %8152 = vrot.lane.b32.xlu0 %v8107, 32
    %v8153 = vpop.permute.xlu0 %8152
    %v8158 = vmul.f32 %v8032, 0.17677669
    %v8159 = vmul.f32 %v8037, 0.17677669
    %v8160 = vmul.f32 %v8042, 0.17677669
    %v8161 = vmul.f32 %v8047, 0.17677669
    %v8162 = vmul.f32 %v8115, 0.17677669
    %v8163 = vmul.f32 %v8117, 0.17677669
    %v8164 = vmul.f32 %v8119, 0.17677669
    %v8165 = vmul.f32 %v8121, 0.17677669
    %v8166 = vmul.f32 %v8131, 0.17677669
    %v8167 = vmul.f32 %v8133, 0.17677669
    %v8168 = vmul.f32 %v8135, 0.17677669
    %v8169 = vmul.f32 %v8137, 0.17677669
    %v8170 = vmul.f32 %v8147, 0.17677669
    %v8171 = vmul.f32 %v8149, 0.17677669
    %v8172 = vmul.f32 %v8151, 0.17677669
    %v8173 = vmul.f32 %v8153, 0.17677669
    %v8174 = vsel %vm68, %v8158, 0.0
    %8175 = vadd.xlane.f32.xlu0 %v8174
    %v8176 = vpop.xlane.xlu0 %8175
    %v8177 = vsel %vm68, %v8159, 0.0
    %8178 = vadd.xlane.f32.xlu0 %v8177
    %v8179 = vpop.xlane.xlu0 %8178
    %v8180 = vsel %vm68, %v8160, 0.0
    %8181 = vadd.xlane.f32.xlu0 %v8180
    %v8182 = vpop.xlane.xlu0 %8181
    %v8183 = vsel %vm68, %v8161, 0.0
    %8184 = vadd.xlane.f32.xlu0 %v8183
    %v8185 = vpop.xlane.xlu0 %8184
    %v8186 = vsel %vm68, %v8162, 0.0
    %8187 = vadd.xlane.f32.xlu0 %v8186
    %v8188 = vpop.xlane.xlu0 %8187
    %v8189 = vsel %vm68, %v8163, 0.0
    %8190 = vadd.xlane.f32.xlu0 %v8189
    %v8191 = vpop.xlane.xlu0 %8190
    %v8192 = vsel %vm68, %v8164, 0.0
    %8193 = vadd.xlane.f32.xlu0 %v8192
    %v8194 = vpop.xlane.xlu0 %8193
    %v8195 = vsel %vm68, %v8165, 0.0
    %8196 = vadd.xlane.f32.xlu0 %v8195
    %v8197 = vpop.xlane.xlu0 %8196
    %v8198 = vsel %vm68, %v8166, 0.0
    %8199 = vadd.xlane.f32.xlu0 %v8198
    %v8200 = vpop.xlane.xlu0 %8199
    %v8201 = vsel %vm68, %v8167, 0.0
    %8202 = vadd.xlane.f32.xlu0 %v8201
    %v8203 = vpop.xlane.xlu0 %8202
    %v8204 = vsel %vm68, %v8168, 0.0
    %8205 = vadd.xlane.f32.xlu0 %v8204
    %v8206 = vpop.xlane.xlu0 %8205
    %v8207 = vsel %vm68, %v8169, 0.0
    %8208 = vadd.xlane.f32.xlu0 %v8207
    %v8209 = vpop.xlane.xlu0 %8208
    %v8210 = vsel %vm68, %v8170, 0.0
    %8211 = vadd.xlane.f32.xlu0 %v8210
    %v8212 = vpop.xlane.xlu0 %8211
    %v8213 = vsel %vm68, %v8171, 0.0
    %8214 = vadd.xlane.f32.xlu0 %v8213
    %v8215 = vpop.xlane.xlu0 %8214
    %v8216 = vsel %vm68, %v8172, 0.0
    %8217 = vadd.xlane.f32.xlu0 %v8216
    %v8218 = vpop.xlane.xlu0 %8217
    %v8219 = vsel %vm68, %v8173, 0.0
    %8220 = vadd.xlane.f32.xlu0 %v8219
    %v8221 = vpop.xlane.xlu0 %8220
    %v8222 = vmul.f32 %v8176, %v81
    %v8223 = vmul.f32 %v8179, %v81
    %v8224 = vmul.f32 %v8182, %v81
    %v8225 = vmul.f32 %v8185, %v81
    %v8226 = vmul.f32 %v8188, %v81
    %v8227 = vmul.f32 %v8191, %v81
    %v8228 = vmul.f32 %v8194, %v81
    %v8229 = vmul.f32 %v8197, %v81
    %v8230 = vmul.f32 %v8200, %v81
    %v8231 = vmul.f32 %v8203, %v81
    %v8232 = vmul.f32 %v8206, %v81
    %v8233 = vmul.f32 %v8209, %v81
    %v8234 = vmul.f32 %v8212, %v81
    %v8235 = vmul.f32 %v8215, %v81
    %v8236 = vmul.f32 %v8218, %v81
    %v8237 = vmul.f32 %v8221, %v81
    %v8238 = vadd.f32 %v8222, %v8223
    %v8239 = vadd.f32 %v8238, %v8224
    %v8240 = vadd.f32 %v8239, %v8225
    %v8241 = vrot.slane %v8240, 4
    %v8242 = vadd.f32 %v8240, %v8241
    %v8243 = vrot.slane %v8242, 2
    %v8244 = vadd.f32 %v8242, %v8243
    %v8245 = vrot.slane %v8244, 1
    %v8246 = vadd.f32 %v8244, %v8245
    %v8247 = vadd.f32 %v8226, %v8227
    %v8248 = vadd.f32 %v8247, %v8228
    %v8249 = vadd.f32 %v8248, %v8229
    %v8250 = vrot.slane %v8249, 4
    %v8251 = vadd.f32 %v8249, %v8250
    %v8252 = vrot.slane %v8251, 2
    %v8253 = vadd.f32 %v8251, %v8252
    %v8254 = vrot.slane %v8253, 1
    %v8255 = vadd.f32 %v8253, %v8254
    %v8256 = vadd.f32 %v8230, %v8231
    %v8257 = vadd.f32 %v8256, %v8232
    %v8258 = vadd.f32 %v8257, %v8233
    %v8259 = vrot.slane %v8258, 4
    %v8260 = vadd.f32 %v8258, %v8259
    %v8261 = vrot.slane %v8260, 2
    %v8262 = vadd.f32 %v8260, %v8261
    %v8263 = vrot.slane %v8262, 1
    %v8264 = vadd.f32 %v8262, %v8263
    %v8265 = vadd.f32 %v8234, %v8235
    %v8266 = vadd.f32 %v8265, %v8236
    %v8267 = vadd.f32 %v8266, %v8237
    %v8268 = vrot.slane %v8267, 4
    %v8269 = vadd.f32 %v8267, %v8268
    %v8270 = vrot.slane %v8269, 2
    %v8271 = vadd.f32 %v8269, %v8270
    %v8272 = vrot.slane %v8271, 1
    %v8273 = vadd.f32 %v8271, %v8272
    %v8274 = vmul.f32 %v8246, %v81
    %v8275 = vmul.f32 %v8255, %v81
    %v8276 = vmul.f32 %v8264, %v81
    %v8277 = vmul.f32 %v8273, %v81
    %v8278 = vsub.f32 %v8158, %v8274
    %v8279 = vsub.f32 %v8159, %v8274
    %v8280 = vsub.f32 %v8160, %v8274
    %v8281 = vsub.f32 %v8161, %v8274
    %v8282 = vsub.f32 %v8162, %v8275
    %v8283 = vsub.f32 %v8163, %v8275
    %v8284 = vsub.f32 %v8164, %v8275
    %v8285 = vsub.f32 %v8165, %v8275
    %v8286 = vsub.f32 %v8166, %v8276
    %v8287 = vsub.f32 %v8167, %v8276
    %v8288 = vsub.f32 %v8168, %v8276
    %v8289 = vsub.f32 %v8169, %v8276
    %v8290 = vsub.f32 %v8170, %v8277
    %v8291 = vsub.f32 %v8171, %v8277
    %v8292 = vsub.f32 %v8172, %v8277
    %v8293 = vsub.f32 %v8173, %v8277
    %v8294 = vmul.f32 %v8278, %v8278
    %v8295 = vmul.f32 %v8279, %v8279
    %v8296 = vmul.f32 %v8280, %v8280
    %v8297 = vmul.f32 %v8281, %v8281
    %v8298 = vmul.f32 %v8282, %v8282
    %v8299 = vmul.f32 %v8283, %v8283
    %v8300 = vmul.f32 %v8284, %v8284
    %v8301 = vmul.f32 %v8285, %v8285
    %v8302 = vmul.f32 %v8286, %v8286
    %v8303 = vmul.f32 %v8287, %v8287
    %v8304 = vmul.f32 %v8288, %v8288
    %v8305 = vmul.f32 %v8289, %v8289
    %v8306 = vmul.f32 %v8290, %v8290
    %v8307 = vmul.f32 %v8291, %v8291
    %v8308 = vmul.f32 %v8292, %v8292
    %v8309 = vmul.f32 %v8293, %v8293
    %v8310 = vsel %vm68, %v8294, 0.0
    %8311 = vadd.xlane.f32.xlu0 %v8310
    %v8312 = vpop.xlane.xlu0 %8311
    %v8313 = vsel %vm68, %v8295, 0.0
    %8314 = vadd.xlane.f32.xlu0 %v8313
    %v8315 = vpop.xlane.xlu0 %8314
    %v8316 = vsel %vm68, %v8296, 0.0
    %8317 = vadd.xlane.f32.xlu0 %v8316
    %v8318 = vpop.xlane.xlu0 %8317
    %v8319 = vsel %vm68, %v8297, 0.0
    %8320 = vadd.xlane.f32.xlu0 %v8319
    %v8321 = vpop.xlane.xlu0 %8320
    %v8322 = vsel %vm68, %v8298, 0.0
    %8323 = vadd.xlane.f32.xlu0 %v8322
    %v8324 = vpop.xlane.xlu0 %8323
    %v8325 = vsel %vm68, %v8299, 0.0
    %8326 = vadd.xlane.f32.xlu0 %v8325
    %v8327 = vpop.xlane.xlu0 %8326
    %v8328 = vsel %vm68, %v8300, 0.0
    %8329 = vadd.xlane.f32.xlu0 %v8328
    %v8330 = vpop.xlane.xlu0 %8329
    %v8331 = vsel %vm68, %v8301, 0.0
    %8332 = vadd.xlane.f32.xlu0 %v8331
    %v8333 = vpop.xlane.xlu0 %8332
    %v8334 = vsel %vm68, %v8302, 0.0
    %8335 = vadd.xlane.f32.xlu0 %v8334
    %v8336 = vpop.xlane.xlu0 %8335
    %v8337 = vsel %vm68, %v8303, 0.0
    %8338 = vadd.xlane.f32.xlu0 %v8337
    %v8339 = vpop.xlane.xlu0 %8338
    %v8340 = vsel %vm68, %v8304, 0.0
    %8341 = vadd.xlane.f32.xlu0 %v8340
    %v8342 = vpop.xlane.xlu0 %8341
    %v8343 = vsel %vm68, %v8305, 0.0
    %8344 = vadd.xlane.f32.xlu0 %v8343
    %v8345 = vpop.xlane.xlu0 %8344
    %v8346 = vsel %vm68, %v8306, 0.0
    %8347 = vadd.xlane.f32.xlu0 %v8346
    %v8348 = vpop.xlane.xlu0 %8347
    %v8349 = vsel %vm68, %v8307, 0.0
    %8350 = vadd.xlane.f32.xlu0 %v8349
    %v8351 = vpop.xlane.xlu0 %8350
    %v8352 = vsel %vm68, %v8308, 0.0
    %8353 = vadd.xlane.f32.xlu0 %v8352
    %v8354 = vpop.xlane.xlu0 %8353
    %v8355 = vsel %vm68, %v8309, 0.0
    %8356 = vadd.xlane.f32.xlu0 %v8355
    %v8357 = vpop.xlane.xlu0 %8356
    %v8358 = vmul.f32 %v8312, %v81
    %v8359 = vmul.f32 %v8315, %v81
    %v8360 = vmul.f32 %v8318, %v81
    %v8361 = vmul.f32 %v8321, %v81
    %v8362 = vmul.f32 %v8324, %v81
    %v8363 = vmul.f32 %v8327, %v81
    %v8364 = vmul.f32 %v8330, %v81
    %v8365 = vmul.f32 %v8333, %v81
    %v8366 = vmul.f32 %v8336, %v81
    %v8367 = vmul.f32 %v8339, %v81
    %v8368 = vmul.f32 %v8342, %v81
    %v8369 = vmul.f32 %v8345, %v81
    %v8370 = vmul.f32 %v8348, %v81
    %v8371 = vmul.f32 %v8351, %v81
    %v8372 = vmul.f32 %v8354, %v81
    %v8373 = vmul.f32 %v8357, %v81
    %v8374 = vadd.f32 %v8358, %v8359
    %v8375 = vadd.f32 %v8374, %v8360
    %v8376 = vadd.f32 %v8375, %v8361
    %v8377 = vrot.slane %v8376, 4
    %v8378 = vadd.f32 %v8376, %v8377
    %v8379 = vrot.slane %v8378, 2
    %v8380 = vadd.f32 %v8378, %v8379
    %v8381 = vrot.slane %v8380, 1
    %v8382 = vadd.f32 %v8380, %v8381
    %v8383 = vadd.f32 %v8362, %v8363
    %v8384 = vadd.f32 %v8383, %v8364
    %v8385 = vadd.f32 %v8384, %v8365
    %v8386 = vrot.slane %v8385, 4
    %v8387 = vadd.f32 %v8385, %v8386
    %v8388 = vrot.slane %v8387, 2
    %v8389 = vadd.f32 %v8387, %v8388
    %v8390 = vrot.slane %v8389, 1
    %v8391 = vadd.f32 %v8389, %v8390
    %v8392 = vadd.f32 %v8366, %v8367
    %v8393 = vadd.f32 %v8392, %v8368
    %v8394 = vadd.f32 %v8393, %v8369
    %v8395 = vrot.slane %v8394, 4
    %v8396 = vadd.f32 %v8394, %v8395
    %v8397 = vrot.slane %v8396, 2
    %v8398 = vadd.f32 %v8396, %v8397
    %v8399 = vrot.slane %v8398, 1
    %v8400 = vadd.f32 %v8398, %v8399
    %v8401 = vadd.f32 %v8370, %v8371
    %v8402 = vadd.f32 %v8401, %v8372
    %v8403 = vadd.f32 %v8402, %v8373
    %v8404 = vrot.slane %v8403, 4
    %v8405 = vadd.f32 %v8403, %v8404
    %v8406 = vrot.slane %v8405, 2
    %v8407 = vadd.f32 %v8405, %v8406
    %v8408 = vrot.slane %v8407, 1
    %v8409 = vadd.f32 %v8407, %v8408
    %v8410 = vmul.f32 %v8382, %v81
    %v8411 = vmul.f32 %v8391, %v81
    %v8412 = vmul.f32 %v8400, %v81
    %v8413 = vmul.f32 %v8409, %v81
    %v8414 = vadd.f32 %v8410, 1e-05
    %v8415 = vadd.f32 %v8411, 1e-05
    %v8416 = vadd.f32 %v8412, 1e-05
    %v8417 = vadd.f32 %v8413, 1e-05
    %v8418 = vrsqrt.pop %v8414
    %v8419 = vrsqrt.pop %v8415
    %v8420 = vrsqrt.pop %v8416
    %v8421 = vrsqrt.pop %v8417
    %v8422 = vmul.f32 %v8278, %v8418
    %v8423 = vmul.f32 %v8279, %v8418
    %v8424 = vmul.f32 %v8280, %v8418
    %v8425 = vmul.f32 %v8281, %v8418
    %v8426 = vmul.f32 %v8282, %v8419
    %v8427 = vmul.f32 %v8283, %v8419
    %v8428 = vmul.f32 %v8284, %v8419
    %v8429 = vmul.f32 %v8285, %v8419
    %v8430 = vmul.f32 %v8286, %v8420
    %v8431 = vmul.f32 %v8287, %v8420
    %v8432 = vmul.f32 %v8288, %v8420
    %v8433 = vmul.f32 %v8289, %v8420
    %v8434 = vmul.f32 %v8290, %v8421
    %v8435 = vmul.f32 %v8291, %v8421
    %v8436 = vmul.f32 %v8292, %v8421
    %v8437 = vmul.f32 %v8293, %v8421
    %v8438 = vsel %vm68, %v8422, -inf
    %8439 = vmax.xlane.f32.xlu0 %v8438
    %v8440 = vpop.xlane.xlu0 %8439
    %v8441 = vsel %vm68, %v8423, -inf
    %8442 = vmax.xlane.f32.xlu0 %v8441
    %v8443 = vpop.xlane.xlu0 %8442
    %v8444 = vsel %vm68, %v8424, -inf
    %8445 = vmax.xlane.f32.xlu0 %v8444
    %v8446 = vpop.xlane.xlu0 %8445
    %v8447 = vsel %vm68, %v8425, -inf
    %8448 = vmax.xlane.f32.xlu0 %v8447
    %v8449 = vpop.xlane.xlu0 %8448
    %v8450 = vsel %vm68, %v8426, -inf
    %8451 = vmax.xlane.f32.xlu0 %v8450
    %v8452 = vpop.xlane.xlu0 %8451
    %v8453 = vsel %vm68, %v8427, -inf
    %8454 = vmax.xlane.f32.xlu0 %v8453
    %v8455 = vpop.xlane.xlu0 %8454
    %v8456 = vsel %vm68, %v8428, -inf
    %8457 = vmax.xlane.f32.xlu0 %v8456
    %v8458 = vpop.xlane.xlu0 %8457
    %v8459 = vsel %vm68, %v8429, -inf
    %8460 = vmax.xlane.f32.xlu0 %v8459
    %v8461 = vpop.xlane.xlu0 %8460
    %v8462 = vsel %vm68, %v8430, -inf
    %8463 = vmax.xlane.f32.xlu0 %v8462
    %v8464 = vpop.xlane.xlu0 %8463
    %v8465 = vsel %vm68, %v8431, -inf
    %8466 = vmax.xlane.f32.xlu0 %v8465
    %v8467 = vpop.xlane.xlu0 %8466
    %v8468 = vsel %vm68, %v8432, -inf
    %8469 = vmax.xlane.f32.xlu0 %v8468
    %v8470 = vpop.xlane.xlu0 %8469
    %v8471 = vsel %vm68, %v8433, -inf
    %8472 = vmax.xlane.f32.xlu0 %v8471
    %v8473 = vpop.xlane.xlu0 %8472
    %v8474 = vsel %vm68, %v8434, -inf
    %8475 = vmax.xlane.f32.xlu0 %v8474
    %v8476 = vpop.xlane.xlu0 %8475
    %v8477 = vsel %vm68, %v8435, -inf
    %8478 = vmax.xlane.f32.xlu0 %v8477
    %v8479 = vpop.xlane.xlu0 %8478
    %v8480 = vsel %vm68, %v8436, -inf
    %8481 = vmax.xlane.f32.xlu0 %v8480
    %v8482 = vpop.xlane.xlu0 %8481
    %v8483 = vsel %vm68, %v8437, -inf
    %8484 = vmax.xlane.f32.xlu0 %v8483
    %v8485 = vpop.xlane.xlu0 %8484
    %v8486 = vsub.f32 %v8422, %v8440
    %v8487 = vsub.f32 %v8423, %v8443
    %v8488 = vsub.f32 %v8424, %v8446
    %v8489 = vsub.f32 %v8425, %v8449
    %v8490 = vsub.f32 %v8426, %v8452
    %v8491 = vsub.f32 %v8427, %v8455
    %v8492 = vsub.f32 %v8428, %v8458
    %v8493 = vsub.f32 %v8429, %v8461
    %v8494 = vsub.f32 %v8430, %v8464
    %v8495 = vsub.f32 %v8431, %v8467
    %v8496 = vsub.f32 %v8432, %v8470
    %v8497 = vsub.f32 %v8433, %v8473
    %v8498 = vsub.f32 %v8434, %v8476
    %v8499 = vsub.f32 %v8435, %v8479
    %v8500 = vsub.f32 %v8436, %v8482
    %v8501 = vsub.f32 %v8437, %v8485
    %v8502 = vmul.f32 %v8486, 1.442695
    %v8503 = vpow.pop %v8502
    %v8504 = vmul.f32 %v8487, 1.442695
    %v8505 = vpow.pop %v8504
    %v8506 = vmul.f32 %v8488, 1.442695
    %v8507 = vpow.pop %v8506
    %v8508 = vmul.f32 %v8489, 1.442695
    %v8509 = vpow.pop %v8508
    %v8510 = vmul.f32 %v8490, 1.442695
    %v8511 = vpow.pop %v8510
    %v8512 = vmul.f32 %v8491, 1.442695
    %v8513 = vpow.pop %v8512
    %v8514 = vmul.f32 %v8492, 1.442695
    %v8515 = vpow.pop %v8514
    %v8516 = vmul.f32 %v8493, 1.442695
    %v8517 = vpow.pop %v8516
    %v8518 = vmul.f32 %v8494, 1.442695
    %v8519 = vpow.pop %v8518
    %v8520 = vmul.f32 %v8495, 1.442695
    %v8521 = vpow.pop %v8520
    %v8522 = vmul.f32 %v8496, 1.442695
    %v8523 = vpow.pop %v8522
    %v8524 = vmul.f32 %v8497, 1.442695
    %v8525 = vpow.pop %v8524
    %v8526 = vmul.f32 %v8498, 1.442695
    %v8527 = vpow.pop %v8526
    %v8528 = vmul.f32 %v8499, 1.442695
    %v8529 = vpow.pop %v8528
    %v8530 = vmul.f32 %v8500, 1.442695
    %v8531 = vpow.pop %v8530
    %v8532 = vmul.f32 %v8501, 1.442695
    %v8533 = vpow.pop %v8532
    %v8534 = vsel %vm68, %v8503, 0.0
    %8535 = vadd.xlane.f32.xlu0 %v8534
    %v8536 = vpop.xlane.xlu0 %8535
    %v8537 = vsel %vm68, %v8505, 0.0
    %8538 = vadd.xlane.f32.xlu0 %v8537
    %v8539 = vpop.xlane.xlu0 %8538
    %v8540 = vsel %vm68, %v8507, 0.0
    %8541 = vadd.xlane.f32.xlu0 %v8540
    %v8542 = vpop.xlane.xlu0 %8541
    %v8543 = vsel %vm68, %v8509, 0.0
    %8544 = vadd.xlane.f32.xlu0 %v8543
    %v8545 = vpop.xlane.xlu0 %8544
    %v8546 = vsel %vm68, %v8511, 0.0
    %8547 = vadd.xlane.f32.xlu0 %v8546
    %v8548 = vpop.xlane.xlu0 %8547
    %v8549 = vsel %vm68, %v8513, 0.0
    %8550 = vadd.xlane.f32.xlu0 %v8549
    %v8551 = vpop.xlane.xlu0 %8550
    %v8552 = vsel %vm68, %v8515, 0.0
    %8553 = vadd.xlane.f32.xlu0 %v8552
    %v8554 = vpop.xlane.xlu0 %8553
    %v8555 = vsel %vm68, %v8517, 0.0
    %8556 = vadd.xlane.f32.xlu0 %v8555
    %v8557 = vpop.xlane.xlu0 %8556
    %v8558 = vsel %vm68, %v8519, 0.0
    %8559 = vadd.xlane.f32.xlu0 %v8558
    %v8560 = vpop.xlane.xlu0 %8559
    %v8561 = vsel %vm68, %v8521, 0.0
    %8562 = vadd.xlane.f32.xlu0 %v8561
    %v8563 = vpop.xlane.xlu0 %8562
    %v8564 = vsel %vm68, %v8523, 0.0
    %8565 = vadd.xlane.f32.xlu0 %v8564
    %v8566 = vpop.xlane.xlu0 %8565
    %v8567 = vsel %vm68, %v8525, 0.0
    %8568 = vadd.xlane.f32.xlu0 %v8567
    %v8569 = vpop.xlane.xlu0 %8568
    %v8570 = vsel %vm68, %v8527, 0.0
    %8571 = vadd.xlane.f32.xlu0 %v8570
    %v8572 = vpop.xlane.xlu0 %8571
    %v8573 = vsel %vm68, %v8529, 0.0
    %8574 = vadd.xlane.f32.xlu0 %v8573
    %v8575 = vpop.xlane.xlu0 %8574
    %v8576 = vsel %vm68, %v8531, 0.0
    %8577 = vadd.xlane.f32.xlu0 %v8576
    %v8578 = vpop.xlane.xlu0 %8577
    %v8579 = vsel %vm68, %v8533, 0.0
    %8580 = vadd.xlane.f32.xlu0 %v8579
    %v8581 = vpop.xlane.xlu0 %8580
    %v8582 = vrcp.pop %v8536
    %v8583 = vrcp.pop %v8539
    %v8584 = vrcp.pop %v8542
    %v8585 = vrcp.pop %v8545
    %v8586 = vrcp.pop %v8548
    %v8587 = vrcp.pop %v8551
    %v8588 = vrcp.pop %v8554
    %v8589 = vrcp.pop %v8557
    %v8590 = vrcp.pop %v8560
    %v8591 = vrcp.pop %v8563
    %v8592 = vrcp.pop %v8566
    %v8593 = vrcp.pop %v8569
    %v8594 = vrcp.pop %v8572
    %v8595 = vrcp.pop %v8575
    %v8596 = vrcp.pop %v8578
    %v8597 = vrcp.pop %v8581
    %v8598 = vmul.f32 %v8503, %v8582
    %v8599 = vmul.f32 %v8505, %v8583
    %v8600 = vmul.f32 %v8507, %v8584
    %v8601 = vmul.f32 %v8509, %v8585
    %v8602 = vmul.f32 %v8511, %v8586
    %v8603 = vmul.f32 %v8513, %v8587
    %v8604 = vmul.f32 %v8515, %v8588
    %v8605 = vmul.f32 %v8517, %v8589
    %v8606 = vmul.f32 %v8519, %v8590
    %v8607 = vmul.f32 %v8521, %v8591
    %v8608 = vmul.f32 %v8523, %v8592
    %v8609 = vmul.f32 %v8525, %v8593
    %v8610 = vmul.f32 %v8527, %v8594
    %v8611 = vmul.f32 %v8529, %v8595
    %v8612 = vmul.f32 %v8531, %v8596
    %v8613 = vmul.f32 %v8533, %v8597
    %v8614 = vsel %vm68, %v8598, 0.0
    %v8615 = vsel %vm68, %v8602, 0.0
    %v8616 = vadd.f32 %v8614, %v8615
    %v8617 = vsel %vm68, %v8606, 0.0
    %v8618 = vadd.f32 %v8616, %v8617
    %v8619 = vsel %vm68, %v8610, 0.0
    %v8620 = vadd.f32 %v8618, %v8619
    %v8621 = vsel %vm68, %v8599, 0.0
    %v8622 = vsel %vm68, %v8603, 0.0
    %v8623 = vadd.f32 %v8621, %v8622
    %v8624 = vsel %vm68, %v8607, 0.0
    %v8625 = vadd.f32 %v8623, %v8624
    %v8626 = vsel %vm68, %v8611, 0.0
    %v8627 = vadd.f32 %v8625, %v8626
    %v8628 = vsel %vm68, %v8600, 0.0
    %v8629 = vsel %vm68, %v8604, 0.0
    %v8630 = vadd.f32 %v8628, %v8629
    %v8631 = vsel %vm68, %v8608, 0.0
    %v8632 = vadd.f32 %v8630, %v8631
    %v8633 = vsel %vm68, %v8612, 0.0
    %v8634 = vadd.f32 %v8632, %v8633
    %v8635 = vsel %vm68, %v8601, 0.0
    %v8636 = vsel %vm68, %v8605, 0.0
    %v8637 = vadd.f32 %v8635, %v8636
    %v8638 = vsel %vm68, %v8609, 0.0
    %v8639 = vadd.f32 %v8637, %v8638
    %v8640 = vsel %vm68, %v8613, 0.0
    %v8641 = vadd.f32 %v8639, %v8640
    %v8642 = vmul.f32 %v8620, %v1098
    %v8643 = vmul.f32 %v8627, %v1098
    %v8644 = vmul.f32 %v8634, %v1098
    %v8645 = vmul.f32 %v8641, %v1098
    %s8646 = scalar_lea.vmem [#allocation7], 224
    %8647 = vst.msk [vmem:[%s8646] sm:$0xff] %vm68, %v8642
    %8648 = vst.msk [vmem:[%s8646 + $0x8] sm:$0xff] %vm68, %v8643
    %8649 = vst.msk [vmem:[%s8646 + $0x10] sm:$0xff] %vm68, %v8644
    %8650 = vst.msk [vmem:[%s8646 + $0x18] sm:$0xff] %vm68, %v8645
    %8651 = vxpose.xlu0.b32.start [1/16] %v8598, 128
    %8652 = vxpose.xlu0.b32.cont [2/16] %v8599, 128
    %8653 = vxpose.xlu0.b32.cont [3/16] %v8600, 128
    %8654 = vxpose.xlu0.b32.cont [4/16] %v8601, 128
    %8655 = vxpose.xlu0.b32.cont [5/16] 0.0, 128
    %8656 = vxpose.xlu0.b32.cont [6/16] 0.0, 128
    %8657 = vxpose.xlu0.b32.cont [7/16] 0.0, 128
    %8658 = vxpose.xlu0.b32.cont [8/16] 0.0, 128
    %8659 = vxpose.xlu0.b32.cont [9/16] 0.0, 128
    %8660 = vxpose.xlu0.b32.cont [10/16] 0.0, 128
    %8661 = vxpose.xlu0.b32.cont [11/16] 0.0, 128
    %8662 = vxpose.xlu0.b32.cont [12/16] 0.0, 128
    %8663 = vxpose.xlu0.b32.cont [13/16] 0.0, 128
    %8664 = vxpose.xlu0.b32.cont [14/16] 0.0, 128
    %8665 = vxpose.xlu0.b32.cont [15/16] 0.0, 128
    %8666 = vxpose.xlu0.b32.end [16/16] 0.0, 128
    %v8667 = vpop.trf.xlu0
    %v8668 = vpop.trf.xlu0
    %v8669 = vpop.trf.xlu0
    %v8670 = vpop.trf.xlu0
    %v8671 = vpop.trf.xlu0
    %v8672 = vpop.trf.xlu0
    %v8673 = vpop.trf.xlu0
    %v8674 = vpop.trf.xlu0
    %v8675 = vpop.trf.xlu0
    %v8676 = vpop.trf.xlu0
    %v8677 = vpop.trf.xlu0
    %v8678 = vpop.trf.xlu0
    %v8679 = vpop.trf.xlu0
    %v8680 = vpop.trf.xlu0
    %v8681 = vpop.trf.xlu0
    %v8682 = vpop.trf.xlu0
    %8683 = vxpose.xlu0.b32.start [1/16] %v8602, 128
    %8684 = vxpose.xlu0.b32.cont [2/16] %v8603, 128
    %8685 = vxpose.xlu0.b32.cont [3/16] %v8604, 128
    %8686 = vxpose.xlu0.b32.cont [4/16] %v8605, 128
    %8687 = vxpose.xlu0.b32.cont [5/16] 0.0, 128
    %8688 = vxpose.xlu0.b32.cont [6/16] 0.0, 128
    %8689 = vxpose.xlu0.b32.cont [7/16] 0.0, 128
    %8690 = vxpose.xlu0.b32.cont [8/16] 0.0, 128
    %8691 = vxpose.xlu0.b32.cont [9/16] 0.0, 128
    %8692 = vxpose.xlu0.b32.cont [10/16] 0.0, 128
    %8693 = vxpose.xlu0.b32.cont [11/16] 0.0, 128
    %8694 = vxpose.xlu0.b32.cont [12/16] 0.0, 128
    %8695 = vxpose.xlu0.b32.cont [13/16] 0.0, 128
    %8696 = vxpose.xlu0.b32.cont [14/16] 0.0, 128
    %8697 = vxpose.xlu0.b32.cont [15/16] 0.0, 128
    %8698 = vxpose.xlu0.b32.end [16/16] 0.0, 128
    %v8699 = vpop.trf.xlu0
    %v8700 = vpop.trf.xlu0
    %v8701 = vpop.trf.xlu0
    %v8702 = vpop.trf.xlu0
    %v8703 = vpop.trf.xlu0
    %v8704 = vpop.trf.xlu0
    %v8705 = vpop.trf.xlu0
    %v8706 = vpop.trf.xlu0
    %v8707 = vpop.trf.xlu0
    %v8708 = vpop.trf.xlu0
    %v8709 = vpop.trf.xlu0
    %v8710 = vpop.trf.xlu0
    %v8711 = vpop.trf.xlu0
    %v8712 = vpop.trf.xlu0
    %v8713 = vpop.trf.xlu0
    %v8714 = vpop.trf.xlu0
    %8715 = vxpose.xlu0.b32.start [1/16] %v8606, 128
    %8716 = vxpose.xlu0.b32.cont [2/16] %v8607, 128
    %8717 = vxpose.xlu0.b32.cont [3/16] %v8608, 128
    %8718 = vxpose.xlu0.b32.cont [4/16] %v8609, 128
    %8719 = vxpose.xlu0.b32.cont [5/16] 0.0, 128
    %8720 = vxpose.xlu0.b32.cont [6/16] 0.0, 128
    %8721 = vxpose.xlu0.b32.cont [7/16] 0.0, 128
    %8722 = vxpose.xlu0.b32.cont [8/16] 0.0, 128
    %8723 = vxpose.xlu0.b32.cont [9/16] 0.0, 128
    %8724 = vxpose.xlu0.b32.cont [10/16] 0.0, 128
    %8725 = vxpose.xlu0.b32.cont [11/16] 0.0, 128
    %8726 = vxpose.xlu0.b32.cont [12/16] 0.0, 128
    %8727 = vxpose.xlu0.b32.cont [13/16] 0.0, 128
    %8728 = vxpose.xlu0.b32.cont [14/16] 0.0, 128
    %8729 = vxpose.xlu0.b32.cont [15/16] 0.0, 128
    %8730 = vxpose.xlu0.b32.end [16/16] 0.0, 128
    %v8731 = vpop.trf.xlu0
    %v8732 = vpop.trf.xlu0
    %v8733 = vpop.trf.xlu0
    %v8734 = vpop.trf.xlu0
    %v8735 = vpop.trf.xlu0
    %v8736 = vpop.trf.xlu0
    %v8737 = vpop.trf.xlu0
    %v8738 = vpop.trf.xlu0
    %v8739 = vpop.trf.xlu0
    %v8740 = vpop.trf.xlu0
    %v8741 = vpop.trf.xlu0
    %v8742 = vpop.trf.xlu0
    %v8743 = vpop.trf.xlu0
    %v8744 = vpop.trf.xlu0
    %v8745 = vpop.trf.xlu0
    %v8746 = vpop.trf.xlu0
    %8747 = vxpose.xlu0.b32.start [1/16] %v8610, 128
    %8748 = vxpose.xlu0.b32.cont [2/16] %v8611, 128
    %8749 = vxpose.xlu0.b32.cont [3/16] %v8612, 128
    %8750 = vxpose.xlu0.b32.cont [4/16] %v8613, 128
    %8751 = vxpose.xlu0.b32.cont [5/16] 0.0, 128
    %8752 = vxpose.xlu0.b32.cont [6/16] 0.0, 128
    %8753 = vxpose.xlu0.b32.cont [7/16] 0.0, 128
    %8754 = vxpose.xlu0.b32.cont [8/16] 0.0, 128
    %8755 = vxpose.xlu0.b32.cont [9/16] 0.0, 128
    %8756 = vxpose.xlu0.b32.cont [10/16] 0.0, 128
    %8757 = vxpose.xlu0.b32.cont [11/16] 0.0, 128
    %8758 = vxpose.xlu0.b32.cont [12/16] 0.0, 128
    %8759 = vxpose.xlu0.b32.cont [13/16] 0.0, 128
    %8760 = vxpose.xlu0.b32.cont [14/16] 0.0, 128
    %8761 = vxpose.xlu0.b32.cont [15/16] 0.0, 128
    %8762 = vxpose.xlu0.b32.end [16/16] 0.0, 128
    %v8763 = vpop.trf.xlu0
    %v8764 = vpop.trf.xlu0
    %v8765 = vpop.trf.xlu0
    %v8766 = vpop.trf.xlu0
    %v8767 = vpop.trf.xlu0
    %v8768 = vpop.trf.xlu0
    %v8769 = vpop.trf.xlu0
    %v8770 = vpop.trf.xlu0
    %v8771 = vpop.trf.xlu0
    %v8772 = vpop.trf.xlu0
    %v8773 = vpop.trf.xlu0
    %v8774 = vpop.trf.xlu0
    %v8775 = vpop.trf.xlu0
    %v8776 = vpop.trf.xlu0
    %v8777 = vpop.trf.xlu0
    %v8778 = vpop.trf.xlu0
    %8779 = vmatprep.subr.mxu0 0.0
    %8780 = vmatpush1.msra.mxu0 %v8667
    %8781 = vmatprep.subr.mxu0 0.0
    %8782 = vmatpush1.msra.mxu0 %v8668
    %8783 = vmatprep.subr.mxu0 0.0
    %8784 = vmatpush1.msra.mxu0 %v8669
    %8785 = vmatprep.subr.mxu0 0.0
    %8786 = vmatpush1.msra.mxu0 %v8670
    %8787 = vmatprep.subr.mxu0 0.0
    %8788 = vmatpush1.msra.mxu0 %v8699
    %8789 = vmatprep.subr.mxu0 0.0
    %8790 = vmatpush1.msra.mxu0 %v8700
    %8791 = vmatprep.subr.mxu0 0.0
    %8792 = vmatpush1.msra.mxu0 %v8701
    %8793 = vmatprep.subr.mxu0 0.0
    %8794 = vmatpush1.msra.mxu0 %v8702
    %8795 = vmatprep.subr.mxu0 0.0
    %8796 = vmatpush1.msra.mxu0 %v8731
    %8797 = vmatprep.subr.mxu0 0.0
    %8798 = vmatpush1.msra.mxu0 %v8732
    %8799 = vmatprep.subr.mxu0 0.0
    %8800 = vmatpush1.msra.mxu0 %v8733
    %8801 = vmatprep.subr.mxu0 0.0
    %8802 = vmatpush1.msra.mxu0 %v8734
    %8803 = vmatprep.subr.mxu0 0.0
    %8804 = vmatpush1.msra.mxu0 %v8763
    %8805 = vmatprep.subr.mxu0 0.0
    %8806 = vmatpush1.msra.mxu0 %v8764
    %8807 = vmatprep.subr.mxu0 0.0
    %8808 = vmatpush1.msra.mxu0 %v8765
    %8809 = vmatprep.subr.mxu0 0.0
    %8810 = vmatpush1.msra.mxu0 %v8766
    %8811 = vmatprep.subr.mxu0 0.0
    %8812 = vmatpush1.msra.mxu0 0.0
    %8813 = vmatprep.subr.mxu0 0.0
    %8814 = vmatpush1.msra.mxu0 0.0
    %8815 = vmatprep.subr.mxu0 0.0
    %8816 = vmatpush1.msra.mxu0 0.0
    %8817 = vmatprep.subr.mxu0 0.0
    %8818 = vmatpush1.msra.mxu0 0.0
    %8819 = vmatprep.subr.mxu0 0.0
    %8820 = vmatpush1.msra.mxu0 0.0
    %8821 = vmatprep.subr.mxu0 0.0
    %8822 = vmatpush1.msra.mxu0 0.0
    %8823 = vmatprep.subr.mxu0 0.0
    %8824 = vmatpush1.msra.mxu0 0.0
    %8825 = vmatprep.subr.mxu0 0.0
    %8826 = vmatpush1.msra.mxu0 0.0
    %8827 = vmatprep.subr.mxu0 0.0
    %8828 = vmatpush1.msra.mxu0 0.0
    %8829 = vmatprep.subr.mxu0 0.0
    %8830 = vmatpush1.msra.mxu0 0.0
    %8831 = vmatprep.subr.mxu0 0.0
    %8832 = vmatpush1.msra.mxu0 0.0
    %8833 = vmatprep.subr.mxu0 0.0
    %8834 = vmatpush1.msra.mxu0 0.0
    %8835 = vmatprep.subr.mxu0 0.0
    %8836 = vmatpush1.msra.mxu0 0.0
    %8837 = vmatprep.subr.mxu0 0.0
    %8838 = vmatpush1.msra.mxu0 0.0
    %8839 = vmatprep.subr.mxu0 0.0
    %8840 = vmatpush1.msra.mxu0 0.0
    %8841 = vmatprep.subr.mxu0 0.0
    %8842 = vmatpush1.msra.mxu0 0.0
    %8843 = vmatprep.mubr.f32.mxu0 0.0
    %8844 = vmatmul.mubr.f32.gmra.mrb[0].mxu0 %v4984
    %v8845 = vpop.f32.mrb[0].mxu0
    %v8846 = vadd.f32 0.0, %v8845
    %v8847 = vpop.f32.mrb[0].mxu0
    %8848 = vdwg.mxu0
    %v8849 = vmul.f32 %v8846, 0.25
    %8850 = vst.msk [vmem:[#allocation2 + $0x18] sm:$0xff] %vm68, %v8849
    %v8851 = vld [vmem:[#allocation2] sm:$0xff]
    %v8852 = vld [vmem:[#allocation2 + $0x8] sm:$0xff]
    %v8853 = vld [vmem:[#allocation2 + $0x10] sm:$0xff]
    %v8854 = vld [vmem:[#allocation2 + $0x18] sm:$0xff]
    %s8855 = scalar_lea.vmem %s4, 32
    %v8856 = vld [vmem:[%s8855] sm:$0xff]
    %v8857 = vld [vmem:[%s8855 + $0x8] sm:$0xff]
    %v8858 = vld [vmem:[%s8855 + $0x10] sm:$0xff]
    %v8859 = vld [vmem:[%s8855 + $0x18] sm:$0xff]
    %v8861 = vsel %vm68, %v8851, 0
    %v8864 = vsel %vm68, %v8852, 0
    %v8867 = vsel %vm68, %v8853, 0
    %v8870 = vsel %vm68, %v8854, 0
    %8872 = vmatprep.subr.mxu0 0.0
    %8873 = vmatpush1.msra.mxu0 %v8856
    %8874 = vmatprep.subr.mxu0 0.0
    %8875 = vmatpush1.msra.mxu0 %v8857
    %8876 = vmatprep.subr.mxu0 0.0
    %8877 = vmatpush1.msra.mxu0 %v8858
    %8878 = vmatprep.subr.mxu0 0.0
    %8879 = vmatpush1.msra.mxu0 %v8859
    %8880 = vmatprep.subr.mxu0 0.0
    %8881 = vmatpush1.msra.mxu0 0.0
    %8882 = vmatprep.subr.mxu0 0.0
    %8883 = vmatpush1.msra.mxu0 0.0
    %8884 = vmatprep.subr.mxu0 0.0
    %8885 = vmatpush1.msra.mxu0 0.0
    %8886 = vmatprep.subr.mxu0 0.0
    %8887 = vmatpush1.msra.mxu0 0.0
    %8888 = vmatprep.subr.mxu0 0.0
    %8889 = vmatpush1.msra.mxu0 0.0
    %8890 = vmatprep.subr.mxu0 0.0
    %8891 = vmatpush1.msra.mxu0 0.0
    %8892 = vmatprep.subr.mxu0 0.0
    %8893 = vmatpush1.msra.mxu0 0.0
    %8894 = vmatprep.subr.mxu0 0.0
    %8895 = vmatpush1.msra.mxu0 0.0
    %8896 = vmatprep.subr.mxu0 0.0
    %8897 = vmatpush1.msra.mxu0 0.0
    %8898 = vmatprep.subr.mxu0 0.0
    %8899 = vmatpush1.msra.mxu0 0.0
    %8900 = vmatprep.subr.mxu0 0.0
    %8901 = vmatpush1.msra.mxu0 0.0
    %8902 = vmatprep.subr.mxu0 0.0
    %8903 = vmatpush1.msra.mxu0 0.0
    %8904 = vmatprep.subr.mxu0 0.0
    %8905 = vmatpush1.msra.mxu0 0.0
    %8906 = vmatprep.subr.mxu0 0.0
    %8907 = vmatpush1.msra.mxu0 0.0
    %8908 = vmatprep.subr.mxu0 0.0
    %8909 = vmatpush1.msra.mxu0 0.0
    %8910 = vmatprep.subr.mxu0 0.0
    %8911 = vmatpush1.msra.mxu0 0.0
    %8912 = vmatprep.subr.mxu0 0.0
    %8913 = vmatpush1.msra.mxu0 0.0
    %8914 = vmatprep.subr.mxu0 0.0
    %8915 = vmatpush1.msra.mxu0 0.0
    %8916 = vmatprep.subr.mxu0 0.0
    %8917 = vmatpush1.msra.mxu0 0.0
    %8918 = vmatprep.subr.mxu0 0.0
    %8919 = vmatpush1.msra.mxu0 0.0
    %8920 = vmatprep.subr.mxu0 0.0
    %8921 = vmatpush1.msra.mxu0 0.0
    %8922 = vmatprep.subr.mxu0 0.0
    %8923 = vmatpush1.msra.mxu0 0.0
    %8924 = vmatprep.subr.mxu0 0.0
    %8925 = vmatpush1.msra.mxu0 0.0
    %8926 = vmatprep.subr.mxu0 0.0
    %8927 = vmatpush1.msra.mxu0 0.0
    %8928 = vmatprep.subr.mxu0 0.0
    %8929 = vmatpush1.msra.mxu0 0.0
    %8930 = vmatprep.subr.mxu0 0.0
    %8931 = vmatpush1.msra.mxu0 0.0
    %8932 = vmatprep.subr.mxu0 0.0
    %8933 = vmatpush1.msra.mxu0 0.0
    %8934 = vmatprep.subr.mxu0 0.0
    %8935 = vmatpush1.msra.mxu0 0.0
    %8936 = vmatprep.mubr.f32.mxu0 0.0
    %8937 = vmatmul.mubr.f32.gmra.mrb[0].mxu0 %v8861
    %v8938 = vpop.f32.mrb[0].mxu0
    %v8939 = vadd.f32 0.0, %v8938
    %v8940 = vpop.f32.mrb[0].mxu0
    %8941 = vmatprep.mubr.f32.mxu0 0.0
    %8942 = vmatmul.mubr.f32.gmra.mrb[0].mxu0 %v8864
    %v8943 = vpop.f32.mrb[0].mxu0
    %v8944 = vadd.f32 0.0, %v8943
    %v8945 = vpop.f32.mrb[0].mxu0
    %8946 = vmatprep.mubr.f32.mxu0 0.0
    %8947 = vmatmul.mubr.f32.gmra.mrb[0].mxu0 %v8867
    %v8948 = vpop.f32.mrb[0].mxu0
    %v8949 = vadd.f32 0.0, %v8948
    %v8950 = vpop.f32.mrb[0].mxu0
    %8951 = vmatprep.mubr.f32.mxu0 0.0
    %8952 = vmatmul.mubr.f32.gmra.mrb[0].mxu0 %v8870
    %v8953 = vpop.f32.mrb[0].mxu0
    %v8954 = vadd.f32 0.0, %v8953
    %v8955 = vpop.f32.mrb[0].mxu0
    %8956 = vdwg.mxu0
    %v8957 = vadd.f32 %v4708, %v8939
    %v8958 = vadd.f32 %v4709, %v8944
    %v8959 = vadd.f32 %v4710, %v8949
    %v8960 = vadd.f32 %v4711, %v8954
    %s8961 = scalar_lea.vmem %s5, 1
    %v8962 = vld [vmem:[%s8961] sm:$0x1]
    %s8963 = scalar_lea.vmem %s6, 1
    %v8964 = vld [vmem:[%s8963] sm:$0x1]
    %v8965 = vsel %vm68, %v8957, 0.0
    %8966 = vadd.xlane.f32.xlu0 %v8965
    %v8967 = vpop.xlane.xlu0 %8966
    %v8968 = vsel %vm68, %v8958, 0.0
    %8969 = vadd.xlane.f32.xlu0 %v8968
    %v8970 = vpop.xlane.xlu0 %8969
    %v8971 = vsel %vm68, %v8959, 0.0
    %8972 = vadd.xlane.f32.xlu0 %v8971
    %v8973 = vpop.xlane.xlu0 %8972
    %v8974 = vsel %vm68, %v8960, 0.0
    %8975 = vadd.xlane.f32.xlu0 %v8974
    %v8976 = vpop.xlane.xlu0 %8975
    %v8977 = vmul.f32 %v8967, %v81
    %v8978 = vmul.f32 %v8970, %v81
    %v8979 = vmul.f32 %v8973, %v81
    %v8980 = vmul.f32 %v8976, %v81
    %v8981 = vsub.f32 %v8957, %v8977
    %v8982 = vsub.f32 %v8958, %v8978
    %v8983 = vsub.f32 %v8959, %v8979
    %v8984 = vsub.f32 %v8960, %v8980
    %v8985 = vmul.f32 %v8981, %v8981
    %v8986 = vmul.f32 %v8982, %v8982
    %v8987 = vmul.f32 %v8983, %v8983
    %v8988 = vmul.f32 %v8984, %v8984
    %v8989 = vsel %vm68, %v8985, 0.0
    %8990 = vadd.xlane.f32.xlu0 %v8989
    %v8991 = vpop.xlane.xlu0 %8990
    %v8992 = vsel %vm68, %v8986, 0.0
    %8993 = vadd.xlane.f32.xlu0 %v8992
    %v8994 = vpop.xlane.xlu0 %8993
    %v8995 = vsel %vm68, %v8987, 0.0
    %8996 = vadd.xlane.f32.xlu0 %v8995
    %v8997 = vpop.xlane.xlu0 %8996
    %v8998 = vsel %vm68, %v8988, 0.0
    %8999 = vadd.xlane.f32.xlu0 %v8998
    %v9000 = vpop.xlane.xlu0 %8999
    %v9001 = vmul.f32 %v8991, %v81
    %v9002 = vmul.f32 %v8994, %v81
    %v9003 = vmul.f32 %v8997, %v81
    %v9004 = vmul.f32 %v9000, %v81
    %v9005 = vadd.f32 %v9001, 1e-06
    %v9006 = vadd.f32 %v9002, 1e-06
    %v9007 = vadd.f32 %v9003, 1e-06
    %v9008 = vadd.f32 %v9004, 1e-06
    %v9009 = vrsqrt.pop %v9005
    %v9010 = vrsqrt.pop %v9006
    %v9011 = vrsqrt.pop %v9007
    %v9012 = vrsqrt.pop %v9008
    %v9013 = vmul.f32 %v8981, %v9009
    %v9014 = vmul.f32 %v8982, %v9010
    %v9015 = vmul.f32 %v8983, %v9011
    %v9016 = vmul.f32 %v8984, %v9012
    %v9018 = vlaneseq
    %v9019 = vshrl.u32 %v9018, 7
    %v9020 = vsub.s32 0, %v9019
    %v9021 = vrot.slane %v8962, %v9020
    %v9023 = vmul.f32 %v9013, %v9021
    %v9024 = vmul.f32 %v9014, %v9021
    %v9025 = vmul.f32 %v9015, %v9021
    %v9026 = vmul.f32 %v9016, %v9021
    %v9028 = vlaneseq
    %v9029 = vshrl.u32 %v9028, 7
    %v9030 = vsub.s32 0, %v9029
    %v9031 = vrot.slane %v8964, %v9030
    %v9033 = vadd.f32 %v9023, %v9031
    %v9034 = vadd.f32 %v9024, %v9031
    %v9035 = vadd.f32 %v9025, %v9031
    %v9036 = vadd.f32 %v9026, %v9031
    %s9037 = scalar_lea.vmem %s7, 32
    %v9038 = vld [vmem:[%s9037] sm:$0xff]
    %v9039 = vld [vmem:[%s9037 + $0x8] sm:$0xff]
    %v9040 = vld [vmem:[%s9037 + $0x10] sm:$0xff]
    %v9041 = vld [vmem:[%s9037 + $0x18] sm:$0xff]
    %s9042 = scalar_lea.vmem %s8, 1
    %v9043 = vld [vmem:[%s9042] sm:$0x1]
    %v9045 = vlaneseq
    %v9046 = vshrl.u32 %v9045, 7
    %v9047 = vsub.s32 0, %v9046
    %v9048 = vrot.slane %v9043, %v9047
    %v9051 = vsel %vm68, %v9033, 0
    %v9054 = vsel %vm68, %v9034, 0
    %v9057 = vsel %vm68, %v9035, 0
    %v9060 = vsel %vm68, %v9036, 0
    %9062 = vmatprep.subr.mxu0 0.0
    %9063 = vmatpush1.msra.mxu0 %v9038
    %9064 = vmatprep.subr.mxu0 0.0
    %9065 = vmatpush1.msra.mxu0 %v9039
    %9066 = vmatprep.subr.mxu0 0.0
    %9067 = vmatpush1.msra.mxu0 %v9040
    %9068 = vmatprep.subr.mxu0 0.0
    %9069 = vmatpush1.msra.mxu0 %v9041
    %9070 = vmatprep.subr.mxu0 0.0
    %9071 = vmatpush1.msra.mxu0 0.0
    %9072 = vmatprep.subr.mxu0 0.0
    %9073 = vmatpush1.msra.mxu0 0.0
    %9074 = vmatprep.subr.mxu0 0.0
    %9075 = vmatpush1.msra.mxu0 0.0
    %9076 = vmatprep.subr.mxu0 0.0
    %9077 = vmatpush1.msra.mxu0 0.0
    %9078 = vmatprep.subr.mxu0 0.0
    %9079 = vmatpush1.msra.mxu0 0.0
    %9080 = vmatprep.subr.mxu0 0.0
    %9081 = vmatpush1.msra.mxu0 0.0
    %9082 = vmatprep.subr.mxu0 0.0
    %9083 = vmatpush1.msra.mxu0 0.0
    %9084 = vmatprep.subr.mxu0 0.0
    %9085 = vmatpush1.msra.mxu0 0.0
    %9086 = vmatprep.subr.mxu0 0.0
    %9087 = vmatpush1.msra.mxu0 0.0
    %9088 = vmatprep.subr.mxu0 0.0
    %9089 = vmatpush1.msra.mxu0 0.0
    %9090 = vmatprep.subr.mxu0 0.0
    %9091 = vmatpush1.msra.mxu0 0.0
    %9092 = vmatprep.subr.mxu0 0.0
    %9093 = vmatpush1.msra.mxu0 0.0
    %9094 = vmatprep.subr.mxu0 0.0
    %9095 = vmatpush1.msra.mxu0 0.0
    %9096 = vmatprep.subr.mxu0 0.0
    %9097 = vmatpush1.msra.mxu0 0.0
    %9098 = vmatprep.subr.mxu0 0.0
    %9099 = vmatpush1.msra.mxu0 0.0
    %9100 = vmatprep.subr.mxu0 0.0
    %9101 = vmatpush1.msra.mxu0 0.0
    %9102 = vmatprep.subr.mxu0 0.0
    %9103 = vmatpush1.msra.mxu0 0.0
    %9104 = vmatprep.subr.mxu0 0.0
    %9105 = vmatpush1.msra.mxu0 0.0
    %9106 = vmatprep.subr.mxu0 0.0
    %9107 = vmatpush1.msra.mxu0 0.0
    %9108 = vmatprep.subr.mxu0 0.0
    %9109 = vmatpush1.msra.mxu0 0.0
    %9110 = vmatprep.subr.mxu0 0.0
    %9111 = vmatpush1.msra.mxu0 0.0
    %9112 = vmatprep.subr.mxu0 0.0
    %9113 = vmatpush1.msra.mxu0 0.0
    %9114 = vmatprep.subr.mxu0 0.0
    %9115 = vmatpush1.msra.mxu0 0.0
    %9116 = vmatprep.subr.mxu0 0.0
    %9117 = vmatpush1.msra.mxu0 0.0
    %9118 = vmatprep.subr.mxu0 0.0
    %9119 = vmatpush1.msra.mxu0 0.0
    %9120 = vmatprep.subr.mxu0 0.0
    %9121 = vmatpush1.msra.mxu0 0.0
    %9122 = vmatprep.subr.mxu0 0.0
    %9123 = vmatpush1.msra.mxu0 0.0
    %9124 = vmatprep.subr.mxu0 0.0
    %9125 = vmatpush1.msra.mxu0 0.0
    %9126 = vmatprep.mubr.f32.mxu0 0.0
    %9127 = vmatmul.mubr.f32.gmra.mrb[0].mxu0 %v9051
    %v9128 = vpop.f32.mrb[0].mxu0
    %v9129 = vadd.f32 %v9048, %v9128
    %v9130 = vpop.f32.mrb[0].mxu0
    %9131 = vmatprep.mubr.f32.mxu0 0.0
    %9132 = vmatmul.mubr.f32.gmra.mrb[0].mxu0 %v9054
    %v9133 = vpop.f32.mrb[0].mxu0
    %v9134 = vadd.f32 %v9048, %v9133
    %v9135 = vpop.f32.mrb[0].mxu0
    %9136 = vmatprep.mubr.f32.mxu0 0.0
    %9137 = vmatmul.mubr.f32.gmra.mrb[0].mxu0 %v9057
    %v9138 = vpop.f32.mrb[0].mxu0
    %v9139 = vadd.f32 %v9048, %v9138
    %v9140 = vpop.f32.mrb[0].mxu0
    %9141 = vmatprep.mubr.f32.mxu0 0.0
    %9142 = vmatmul.mubr.f32.gmra.mrb[0].mxu0 %v9060
    %v9143 = vpop.f32.mrb[0].mxu0
    %v9144 = vadd.f32 %v9048, %v9143
    %v9145 = vpop.f32.mrb[0].mxu0
    %9146 = vdwg.mxu0
    %v9147 = vmul.f32 %v9129, 0.5
    %v9148 = vmul.f32 %v9134, 0.5
    %v9149 = vmul.f32 %v9139, 0.5
    %v9150 = vmul.f32 %v9144, 0.5
    %v9151 = vmul.f32 %v9129, 0.70710677
    %v9152 = vmul.f32 %v9134, 0.70710677
    %v9153 = vmul.f32 %v9139, 0.70710677
    %v9154 = vmul.f32 %v9144, 0.70710677
    %vm9155 = vcmp.lt.f32.partialorder %v9151, 0.0
    %vm9156 = vcmp.lt.f32.partialorder %v9152, 0.0
    %vm9157 = vcmp.lt.f32.partialorder %v9153, 0.0
    %vm9158 = vcmp.lt.f32.partialorder %v9154, 0.0
    %v9159 = vsel %vm9155, -1.0, 1.0
    %v9160 = vsel %vm9156, -1.0, 1.0
    %v9161 = vsel %vm9157, -1.0, 1.0
    %v9162 = vsel %vm9158, -1.0, 1.0
    %v9163 = vand.u32 2147483647, %v9151
    %v9164 = vand.u32 2147483647, %v9152
    %v9165 = vand.u32 2147483647, %v9153
    %v9166 = vand.u32 2147483647, %v9154
    %v9167 = vmul.f32 %v9163, 0.3275911
    %v9168 = vmul.f32 %v9164, 0.3275911
    %v9169 = vmul.f32 %v9165, 0.3275911
    %v9170 = vmul.f32 %v9166, 0.3275911
    %v9171 = vadd.f32 %v9167, 1.0
    %v9172 = vadd.f32 %v9168, 1.0
    %v9173 = vadd.f32 %v9169, 1.0
    %v9174 = vadd.f32 %v9170, 1.0
    %v9175 = vrcp.pop %v9171
    %v9176 = vrcp.pop %v9172
    %v9177 = vrcp.pop %v9173
    %v9178 = vrcp.pop %v9174
    %v9179 = vmul.f32 %v9175, 1.0614054
    %v9180 = vmul.f32 %v9176, 1.0614054
    %v9181 = vmul.f32 %v9177, 1.0614054
    %v9182 = vmul.f32 %v9178, 1.0614054
    %v9183 = vadd.f32 %v9179, -1.4531521
    %v9184 = vadd.f32 %v9180, -1.4531521
    %v9185 = vadd.f32 %v9181, -1.4531521
    %v9186 = vadd.f32 %v9182, -1.4531521
    %v9187 = vmul.f32 %v9183, %v9175
    %v9188 = vmul.f32 %v9184, %v9176
    %v9189 = vmul.f32 %v9185, %v9177
    %v9190 = vmul.f32 %v9186, %v9178
    %v9191 = vadd.f32 %v9187, 1.4214138
    %v9192 = vadd.f32 %v9188, 1.4214138
    %v9193 = vadd.f32 %v9189, 1.4214138
    %v9194 = vadd.f32 %v9190, 1.4214138
    %v9195 = vmul.f32 %v9191, %v9175
    %v9196 = vmul.f32 %v9192, %v9176
    %v9197 = vmul.f32 %v9193, %v9177
    %v9198 = vmul.f32 %v9194, %v9178
    %v9199 = vadd.f32 %v9195, -0.28449672
    %v9200 = vadd.f32 %v9196, -0.28449672
    %v9201 = vadd.f32 %v9197, -0.28449672
    %v9202 = vadd.f32 %v9198, -0.28449672
    %v9203 = vmul.f32 %v9199, %v9175
    %v9204 = vmul.f32 %v9200, %v9176
    %v9205 = vmul.f32 %v9201, %v9177
    %v9206 = vmul.f32 %v9202, %v9178
    %v9207 = vadd.f32 %v9203, 0.2548296
    %v9208 = vadd.f32 %v9204, 0.2548296
    %v9209 = vadd.f32 %v9205, 0.2548296
    %v9210 = vadd.f32 %v9206, 0.2548296
    %v9211 = vmul.f32 %v9207, %v9175
    %v9212 = vmul.f32 %v9208, %v9176
    %v9213 = vmul.f32 %v9209, %v9177
    %v9214 = vmul.f32 %v9210, %v9178
    %v9215 = vsub.f32 0.0, %v9163
    %v9216 = vsub.f32 0.0, %v9164
    %v9217 = vsub.f32 0.0, %v9165
    %v9218 = vsub.f32 0.0, %v9166
    %v9219 = vmul.f32 %v9215, %v9163
    %v9220 = vmul.f32 %v9216, %v9164
    %v9221 = vmul.f32 %v9217, %v9165
    %v9222 = vmul.f32 %v9218, %v9166
    %v9223 = vmul.f32 %v9219, 1.442695
    %v9224 = vpow.pop %v9223
    %v9225 = vmul.f32 %v9220, 1.442695
    %v9226 = vpow.pop %v9225
    %v9227 = vmul.f32 %v9221, 1.442695
    %v9228 = vpow.pop %v9227
    %v9229 = vmul.f32 %v9222, 1.442695
    %v9230 = vpow.pop %v9229
    %v9231 = vmul.f32 %v9211, %v9224
    %v9232 = vmul.f32 %v9212, %v9226
    %v9233 = vmul.f32 %v9213, %v9228
    %v9234 = vmul.f32 %v9214, %v9230
    %v9235 = vsub.f32 1.0, %v9231
    %v9236 = vsub.f32 1.0, %v9232
    %v9237 = vsub.f32 1.0, %v9233
    %v9238 = vsub.f32 1.0, %v9234
    %v9239 = vmul.f32 %v9159, %v9235
    %v9240 = vmul.f32 %v9160, %v9236
    %v9241 = vmul.f32 %v9161, %v9237
    %v9242 = vmul.f32 %v9162, %v9238
    %v9243 = vadd.f32 %v9239, 1.0
    %v9244 = vadd.f32 %v9240, 1.0
    %v9245 = vadd.f32 %v9241, 1.0
    %v9246 = vadd.f32 %v9242, 1.0
    %v9247 = vmul.f32 %v9147, %v9243
    %v9248 = vmul.f32 %v9148, %v9244
    %v9249 = vmul.f32 %v9149, %v9245
    %v9250 = vmul.f32 %v9150, %v9246
    %s9251 = scalar_lea.vmem %s9, 128
    %v9252 = vld [vmem:[%s9251] sm:$0xff]
    %v9253 = vld [vmem:[%s9251 + $0x8] sm:$0xff]
    %v9254 = vld [vmem:[%s9251 + $0x10] sm:$0xff]
    %v9255 = vld [vmem:[%s9251 + $0x18] sm:$0xff]
    %v9256 = vld [vmem:[%s9251 + $0x20] sm:$0xff]
    %v9257 = vld [vmem:[%s9251 + $0x28] sm:$0xff]
    %v9258 = vld [vmem:[%s9251 + $0x30] sm:$0xff]
    %v9259 = vld [vmem:[%s9251 + $0x38] sm:$0xff]
    %v9260 = vld [vmem:[%s9251 + $0x40] sm:$0xff]
    %v9261 = vld [vmem:[%s9251 + $0x48] sm:$0xff]
    %v9262 = vld [vmem:[%s9251 + $0x50] sm:$0xff]
    %v9263 = vld [vmem:[%s9251 + $0x58] sm:$0xff]
    %v9264 = vld [vmem:[%s9251 + $0x60] sm:$0xff]
    %v9265 = vld [vmem:[%s9251 + $0x68] sm:$0xff]
    %v9266 = vld [vmem:[%s9251 + $0x70] sm:$0xff]
    %v9267 = vld [vmem:[%s9251 + $0x78] sm:$0xff]
    %s9268 = scalar_lea.vmem %s10, 1
    %v9269 = vld [vmem:[%s9268] sm:$0x1]
    %v9271 = vlaneseq
    %v9272 = vshrl.u32 %v9271, 7
    %v9273 = vsub.s32 0, %v9272
    %v9274 = vrot.slane %v9269, %v9273
    %9276 = vmatprep.subr.mxu0 0.0
    %9277 = vmatpush1.msra.mxu0 %v9252
    %9278 = vmatprep.subr.mxu0 0.0
    %9279 = vmatpush1.msra.mxu0 %v9253
    %9280 = vmatprep.subr.mxu0 0.0
    %9281 = vmatpush1.msra.mxu0 %v9254
    %9282 = vmatprep.subr.mxu0 0.0
    %9283 = vmatpush1.msra.mxu0 %v9255
    %9284 = vmatprep.subr.mxu0 0.0
    %9285 = vmatpush1.msra.mxu0 %v9256
    %9286 = vmatprep.subr.mxu0 0.0
    %9287 = vmatpush1.msra.mxu0 %v9257
    %9288 = vmatprep.subr.mxu0 0.0
    %9289 = vmatpush1.msra.mxu0 %v9258
    %9290 = vmatprep.subr.mxu0 0.0
    %9291 = vmatpush1.msra.mxu0 %v9259
    %9292 = vmatprep.subr.mxu0 0.0
    %9293 = vmatpush1.msra.mxu0 %v9260
    %9294 = vmatprep.subr.mxu0 0.0
    %9295 = vmatpush1.msra.mxu0 %v9261
    %9296 = vmatprep.subr.mxu0 0.0
    %9297 = vmatpush1.msra.mxu0 %v9262
    %9298 = vmatprep.subr.mxu0 0.0
    %9299 = vmatpush1.msra.mxu0 %v9263
    %9300 = vmatprep.subr.mxu0 0.0
    %9301 = vmatpush1.msra.mxu0 %v9264
    %9302 = vmatprep.subr.mxu0 0.0
    %9303 = vmatpush1.msra.mxu0 %v9265
    %9304 = vmatprep.subr.mxu0 0.0
    %9305 = vmatpush1.msra.mxu0 %v9266
    %9306 = vmatprep.subr.mxu0 0.0
    %9307 = vmatpush1.msra.mxu0 %v9267
    %9308 = vmatprep.subr.mxu0 0.0
    %9309 = vmatpush1.msra.mxu0 0.0
    %9310 = vmatprep.subr.mxu0 0.0
    %9311 = vmatpush1.msra.mxu0 0.0
    %9312 = vmatprep.subr.mxu0 0.0
    %9313 = vmatpush1.msra.mxu0 0.0
    %9314 = vmatprep.subr.mxu0 0.0
    %9315 = vmatpush1.msra.mxu0 0.0
    %9316 = vmatprep.subr.mxu0 0.0
    %9317 = vmatpush1.msra.mxu0 0.0
    %9318 = vmatprep.subr.mxu0 0.0
    %9319 = vmatpush1.msra.mxu0 0.0
    %9320 = vmatprep.subr.mxu0 0.0
    %9321 = vmatpush1.msra.mxu0 0.0
    %9322 = vmatprep.subr.mxu0 0.0
    %9323 = vmatpush1.msra.mxu0 0.0
    %9324 = vmatprep.subr.mxu0 0.0
    %9325 = vmatpush1.msra.mxu0 0.0
    %9326 = vmatprep.subr.mxu0 0.0
    %9327 = vmatpush1.msra.mxu0 0.0
    %9328 = vmatprep.subr.mxu0 0.0
    %9329 = vmatpush1.msra.mxu0 0.0
    %9330 = vmatprep.subr.mxu0 0.0
    %9331 = vmatpush1.msra.mxu0 0.0
    %9332 = vmatprep.subr.mxu0 0.0
    %9333 = vmatpush1.msra.mxu0 0.0
    %9334 = vmatprep.subr.mxu0 0.0
    %9335 = vmatpush1.msra.mxu0 0.0
    %9336 = vmatprep.subr.mxu0 0.0
    %9337 = vmatpush1.msra.mxu0 0.0
    %9338 = vmatprep.subr.mxu0 0.0
    %9339 = vmatpush1.msra.mxu0 0.0
    %9340 = vmatprep.mubr.f32.mxu0 0.0
    %9341 = vmatmul.mubr.f32.gmra.mrb[0].mxu0 %v9247
    %v9342 = vpop.f32.mrb[0].mxu0
    %v9343 = vadd.f32 %v9274, %v9342
    %v9344 = vpop.f32.mrb[0].mxu0
    %9345 = vmatprep.mubr.f32.mxu0 0.0
    %9346 = vmatmul.mubr.f32.gmra.mrb[0].mxu0 %v9248
    %v9347 = vpop.f32.mrb[0].mxu0
    %v9348 = vadd.f32 %v9274, %v9347
    %v9349 = vpop.f32.mrb[0].mxu0
    %9350 = vmatprep.mubr.f32.mxu0 0.0
    %9351 = vmatmul.mubr.f32.gmra.mrb[0].mxu0 %v9249
    %v9352 = vpop.f32.mrb[0].mxu0
    %v9353 = vadd.f32 %v9274, %v9352
    %v9354 = vpop.f32.mrb[0].mxu0
    %9355 = vmatprep.mubr.f32.mxu0 0.0
    %9356 = vmatmul.mubr.f32.gmra.mrb[0].mxu0 %v9250
    %v9357 = vpop.f32.mrb[0].mxu0
    %v9358 = vadd.f32 %v9274, %v9357
    %v9359 = vpop.f32.mrb[0].mxu0
    %9360 = vdwg.mxu0
    %v9361 = vadd.f32 %v9343, %v8957
    %v9362 = vadd.f32 %v9348, %v8958
    %v9363 = vadd.f32 %v9353, %v8959
    %v9364 = vadd.f32 %v9358, %v8960
    %v9365 = vld [vmem:[%s11] sm:$0x1]
    %v9366 = vld [vmem:[%s12] sm:$0x1]
    %v9367 = vsel %vm68, %v9361, 0.0
    %9368 = vadd.xlane.f32.xlu0 %v9367
    %v9369 = vpop.xlane.xlu0 %9368
    %v9370 = vsel %vm68, %v9362, 0.0
    %9371 = vadd.xlane.f32.xlu0 %v9370
    %v9372 = vpop.xlane.xlu0 %9371
    %v9373 = vsel %vm68, %v9363, 0.0
    %9374 = vadd.xlane.f32.xlu0 %v9373
    %v9375 = vpop.xlane.xlu0 %9374
    %v9376 = vsel %vm68, %v9364, 0.0
    %9377 = vadd.xlane.f32.xlu0 %v9376
    %v9378 = vpop.xlane.xlu0 %9377
    %v9379 = vmul.f32 %v9369, %v81
    %v9380 = vmul.f32 %v9372, %v81
    %v9381 = vmul.f32 %v9375, %v81
    %v9382 = vmul.f32 %v9378, %v81
    %v9383 = vsub.f32 %v9361, %v9379
    %v9384 = vsub.f32 %v9362, %v9380
    %v9385 = vsub.f32 %v9363, %v9381
    %v9386 = vsub.f32 %v9364, %v9382
    %v9387 = vmul.f32 %v9383, %v9383
    %v9388 = vmul.f32 %v9384, %v9384
    %v9389 = vmul.f32 %v9385, %v9385
    %v9390 = vmul.f32 %v9386, %v9386
    %v9391 = vsel %vm68, %v9387, 0.0
    %9392 = vadd.xlane.f32.xlu0 %v9391
    %v9393 = vpop.xlane.xlu0 %9392
    %v9394 = vsel %vm68, %v9388, 0.0
    %9395 = vadd.xlane.f32.xlu0 %v9394
    %v9396 = vpop.xlane.xlu0 %9395
    %v9397 = vsel %vm68, %v9389, 0.0
    %9398 = vadd.xlane.f32.xlu0 %v9397
    %v9399 = vpop.xlane.xlu0 %9398
    %v9400 = vsel %vm68, %v9390, 0.0
    %9401 = vadd.xlane.f32.xlu0 %v9400
    %v9402 = vpop.xlane.xlu0 %9401
    %v9403 = vmul.f32 %v9393, %v81
    %v9404 = vmul.f32 %v9396, %v81
    %v9405 = vmul.f32 %v9399, %v81
    %v9406 = vmul.f32 %v9402, %v81
    %v9407 = vadd.f32 %v9403, 1e-06
    %v9408 = vadd.f32 %v9404, 1e-06
    %v9409 = vadd.f32 %v9405, 1e-06
    %v9410 = vadd.f32 %v9406, 1e-06
    %v9411 = vrsqrt.pop %v9407
    %v9412 = vrsqrt.pop %v9408
    %v9413 = vrsqrt.pop %v9409
    %v9414 = vrsqrt.pop %v9410
    %v9415 = vmul.f32 %v9383, %v9411
    %v9416 = vmul.f32 %v9384, %v9412
    %v9417 = vmul.f32 %v9385, %v9413
    %v9418 = vmul.f32 %v9386, %v9414
    %v9420 = vlaneseq
    %v9421 = vshrl.u32 %v9420, 7
    %v9422 = vsub.s32 0, %v9421
    %v9423 = vrot.slane %v9365, %v9422
    %v9425 = vmul.f32 %v9415, %v9423
    %v9426 = vmul.f32 %v9416, %v9423
    %v9427 = vmul.f32 %v9417, %v9423
    %v9428 = vmul.f32 %v9418, %v9423
    %v9430 = vlaneseq
    %v9431 = vshrl.u32 %v9430, 7
    %v9432 = vsub.s32 0, %v9431
    %v9433 = vrot.slane %v9366, %v9432
    %v9435 = vadd.f32 %v9425, %v9433
    %v9436 = vadd.f32 %v9426, %v9433
    %v9437 = vadd.f32 %v9427, %v9433
    %v9438 = vadd.f32 %v9428, %v9433
    %9439 = vst.msk [vmem:[#allocation6] sm:$0xff] %vm68, %v9435
    %9440 = vst.msk [vmem:[#allocation6 + $0x8] sm:$0xff] %vm68, %v9436
    %9441 = vst.msk [vmem:[#allocation6 + $0x10] sm:$0xff] %vm68, %v9437
    %9442 = vst.msk [vmem:[#allocation6 + $0x18] sm:$0xff] %vm68, %v9438
    // Predicated region
    $region58: #{tpu_custom_call.1} parent=1 // pred_check
      _
    $region59: #{tpu_custom_call.1} parent=1 // pred_check_branch
      %9444 = sbr.rel (0) target = $region61
    $region60: #{tpu_custom_call.1} parent=1 // pred_region
      %s9446 = ssub.s32 512, 512
      %9447 = vsyncadd [#allocation5], %s9446
      %s9448 = sshll.u32 [#allocation6], 4
      %s9449 = int_to_ptr.vmem [resolvable:$true] %s9448
      %9454 = dma.vmem_to_hbm [thread:$0]  %s9449, 512, %s13, [#allocation5], 128, 128, 8
    $region61: #{tpu_custom_call.1} parent=1 // pred_fallthru
      _
    // Predicated region
    $region62: #{tpu_custom_call.1} parent=1 // pred_check
      _
    $region63: #{tpu_custom_call.1} parent=1 // pred_check_branch
      %9456 = sbr.rel (0) target = $region65
    $region64: #{tpu_custom_call.1} parent=1 // pred_region
      %s9458 = ssub.s32 4096, 4096
      %9459 = vsyncadd [#allocation8], %s9458
      %s9460 = sshll.u32 [#allocation7], 4
      %s9461 = int_to_ptr.vmem [resolvable:$true] %s9460
      %9466 = dma.vmem_to_hbm [thread:$0]  %s9461, 4096, %s14, [#allocation8], 128, 128, 8
    $region65: #{tpu_custom_call.1} parent=1 // pred_fallthru
      _
    // Predicated region
    $region66: #{tpu_custom_call.1} parent=1 // pred_check
      _
    $region67: #{tpu_custom_call.1} parent=1 // pred_check_branch
      %9468 = sbr.rel (0) target = $region69
    $region68: #{tpu_custom_call.1} parent=1 // pred_region
      %9469 = dma.done [#allocation5], 512
    $region69: #{tpu_custom_call.1} parent=1 // pred_fallthru
      _
    // Predicated region
    $region70: #{tpu_custom_call.1} parent=1 // pred_check
      _
    $region71: #{tpu_custom_call.1} parent=1 // pred_check_branch
      %9471 = sbr.rel (0) target = $region73
    $region72: #{tpu_custom_call.1} parent=1 // pred_region
      %9472 = dma.done [#allocation8], 4096
    $region73: #{tpu_custom_call.1} parent=1 // pred_fallthru
      _
    %9473 = vsyncpa [#allocation4], 1
    %9474 = vsyncpa [#allocation5], 1
    %9475 = vsyncpa [#allocation8], 1

</llo_original>
